<compile_context>
chip_gen: v7x
topology: tpu7x:2x2x1
jax: 0.10.0
libtpu: 0.0.40
codegen_flags: <defaults>
</compile_context>

<pallas_src>
import jax
import jax.numpy as jnp
from jax.experimental import pallas as pl
from jax.experimental.pallas import tpu as pltpu

# Model geometry fixed by the PyTorch module (Linear(10*15*64, ...)):
H = 10          # spatial height
W0 = 18         # input width: 18 -> 18 -> 17 -> 15 through the three convs
CONV_DIMS = [   # (Cin, kw, Cout) for the (1, kw) convs
    (1, 1, 16),
    (16, 2, 32),
    (32, 3, 64),
]
BN_EPS = 1e-5
W_FINAL = W0 - sum(kw - 1 for (_, kw, _) in CONV_DIMS)   # 15
C_FINAL = CONV_DIMS[-1][2]                               # 64
FEAT = H * W_FINAL * C_FINAL                             # 9600
FEATP = 1024                                             # 15*64=960 padded to 8*128


def _round_up(x, m):
    return ((x + m - 1) // m) * m


# --------------------------------- kernel ----------------------------------

def _net_kernel(x_ref, m1, c1, m2, c2, m3, c3,
                w1, b1, w2, b2, w3, b3, w4, b4,
                o_ref, a3_ref, acc_ref):
    """One batch tile: conv1/2/3 (+ReLU, BN folded forward) then the fused
    4-layer MLP head.  For dueling nets the two heads AND the dueling combine
    are already folded into (w1..w4, b1..b4) at pack time."""
    wdt = m1.dtype                      # compute dtype (bf16 serving / f32 debug)
    tb = x_ref.shape[1]                 # batch rows in this tile

    # ---- conv stack as 3 plain matmuls on the (h*b, w*c) layout ----
    x2 = x_ref[...].reshape(H * tb, W0).astype(wdt)
    a = jnp.maximum(jnp.dot(x2, m1[...],
                            preferred_element_type=jnp.float32) + c1[...], 0.0)
    a = jnp.maximum(jnp.dot(a.astype(wdt), m2[...],
                            preferred_element_type=jnp.float32) + c2[...], 0.0)
    a = jnp.maximum(jnp.dot(a.astype(wdt), m3[...],
                            preferred_element_type=jnp.float32) + c3[...], 0.0)
    # (H*tb, FEATP) -> (H, tb, FEATP) scratch in the compute dtype.
    a3_ref[...] = a.reshape(H, tb, FEATP).astype(wdt)

    # ---- MLP layer 1: accumulate over h into a VMEM scratch (bounded vregs).
    # The NCHW-flatten permutation + BN3 are folded into w1 (H, FEATP, N1).
    acc_ref[...] = jnp.dot(a3_ref[0], w1[0], preferred_element_type=jnp.float32)
    for h in range(1, H):                                   # static, small
        acc_ref[...] += jnp.dot(a3_ref[h], w1[h],
                                preferred_element_type=jnp.float32)

    a = jnp.maximum(acc_ref[...] + b1[...], 0.0)
    a = jnp.maximum(jnp.dot(a.astype(wdt), w2[...],
                            preferred_element_type=jnp.float32) + b2[...], 0.0)
    a = jnp.maximum(jnp.dot(a.astype(wdt), w3[...],
                            preferred_element_type=jnp.float32) + b3[...], 0.0)
    o_ref[...] = (jnp.dot(a.astype(wdt), w4[...],
                          preferred_element_type=jnp.float32)
                  + b4[...]).astype(o_ref.dtype)


# ------------------------------ public forward ------------------------------

def net_forward(x_nchw, packed, n_actions):
    """x_nchw: (B, 1, 10, 18) float32, PyTorch layout.  `packed` comes from
    pack_params(); works for both the standard and the dueling head."""
    B = x_nchw.shape[0]
    TB = min(128, _round_up(B, 8))          # batch tile (multiple of 8 sublanes)
    B_pad = _round_up(B, TB)
    n_tiles = B_pad // TB

    # NCHW -> (H, B_pad, W0): rows of a tile are contiguous in b, h is leading.
    x = jnp.transpose(x_nchw[:, 0, :, :].astype(jnp.float32), (1, 0, 2))
    if B_pad != B:
        x = jnp.pad(x, ((0, 0), (0, B_pad - B), (0, 0)))

    wdtype = packed[0].dtype
    n1 = packed[6].shape[-1]                # fused layer-1 width (256 or 512)

    def _resident(shape):
        # Full-array block + constant index_map: DMA'd once, stays VMEM-resident
        # while batch tiles stream.
        nd = len(shape)
        return pl.BlockSpec(shape, lambda i, _nd=nd: (0,) * _nd)

    in_specs = [pl.BlockSpec((H, TB, W0), lambda i: (0, i, 0))]
    in_specs += [_resident(p.shape) for p in packed]

    out = pl.pallas_call(
        _net_kernel,
        out_shape=jax.ShapeDtypeStruct((B_pad, n_actions), jnp.float32),
        grid=(n_tiles,),
        in_specs=in_specs,
        out_specs=pl.BlockSpec((TB, n_actions), lambda i: (i, 0)),
        scratch_shapes=[pltpu.VMEM((H, TB, FEATP), wdtype),     # conv output
                        pltpu.VMEM((TB, n1), jnp.float32)],     # layer-1 acc
        compiler_params=pltpu.CompilerParams(
            dimension_semantics=("parallel",),   # batch tiles across TCs on v7x
            vmem_limit_bytes=48 << 20),          # fits the 64 MiB/TC of v7x
    )(x, *packed)
    return out[:B]


# -------------------------- parameter init / packing ------------------------

def _fold_bn(gamma, beta, mean, var):
    scale = gamma / jnp.sqrt(var + BN_EPS)
    return scale, beta - mean * scale


def _conv_as_matmul(w, w_in):
    """Dense (w_in*cin, w_out*cout) matrix implementing a (1,kw) valid conv on
    the row-major (w, c) lane layout.  w: (cout, cin, kw)."""
    cout, cin, kw = w.shape
    w_out = w_in - kw + 1
    m = jnp.zeros((w_in * cin, w_out * cout), jnp.float32)
    for d in range(kw):
        shift_eye = jnp.eye(w_in, w_out, k=-d, dtype=jnp.float32)  # [wo+d, wo]=1
        m = m + jnp.kron(shift_eye, w[:, :, d].T)                  # (cin,cout) blocks
    return m


def _block_diag(a, b):
    return jnp.block([[a, jnp.zeros((a.shape[0], b.shape[1]), jnp.float32)],
                      [jnp.zeros((b.shape[0], a.shape[1]), jnp.float32), b]])


def init_raw_params(key, n_actions, dueling=False):
    """'PyTorch-layout' random params (to load a real torch model: conv weight
    (cout,cin,1,kw) -> squeeze; Linear weight (out,in) -> transpose)."""
    ki = iter(jax.random.split(key, 40))

    def normal(shape, fan_in):
        return jax.random.normal(next(ki), shape, jnp.float32) / jnp.sqrt(float(fan_in))

    convs = []
    for (cin, kw, cout) in CONV_DIMS:
        w = normal((cout, cin, kw), cin * kw)
        b = normal((cout,), cin * kw) * 0.1
        gamma = 1.0 + 0.1 * jax.random.normal(next(ki), (cout,), jnp.float32)
        beta = 0.05 * jax.random.normal(next(ki), (cout,), jnp.float32)
        rmean = 0.05 * jax.random.normal(next(ki), (cout,), jnp.float32)
        rvar = 1.0 + 0.1 * jnp.abs(jax.random.normal(next(ki), (cout,), jnp.float32))
        convs.append((w, b, (gamma, beta, rmean, rvar)))

    def head(n_out):
        dims = [(FEAT, 256), (256, 128), (128, 64), (64, n_out)]
        return [(normal((fin, fout), fin), normal((fout,), fin) * 0.1)
                for (fin, fout) in dims]

    return {"convs": convs,
            "value": head(1 if dueling else n_actions),
            "advantage": head(n_actions) if dueling else None}


def pack_params(raw, weight_dtype=jnp.bfloat16):
    """Build the fused-kernel operand list: conv matmul matrices with BN folded
    forward (and lane padding 960->1024 on conv3), and ONE MLP head whose first
    weight absorbs the NCHW-flatten permutation + BN3.  For dueling nets the
    two heads are fused (concat W1 / block-diag W2-W4) and the dueling combine
    is folded into W4/b4, so the kernel is head-agnostic."""
    ops = []
    w_in = W0
    prev_scale = prev_shift = None
    n_convs = len(raw["convs"])
    for li, (w, b, bn) in enumerate(raw["convs"]):
        cout, _, kw = w.shape
        m = _conv_as_matmul(w, w_in)
        w_out = w_in - kw + 1
        bias = jnp.tile(b, w_out)
        if prev_scale is not None:                   # fold previous BatchNorm
            bias = bias + jnp.tile(prev_shift, w_in) @ m     # uses unscaled m
            m = m * jnp.tile(prev_scale, w_in)[:, None]
        if li == n_convs - 1:                        # lane-pad 960 -> 1024
            pad = FEATP - w_out * cout
            m = jnp.pad(m, ((0, 0), (0, pad)))
            bias = jnp.pad(bias, (0, pad))
        ops += [m.astype(weight_dtype), bias.reshape(1, -1).astype(jnp.float32)]
        prev_scale, prev_shift = _fold_bn(*bn)
        w_in = w_out

    def fold_w1(w1, b1):
        # w1 rows are indexed c*(H*W) + h*W + w (torch NCHW flatten order).
        nh = w1.shape[1]
        b1f = b1 + jnp.repeat(prev_shift, H * W_FINAL) @ w1
        w1r = w1.reshape(C_FINAL, H, W_FINAL, nh) * prev_scale[:, None, None, None]
        w1f = jnp.transpose(w1r, (1, 2, 0, 3)).reshape(H, W_FINAL * C_FINAL, nh)
        w1f = jnp.pad(w1f, ((0, 0), (0, FEATP - W_FINAL * C_FINAL), (0, 0)))
        return w1f, b1f

    if raw.get("advantage") is None:
        (w1, b1), (w2, b2), (w3, b3), (w4, b4) = raw["value"]
        w1f, b1f = fold_w1(w1, b1)
    else:
        (vw1, vb1), (vw2, vb2), (vw3, vb3), (vw4, vb4) = raw["value"]
        (aw1, ab1), (aw2, ab2), (aw3, ab3), (aw4, ab4) = raw["advantage"]
        vw1f, vb1f = fold_w1(vw1, vb1)
        aw1f, ab1f = fold_w1(aw1, ab1)
        w1f = jnp.concatenate([vw1f, aw1f], axis=-1)          # (H, FEATP, 512)
        b1f = jnp.concatenate([vb1f, ab1f])
        w2 = _block_diag(vw2, aw2); b2 = jnp.concatenate([vb2, ab2])   # (512,256)
        w3 = _block_diag(vw3, aw3); b3 = jnp.concatenate([vb3, ab3])   # (256,128)
        w4bd = _block_diag(vw4, aw4)                                   # (128,1+nA)
        b4bd = jnp.concatenate([vb4, ab4])
        # Fold the dueling combine (ya - mean(ya)) + ys into W4/b4.
        n_a = aw4.shape[1]
        comb = jnp.concatenate(
            [jnp.ones((1, n_a), jnp.float32),
             jnp.eye(n_a, dtype=jnp.float32) - 1.0 / n_a], axis=0)     # (1+nA, nA)
        w4 = w4bd @ comb
        b4 = b4bd @ comb

    for (wi, bi) in ((w1f, b1f), (w2, b2), (w3, b3), (w4, b4)):
        ops += [wi.astype(weight_dtype), bi.reshape(1, -1).astype(jnp.float32)]
    return ops


# ---------------------------- pure-JAX reference ----------------------------

def reference_forward(x_nchw, raw, n_actions, dueling):
    x = x_nchw.astype(jnp.float32)
    for (w, b, bn) in raw["convs"]:
        cout, cin, kw = w.shape
        wout = x.shape[-1] - kw + 1
        y = jnp.zeros(x.shape[:1] + (cout,) + x.shape[2:3] + (wout,), jnp.float32)
        for d in range(kw):
            y = y + jnp.einsum('bchw,oc->bohw', x[:, :, :, d:d + wout], w[:, :, d])
        y = jnp.maximum(y + b[None, :, None, None], 0.0)
        scale, shift = _fold_bn(*bn)
        x = y * scale[None, :, None, None] + shift[None, :, None, None]
    flat = x.reshape(x.shape[0], -1)                 # NCHW flatten, like torch

    def head(layers):
        h = flat
        for i, (w, b) in enumerate(layers):
            h = h @ w + b
            if i < 3:
                h = jnp.maximum(h, 0.0)
        return h

    if not dueling:
        return head(raw["value"])
    ya = head(raw["advantage"])
    ys = head(raw["value"])
    mean = jnp.sum(ya, axis=1, keepdims=True) / n_actions
    return (ya - mean) + ys


# ----------------------------------- main -----------------------------------

if __name__ == "__main__":
    n_actions = 4
    key = jax.random.PRNGKey(0)
    k_p, k_pd, k_x, k_xl = jax.random.split(key, 4)

    # Input (B, 1, 10, 18): W=18 so the conv stack yields 10x15x64 = 9600 feats.
    x = jax.random.normal(k_x, (2, 1, H, W0), dtype=jnp.float32)

    fwd = jax.jit(net_forward, static_argnums=(2,))

    # ---- standard head ----
    raw = init_raw_params(k_p, n_actions, dueling=False)
    q_ref = reference_forward(x, raw, n_actions, False)
    # f32-weight debug path: tight tolerance validates BN folds + flatten fold.
    q_dbg = jax.block_until_ready(fwd(x, pack_params(raw, jnp.float32), n_actions))
    assert q_dbg.shape == (2, n_actions), q_dbg.shape
    assert jnp.allclose(q_dbg, q_ref, rtol=5e-2, atol=5e-2), (q_dbg, q_ref)
    # bf16 serving path.
    q = jax.block_until_ready(fwd(x, pack_params(raw), n_actions))
    assert jnp.allclose(q, q_ref, rtol=1.5e-1, atol=1.5e-1), (q, q_ref)

    # ---- dueling head (heads fused + combine folded into W4 at pack time) ----
    raw_d = init_raw_params(k_pd, n_actions, dueling=True)
    packed_d = pack_params(raw_d)
    qd = jax.block_until_ready(fwd(x, packed_d, n_actions))
    qd_ref = reference_forward(x, raw_d, n_actions, True)
    assert qd.shape == (2, n_actions), qd.shape
    assert jnp.allclose(qd, qd_ref, rtol=1.5e-1, atol=1.5e-1), (qd, qd_ref)

    # ---- multi-tile batch grid (exercises the batch-tile pipeline) ----
    xl = jax.random.normal(k_xl, (200, 1, H, W0), dtype=jnp.float32)
    ql = jax.block_until_ready(fwd(xl, packed_d, n_actions))
    ql_ref = reference_forward(xl, raw_d, n_actions, True)
    assert ql.shape == (200, n_actions), ql.shape
    assert jnp.allclose(ql, ql_ref, rtol=2e-1, atol=2e-1), "large-batch mismatch"

    print("KERNEL_OK")
</pallas_src>

<mosaic_0001>
module attributes {stable_mosaic.version = 11 : i64} {
  func.func @_net_kernel(%arg0: i32, %arg1: memref<10x8x18xf32, #tpu.memory_space<vmem>>, %arg2: memref<18x288xf32, #tpu.memory_space<vmem>>, %arg3: memref<1x288xf32, #tpu.memory_space<vmem>>, %arg4: memref<288x544xf32, #tpu.memory_space<vmem>>, %arg5: memref<1x544xf32, #tpu.memory_space<vmem>>, %arg6: memref<544x1024xf32, #tpu.memory_space<vmem>>, %arg7: memref<1x1024xf32, #tpu.memory_space<vmem>>, %arg8: memref<10x1024x256xf32, #tpu.memory_space<vmem>>, %arg9: memref<1x256xf32, #tpu.memory_space<vmem>>, %arg10: memref<256x128xf32, #tpu.memory_space<vmem>>, %arg11: memref<1x128xf32, #tpu.memory_space<vmem>>, %arg12: memref<128x64xf32, #tpu.memory_space<vmem>>, %arg13: memref<1x64xf32, #tpu.memory_space<vmem>>, %arg14: memref<64x4xf32, #tpu.memory_space<vmem>>, %arg15: memref<1x4xf32, #tpu.memory_space<vmem>>, %arg16: memref<8x4xf32, #tpu.memory_space<vmem>>, %arg17: memref<10x8x1024xf32, #tpu.memory_space<vmem>>, %arg18: memref<8x256xf32, #tpu.memory_space<vmem>>) attributes {dimension_semantics = [#tpu.dimension_semantics<parallel>], iteration_bounds = array<i64: 1>, scalar_prefetch = 0 : i64, scratch_operands = 2 : i64, tpu.core_type = #tpu.core_type<tc>, window_params = [{transform_indices = @transform_0, window_bounds = array<i64: 10, 8, 18>}, {pipeline_mode = #tpu.pipeline_mode<synchronous>, transform_indices = @transform_1, window_bounds = array<i64: 18, 288>}, {pipeline_mode = #tpu.pipeline_mode<synchronous>, transform_indices = @transform_2, window_bounds = array<i64: 1, 288>}, {pipeline_mode = #tpu.pipeline_mode<synchronous>, transform_indices = @transform_3, window_bounds = array<i64: 288, 544>}, {pipeline_mode = #tpu.pipeline_mode<synchronous>, transform_indices = @transform_4, window_bounds = array<i64: 1, 544>}, {pipeline_mode = #tpu.pipeline_mode<synchronous>, transform_indices = @transform_5, window_bounds = array<i64: 544, 1024>}, {pipeline_mode = #tpu.pipeline_mode<synchronous>, transform_indices = @transform_6, window_bounds = array<i64: 1, 1024>}, {pipeline_mode = #tpu.pipeline_mode<synchronous>, transform_indices = @transform_7, window_bounds = array<i64: 10, 1024, 256>}, {pipeline_mode = #tpu.pipeline_mode<synchronous>, transform_indices = @transform_8, window_bounds = array<i64: 1, 256>}, {pipeline_mode = #tpu.pipeline_mode<synchronous>, transform_indices = @transform_9, window_bounds = array<i64: 256, 128>}, {pipeline_mode = #tpu.pipeline_mode<synchronous>, transform_indices = @transform_10, window_bounds = array<i64: 1, 128>}, {pipeline_mode = #tpu.pipeline_mode<synchronous>, transform_indices = @transform_11, window_bounds = array<i64: 128, 64>}, {pipeline_mode = #tpu.pipeline_mode<synchronous>, transform_indices = @transform_12, window_bounds = array<i64: 1, 64>}, {pipeline_mode = #tpu.pipeline_mode<synchronous>, transform_indices = @transform_13, window_bounds = array<i64: 64, 4>}, {pipeline_mode = #tpu.pipeline_mode<synchronous>, transform_indices = @transform_14, window_bounds = array<i64: 1, 4>}, {transform_indices = @transform_15, window_bounds = array<i64: 8, 4>}]} {
    %c0 = arith.constant 0 : index
    %c0_0 = arith.constant 0 : index
    %c0_1 = arith.constant 0 : index
    %0 = vector.load %arg1[%c0, %c0_0, %c0_1] : memref<10x8x18xf32, #tpu.memory_space<vmem>>, vector<10x8x18xf32>
    %1 = vector.shape_cast %0 : vector<10x8x18xf32> to vector<80x18xf32>
    %c0_2 = arith.constant 0 : index
    %c0_3 = arith.constant 0 : index
    %2 = vector.load %arg2[%c0_2, %c0_3] : memref<18x288xf32, #tpu.memory_space<vmem>>, vector<18x288xf32>
    %cst = arith.constant dense<0.000000e+00> : vector<80x288xf32>
    %3 = tpu.matmul %1, %2, %cst {dimension_numbers = #tpu.dot_dimension_numbers<[1], [0], [0], [1], [0, 0, 1, 1], [], []>} : vector<80x18xf32>, vector<18x288xf32>, vector<80x288xf32> -> vector<80x288xf32>
    %c0_4 = arith.constant 0 : index
    %c0_5 = arith.constant 0 : index
    %4 = vector.load %arg3[%c0_4, %c0_5] : memref<1x288xf32, #tpu.memory_space<vmem>>, vector<1x288xf32>
    %5 = vector.broadcast %4 : vector<1x288xf32> to vector<80x288xf32>
    %6 = arith.addf %3, %5 : vector<80x288xf32>
    %cst_6 = arith.constant 0.000000e+00 : f32
    %7 = vector.broadcast %cst_6 : f32 to vector<80x288xf32>
    %8 = arith.maximumf %6, %7 : vector<80x288xf32>
    %c0_7 = arith.constant 0 : index
    %c0_8 = arith.constant 0 : index
    %9 = vector.load %arg4[%c0_7, %c0_8] : memref<288x544xf32, #tpu.memory_space<vmem>>, vector<288x544xf32>
    %cst_9 = arith.constant dense<0.000000e+00> : vector<80x544xf32>
    %10 = tpu.matmul %8, %9, %cst_9 {dimension_numbers = #tpu.dot_dimension_numbers<[1], [0], [0], [1], [0, 0, 1, 1], [], []>} : vector<80x288xf32>, vector<288x544xf32>, vector<80x544xf32> -> vector<80x544xf32>
    %c0_10 = arith.constant 0 : index
    %c0_11 = arith.constant 0 : index
    %11 = vector.load %arg5[%c0_10, %c0_11] : memref<1x544xf32, #tpu.memory_space<vmem>>, vector<1x544xf32>
    %12 = vector.broadcast %11 : vector<1x544xf32> to vector<80x544xf32>
    %13 = arith.addf %10, %12 : vector<80x544xf32>
    %cst_12 = arith.constant 0.000000e+00 : f32
    %14 = vector.broadcast %cst_12 : f32 to vector<80x544xf32>
    %15 = arith.maximumf %13, %14 : vector<80x544xf32>
    %c0_13 = arith.constant 0 : index
    %c0_14 = arith.constant 0 : index
    %16 = vector.load %arg6[%c0_13, %c0_14] : memref<544x1024xf32, #tpu.memory_space<vmem>>, vector<544x1024xf32>
    %cst_15 = arith.constant dense<0.000000e+00> : vector<80x1024xf32>
    %17 = tpu.matmul %15, %16, %cst_15 {dimension_numbers = #tpu.dot_dimension_numbers<[1], [0], [0], [1], [0, 0, 1, 1], [], []>} : vector<80x544xf32>, vector<544x1024xf32>, vector<80x1024xf32> -> vector<80x1024xf32>
    %c0_16 = arith.constant 0 : index
    %c0_17 = arith.constant 0 : index
    %18 = vector.load %arg7[%c0_16, %c0_17] : memref<1x1024xf32, #tpu.memory_space<vmem>>, vector<1x1024xf32>
    %19 = vector.broadcast %18 : vector<1x1024xf32> to vector<80x1024xf32>
    %20 = arith.addf %17, %19 : vector<80x1024xf32>
    %cst_18 = arith.constant 0.000000e+00 : f32
    %21 = vector.broadcast %cst_18 : f32 to vector<80x1024xf32>
    %22 = arith.maximumf %20, %21 : vector<80x1024xf32>
    %23 = vector.shape_cast %22 : vector<80x1024xf32> to vector<10x8x1024xf32>
    %c0_19 = arith.constant 0 : index
    %c0_20 = arith.constant 0 : index
    %c0_21 = arith.constant 0 : index
    %24 = vector.load %arg17[%c0_19, %c0_20, %c0_21] : memref<10x8x1024xf32, #tpu.memory_space<vmem>>, vector<10x8x1024xf32>
    tpu.vector_store %arg17[%c0_19, %c0_20, %c0_21], %23 {strides = array<i32>} : memref<10x8x1024xf32, #tpu.memory_space<vmem>>, vector<10x8x1024xf32>,
    %c0_22 = arith.constant 0 : index
    %c0_23 = arith.constant 0 : index
    %c0_24 = arith.constant 0 : index
    %25 = vector.load %arg17[%c0_22, %c0_23, %c0_24] : memref<10x8x1024xf32, #tpu.memory_space<vmem>>, vector<1x8x1024xf32>
    %26 = vector.shape_cast %25 : vector<1x8x1024xf32> to vector<8x1024xf32>
    %c0_25 = arith.constant 0 : index
    %c0_26 = arith.constant 0 : index
    %c0_27 = arith.constant 0 : index
    %27 = vector.load %arg8[%c0_25, %c0_26, %c0_27] : memref<10x1024x256xf32, #tpu.memory_space<vmem>>, vector<1x1024x256xf32>
    %28 = vector.shape_cast %27 : vector<1x1024x256xf32> to vector<1024x256xf32>
    %cst_28 = arith.constant dense<0.000000e+00> : vector<8x256xf32>
    %29 = tpu.matmul %26, %28, %cst_28 {dimension_numbers = #tpu.dot_dimension_numbers<[1], [0], [0], [1], [0, 0, 1, 1], [], []>} : vector<8x1024xf32>, vector<1024x256xf32>, vector<8x256xf32> -> vector<8x256xf32>
    %c0_29 = arith.constant 0 : index
    %c0_30 = arith.constant 0 : index
    %30 = vector.load %arg18[%c0_29, %c0_30] : memref<8x256xf32, #tpu.memory_space<vmem>>, vector<8x256xf32>
    tpu.vector_store %arg18[%c0_29, %c0_30], %29 {strides = array<i32>} : memref<8x256xf32, #tpu.memory_space<vmem>>, vector<8x256xf32>,
    %c0_31 = arith.constant 0 : index
    %c0_32 = arith.constant 0 : index
    %31 = vector.load %arg18[%c0_31, %c0_32] : memref<8x256xf32, #tpu.memory_space<vmem>>, vector<8x256xf32>
    %c1 = arith.constant 1 : index
    %c0_33 = arith.constant 0 : index
    %c0_34 = arith.constant 0 : index
    %32 = vector.load %arg17[%c1, %c0_33, %c0_34] : memref<10x8x1024xf32, #tpu.memory_space<vmem>>, vector<1x8x1024xf32>
    %33 = vector.shape_cast %32 : vector<1x8x1024xf32> to vector<8x1024xf32>
    %c1_35 = arith.constant 1 : index
    %c0_36 = arith.constant 0 : index
    %c0_37 = arith.constant 0 : index
    %34 = vector.load %arg8[%c1_35, %c0_36, %c0_37] : memref<10x1024x256xf32, #tpu.memory_space<vmem>>, vector<1x1024x256xf32>
    %35 = vector.shape_cast %34 : vector<1x1024x256xf32> to vector<1024x256xf32>
    %cst_38 = arith.constant dense<0.000000e+00> : vector<8x256xf32>
    %36 = tpu.matmul %33, %35, %cst_38 {dimension_numbers = #tpu.dot_dimension_numbers<[1], [0], [0], [1], [0, 0, 1, 1], [], []>} : vector<8x1024xf32>, vector<1024x256xf32>, vector<8x256xf32> -> vector<8x256xf32>
    %37 = arith.addf %31, %36 : vector<8x256xf32>
    %c0_39 = arith.constant 0 : index
    %c0_40 = arith.constant 0 : index
    %38 = vector.load %arg18[%c0_39, %c0_40] : memref<8x256xf32, #tpu.memory_space<vmem>>, vector<8x256xf32>
    tpu.vector_store %arg18[%c0_39, %c0_40], %37 {strides = array<i32>} : memref<8x256xf32, #tpu.memory_space<vmem>>, vector<8x256xf32>,
    %c0_41 = arith.constant 0 : index
    %c0_42 = arith.constant 0 : index
    %39 = vector.load %arg18[%c0_41, %c0_42] : memref<8x256xf32, #tpu.memory_space<vmem>>, vector<8x256xf32>
    %c2 = arith.constant 2 : index
    %c0_43 = arith.constant 0 : index
    %c0_44 = arith.constant 0 : index
    %40 = vector.load %arg17[%c2, %c0_43, %c0_44] : memref<10x8x1024xf32, #tpu.memory_space<vmem>>, vector<1x8x1024xf32>
    %41 = vector.shape_cast %40 : vector<1x8x1024xf32> to vector<8x1024xf32>
    %c2_45 = arith.constant 2 : index
    %c0_46 = arith.constant 0 : index
    %c0_47 = arith.constant 0 : index
    %42 = vector.load %arg8[%c2_45, %c0_46, %c0_47] : memref<10x1024x256xf32, #tpu.memory_space<vmem>>, vector<1x1024x256xf32>
    %43 = vector.shape_cast %42 : vector<1x1024x256xf32> to vector<1024x256xf32>
    %cst_48 = arith.constant dense<0.000000e+00> : vector<8x256xf32>
    %44 = tpu.matmul %41, %43, %cst_48 {dimension_numbers = #tpu.dot_dimension_numbers<[1], [0], [0], [1], [0, 0, 1, 1], [], []>} : vector<8x1024xf32>, vector<1024x256xf32>, vector<8x256xf32> -> vector<8x256xf32>
    %45 = arith.addf %39, %44 : vector<8x256xf32>
    %c0_49 = arith.constant 0 : index
    %c0_50 = arith.constant 0 : index
    %46 = vector.load %arg18[%c0_49, %c0_50] : memref<8x256xf32, #tpu.memory_space<vmem>>, vector<8x256xf32>
    tpu.vector_store %arg18[%c0_49, %c0_50], %45 {strides = array<i32>} : memref<8x256xf32, #tpu.memory_space<vmem>>, vector<8x256xf32>,
    %c0_51 = arith.constant 0 : index
    %c0_52 = arith.constant 0 : index
    %47 = vector.load %arg18[%c0_51, %c0_52] : memref<8x256xf32, #tpu.memory_space<vmem>>, vector<8x256xf32>
    %c3 = arith.constant 3 : index
    %c0_53 = arith.constant 0 : index
    %c0_54 = arith.constant 0 : index
    %48 = vector.load %arg17[%c3, %c0_53, %c0_54] : memref<10x8x1024xf32, #tpu.memory_space<vmem>>, vector<1x8x1024xf32>
    %49 = vector.shape_cast %48 : vector<1x8x1024xf32> to vector<8x1024xf32>
    %c3_55 = arith.constant 3 : index
    %c0_56 = arith.constant 0 : index
    %c0_57 = arith.constant 0 : index
    %50 = vector.load %arg8[%c3_55, %c0_56, %c0_57] : memref<10x1024x256xf32, #tpu.memory_space<vmem>>, vector<1x1024x256xf32>
    %51 = vector.shape_cast %50 : vector<1x1024x256xf32> to vector<1024x256xf32>
    %cst_58 = arith.constant dense<0.000000e+00> : vector<8x256xf32>
    %52 = tpu.matmul %49, %51, %cst_58 {dimension_numbers = #tpu.dot_dimension_numbers<[1], [0], [0], [1], [0, 0, 1, 1], [], []>} : vector<8x1024xf32>, vector<1024x256xf32>, vector<8x256xf32> -> vector<8x256xf32>
    %53 = arith.addf %47, %52 : vector<8x256xf32>
    %c0_59 = arith.constant 0 : index
    %c0_60 = arith.constant 0 : index
    %54 = vector.load %arg18[%c0_59, %c0_60] : memref<8x256xf32, #tpu.memory_space<vmem>>, vector<8x256xf32>
    tpu.vector_store %arg18[%c0_59, %c0_60], %53 {strides = array<i32>} : memref<8x256xf32, #tpu.memory_space<vmem>>, vector<8x256xf32>,
    %c0_61 = arith.constant 0 : index
    %c0_62 = arith.constant 0 : index
    %55 = vector.load %arg18[%c0_61, %c0_62] : memref<8x256xf32, #tpu.memory_space<vmem>>, vector<8x256xf32>
    %c4 = arith.constant 4 : index
    %c0_63 = arith.constant 0 : index
    %c0_64 = arith.constant 0 : index
    %56 = vector.load %arg17[%c4, %c0_63, %c0_64] : memref<10x8x1024xf32, #tpu.memory_space<vmem>>, vector<1x8x1024xf32>
    %57 = vector.shape_cast %56 : vector<1x8x1024xf32> to vector<8x1024xf32>
    %c4_65 = arith.constant 4 : index
    %c0_66 = arith.constant 0 : index
    %c0_67 = arith.constant 0 : index
    %58 = vector.load %arg8[%c4_65, %c0_66, %c0_67] : memref<10x1024x256xf32, #tpu.memory_space<vmem>>, vector<1x1024x256xf32>
    %59 = vector.shape_cast %58 : vector<1x1024x256xf32> to vector<1024x256xf32>
    %cst_68 = arith.constant dense<0.000000e+00> : vector<8x256xf32>
    %60 = tpu.matmul %57, %59, %cst_68 {dimension_numbers = #tpu.dot_dimension_numbers<[1], [0], [0], [1], [0, 0, 1, 1], [], []>} : vector<8x1024xf32>, vector<1024x256xf32>, vector<8x256xf32> -> vector<8x256xf32>
    %61 = arith.addf %55, %60 : vector<8x256xf32>
    %c0_69 = arith.constant 0 : index
    %c0_70 = arith.constant 0 : index
    %62 = vector.load %arg18[%c0_69, %c0_70] : memref<8x256xf32, #tpu.memory_space<vmem>>, vector<8x256xf32>
    tpu.vector_store %arg18[%c0_69, %c0_70], %61 {strides = array<i32>} : memref<8x256xf32, #tpu.memory_space<vmem>>, vector<8x256xf32>,
    %c0_71 = arith.constant 0 : index
    %c0_72 = arith.constant 0 : index
    %63 = vector.load %arg18[%c0_71, %c0_72] : memref<8x256xf32, #tpu.memory_space<vmem>>, vector<8x256xf32>
    %c5 = arith.constant 5 : index
    %c0_73 = arith.constant 0 : index
    %c0_74 = arith.constant 0 : index
    %64 = vector.load %arg17[%c5, %c0_73, %c0_74] : memref<10x8x1024xf32, #tpu.memory_space<vmem>>, vector<1x8x1024xf32>
    %65 = vector.shape_cast %64 : vector<1x8x1024xf32> to vector<8x1024xf32>
    %c5_75 = arith.constant 5 : index
    %c0_76 = arith.constant 0 : index
    %c0_77 = arith.constant 0 : index
    %66 = vector.load %arg8[%c5_75, %c0_76, %c0_77] : memref<10x1024x256xf32, #tpu.memory_space<vmem>>, vector<1x1024x256xf32>
    %67 = vector.shape_cast %66 : vector<1x1024x256xf32> to vector<1024x256xf32>
    %cst_78 = arith.constant dense<0.000000e+00> : vector<8x256xf32>
    %68 = tpu.matmul %65, %67, %cst_78 {dimension_numbers = #tpu.dot_dimension_numbers<[1], [0], [0], [1], [0, 0, 1, 1], [], []>} : vector<8x1024xf32>, vector<1024x256xf32>, vector<8x256xf32> -> vector<8x256xf32>
    %69 = arith.addf %63, %68 : vector<8x256xf32>
    %c0_79 = arith.constant 0 : index
    %c0_80 = arith.constant 0 : index
    %70 = vector.load %arg18[%c0_79, %c0_80] : memref<8x256xf32, #tpu.memory_space<vmem>>, vector<8x256xf32>
    tpu.vector_store %arg18[%c0_79, %c0_80], %69 {strides = array<i32>} : memref<8x256xf32, #tpu.memory_space<vmem>>, vector<8x256xf32>,
    %c0_81 = arith.constant 0 : index
    %c0_82 = arith.constant 0 : index
    %71 = vector.load %arg18[%c0_81, %c0_82] : memref<8x256xf32, #tpu.memory_space<vmem>>, vector<8x256xf32>
    %c6 = arith.constant 6 : index
    %c0_83 = arith.constant 0 : index
    %c0_84 = arith.constant 0 : index
    %72 = vector.load %arg17[%c6, %c0_83, %c0_84] : memref<10x8x1024xf32, #tpu.memory_space<vmem>>, vector<1x8x1024xf32>
    %73 = vector.shape_cast %72 : vector<1x8x1024xf32> to vector<8x1024xf32>
    %c6_85 = arith.constant 6 : index
    %c0_86 = arith.constant 0 : index
    %c0_87 = arith.constant 0 : index
    %74 = vector.load %arg8[%c6_85, %c0_86, %c0_87] : memref<10x1024x256xf32, #tpu.memory_space<vmem>>, vector<1x1024x256xf32>
    %75 = vector.shape_cast %74 : vector<1x1024x256xf32> to vector<1024x256xf32>
    %cst_88 = arith.constant dense<0.000000e+00> : vector<8x256xf32>
    %76 = tpu.matmul %73, %75, %cst_88 {dimension_numbers = #tpu.dot_dimension_numbers<[1], [0], [0], [1], [0, 0, 1, 1], [], []>} : vector<8x1024xf32>, vector<1024x256xf32>, vector<8x256xf32> -> vector<8x256xf32>
    %77 = arith.addf %71, %76 : vector<8x256xf32>
    %c0_89 = arith.constant 0 : index
    %c0_90 = arith.constant 0 : index
    %78 = vector.load %arg18[%c0_89, %c0_90] : memref<8x256xf32, #tpu.memory_space<vmem>>, vector<8x256xf32>
    tpu.vector_store %arg18[%c0_89, %c0_90], %77 {strides = array<i32>} : memref<8x256xf32, #tpu.memory_space<vmem>>, vector<8x256xf32>,
    %c0_91 = arith.constant 0 : index
    %c0_92 = arith.constant 0 : index
    %79 = vector.load %arg18[%c0_91, %c0_92] : memref<8x256xf32, #tpu.memory_space<vmem>>, vector<8x256xf32>
    %c7 = arith.constant 7 : index
    %c0_93 = arith.constant 0 : index
    %c0_94 = arith.constant 0 : index
    %80 = vector.load %arg17[%c7, %c0_93, %c0_94] : memref<10x8x1024xf32, #tpu.memory_space<vmem>>, vector<1x8x1024xf32>
    %81 = vector.shape_cast %80 : vector<1x8x1024xf32> to vector<8x1024xf32>
    %c7_95 = arith.constant 7 : index
    %c0_96 = arith.constant 0 : index
    %c0_97 = arith.constant 0 : index
    %82 = vector.load %arg8[%c7_95, %c0_96, %c0_97] : memref<10x1024x256xf32, #tpu.memory_space<vmem>>, vector<1x1024x256xf32>
    %83 = vector.shape_cast %82 : vector<1x1024x256xf32> to vector<1024x256xf32>
    %cst_98 = arith.constant dense<0.000000e+00> : vector<8x256xf32>
    %84 = tpu.matmul %81, %83, %cst_98 {dimension_numbers = #tpu.dot_dimension_numbers<[1], [0], [0], [1], [0, 0, 1, 1], [], []>} : vector<8x1024xf32>, vector<1024x256xf32>, vector<8x256xf32> -> vector<8x256xf32>
    %85 = arith.addf %79, %84 : vector<8x256xf32>
    %c0_99 = arith.constant 0 : index
    %c0_100 = arith.constant 0 : index
    %86 = vector.load %arg18[%c0_99, %c0_100] : memref<8x256xf32, #tpu.memory_space<vmem>>, vector<8x256xf32>
    tpu.vector_store %arg18[%c0_99, %c0_100], %85 {strides = array<i32>} : memref<8x256xf32, #tpu.memory_space<vmem>>, vector<8x256xf32>,
    %c0_101 = arith.constant 0 : index
    %c0_102 = arith.constant 0 : index
    %87 = vector.load %arg18[%c0_101, %c0_102] : memref<8x256xf32, #tpu.memory_space<vmem>>, vector<8x256xf32>
    %c8 = arith.constant 8 : index
    %c0_103 = arith.constant 0 : index
    %c0_104 = arith.constant 0 : index
    %88 = vector.load %arg17[%c8, %c0_103, %c0_104] : memref<10x8x1024xf32, #tpu.memory_space<vmem>>, vector<1x8x1024xf32>
    %89 = vector.shape_cast %88 : vector<1x8x1024xf32> to vector<8x1024xf32>
    %c8_105 = arith.constant 8 : index
    %c0_106 = arith.constant 0 : index
    %c0_107 = arith.constant 0 : index
    %90 = vector.load %arg8[%c8_105, %c0_106, %c0_107] : memref<10x1024x256xf32, #tpu.memory_space<vmem>>, vector<1x1024x256xf32>
    %91 = vector.shape_cast %90 : vector<1x1024x256xf32> to vector<1024x256xf32>
    %cst_108 = arith.constant dense<0.000000e+00> : vector<8x256xf32>
    %92 = tpu.matmul %89, %91, %cst_108 {dimension_numbers = #tpu.dot_dimension_numbers<[1], [0], [0], [1], [0, 0, 1, 1], [], []>} : vector<8x1024xf32>, vector<1024x256xf32>, vector<8x256xf32> -> vector<8x256xf32>
    %93 = arith.addf %87, %92 : vector<8x256xf32>
    %c0_109 = arith.constant 0 : index
    %c0_110 = arith.constant 0 : index
    %94 = vector.load %arg18[%c0_109, %c0_110] : memref<8x256xf32, #tpu.memory_space<vmem>>, vector<8x256xf32>
    tpu.vector_store %arg18[%c0_109, %c0_110], %93 {strides = array<i32>} : memref<8x256xf32, #tpu.memory_space<vmem>>, vector<8x256xf32>,
    %c0_111 = arith.constant 0 : index
    %c0_112 = arith.constant 0 : index
    %95 = vector.load %arg18[%c0_111, %c0_112] : memref<8x256xf32, #tpu.memory_space<vmem>>, vector<8x256xf32>
    %c9 = arith.constant 9 : index
    %c0_113 = arith.constant 0 : index
    %c0_114 = arith.constant 0 : index
    %96 = vector.load %arg17[%c9, %c0_113, %c0_114] : memref<10x8x1024xf32, #tpu.memory_space<vmem>>, vector<1x8x1024xf32>
    %97 = vector.shape_cast %96 : vector<1x8x1024xf32> to vector<8x1024xf32>
    %c9_115 = arith.constant 9 : index
    %c0_116 = arith.constant 0 : index
    %c0_117 = arith.constant 0 : index
    %98 = vector.load %arg8[%c9_115, %c0_116, %c0_117] : memref<10x1024x256xf32, #tpu.memory_space<vmem>>, vector<1x1024x256xf32>
    %99 = vector.shape_cast %98 : vector<1x1024x256xf32> to vector<1024x256xf32>
    %cst_118 = arith.constant dense<0.000000e+00> : vector<8x256xf32>
    %100 = tpu.matmul %97, %99, %cst_118 {dimension_numbers = #tpu.dot_dimension_numbers<[1], [0], [0], [1], [0, 0, 1, 1], [], []>} : vector<8x1024xf32>, vector<1024x256xf32>, vector<8x256xf32> -> vector<8x256xf32>
    %101 = arith.addf %95, %100 : vector<8x256xf32>
    %c0_119 = arith.constant 0 : index
    %c0_120 = arith.constant 0 : index
    %102 = vector.load %arg18[%c0_119, %c0_120] : memref<8x256xf32, #tpu.memory_space<vmem>>, vector<8x256xf32>
    tpu.vector_store %arg18[%c0_119, %c0_120], %101 {strides = array<i32>} : memref<8x256xf32, #tpu.memory_space<vmem>>, vector<8x256xf32>,
    %c0_121 = arith.constant 0 : index
    %c0_122 = arith.constant 0 : index
    %103 = vector.load %arg18[%c0_121, %c0_122] : memref<8x256xf32, #tpu.memory_space<vmem>>, vector<8x256xf32>
    %c0_123 = arith.constant 0 : index
    %c0_124 = arith.constant 0 : index
    %104 = vector.load %arg9[%c0_123, %c0_124] : memref<1x256xf32, #tpu.memory_space<vmem>>, vector<1x256xf32>
    %105 = vector.broadcast %104 : vector<1x256xf32> to vector<8x256xf32>
    %106 = arith.addf %103, %105 : vector<8x256xf32>
    %cst_125 = arith.constant 0.000000e+00 : f32
    %107 = vector.broadcast %cst_125 : f32 to vector<8x256xf32>
    %108 = arith.maximumf %106, %107 : vector<8x256xf32>
    %c0_126 = arith.constant 0 : index
    %c0_127 = arith.constant 0 : index
    %109 = vector.load %arg10[%c0_126, %c0_127] : memref<256x128xf32, #tpu.memory_space<vmem>>, vector<256x128xf32>
    %cst_128 = arith.constant dense<0.000000e+00> : vector<8x128xf32>
    %110 = tpu.matmul %108, %109, %cst_128 {dimension_numbers = #tpu.dot_dimension_numbers<[1], [0], [0], [1], [0, 0, 1, 1], [], []>} : vector<8x256xf32>, vector<256x128xf32>, vector<8x128xf32> -> vector<8x128xf32>
    %c0_129 = arith.constant 0 : index
    %c0_130 = arith.constant 0 : index
    %111 = vector.load %arg11[%c0_129, %c0_130] : memref<1x128xf32, #tpu.memory_space<vmem>>, vector<1x128xf32>
    %112 = vector.broadcast %111 : vector<1x128xf32> to vector<8x128xf32>
    %113 = arith.addf %110, %112 : vector<8x128xf32>
    %cst_131 = arith.constant 0.000000e+00 : f32
    %114 = vector.broadcast %cst_131 : f32 to vector<8x128xf32>
    %115 = arith.maximumf %113, %114 : vector<8x128xf32>
    %c0_132 = arith.constant 0 : index
    %c0_133 = arith.constant 0 : index
    %116 = vector.load %arg12[%c0_132, %c0_133] : memref<128x64xf32, #tpu.memory_space<vmem>>, vector<128x64xf32>
    %cst_134 = arith.constant dense<0.000000e+00> : vector<8x64xf32>
    %117 = tpu.matmul %115, %116, %cst_134 {dimension_numbers = #tpu.dot_dimension_numbers<[1], [0], [0], [1], [0, 0, 1, 1], [], []>} : vector<8x128xf32>, vector<128x64xf32>, vector<8x64xf32> -> vector<8x64xf32>
    %c0_135 = arith.constant 0 : index
    %c0_136 = arith.constant 0 : index
    %118 = vector.load %arg13[%c0_135, %c0_136] : memref<1x64xf32, #tpu.memory_space<vmem>>, vector<1x64xf32>
    %119 = vector.broadcast %118 : vector<1x64xf32> to vector<8x64xf32>
    %120 = arith.addf %117, %119 : vector<8x64xf32>
    %cst_137 = arith.constant 0.000000e+00 : f32
    %121 = vector.broadcast %cst_137 : f32 to vector<8x64xf32>
    %122 = arith.maximumf %120, %121 : vector<8x64xf32>
    %c0_138 = arith.constant 0 : index
    %c0_139 = arith.constant 0 : index
    %123 = vector.load %arg14[%c0_138, %c0_139] : memref<64x4xf32, #tpu.memory_space<vmem>>, vector<64x4xf32>
    %cst_140 = arith.constant dense<0.000000e+00> : vector<8x4xf32>
    %124 = tpu.matmul %122, %123, %cst_140 {dimension_numbers = #tpu.dot_dimension_numbers<[1], [0], [0], [1], [0, 0, 1, 1], [], []>} : vector<8x64xf32>, vector<64x4xf32>, vector<8x4xf32> -> vector<8x4xf32>
    %c0_141 = arith.constant 0 : index
    %c0_142 = arith.constant 0 : index
    %125 = vector.load %arg15[%c0_141, %c0_142] : memref<1x4xf32, #tpu.memory_space<vmem>>, vector<1x4xf32>
    %126 = vector.broadcast %125 : vector<1x4xf32> to vector<8x4xf32>
    %127 = arith.addf %124, %126 : vector<8x4xf32>
    %c0_143 = arith.constant 0 : index
    %c0_144 = arith.constant 0 : index
    %128 = vector.load %arg16[%c0_143, %c0_144] : memref<8x4xf32, #tpu.memory_space<vmem>>, vector<8x4xf32>
    tpu.vector_store %arg16[%c0_143, %c0_144], %127 {strides = array<i32>} : memref<8x4xf32, #tpu.memory_space<vmem>>, vector<8x4xf32>,
    return
  }
  func.func @transform_0(%arg0: i32) -> (i32, i32, i32) {
    %c0_i32 = arith.constant 0 : i32
    %c0_i32_0 = arith.constant 0 : i32
    %c0_i32_1 = arith.constant 0 : i32
    return %c0_i32, %arg0, %c0_i32_0 : i32, i32, i32
  }
  func.func @transform_1(%arg0: i32) -> (i32, i32) {
    %c0_i32 = arith.constant 0 : i32
    %c0_i32_0 = arith.constant 0 : i32
    %c0_i32_1 = arith.constant 0 : i32
    return %c0_i32, %c0_i32_0 : i32, i32
  }
  func.func @transform_2(%arg0: i32) -> (i32, i32) {
    %c0_i32 = arith.constant 0 : i32
    %c0_i32_0 = arith.constant 0 : i32
    %c0_i32_1 = arith.constant 0 : i32
    return %c0_i32, %c0_i32_0 : i32, i32
  }
  func.func @transform_3(%arg0: i32) -> (i32, i32) {
    %c0_i32 = arith.constant 0 : i32
    %c0_i32_0 = arith.constant 0 : i32
    %c0_i32_1 = arith.constant 0 : i32
    return %c0_i32, %c0_i32_0 : i32, i32
  }
  func.func @transform_4(%arg0: i32) -> (i32, i32) {
    %c0_i32 = arith.constant 0 : i32
    %c0_i32_0 = arith.constant 0 : i32
    %c0_i32_1 = arith.constant 0 : i32
    return %c0_i32, %c0_i32_0 : i32, i32
  }
  func.func @transform_5(%arg0: i32) -> (i32, i32) {
    %c0_i32 = arith.constant 0 : i32
    %c0_i32_0 = arith.constant 0 : i32
    %c0_i32_1 = arith.constant 0 : i32
    return %c0_i32, %c0_i32_0 : i32, i32
  }
  func.func @transform_6(%arg0: i32) -> (i32, i32) {
    %c0_i32 = arith.constant 0 : i32
    %c0_i32_0 = arith.constant 0 : i32
    %c0_i32_1 = arith.constant 0 : i32
    return %c0_i32, %c0_i32_0 : i32, i32
  }
  func.func @transform_7(%arg0: i32) -> (i32, i32, i32) {
    %c0_i32 = arith.constant 0 : i32
    %c0_i32_0 = arith.constant 0 : i32
    %c0_i32_1 = arith.constant 0 : i32
    %c0_i32_2 = arith.constant 0 : i32
    return %c0_i32, %c0_i32_0, %c0_i32_1 : i32, i32, i32
  }
  func.func @transform_8(%arg0: i32) -> (i32, i32) {
    %c0_i32 = arith.constant 0 : i32
    %c0_i32_0 = arith.constant 0 : i32
    %c0_i32_1 = arith.constant 0 : i32
    return %c0_i32, %c0_i32_0 : i32, i32
  }
  func.func @transform_9(%arg0: i32) -> (i32, i32) {
    %c0_i32 = arith.constant 0 : i32
    %c0_i32_0 = arith.constant 0 : i32
    %c0_i32_1 = arith.constant 0 : i32
    return %c0_i32, %c0_i32_0 : i32, i32
  }
  func.func @transform_10(%arg0: i32) -> (i32, i32) {
    %c0_i32 = arith.constant 0 : i32
    %c0_i32_0 = arith.constant 0 : i32
    %c0_i32_1 = arith.constant 0 : i32
    return %c0_i32, %c0_i32_0 : i32, i32
  }
  func.func @transform_11(%arg0: i32) -> (i32, i32) {
    %c0_i32 = arith.constant 0 : i32
    %c0_i32_0 = arith.constant 0 : i32
    %c0_i32_1 = arith.constant 0 : i32
    return %c0_i32, %c0_i32_0 : i32, i32
  }
  func.func @transform_12(%arg0: i32) -> (i32, i32) {
    %c0_i32 = arith.constant 0 : i32
    %c0_i32_0 = arith.constant 0 : i32
    %c0_i32_1 = arith.constant 0 : i32
    return %c0_i32, %c0_i32_0 : i32, i32
  }
  func.func @transform_13(%arg0: i32) -> (i32, i32) {
    %c0_i32 = arith.constant 0 : i32
    %c0_i32_0 = arith.constant 0 : i32
    %c0_i32_1 = arith.constant 0 : i32
    return %c0_i32, %c0_i32_0 : i32, i32
  }
  func.func @transform_14(%arg0: i32) -> (i32, i32) {
    %c0_i32 = arith.constant 0 : i32
    %c0_i32_0 = arith.constant 0 : i32
    %c0_i32_1 = arith.constant 0 : i32
    return %c0_i32, %c0_i32_0 : i32, i32
  }
  func.func @transform_15(%arg0: i32) -> (i32, i32) {
    %c0_i32 = arith.constant 0 : i32
    %c0_i32_0 = arith.constant 0 : i32
    return %arg0, %c0_i32 : i32, i32
  }
}

</mosaic_0001>

<llo_original>
// kernel: net_forward.1
$region0: #{net_forward.1}
  #allocation0 [shape = 'u32[]', space=smem, size = 0x4, offset = 0x4, fixed_abs, tag = 'smem constant byte address 0x4 - core index']
  #allocation1 [shape = 'u32[144,128]{1,0:T(1,128)}', space=vmem, size = 0x12000, scoped, tag = 'internal scratch']
  #allocation2 [shape = 'f32[10,8,1024]{2,1,0:T(8,128)}', space=vmem, size = 0x50000, scoped, tag = 'scratch operand']
  #allocation3 [shape = 'f32[8,256]{1,0:T(8,128)}', space=vmem, size = 0x2000, scoped, tag = 'scratch operand']
  %s0 = inlined_call_operand.vmem [shape: f32[10,8,18], index: 0, kind: input, shape index: {}]
  %s1 = inlined_call_operand.hbm [shape: f32[18,288], index: 1, kind: input, shape index: {}]
  %s2 = inlined_call_operand.hbm [shape: f32[1,288], index: 2, kind: input, shape index: {}]
  %s3 = inlined_call_operand.hbm [shape: f32[288,544], index: 3, kind: input, shape index: {}]
  %s4 = inlined_call_operand.hbm [shape: f32[1,544], index: 4, kind: input, shape index: {}]
  %s5 = inlined_call_operand.hbm [shape: f32[544,1024], index: 5, kind: input, shape index: {}]
  %s6 = inlined_call_operand.hbm [shape: f32[1,1024], index: 6, kind: input, shape index: {}]
  %s7 = inlined_call_operand.hbm [shape: f32[10,1024,256], index: 7, kind: input, shape index: {}]
  %s8 = inlined_call_operand.hbm [shape: f32[1,256], index: 8, kind: input, shape index: {}]
  %s9 = inlined_call_operand.hbm [shape: f32[256,128], index: 9, kind: input, shape index: {}]
  %s10 = inlined_call_operand.hbm [shape: f32[1,128], index: 10, kind: input, shape index: {}]
  %s11 = inlined_call_operand.vmem [shape: f32[128,64], index: 11, kind: input, shape index: {}]
  %s12 = inlined_call_operand.hbm [shape: f32[1,64], index: 12, kind: input, shape index: {}]
  %s13 = inlined_call_operand.vmem [shape: f32[64,4], index: 13, kind: input, shape index: {}]
  %s14 = inlined_call_operand.hbm [shape: f32[1,4], index: 14, kind: input, shape index: {}]
  %s15 = inlined_call_operand.vmem [shape: f32[8,4], index: 15, kind: output, shape index: {}]
  %s16 = sld [smem:[#allocation0]]
  $region118: #{net_forward.1} parent=0
    _
  %s18 = ssub.s32 1, %s16
  %s19 = scalar_select 0, %s18, %s16
  $region1: #{net_forward.1} parent=0
    #allocation4 [shape = 'u8[36864]{0}', space=vmem, size = 0x9000, scoped, tag = 'input window, operand 1, single buffered']
    #allocation5 [shape = 's32[1]{0}', space=sflag, size = 0x4, scoped, tag = 'scoped memory for net_forward.1']
    #allocation6 [shape = 'u8[1536]{0}', space=vmem, size = 0x800, scoped, tag = 'input window, operand 2, single buffered']
    #allocation7 [shape = 's32[1]{0}', space=sflag, size = 0x4, scoped, tag = 'scoped memory for net_forward.1']
    #allocation8 [shape = 'u8[737280]{0}', space=vmem, size = 0xb4000, scoped, tag = 'input window, operand 3, single buffered']
    #allocation9 [shape = 'u8[2560]{0}', space=vmem, size = 0xc00, scoped, tag = 'input window, operand 4, single buffered']
    #allocation10 [shape = 's32[1]{0}', space=sflag, size = 0x4, scoped, tag = 'scoped memory for net_forward.1']
    #allocation11 [shape = 'u8[2228224]{0}', space=vmem, size = 0x220000, scoped, tag = 'input window, operand 5, single buffered']
    #allocation12 [shape = 'u8[4096]{0}', space=vmem, size = 0x1000, scoped, tag = 'input window, operand 6, single buffered']
    #allocation13 [shape = 's32[1]{0}', space=sflag, size = 0x4, scoped, tag = 'scoped memory for net_forward.1']
    #allocation14 [shape = 'u8[10485760]{0}', space=vmem, size = 0xa00000, scoped, tag = 'input window, operand 7, single buffered']
    #allocation15 [shape = 'u8[1024]{0}', space=vmem, size = 0x400, scoped, tag = 'input window, operand 8, single buffered']
    #allocation16 [shape = 's32[1]{0}', space=sflag, size = 0x4, scoped, tag = 'scoped memory for net_forward.1']
    #allocation17 [shape = 'u8[131072]{0}', space=vmem, size = 0x20000, scoped, tag = 'input window, operand 9, single buffered']
    #allocation18 [shape = 'u8[512]{0}', space=vmem, size = 0x400, scoped, tag = 'input window, operand 10, single buffered']
    #allocation19 [shape = 's32[1]{0}', space=sflag, size = 0x4, scoped, tag = 'scoped memory for net_forward.1']
    #allocation20 [shape = 'u8[512]{0}', space=vmem, size = 0x400, scoped, tag = 'input window, operand 12, single buffered']
    #allocation21 [shape = 'u8[512]{0}', space=vmem, size = 0x400, scoped, tag = 'input window, operand 14, single buffered']
    #allocation22 [shape = 's32[1]{0}', space=sflag, size = 0x4, scoped, tag = 'scoped memory for net_forward.1']
    %20 = vsyncpa [#allocation5], 0
    %21 = vsyncpa [#allocation7], 0
    %22 = vsyncpa [#allocation10], 0
    %23 = vsyncpa [#allocation13], 0
    %24 = vsyncpa [#allocation16], 0
    %25 = vsyncpa [#allocation19], 0
    %26 = vsyncpa [#allocation22], 0
    // Predicated region
    $region2: #{net_forward.1} parent=1 // pred_check
      _
    $region3: #{net_forward.1} parent=1 // pred_check_branch
      %28 = sbr.rel (0) target = $region5
    $region4: #{net_forward.1} parent=1 // pred_region
      _
    $region5: #{net_forward.1} parent=1 // pred_fallthru
      _
    // Predicated region
    $region6: #{net_forward.1} parent=1 // pred_check
      _
    $region7: #{net_forward.1} parent=1 // pred_check_branch
      %30 = sbr.rel (0) target = $region9
    $region8: #{net_forward.1} parent=1 // pred_region
      %s32 = ssub.s32 1152, 1152
      %33 = vsyncadd [#allocation5], %s32
      %s34 = sshll.u32 [#allocation4], 4
      %s35 = int_to_ptr.vmem [resolvable:$true] %s34
      %40 = dma.hbm_to_vmem [thread:$0]  %s1, 1152, %s35, [#allocation5], 384, 384, 24
    $region9: #{net_forward.1} parent=1 // pred_fallthru
      _
    // Predicated region
    $region10: #{net_forward.1} parent=1 // pred_check
      _
    $region11: #{net_forward.1} parent=1 // pred_check_branch
      %42 = sbr.rel (0) target = $region13
    $region12: #{net_forward.1} parent=1 // pred_region
      %s44 = ssub.s32 48, 48
      %45 = vsyncadd [#allocation7], %s44
      %s47 = sshll.u32 [#allocation6], 4
      %s48 = int_to_ptr.vmem [resolvable:$true] %s47
      %50 = dma.hbm_to_vmem [thread:$0]  %s2, 48, %s48, [#allocation7]
    $region13: #{net_forward.1} parent=1 // pred_fallthru
      _
    // Predicated region
    $region14: #{net_forward.1} parent=1 // pred_check
      _
    $region15: #{net_forward.1} parent=1 // pred_check_branch
      %52 = sbr.rel (0) target = $region17
    $region16: #{net_forward.1} parent=1 // pred_region
      %s54 = ssub.s32 23040, 23040
      %55 = vsyncadd [#allocation7], %s54
      %s56 = sshll.u32 [#allocation8], 4
      %s57 = int_to_ptr.vmem [resolvable:$true] %s56
      %62 = dma.hbm_to_vmem [thread:$0]  %s3, 23040, %s57, [#allocation7], 640, 640, 40
    $region17: #{net_forward.1} parent=1 // pred_fallthru
      _
    // Predicated region
    $region18: #{net_forward.1} parent=1 // pred_check
      _
    $region19: #{net_forward.1} parent=1 // pred_check_branch
      %64 = sbr.rel (0) target = $region21
    $region20: #{net_forward.1} parent=1 // pred_region
      %s66 = ssub.s32 80, 80
      %67 = vsyncadd [#allocation10], %s66
      %s69 = sshll.u32 [#allocation9], 4
      %s70 = int_to_ptr.vmem [resolvable:$true] %s69
      %72 = dma.hbm_to_vmem [thread:$0]  %s4, 80, %s70, [#allocation10]
    $region21: #{net_forward.1} parent=1 // pred_fallthru
      _
    // Predicated region
    $region22: #{net_forward.1} parent=1 // pred_check
      _
    $region23: #{net_forward.1} parent=1 // pred_check_branch
      %74 = sbr.rel (0) target = $region25
    $region24: #{net_forward.1} parent=1 // pred_region
      %s76 = ssub.s32 69632, 69632
      %77 = vsyncadd [#allocation10], %s76
      %s78 = sshll.u32 [#allocation11], 4
      %s79 = int_to_ptr.vmem [resolvable:$true] %s78
      %84 = dma.hbm_to_vmem [thread:$0]  %s5, 69632, %s79, [#allocation10], 1024, 1024, 64
    $region25: #{net_forward.1} parent=1 // pred_fallthru
      _
    // Predicated region
    $region26: #{net_forward.1} parent=1 // pred_check
      _
    $region27: #{net_forward.1} parent=1 // pred_check_branch
      %86 = sbr.rel (0) target = $region29
    $region28: #{net_forward.1} parent=1 // pred_region
      %s88 = ssub.s32 128, 128
      %89 = vsyncadd [#allocation13], %s88
      %s91 = sshll.u32 [#allocation12], 4
      %s92 = int_to_ptr.vmem [resolvable:$true] %s91
      %94 = dma.hbm_to_vmem [thread:$0]  %s6, 128, %s92, [#allocation13]
    $region29: #{net_forward.1} parent=1 // pred_fallthru
      _
    // Predicated region
    $region30: #{net_forward.1} parent=1 // pred_check
      _
    $region31: #{net_forward.1} parent=1 // pred_check_branch
      %96 = sbr.rel (0) target = $region33
    $region32: #{net_forward.1} parent=1 // pred_region
      %s98 = ssub.s32 327680, 327680
      %99 = vsyncadd [#allocation13], %s98
      %s100 = sshll.u32 [#allocation14], 4
      %s101 = int_to_ptr.vmem [resolvable:$true] %s100
      %106 = dma.hbm_to_vmem [thread:$0]  %s7, 327680, %s101, [#allocation13], 256, 256, 16
    $region33: #{net_forward.1} parent=1 // pred_fallthru
      _
    // Predicated region
    $region34: #{net_forward.1} parent=1 // pred_check
      _
    $region35: #{net_forward.1} parent=1 // pred_check_branch
      %108 = sbr.rel (0) target = $region37
    $region36: #{net_forward.1} parent=1 // pred_region
      %s110 = ssub.s32 32, 32
      %111 = vsyncadd [#allocation16], %s110
      %s113 = sshll.u32 [#allocation15], 4
      %s114 = int_to_ptr.vmem [resolvable:$true] %s113
      %116 = dma.hbm_to_vmem [thread:$0]  %s8, 32, %s114, [#allocation16]
    $region37: #{net_forward.1} parent=1 // pred_fallthru
      _
    // Predicated region
    $region38: #{net_forward.1} parent=1 // pred_check
      _
    $region39: #{net_forward.1} parent=1 // pred_check_branch
      %118 = sbr.rel (0) target = $region41
    $region40: #{net_forward.1} parent=1 // pred_region
      %s120 = ssub.s32 4096, 4096
      %121 = vsyncadd [#allocation16], %s120
      %s122 = sshll.u32 [#allocation17], 4
      %s123 = int_to_ptr.vmem [resolvable:$true] %s122
      %128 = dma.hbm_to_vmem [thread:$0]  %s9, 4096, %s123, [#allocation16], 128, 128, 8
    $region41: #{net_forward.1} parent=1 // pred_fallthru
      _
    // Predicated region
    $region42: #{net_forward.1} parent=1 // pred_check
      _
    $region43: #{net_forward.1} parent=1 // pred_check_branch
      %130 = sbr.rel (0) target = $region45
    $region44: #{net_forward.1} parent=1 // pred_region
      %s132 = ssub.s32 16, 16
      %133 = vsyncadd [#allocation19], %s132
      %s135 = sshll.u32 [#allocation18], 4
      %s136 = int_to_ptr.vmem [resolvable:$true] %s135
      %138 = dma.hbm_to_vmem [thread:$0]  %s10, 16, %s136, [#allocation19]
    $region45: #{net_forward.1} parent=1 // pred_fallthru
      _
    // Predicated region
    $region46: #{net_forward.1} parent=1 // pred_check
      _
    $region47: #{net_forward.1} parent=1 // pred_check_branch
      %140 = sbr.rel (0) target = $region49
    $region48: #{net_forward.1} parent=1 // pred_region
      _
    $region49: #{net_forward.1} parent=1 // pred_fallthru
      _
    // Predicated region
    $region50: #{net_forward.1} parent=1 // pred_check
      _
    $region51: #{net_forward.1} parent=1 // pred_check_branch
      %142 = sbr.rel (0) target = $region53
    $region52: #{net_forward.1} parent=1 // pred_region
      %s144 = ssub.s32 16, 16
      %145 = vsyncadd [#allocation19], %s144
      %s147 = sshll.u32 [#allocation20], 4
      %s148 = int_to_ptr.vmem [resolvable:$true] %s147
      %150 = dma.hbm_to_vmem [thread:$0]  %s12, 16, %s148, [#allocation19]
    $region53: #{net_forward.1} parent=1 // pred_fallthru
      _
    // Predicated region
    $region54: #{net_forward.1} parent=1 // pred_check
      _
    $region55: #{net_forward.1} parent=1 // pred_check_branch
      %152 = sbr.rel (0) target = $region57
    $region56: #{net_forward.1} parent=1 // pred_region
      _
    $region57: #{net_forward.1} parent=1 // pred_fallthru
      _
    // Predicated region
    $region58: #{net_forward.1} parent=1 // pred_check
      _
    $region59: #{net_forward.1} parent=1 // pred_check_branch
      %154 = sbr.rel (0) target = $region61
    $region60: #{net_forward.1} parent=1 // pred_region
      %s156 = ssub.s32 16, 16
      %157 = vsyncadd [#allocation22], %s156
      %s159 = sshll.u32 [#allocation21], 4
      %s160 = int_to_ptr.vmem [resolvable:$true] %s159
      %162 = dma.hbm_to_vmem [thread:$0]  %s14, 16, %s160, [#allocation22]
    $region61: #{net_forward.1} parent=1 // pred_fallthru
      _
    // Predicated region
    $region62: #{net_forward.1} parent=1 // pred_check
      _
    $region63: #{net_forward.1} parent=1 // pred_check_branch
      %164 = sbr.rel (0) target = $region65
    $region64: #{net_forward.1} parent=1 // pred_region
      %165 = dma.done [#allocation5], 1152
    $region65: #{net_forward.1} parent=1 // pred_fallthru
      _
    // Predicated region
    $region66: #{net_forward.1} parent=1 // pred_check
      _
    $region67: #{net_forward.1} parent=1 // pred_check_branch
      %167 = sbr.rel (0) target = $region69
    $region68: #{net_forward.1} parent=1 // pred_region
      %168 = dma.done [#allocation7], 48
    $region69: #{net_forward.1} parent=1 // pred_fallthru
      _
    // Predicated region
    $region70: #{net_forward.1} parent=1 // pred_check
      _
    $region71: #{net_forward.1} parent=1 // pred_check_branch
      %170 = sbr.rel (0) target = $region73
    $region72: #{net_forward.1} parent=1 // pred_region
      %171 = dma.done [#allocation7], 23040
    $region73: #{net_forward.1} parent=1 // pred_fallthru
      _
    // Predicated region
    $region74: #{net_forward.1} parent=1 // pred_check
      _
    $region75: #{net_forward.1} parent=1 // pred_check_branch
      %173 = sbr.rel (0) target = $region77
    $region76: #{net_forward.1} parent=1 // pred_region
      %174 = dma.done [#allocation10], 80
    $region77: #{net_forward.1} parent=1 // pred_fallthru
      _
    // Predicated region
    $region78: #{net_forward.1} parent=1 // pred_check
      _
    $region79: #{net_forward.1} parent=1 // pred_check_branch
      %176 = sbr.rel (0) target = $region81
    $region80: #{net_forward.1} parent=1 // pred_region
      %177 = dma.done [#allocation10], 69632
    $region81: #{net_forward.1} parent=1 // pred_fallthru
      _
    // Predicated region
    $region82: #{net_forward.1} parent=1 // pred_check
      _
    $region83: #{net_forward.1} parent=1 // pred_check_branch
      %179 = sbr.rel (0) target = $region85
    $region84: #{net_forward.1} parent=1 // pred_region
      %180 = dma.done [#allocation13], 128
    $region85: #{net_forward.1} parent=1 // pred_fallthru
      _
    // Predicated region
    $region86: #{net_forward.1} parent=1 // pred_check
      _
    $region87: #{net_forward.1} parent=1 // pred_check_branch
      %182 = sbr.rel (0) target = $region89
    $region88: #{net_forward.1} parent=1 // pred_region
      %183 = dma.done [#allocation13], 327680
    $region89: #{net_forward.1} parent=1 // pred_fallthru
      _
    // Predicated region
    $region90: #{net_forward.1} parent=1 // pred_check
      _
    $region91: #{net_forward.1} parent=1 // pred_check_branch
      %185 = sbr.rel (0) target = $region93
    $region92: #{net_forward.1} parent=1 // pred_region
      %186 = dma.done [#allocation16], 32
    $region93: #{net_forward.1} parent=1 // pred_fallthru
      _
    // Predicated region
    $region94: #{net_forward.1} parent=1 // pred_check
      _
    $region95: #{net_forward.1} parent=1 // pred_check_branch
      %188 = sbr.rel (0) target = $region97
    $region96: #{net_forward.1} parent=1 // pred_region
      %189 = dma.done [#allocation16], 4096
    $region97: #{net_forward.1} parent=1 // pred_fallthru
      _
    // Predicated region
    $region98: #{net_forward.1} parent=1 // pred_check
      _
    $region99: #{net_forward.1} parent=1 // pred_check_branch
      %191 = sbr.rel (0) target = $region101
    $region100: #{net_forward.1} parent=1 // pred_region
      %192 = dma.done [#allocation19], 16
    $region101: #{net_forward.1} parent=1 // pred_fallthru
      _
    // Predicated region
    $region102: #{net_forward.1} parent=1 // pred_check
      _
    $region103: #{net_forward.1} parent=1 // pred_check_branch
      %194 = sbr.rel (0) target = $region105
    $region104: #{net_forward.1} parent=1 // pred_region
      %195 = dma.done [#allocation19], 16
    $region105: #{net_forward.1} parent=1 // pred_fallthru
      _
    // Predicated region
    $region106: #{net_forward.1} parent=1 // pred_check
      _
    $region107: #{net_forward.1} parent=1 // pred_check_branch
      %197 = sbr.rel (0) target = $region109
    $region108: #{net_forward.1} parent=1 // pred_region
      %198 = dma.done [#allocation22], 16
    $region109: #{net_forward.1} parent=1 // pred_fallthru
      _
    %v199 = vld [vmem:[%s0] sm:$0xff]
    %v200 = vld [vmem:[%s0 + $0x8] sm:$0xff]
    %v201 = vld [vmem:[%s0 + $0x10] sm:$0xff]
    %v202 = vld [vmem:[%s0 + $0x18] sm:$0xff]
    %v203 = vld [vmem:[%s0 + $0x20] sm:$0xff]
    %v204 = vld [vmem:[%s0 + $0x28] sm:$0xff]
    %v205 = vld [vmem:[%s0 + $0x30] sm:$0xff]
    %v206 = vld [vmem:[%s0 + $0x38] sm:$0xff]
    %v207 = vld [vmem:[%s0 + $0x40] sm:$0xff]
    %v208 = vld [vmem:[%s0 + $0x48] sm:$0xff]
    %v209 = vld [vmem:[#allocation4] sm:$0xff]
    %v210 = vld [vmem:[#allocation4 + $0x8] sm:$0xff]
    %v211 = vld [vmem:[#allocation4 + $0x10] sm:$0xff]
    %v212 = vld [vmem:[#allocation4 + $0x18] sm:$0xff]
    %v213 = vld [vmem:[#allocation4 + $0x20] sm:$0xff]
    %v214 = vld [vmem:[#allocation4 + $0x28] sm:$0xff]
    %v215 = vld [vmem:[#allocation4 + $0x30] sm:$0x3]
    %v216 = vld [vmem:[#allocation4 + $0x38] sm:$0x3]
    %v217 = vld [vmem:[#allocation4 + $0x40] sm:$0x3]
    %v218 = vld [vmem:[#allocation6] sm:$0x7]
    %v220 = vlaneseq
    %v221 = vshrl.u32 %v220, 7
    %v222 = vsub.s32 0, %v221
    %v223 = vrot.slane %v218, %v222
    %v224 = vlaneseq
    %v225 = vshrl.u32 %v224, 7
    %v226 = vsub.s32 1, %v225
    %v227 = vrot.slane %v218, %v226
    %v228 = vlaneseq
    %v229 = vshrl.u32 %v228, 7
    %v230 = vsub.s32 2, %v229
    %v231 = vrot.slane %v218, %v230
    %vm235 = vcmask 146432
    %v237 = vsel %vm235, %v199, 0
    %v240 = vsel %vm235, %v200, 0
    %v243 = vsel %vm235, %v201, 0
    %v246 = vsel %vm235, %v202, 0
    %v249 = vsel %vm235, %v203, 0
    %v252 = vsel %vm235, %v204, 0
    %v255 = vsel %vm235, %v205, 0
    %v258 = vsel %vm235, %v206, 0
    %v261 = vsel %vm235, %v207, 0
    %v264 = vsel %vm235, %v208, 0
    %vm266 = vcmask 1041408
    %v268 = vsel %vm266, %v215, 0
    %v271 = vsel %vm266, %v216, 0
    %v274 = vsel %vm266, %v217, 0
    %276 = vmatprep.subr.mxu0 %v210
    %277 = vmatpush1.msra.mxu0 %v209
    %278 = vmatprep.subr.mxu0 %v213
    %279 = vmatpush1.msra.mxu0 %v212
    %280 = vmatprep.subr.mxu0 %v271
    %281 = vmatpush1.msra.mxu0 %v268
    %282 = vmatprep.subr.mxu0 0.0
    %283 = vmatpush1.msra.mxu0 0.0
    %284 = vmatprep.subr.mxu0 0.0
    %285 = vmatpush1.msra.mxu0 0.0
    %286 = vmatprep.subr.mxu0 0.0
    %287 = vmatpush1.msra.mxu0 0.0
    %288 = vmatprep.subr.mxu0 0.0
    %289 = vmatpush1.msra.mxu0 0.0
    %290 = vmatprep.subr.mxu0 0.0
    %291 = vmatpush1.msra.mxu0 0.0
    %292 = vmatprep.subr.mxu0 0.0
    %293 = vmatpush1.msra.mxu0 0.0
    %294 = vmatprep.subr.mxu0 0.0
    %295 = vmatpush1.msra.mxu0 0.0
    %296 = vmatprep.subr.mxu0 0.0
    %297 = vmatpush1.msra.mxu0 0.0
    %298 = vmatprep.subr.mxu0 0.0
    %299 = vmatpush1.msra.mxu0 0.0
    %300 = vmatprep.subr.mxu0 0.0
    %301 = vmatpush1.msra.mxu0 0.0
    %302 = vmatprep.subr.mxu0 0.0
    %303 = vmatpush1.msra.mxu0 0.0
    %304 = vmatprep.subr.mxu0 0.0
    %305 = vmatpush1.msra.mxu0 0.0
    %306 = vmatprep.subr.mxu0 0.0
    %307 = vmatpush1.msra.mxu0 0.0
    %308 = vmatprep.subr.mxu0 0.0
    %309 = vmatpush1.msra.mxu0 0.0
    %310 = vmatprep.subr.mxu0 0.0
    %311 = vmatpush1.msra.mxu0 0.0
    %312 = vmatprep.subr.mxu0 0.0
    %313 = vmatpush1.msra.mxu0 0.0
    %314 = vmatprep.subr.mxu0 0.0
    %315 = vmatpush1.msra.mxu0 0.0
    %316 = vmatprep.subr.mxu0 0.0
    %317 = vmatpush1.msra.mxu0 0.0
    %318 = vmatprep.subr.mxu0 0.0
    %319 = vmatpush1.msra.mxu0 0.0
    %320 = vmatprep.subr.mxu0 0.0
    %321 = vmatpush1.msra.mxu0 0.0
    %322 = vmatprep.subr.mxu0 0.0
    %323 = vmatpush1.msra.mxu0 0.0
    %324 = vmatprep.subr.mxu0 0.0
    %325 = vmatpush1.msra.mxu0 0.0
    %326 = vmatprep.subr.mxu0 0.0
    %327 = vmatpush1.msra.mxu0 0.0
    %328 = vmatprep.subr.mxu0 0.0
    %329 = vmatpush1.msra.mxu0 0.0
    %330 = vmatprep.subr.mxu0 0.0
    %331 = vmatpush1.msra.mxu0 0.0
    %332 = vmatprep.subr.mxu0 0.0
    %333 = vmatpush1.msra.mxu0 0.0
    %334 = vmatprep.subr.mxu0 0.0
    %335 = vmatpush1.msra.mxu0 0.0
    %336 = vmatprep.subr.mxu0 0.0
    %337 = vmatpush1.msra.mxu0 0.0
    %338 = vmatprep.subr.mxu0 0.0
    %339 = vmatpush1.msra.mxu0 0.0
    %340 = vmatprep.mubr.f32.mxu0 0.0
    %341 = vmatmul.mubr.f32.gmra.mrb[0].mxu0 %v237
    %v342 = vpop.f32.mrb[0].mxu0
    %v343 = vadd.f32 %v223, %v342
    %v344 = vpop.f32.mrb[0].mxu0
    %v345 = vadd.f32 %v227, %v344
    %346 = vmatprep.mubr.f32.mxu0 0.0
    %347 = vmatmul.mubr.f32.gmra.mrb[0].mxu0 %v240
    %v348 = vpop.f32.mrb[0].mxu0
    %v349 = vadd.f32 %v223, %v348
    %v350 = vpop.f32.mrb[0].mxu0
    %v351 = vadd.f32 %v227, %v350
    %352 = vmatprep.mubr.f32.mxu0 0.0
    %353 = vmatmul.mubr.f32.gmra.mrb[0].mxu0 %v243
    %v354 = vpop.f32.mrb[0].mxu0
    %v355 = vadd.f32 %v223, %v354
    %v356 = vpop.f32.mrb[0].mxu0
    %v357 = vadd.f32 %v227, %v356
    %358 = vmatprep.mubr.f32.mxu0 0.0
    %359 = vmatmul.mubr.f32.gmra.mrb[0].mxu0 %v246
    %v360 = vpop.f32.mrb[0].mxu0
    %v361 = vadd.f32 %v223, %v360
    %v362 = vpop.f32.mrb[0].mxu0
    %v363 = vadd.f32 %v227, %v362
    %364 = vmatprep.mubr.f32.mxu0 0.0
    %365 = vmatmul.mubr.f32.gmra.mrb[0].mxu0 %v249
    %v366 = vpop.f32.mrb[0].mxu0
    %v367 = vadd.f32 %v223, %v366
    %v368 = vpop.f32.mrb[0].mxu0
    %v369 = vadd.f32 %v227, %v368
    %370 = vmatprep.mubr.f32.mxu0 0.0
    %371 = vmatmul.mubr.f32.gmra.mrb[0].mxu0 %v252
    %v372 = vpop.f32.mrb[0].mxu0
    %v373 = vadd.f32 %v223, %v372
    %v374 = vpop.f32.mrb[0].mxu0
    %v375 = vadd.f32 %v227, %v374
    %376 = vmatprep.mubr.f32.mxu0 0.0
    %377 = vmatmul.mubr.f32.gmra.mrb[0].mxu0 %v255
    %v378 = vpop.f32.mrb[0].mxu0
    %v379 = vadd.f32 %v223, %v378
    %v380 = vpop.f32.mrb[0].mxu0
    %v381 = vadd.f32 %v227, %v380
    %382 = vmatprep.mubr.f32.mxu0 0.0
    %383 = vmatmul.mubr.f32.gmra.mrb[0].mxu0 %v258
    %v384 = vpop.f32.mrb[0].mxu0
    %v385 = vadd.f32 %v223, %v384
    %v386 = vpop.f32.mrb[0].mxu0
    %v387 = vadd.f32 %v227, %v386
    %388 = vmatprep.mubr.f32.mxu0 0.0
    %389 = vmatmul.mubr.f32.gmra.mrb[0].mxu0 %v261
    %v390 = vpop.f32.mrb[0].mxu0
    %v391 = vadd.f32 %v223, %v390
    %v392 = vpop.f32.mrb[0].mxu0
    %v393 = vadd.f32 %v227, %v392
    %394 = vmatprep.mubr.f32.mxu0 0.0
    %395 = vmatmul.mubr.f32.gmra.mrb[0].mxu0 %v264
    %v396 = vpop.f32.mrb[0].mxu0
    %v397 = vadd.f32 %v223, %v396
    %v398 = vpop.f32.mrb[0].mxu0
    %v399 = vadd.f32 %v227, %v398
    %400 = vdwg.mxu0
    %401 = vmatprep.subr.mxu0 0.0
    %402 = vmatpush1.msra.mxu0 %v211
    %403 = vmatprep.subr.mxu0 0.0
    %404 = vmatpush1.msra.mxu0 %v214
    %405 = vmatprep.subr.mxu0 0.0
    %406 = vmatpush1.msra.mxu0 %v274
    %407 = vmatprep.subr.mxu0 0.0
    %408 = vmatpush1.msra.mxu0 0.0
    %409 = vmatprep.subr.mxu0 0.0
    %410 = vmatpush1.msra.mxu0 0.0
    %411 = vmatprep.subr.mxu0 0.0
    %412 = vmatpush1.msra.mxu0 0.0
    %413 = vmatprep.subr.mxu0 0.0
    %414 = vmatpush1.msra.mxu0 0.0
    %415 = vmatprep.subr.mxu0 0.0
    %416 = vmatpush1.msra.mxu0 0.0
    %417 = vmatprep.subr.mxu0 0.0
    %418 = vmatpush1.msra.mxu0 0.0
    %419 = vmatprep.subr.mxu0 0.0
    %420 = vmatpush1.msra.mxu0 0.0
    %421 = vmatprep.subr.mxu0 0.0
    %422 = vmatpush1.msra.mxu0 0.0
    %423 = vmatprep.subr.mxu0 0.0
    %424 = vmatpush1.msra.mxu0 0.0
    %425 = vmatprep.subr.mxu0 0.0
    %426 = vmatpush1.msra.mxu0 0.0
    %427 = vmatprep.subr.mxu0 0.0
    %428 = vmatpush1.msra.mxu0 0.0
    %429 = vmatprep.subr.mxu0 0.0
    %430 = vmatpush1.msra.mxu0 0.0
    %431 = vmatprep.subr.mxu0 0.0
    %432 = vmatpush1.msra.mxu0 0.0
    %433 = vmatprep.subr.mxu0 0.0
    %434 = vmatpush1.msra.mxu0 0.0
    %435 = vmatprep.subr.mxu0 0.0
    %436 = vmatpush1.msra.mxu0 0.0
    %437 = vmatprep.subr.mxu0 0.0
    %438 = vmatpush1.msra.mxu0 0.0
    %439 = vmatprep.subr.mxu0 0.0
    %440 = vmatpush1.msra.mxu0 0.0
    %441 = vmatprep.subr.mxu0 0.0
    %442 = vmatpush1.msra.mxu0 0.0
    %443 = vmatprep.subr.mxu0 0.0
    %444 = vmatpush1.msra.mxu0 0.0
    %445 = vmatprep.subr.mxu0 0.0
    %446 = vmatpush1.msra.mxu0 0.0
    %447 = vmatprep.subr.mxu0 0.0
    %448 = vmatpush1.msra.mxu0 0.0
    %449 = vmatprep.subr.mxu0 0.0
    %450 = vmatpush1.msra.mxu0 0.0
    %451 = vmatprep.subr.mxu0 0.0
    %452 = vmatpush1.msra.mxu0 0.0
    %453 = vmatprep.subr.mxu0 0.0
    %454 = vmatpush1.msra.mxu0 0.0
    %455 = vmatprep.subr.mxu0 0.0
    %456 = vmatpush1.msra.mxu0 0.0
    %457 = vmatprep.subr.mxu0 0.0
    %458 = vmatpush1.msra.mxu0 0.0
    %459 = vmatprep.subr.mxu0 0.0
    %460 = vmatpush1.msra.mxu0 0.0
    %461 = vmatprep.subr.mxu0 0.0
    %462 = vmatpush1.msra.mxu0 0.0
    %463 = vmatprep.subr.mxu0 0.0
    %464 = vmatpush1.msra.mxu0 0.0
    %465 = vmatprep.mubr.f32.mxu0 0.0
    %466 = vmatmul.mubr.f32.gmra.mrb[0].mxu0 %v237
    %v467 = vpop.f32.mrb[0].mxu0
    %v468 = vadd.f32 %v231, %v467
    %v469 = vpop.f32.mrb[0].mxu0
    %470 = vmatprep.mubr.f32.mxu0 0.0
    %471 = vmatmul.mubr.f32.gmra.mrb[0].mxu0 %v240
    %v472 = vpop.f32.mrb[0].mxu0
    %v473 = vadd.f32 %v231, %v472
    %v474 = vpop.f32.mrb[0].mxu0
    %475 = vmatprep.mubr.f32.mxu0 0.0
    %476 = vmatmul.mubr.f32.gmra.mrb[0].mxu0 %v243
    %v477 = vpop.f32.mrb[0].mxu0
    %v478 = vadd.f32 %v231, %v477
    %v479 = vpop.f32.mrb[0].mxu0
    %480 = vmatprep.mubr.f32.mxu0 0.0
    %481 = vmatmul.mubr.f32.gmra.mrb[0].mxu0 %v246
    %v482 = vpop.f32.mrb[0].mxu0
    %v483 = vadd.f32 %v231, %v482
    %v484 = vpop.f32.mrb[0].mxu0
    %485 = vmatprep.mubr.f32.mxu0 0.0
    %486 = vmatmul.mubr.f32.gmra.mrb[0].mxu0 %v249
    %v487 = vpop.f32.mrb[0].mxu0
    %v488 = vadd.f32 %v231, %v487
    %v489 = vpop.f32.mrb[0].mxu0
    %490 = vmatprep.mubr.f32.mxu0 0.0
    %491 = vmatmul.mubr.f32.gmra.mrb[0].mxu0 %v252
    %v492 = vpop.f32.mrb[0].mxu0
    %v493 = vadd.f32 %v231, %v492
    %v494 = vpop.f32.mrb[0].mxu0
    %495 = vmatprep.mubr.f32.mxu0 0.0
    %496 = vmatmul.mubr.f32.gmra.mrb[0].mxu0 %v255
    %v497 = vpop.f32.mrb[0].mxu0
    %v498 = vadd.f32 %v231, %v497
    %v499 = vpop.f32.mrb[0].mxu0
    %500 = vmatprep.mubr.f32.mxu0 0.0
    %501 = vmatmul.mubr.f32.gmra.mrb[0].mxu0 %v258
    %v502 = vpop.f32.mrb[0].mxu0
    %v503 = vadd.f32 %v231, %v502
    %v504 = vpop.f32.mrb[0].mxu0
    %505 = vmatprep.mubr.f32.mxu0 0.0
    %506 = vmatmul.mubr.f32.gmra.mrb[0].mxu0 %v261
    %v507 = vpop.f32.mrb[0].mxu0
    %v508 = vadd.f32 %v231, %v507
    %v509 = vpop.f32.mrb[0].mxu0
    %510 = vmatprep.mubr.f32.mxu0 0.0
    %511 = vmatmul.mubr.f32.gmra.mrb[0].mxu0 %v264
    %v512 = vpop.f32.mrb[0].mxu0
    %v513 = vadd.f32 %v231, %v512
    %v514 = vpop.f32.mrb[0].mxu0
    %515 = vdwg.mxu0
    %v516 = vmax.f32 %v343, 0.0
    %v517 = vmax.f32 %v345, 0.0
    %v518 = vmax.f32 %v468, 0.0
    %v519 = vmax.f32 %v349, 0.0
    %v520 = vmax.f32 %v351, 0.0
    %v521 = vmax.f32 %v473, 0.0
    %v522 = vmax.f32 %v355, 0.0
    %v523 = vmax.f32 %v357, 0.0
    %v524 = vmax.f32 %v478, 0.0
    %v525 = vmax.f32 %v361, 0.0
    %v526 = vmax.f32 %v363, 0.0
    %v527 = vmax.f32 %v483, 0.0
    %v528 = vmax.f32 %v367, 0.0
    %v529 = vmax.f32 %v369, 0.0
    %v530 = vmax.f32 %v488, 0.0
    %v531 = vmax.f32 %v373, 0.0
    %v532 = vmax.f32 %v375, 0.0
    %v533 = vmax.f32 %v493, 0.0
    %v534 = vmax.f32 %v379, 0.0
    %v535 = vmax.f32 %v381, 0.0
    %v536 = vmax.f32 %v498, 0.0
    %v537 = vmax.f32 %v385, 0.0
    %v538 = vmax.f32 %v387, 0.0
    %v539 = vmax.f32 %v503, 0.0
    %v540 = vmax.f32 %v391, 0.0
    %v541 = vmax.f32 %v393, 0.0
    %v542 = vmax.f32 %v508, 0.0
    %v543 = vmax.f32 %v397, 0.0
    %v544 = vmax.f32 %v399, 0.0
    %v545 = vmax.f32 %v513, 0.0
    %v546 = vld [vmem:[#allocation8] sm:$0xff]
    %v547 = vld [vmem:[#allocation8 + $0x8] sm:$0xff]
    %v548 = vld [vmem:[#allocation8 + $0x10] sm:$0xff]
    %v549 = vld [vmem:[#allocation8 + $0x18] sm:$0xff]
    %v550 = vld [vmem:[#allocation8 + $0x20] sm:$0xff]
    %v551 = vld [vmem:[#allocation8 + $0x28] sm:$0xff]
    %v552 = vld [vmem:[#allocation8 + $0x30] sm:$0xff]
    %v553 = vld [vmem:[#allocation8 + $0x38] sm:$0xff]
    %v554 = vld [vmem:[#allocation8 + $0x40] sm:$0xff]
    %v555 = vld [vmem:[#allocation8 + $0x48] sm:$0xff]
    %v556 = vld [vmem:[#allocation8 + $0x50] sm:$0xff]
    %v557 = vld [vmem:[#allocation8 + $0x58] sm:$0xff]
    %v558 = vld [vmem:[#allocation8 + $0x60] sm:$0xff]
    %v559 = vld [vmem:[#allocation8 + $0x68] sm:$0xff]
    %v560 = vld [vmem:[#allocation8 + $0x70] sm:$0xff]
    %v561 = vld [vmem:[#allocation8 + $0x78] sm:$0xff]
    %v562 = vld [vmem:[#allocation8 + $0x80] sm:$0xff]
    %v563 = vld [vmem:[#allocation8 + $0x88] sm:$0xff]
    %v564 = vld [vmem:[#allocation8 + $0x90] sm:$0xff]
    %v565 = vld [vmem:[#allocation8 + $0x98] sm:$0xff]
    %v566 = vld [vmem:[#allocation8 + $0xa0] sm:$0xff]
    %v567 = vld [vmem:[#allocation8 + $0xa8] sm:$0xff]
    %v568 = vld [vmem:[#allocation8 + $0xb0] sm:$0xff]
    %v569 = vld [vmem:[#allocation8 + $0xb8] sm:$0xff]
    %v570 = vld [vmem:[#allocation8 + $0xc0] sm:$0xff]
    %v571 = vld [vmem:[#allocation8 + $0xc8] sm:$0xff]
    %v572 = vld [vmem:[#allocation8 + $0xd0] sm:$0xff]
    %v573 = vld [vmem:[#allocation8 + $0xd8] sm:$0xff]
    %v574 = vld [vmem:[#allocation8 + $0xe0] sm:$0xff]
    %v575 = vld [vmem:[#allocation8 + $0xe8] sm:$0xff]
    %v576 = vld [vmem:[#allocation8 + $0xf0] sm:$0xff]
    %v577 = vld [vmem:[#allocation8 + $0xf8] sm:$0xff]
    %v578 = vld [vmem:[#allocation8 + $0x100] sm:$0xff]
    %v579 = vld [vmem:[#allocation8 + $0x108] sm:$0xff]
    %v580 = vld [vmem:[#allocation8 + $0x110] sm:$0xff]
    %v581 = vld [vmem:[#allocation8 + $0x118] sm:$0xff]
    %v582 = vld [vmem:[#allocation8 + $0x120] sm:$0xff]
    %v583 = vld [vmem:[#allocation8 + $0x128] sm:$0xff]
    %v584 = vld [vmem:[#allocation8 + $0x130] sm:$0xff]
    %v585 = vld [vmem:[#allocation8 + $0x138] sm:$0xff]
    %v586 = vld [vmem:[#allocation8 + $0x140] sm:$0xff]
    %v587 = vld [vmem:[#allocation8 + $0x148] sm:$0xff]
    %v588 = vld [vmem:[#allocation8 + $0x150] sm:$0xff]
    %v589 = vld [vmem:[#allocation8 + $0x158] sm:$0xff]
    %v590 = vld [vmem:[#allocation8 + $0x160] sm:$0xff]
    %v591 = vld [vmem:[#allocation8 + $0x168] sm:$0xff]
    %v592 = vld [vmem:[#allocation8 + $0x170] sm:$0xff]
    %v593 = vld [vmem:[#allocation8 + $0x178] sm:$0xff]
    %v594 = vld [vmem:[#allocation8 + $0x180] sm:$0xff]
    %v595 = vld [vmem:[#allocation8 + $0x188] sm:$0xff]
    %v596 = vld [vmem:[#allocation8 + $0x190] sm:$0xff]
    %v597 = vld [vmem:[#allocation8 + $0x198] sm:$0xff]
    %v598 = vld [vmem:[#allocation8 + $0x1a0] sm:$0xff]
    %v599 = vld [vmem:[#allocation8 + $0x1a8] sm:$0xff]
    %v600 = vld [vmem:[#allocation8 + $0x1b0] sm:$0xff]
    %v601 = vld [vmem:[#allocation8 + $0x1b8] sm:$0xff]
    %v602 = vld [vmem:[#allocation8 + $0x1c0] sm:$0xff]
    %v603 = vld [vmem:[#allocation8 + $0x1c8] sm:$0xff]
    %v604 = vld [vmem:[#allocation8 + $0x1d0] sm:$0xff]
    %v605 = vld [vmem:[#allocation8 + $0x1d8] sm:$0xff]
    %v606 = vld [vmem:[#allocation8 + $0x1e0] sm:$0xff]
    %v607 = vld [vmem:[#allocation8 + $0x1e8] sm:$0xff]
    %v608 = vld [vmem:[#allocation8 + $0x1f0] sm:$0xff]
    %v609 = vld [vmem:[#allocation8 + $0x1f8] sm:$0xff]
    %v610 = vld [vmem:[#allocation8 + $0x200] sm:$0xff]
    %v611 = vld [vmem:[#allocation8 + $0x208] sm:$0xff]
    %v612 = vld [vmem:[#allocation8 + $0x210] sm:$0xff]
    %v613 = vld [vmem:[#allocation8 + $0x218] sm:$0xff]
    %v614 = vld [vmem:[#allocation8 + $0x220] sm:$0xff]
    %v615 = vld [vmem:[#allocation8 + $0x228] sm:$0xff]
    %v616 = vld [vmem:[#allocation8 + $0x230] sm:$0xff]
    %v617 = vld [vmem:[#allocation8 + $0x238] sm:$0xff]
    %v618 = vld [vmem:[#allocation8 + $0x240] sm:$0xff]
    %v619 = vld [vmem:[#allocation8 + $0x248] sm:$0xff]
    %v620 = vld [vmem:[#allocation8 + $0x250] sm:$0xff]
    %v621 = vld [vmem:[#allocation8 + $0x258] sm:$0xff]
    %v622 = vld [vmem:[#allocation8 + $0x260] sm:$0xff]
    %v623 = vld [vmem:[#allocation8 + $0x268] sm:$0xff]
    %v624 = vld [vmem:[#allocation8 + $0x270] sm:$0xff]
    %v625 = vld [vmem:[#allocation8 + $0x278] sm:$0xff]
    %v626 = vld [vmem:[#allocation8 + $0x280] sm:$0xff]
    %v627 = vld [vmem:[#allocation8 + $0x288] sm:$0xff]
    %v628 = vld [vmem:[#allocation8 + $0x290] sm:$0xff]
    %v629 = vld [vmem:[#allocation8 + $0x298] sm:$0xff]
    %v630 = vld [vmem:[#allocation8 + $0x2a0] sm:$0xff]
    %v631 = vld [vmem:[#allocation8 + $0x2a8] sm:$0xff]
    %v632 = vld [vmem:[#allocation8 + $0x2b0] sm:$0xff]
    %v633 = vld [vmem:[#allocation8 + $0x2b8] sm:$0xff]
    %v634 = vld [vmem:[#allocation8 + $0x2c0] sm:$0xff]
    %v635 = vld [vmem:[#allocation8 + $0x2c8] sm:$0xff]
    %v636 = vld [vmem:[#allocation8 + $0x2d0] sm:$0xff]
    %v637 = vld [vmem:[#allocation8 + $0x2d8] sm:$0xff]
    %v638 = vld [vmem:[#allocation8 + $0x2e0] sm:$0xff]
    %v639 = vld [vmem:[#allocation8 + $0x2e8] sm:$0xff]
    %v640 = vld [vmem:[#allocation8 + $0x2f0] sm:$0xff]
    %v641 = vld [vmem:[#allocation8 + $0x2f8] sm:$0xff]
    %v642 = vld [vmem:[#allocation8 + $0x300] sm:$0xff]
    %v643 = vld [vmem:[#allocation8 + $0x308] sm:$0xff]
    %v644 = vld [vmem:[#allocation8 + $0x310] sm:$0xff]
    %v645 = vld [vmem:[#allocation8 + $0x318] sm:$0xff]
    %v646 = vld [vmem:[#allocation8 + $0x320] sm:$0xff]
    %v647 = vld [vmem:[#allocation8 + $0x328] sm:$0xff]
    %v648 = vld [vmem:[#allocation8 + $0x330] sm:$0xff]
    %v649 = vld [vmem:[#allocation8 + $0x338] sm:$0xff]
    %v650 = vld [vmem:[#allocation8 + $0x340] sm:$0xff]
    %v651 = vld [vmem:[#allocation8 + $0x348] sm:$0xff]
    %v652 = vld [vmem:[#allocation8 + $0x350] sm:$0xff]
    %v653 = vld [vmem:[#allocation8 + $0x358] sm:$0xff]
    %v654 = vld [vmem:[#allocation8 + $0x360] sm:$0xff]
    %v655 = vld [vmem:[#allocation8 + $0x368] sm:$0xff]
    %v656 = vld [vmem:[#allocation8 + $0x370] sm:$0xff]
    %v657 = vld [vmem:[#allocation8 + $0x378] sm:$0xff]
    %v658 = vld [vmem:[#allocation8 + $0x380] sm:$0xff]
    %v659 = vld [vmem:[#allocation8 + $0x388] sm:$0xff]
    %v660 = vld [vmem:[#allocation8 + $0x390] sm:$0xff]
    %v661 = vld [vmem:[#allocation8 + $0x398] sm:$0xff]
    %v662 = vld [vmem:[#allocation8 + $0x3a0] sm:$0xff]
    %v663 = vld [vmem:[#allocation8 + $0x3a8] sm:$0xff]
    %v664 = vld [vmem:[#allocation8 + $0x3b0] sm:$0xff]
    %v665 = vld [vmem:[#allocation8 + $0x3b8] sm:$0xff]
    %v666 = vld [vmem:[#allocation8 + $0x3c0] sm:$0xff]
    %v667 = vld [vmem:[#allocation8 + $0x3c8] sm:$0xff]
    %v668 = vld [vmem:[#allocation8 + $0x3d0] sm:$0xff]
    %v669 = vld [vmem:[#allocation8 + $0x3d8] sm:$0xff]
    %v670 = vld [vmem:[#allocation8 + $0x3e0] sm:$0xff]
    %v671 = vld [vmem:[#allocation8 + $0x3e8] sm:$0xff]
    %v672 = vld [vmem:[#allocation8 + $0x3f0] sm:$0xff]
    %v673 = vld [vmem:[#allocation8 + $0x3f8] sm:$0xff]
    %v674 = vld [vmem:[#allocation8 + $0x400] sm:$0xff]
    %v675 = vld [vmem:[#allocation8 + $0x408] sm:$0xff]
    %v676 = vld [vmem:[#allocation8 + $0x410] sm:$0xff]
    %v677 = vld [vmem:[#allocation8 + $0x418] sm:$0xff]
    %v678 = vld [vmem:[#allocation8 + $0x420] sm:$0xff]
    %v679 = vld [vmem:[#allocation8 + $0x428] sm:$0xff]
    %v680 = vld [vmem:[#allocation8 + $0x430] sm:$0xff]
    %v681 = vld [vmem:[#allocation8 + $0x438] sm:$0xff]
    %v682 = vld [vmem:[#allocation8 + $0x440] sm:$0xff]
    %v683 = vld [vmem:[#allocation8 + $0x448] sm:$0xff]
    %v684 = vld [vmem:[#allocation8 + $0x450] sm:$0xff]
    %v685 = vld [vmem:[#allocation8 + $0x458] sm:$0xff]
    %v686 = vld [vmem:[#allocation8 + $0x460] sm:$0xff]
    %v687 = vld [vmem:[#allocation8 + $0x468] sm:$0xff]
    %v688 = vld [vmem:[#allocation8 + $0x470] sm:$0xff]
    %v689 = vld [vmem:[#allocation8 + $0x478] sm:$0xff]
    %v690 = vld [vmem:[#allocation8 + $0x480] sm:$0xff]
    %v691 = vld [vmem:[#allocation8 + $0x488] sm:$0xff]
    %v692 = vld [vmem:[#allocation8 + $0x490] sm:$0xff]
    %v693 = vld [vmem:[#allocation8 + $0x498] sm:$0xff]
    %v694 = vld [vmem:[#allocation8 + $0x4a0] sm:$0xff]
    %v695 = vld [vmem:[#allocation8 + $0x4a8] sm:$0xff]
    %v696 = vld [vmem:[#allocation8 + $0x4b0] sm:$0xff]
    %v697 = vld [vmem:[#allocation8 + $0x4b8] sm:$0xff]
    %v698 = vld [vmem:[#allocation8 + $0x4c0] sm:$0xff]
    %v699 = vld [vmem:[#allocation8 + $0x4c8] sm:$0xff]
    %v700 = vld [vmem:[#allocation8 + $0x4d0] sm:$0xff]
    %v701 = vld [vmem:[#allocation8 + $0x4d8] sm:$0xff]
    %v702 = vld [vmem:[#allocation8 + $0x4e0] sm:$0xff]
    %v703 = vld [vmem:[#allocation8 + $0x4e8] sm:$0xff]
    %v704 = vld [vmem:[#allocation8 + $0x4f0] sm:$0xff]
    %v705 = vld [vmem:[#allocation8 + $0x4f8] sm:$0xff]
    %v706 = vld [vmem:[#allocation8 + $0x500] sm:$0xff]
    %v707 = vld [vmem:[#allocation8 + $0x508] sm:$0xff]
    %v708 = vld [vmem:[#allocation8 + $0x510] sm:$0xff]
    %v709 = vld [vmem:[#allocation8 + $0x518] sm:$0xff]
    %v710 = vld [vmem:[#allocation8 + $0x520] sm:$0xff]
    %v711 = vld [vmem:[#allocation8 + $0x528] sm:$0xff]
    %v712 = vld [vmem:[#allocation8 + $0x530] sm:$0xff]
    %v713 = vld [vmem:[#allocation8 + $0x538] sm:$0xff]
    %v714 = vld [vmem:[#allocation8 + $0x540] sm:$0xff]
    %v715 = vld [vmem:[#allocation8 + $0x548] sm:$0xff]
    %v716 = vld [vmem:[#allocation8 + $0x550] sm:$0xff]
    %v717 = vld [vmem:[#allocation8 + $0x558] sm:$0xff]
    %v718 = vld [vmem:[#allocation8 + $0x560] sm:$0xff]
    %v719 = vld [vmem:[#allocation8 + $0x568] sm:$0xff]
    %v720 = vld [vmem:[#allocation8 + $0x570] sm:$0xff]
    %v721 = vld [vmem:[#allocation8 + $0x578] sm:$0xff]
    %v722 = vld [vmem:[#allocation8 + $0x580] sm:$0xff]
    %v723 = vld [vmem:[#allocation8 + $0x588] sm:$0xff]
    %v724 = vld [vmem:[#allocation8 + $0x590] sm:$0xff]
    %v725 = vld [vmem:[#allocation8 + $0x598] sm:$0xff]
    %v726 = vld [vmem:[#allocation9] sm:$0x1f]
    %v728 = vlaneseq
    %v729 = vshrl.u32 %v728, 7
    %v730 = vsub.s32 0, %v729
    %v731 = vrot.slane %v726, %v730
    %v732 = vlaneseq
    %v733 = vshrl.u32 %v732, 7
    %v734 = vsub.s32 1, %v733
    %v735 = vrot.slane %v726, %v734
    %v736 = vlaneseq
    %v737 = vshrl.u32 %v736, 7
    %v738 = vsub.s32 2, %v737
    %v739 = vrot.slane %v726, %v738
    %v740 = vlaneseq
    %v741 = vshrl.u32 %v740, 7
    %v742 = vsub.s32 3, %v741
    %v743 = vrot.slane %v726, %v742
    %v744 = vlaneseq
    %v745 = vshrl.u32 %v744, 7
    %v746 = vsub.s32 4, %v745
    %v747 = vrot.slane %v726, %v746
    %vm753 = vcmask 261120
    %v755 = vsel %vm753, %v518, 0
    %v758 = vsel %vm753, %v521, 0
    %v761 = vsel %vm753, %v524, 0
    %v764 = vsel %vm753, %v527, 0
    %v767 = vsel %vm753, %v530, 0
    %v770 = vsel %vm753, %v533, 0
    %v773 = vsel %vm753, %v536, 0
    %v776 = vsel %vm753, %v539, 0
    %v779 = vsel %vm753, %v542, 0
    %v782 = vsel %vm753, %v545, 0
    %784 = vmatprep.subr.mxu0 %v547
    %785 = vmatpush1.msra.mxu0 %v546
    %786 = vmatprep.subr.mxu0 %v552
    %787 = vmatpush1.msra.mxu0 %v551
    %788 = vmatprep.subr.mxu0 %v557
    %789 = vmatpush1.msra.mxu0 %v556
    %790 = vmatprep.subr.mxu0 %v562
    %791 = vmatpush1.msra.mxu0 %v561
    %792 = vmatprep.subr.mxu0 %v567
    %793 = vmatpush1.msra.mxu0 %v566
    %794 = vmatprep.subr.mxu0 %v572
    %795 = vmatpush1.msra.mxu0 %v571
    %796 = vmatprep.subr.mxu0 %v577
    %797 = vmatpush1.msra.mxu0 %v576
    %798 = vmatprep.subr.mxu0 %v582
    %799 = vmatpush1.msra.mxu0 %v581
    %800 = vmatprep.subr.mxu0 %v587
    %801 = vmatpush1.msra.mxu0 %v586
    %802 = vmatprep.subr.mxu0 %v592
    %803 = vmatpush1.msra.mxu0 %v591
    %804 = vmatprep.subr.mxu0 %v597
    %805 = vmatpush1.msra.mxu0 %v596
    %806 = vmatprep.subr.mxu0 %v602
    %807 = vmatpush1.msra.mxu0 %v601
    %808 = vmatprep.subr.mxu0 %v607
    %809 = vmatpush1.msra.mxu0 %v606
    %810 = vmatprep.subr.mxu0 %v612
    %811 = vmatpush1.msra.mxu0 %v611
    %812 = vmatprep.subr.mxu0 %v617
    %813 = vmatpush1.msra.mxu0 %v616
    %814 = vmatprep.subr.mxu0 %v622
    %815 = vmatpush1.msra.mxu0 %v621
    %816 = vmatprep.subr.mxu0 %v627
    %817 = vmatpush1.msra.mxu0 %v626
    %818 = vmatprep.subr.mxu0 %v632
    %819 = vmatpush1.msra.mxu0 %v631
    %820 = vmatprep.subr.mxu0 %v637
    %821 = vmatpush1.msra.mxu0 %v636
    %822 = vmatprep.subr.mxu0 %v642
    %823 = vmatpush1.msra.mxu0 %v641
    %824 = vmatprep.subr.mxu0 %v647
    %825 = vmatpush1.msra.mxu0 %v646
    %826 = vmatprep.subr.mxu0 %v652
    %827 = vmatpush1.msra.mxu0 %v651
    %828 = vmatprep.subr.mxu0 %v657
    %829 = vmatpush1.msra.mxu0 %v656
    %830 = vmatprep.subr.mxu0 %v662
    %831 = vmatpush1.msra.mxu0 %v661
    %832 = vmatprep.subr.mxu0 %v667
    %833 = vmatpush1.msra.mxu0 %v666
    %834 = vmatprep.subr.mxu0 %v672
    %835 = vmatpush1.msra.mxu0 %v671
    %836 = vmatprep.subr.mxu0 %v677
    %837 = vmatpush1.msra.mxu0 %v676
    %838 = vmatprep.subr.mxu0 %v682
    %839 = vmatpush1.msra.mxu0 %v681
    %840 = vmatprep.subr.mxu0 %v687
    %841 = vmatpush1.msra.mxu0 %v686
    %842 = vmatprep.subr.mxu0 %v692
    %843 = vmatpush1.msra.mxu0 %v691
    %844 = vmatprep.subr.mxu0 %v697
    %845 = vmatpush1.msra.mxu0 %v696
    %846 = vmatprep.subr.mxu0 %v702
    %847 = vmatpush1.msra.mxu0 %v701
    %848 = vmatprep.mubr.f32.mxu0 %v517
    %849 = vmatmul.mubr.f32.gmra.mrb[0].mxu0 %v516
    %v850 = vpop.f32.mrb[0].mxu0
    %v851 = vadd.f32 %v731, %v850
    %v852 = vpop.f32.mrb[0].mxu0
    %v853 = vadd.f32 %v735, %v852
    %854 = vmatprep.mubr.f32.mxu0 %v520
    %855 = vmatmul.mubr.f32.gmra.mrb[0].mxu0 %v519
    %v856 = vpop.f32.mrb[0].mxu0
    %v857 = vadd.f32 %v731, %v856
    %v858 = vpop.f32.mrb[0].mxu0
    %v859 = vadd.f32 %v735, %v858
    %860 = vmatprep.mubr.f32.mxu0 %v523
    %861 = vmatmul.mubr.f32.gmra.mrb[0].mxu0 %v522
    %v862 = vpop.f32.mrb[0].mxu0
    %v863 = vadd.f32 %v731, %v862
    %v864 = vpop.f32.mrb[0].mxu0
    %v865 = vadd.f32 %v735, %v864
    %866 = vmatprep.mubr.f32.mxu0 %v526
    %867 = vmatmul.mubr.f32.gmra.mrb[0].mxu0 %v525
    %v868 = vpop.f32.mrb[0].mxu0
    %v869 = vadd.f32 %v731, %v868
    %v870 = vpop.f32.mrb[0].mxu0
    %v871 = vadd.f32 %v735, %v870
    %872 = vmatprep.mubr.f32.mxu0 %v529
    %873 = vmatmul.mubr.f32.gmra.mrb[0].mxu0 %v528
    %v874 = vpop.f32.mrb[0].mxu0
    %v875 = vadd.f32 %v731, %v874
    %v876 = vpop.f32.mrb[0].mxu0
    %v877 = vadd.f32 %v735, %v876
    %878 = vmatprep.mubr.f32.mxu0 %v532
    %879 = vmatmul.mubr.f32.gmra.mrb[0].mxu0 %v531
    %v880 = vpop.f32.mrb[0].mxu0
    %v881 = vadd.f32 %v731, %v880
    %v882 = vpop.f32.mrb[0].mxu0
    %v883 = vadd.f32 %v735, %v882
    %884 = vmatprep.mubr.f32.mxu0 %v535
    %885 = vmatmul.mubr.f32.gmra.mrb[0].mxu0 %v534
    %v886 = vpop.f32.mrb[0].mxu0
    %v887 = vadd.f32 %v731, %v886
    %v888 = vpop.f32.mrb[0].mxu0
    %v889 = vadd.f32 %v735, %v888
    %890 = vmatprep.mubr.f32.mxu0 %v538
    %891 = vmatmul.mubr.f32.gmra.mrb[0].mxu0 %v537
    %v892 = vpop.f32.mrb[0].mxu0
    %v893 = vadd.f32 %v731, %v892
    %v894 = vpop.f32.mrb[0].mxu0
    %v895 = vadd.f32 %v735, %v894
    %896 = vmatprep.mubr.f32.mxu0 %v541
    %897 = vmatmul.mubr.f32.gmra.mrb[0].mxu0 %v540
    %v898 = vpop.f32.mrb[0].mxu0
    %v899 = vadd.f32 %v731, %v898
    %v900 = vpop.f32.mrb[0].mxu0
    %v901 = vadd.f32 %v735, %v900
    %902 = vmatprep.mubr.f32.mxu0 %v544
    %903 = vmatmul.mubr.f32.gmra.mrb[0].mxu0 %v543
    %v904 = vpop.f32.mrb[0].mxu0
    %v905 = vadd.f32 %v731, %v904
    %v906 = vpop.f32.mrb[0].mxu0
    %v907 = vadd.f32 %v735, %v906
    %908 = vdwg.mxu0
    %909 = vmatprep.subr.mxu0 %v707
    %910 = vmatpush1.msra.mxu0 %v706
    %911 = vmatprep.subr.mxu0 %v712
    %912 = vmatpush1.msra.mxu0 %v711
    %913 = vmatprep.subr.mxu0 %v717
    %914 = vmatpush1.msra.mxu0 %v716
    %915 = vmatprep.subr.mxu0 %v722
    %916 = vmatpush1.msra.mxu0 %v721
    %917 = vmatprep.subr.mxu0 0.0
    %918 = vmatpush1.msra.mxu0 0.0
    %919 = vmatprep.subr.mxu0 0.0
    %920 = vmatpush1.msra.mxu0 0.0
    %921 = vmatprep.subr.mxu0 0.0
    %922 = vmatpush1.msra.mxu0 0.0
    %923 = vmatprep.subr.mxu0 0.0
    %924 = vmatpush1.msra.mxu0 0.0
    %925 = vmatprep.subr.mxu0 0.0
    %926 = vmatpush1.msra.mxu0 0.0
    %927 = vmatprep.subr.mxu0 0.0
    %928 = vmatpush1.msra.mxu0 0.0
    %929 = vmatprep.subr.mxu0 0.0
    %930 = vmatpush1.msra.mxu0 0.0
    %931 = vmatprep.subr.mxu0 0.0
    %932 = vmatpush1.msra.mxu0 0.0
    %933 = vmatprep.subr.mxu0 0.0
    %934 = vmatpush1.msra.mxu0 0.0
    %935 = vmatprep.subr.mxu0 0.0
    %936 = vmatpush1.msra.mxu0 0.0
    %937 = vmatprep.subr.mxu0 0.0
    %938 = vmatpush1.msra.mxu0 0.0
    %939 = vmatprep.subr.mxu0 0.0
    %940 = vmatpush1.msra.mxu0 0.0
    %941 = vmatprep.subr.mxu0 0.0
    %942 = vmatpush1.msra.mxu0 0.0
    %943 = vmatprep.subr.mxu0 0.0
    %944 = vmatpush1.msra.mxu0 0.0
    %945 = vmatprep.subr.mxu0 0.0
    %946 = vmatpush1.msra.mxu0 0.0
    %947 = vmatprep.subr.mxu0 0.0
    %948 = vmatpush1.msra.mxu0 0.0
    %949 = vmatprep.subr.mxu0 0.0
    %950 = vmatpush1.msra.mxu0 0.0
    %951 = vmatprep.subr.mxu0 0.0
    %952 = vmatpush1.msra.mxu0 0.0
    %953 = vmatprep.subr.mxu0 0.0
    %954 = vmatpush1.msra.mxu0 0.0
    %955 = vmatprep.subr.mxu0 0.0
    %956 = vmatpush1.msra.mxu0 0.0
    %957 = vmatprep.subr.mxu0 0.0
    %958 = vmatpush1.msra.mxu0 0.0
    %959 = vmatprep.subr.mxu0 0.0
    %960 = vmatpush1.msra.mxu0 0.0
    %961 = vmatprep.subr.mxu0 0.0
    %962 = vmatpush1.msra.mxu0 0.0
    %963 = vmatprep.subr.mxu0 0.0
    %964 = vmatpush1.msra.mxu0 0.0
    %965 = vmatprep.subr.mxu0 0.0
    %966 = vmatpush1.msra.mxu0 0.0
    %967 = vmatprep.subr.mxu0 0.0
    %968 = vmatpush1.msra.mxu0 0.0
    %969 = vmatprep.subr.mxu0 0.0
    %970 = vmatpush1.msra.mxu0 0.0
    %971 = vmatprep.subr.mxu0 0.0
    %972 = vmatpush1.msra.mxu0 0.0
    %973 = vmatprep.mubr.f32.mxu0 0.0
    %974 = vmatmul.mubr.f32.gmra.mrb[0].mxu0 %v755
    %v975 = vpop.f32.mrb[0].mxu0
    %v976 = vadd.f32 %v851, %v975
    %v977 = vpop.f32.mrb[0].mxu0
    %v978 = vadd.f32 %v853, %v977
    %979 = vmatprep.mubr.f32.mxu0 0.0
    %980 = vmatmul.mubr.f32.gmra.mrb[0].mxu0 %v758
    %v981 = vpop.f32.mrb[0].mxu0
    %v982 = vadd.f32 %v857, %v981
    %v983 = vpop.f32.mrb[0].mxu0
    %v984 = vadd.f32 %v859, %v983
    %985 = vmatprep.mubr.f32.mxu0 0.0
    %986 = vmatmul.mubr.f32.gmra.mrb[0].mxu0 %v761
    %v987 = vpop.f32.mrb[0].mxu0
    %v988 = vadd.f32 %v863, %v987
    %v989 = vpop.f32.mrb[0].mxu0
    %v990 = vadd.f32 %v865, %v989
    %991 = vmatprep.mubr.f32.mxu0 0.0
    %992 = vmatmul.mubr.f32.gmra.mrb[0].mxu0 %v764
    %v993 = vpop.f32.mrb[0].mxu0
    %v994 = vadd.f32 %v869, %v993
    %v995 = vpop.f32.mrb[0].mxu0
    %v996 = vadd.f32 %v871, %v995
    %997 = vmatprep.mubr.f32.mxu0 0.0
    %998 = vmatmul.mubr.f32.gmra.mrb[0].mxu0 %v767
    %v999 = vpop.f32.mrb[0].mxu0
    %v1000 = vadd.f32 %v875, %v999
    %v1001 = vpop.f32.mrb[0].mxu0
    %v1002 = vadd.f32 %v877, %v1001
    %1003 = vmatprep.mubr.f32.mxu0 0.0
    %1004 = vmatmul.mubr.f32.gmra.mrb[0].mxu0 %v770
    %v1005 = vpop.f32.mrb[0].mxu0
    %v1006 = vadd.f32 %v881, %v1005
    %v1007 = vpop.f32.mrb[0].mxu0
    %v1008 = vadd.f32 %v883, %v1007
    %1009 = vmatprep.mubr.f32.mxu0 0.0
    %1010 = vmatmul.mubr.f32.gmra.mrb[0].mxu0 %v773
    %v1011 = vpop.f32.mrb[0].mxu0
    %v1012 = vadd.f32 %v887, %v1011
    %v1013 = vpop.f32.mrb[0].mxu0
    %v1014 = vadd.f32 %v889, %v1013
    %1015 = vmatprep.mubr.f32.mxu0 0.0
    %1016 = vmatmul.mubr.f32.gmra.mrb[0].mxu0 %v776
    %v1017 = vpop.f32.mrb[0].mxu0
    %v1018 = vadd.f32 %v893, %v1017
    %v1019 = vpop.f32.mrb[0].mxu0
    %v1020 = vadd.f32 %v895, %v1019
    %1021 = vmatprep.mubr.f32.mxu0 0.0
    %1022 = vmatmul.mubr.f32.gmra.mrb[0].mxu0 %v779
    %v1023 = vpop.f32.mrb[0].mxu0
    %v1024 = vadd.f32 %v899, %v1023
    %v1025 = vpop.f32.mrb[0].mxu0
    %v1026 = vadd.f32 %v901, %v1025
    %1027 = vmatprep.mubr.f32.mxu0 0.0
    %1028 = vmatmul.mubr.f32.gmra.mrb[0].mxu0 %v782
    %v1029 = vpop.f32.mrb[0].mxu0
    %v1030 = vadd.f32 %v905, %v1029
    %v1031 = vpop.f32.mrb[0].mxu0
    %v1032 = vadd.f32 %v907, %v1031
    %1033 = vdwg.mxu0
    %1034 = vmatprep.subr.mxu0 %v549
    %1035 = vmatpush1.msra.mxu0 %v548
    %1036 = vmatprep.subr.mxu0 %v554
    %1037 = vmatpush1.msra.mxu0 %v553
    %1038 = vmatprep.subr.mxu0 %v559
    %1039 = vmatpush1.msra.mxu0 %v558
    %1040 = vmatprep.subr.mxu0 %v564
    %1041 = vmatpush1.msra.mxu0 %v563
    %1042 = vmatprep.subr.mxu0 %v569
    %1043 = vmatpush1.msra.mxu0 %v568
    %1044 = vmatprep.subr.mxu0 %v574
    %1045 = vmatpush1.msra.mxu0 %v573
    %1046 = vmatprep.subr.mxu0 %v579
    %1047 = vmatpush1.msra.mxu0 %v578
    %1048 = vmatprep.subr.mxu0 %v584
    %1049 = vmatpush1.msra.mxu0 %v583
    %1050 = vmatprep.subr.mxu0 %v589
    %1051 = vmatpush1.msra.mxu0 %v588
    %1052 = vmatprep.subr.mxu0 %v594
    %1053 = vmatpush1.msra.mxu0 %v593
    %1054 = vmatprep.subr.mxu0 %v599
    %1055 = vmatpush1.msra.mxu0 %v598
    %1056 = vmatprep.subr.mxu0 %v604
    %1057 = vmatpush1.msra.mxu0 %v603
    %1058 = vmatprep.subr.mxu0 %v609
    %1059 = vmatpush1.msra.mxu0 %v608
    %1060 = vmatprep.subr.mxu0 %v614
    %1061 = vmatpush1.msra.mxu0 %v613
    %1062 = vmatprep.subr.mxu0 %v619
    %1063 = vmatpush1.msra.mxu0 %v618
    %1064 = vmatprep.subr.mxu0 %v624
    %1065 = vmatpush1.msra.mxu0 %v623
    %1066 = vmatprep.subr.mxu0 %v629
    %1067 = vmatpush1.msra.mxu0 %v628
    %1068 = vmatprep.subr.mxu0 %v634
    %1069 = vmatpush1.msra.mxu0 %v633
    %1070 = vmatprep.subr.mxu0 %v639
    %1071 = vmatpush1.msra.mxu0 %v638
    %1072 = vmatprep.subr.mxu0 %v644
    %1073 = vmatpush1.msra.mxu0 %v643
    %1074 = vmatprep.subr.mxu0 %v649
    %1075 = vmatpush1.msra.mxu0 %v648
    %1076 = vmatprep.subr.mxu0 %v654
    %1077 = vmatpush1.msra.mxu0 %v653
    %1078 = vmatprep.subr.mxu0 %v659
    %1079 = vmatpush1.msra.mxu0 %v658
    %1080 = vmatprep.subr.mxu0 %v664
    %1081 = vmatpush1.msra.mxu0 %v663
    %1082 = vmatprep.subr.mxu0 %v669
    %1083 = vmatpush1.msra.mxu0 %v668
    %1084 = vmatprep.subr.mxu0 %v674
    %1085 = vmatpush1.msra.mxu0 %v673
    %1086 = vmatprep.subr.mxu0 %v679
    %1087 = vmatpush1.msra.mxu0 %v678
    %1088 = vmatprep.subr.mxu0 %v684
    %1089 = vmatpush1.msra.mxu0 %v683
    %1090 = vmatprep.subr.mxu0 %v689
    %1091 = vmatpush1.msra.mxu0 %v688
    %1092 = vmatprep.subr.mxu0 %v694
    %1093 = vmatpush1.msra.mxu0 %v693
    %1094 = vmatprep.subr.mxu0 %v699
    %1095 = vmatpush1.msra.mxu0 %v698
    %1096 = vmatprep.subr.mxu0 %v704
    %1097 = vmatpush1.msra.mxu0 %v703
    %1098 = vmatprep.mubr.f32.mxu0 %v517
    %1099 = vmatmul.mubr.f32.gmra.mrb[0].mxu0 %v516
    %v1100 = vpop.f32.mrb[0].mxu0
    %v1101 = vadd.f32 %v739, %v1100
    %v1102 = vpop.f32.mrb[0].mxu0
    %v1103 = vadd.f32 %v743, %v1102
    %1104 = vmatprep.mubr.f32.mxu0 %v520
    %1105 = vmatmul.mubr.f32.gmra.mrb[0].mxu0 %v519
    %v1106 = vpop.f32.mrb[0].mxu0
    %v1107 = vadd.f32 %v739, %v1106
    %v1108 = vpop.f32.mrb[0].mxu0
    %v1109 = vadd.f32 %v743, %v1108
    %1110 = vmatprep.mubr.f32.mxu0 %v523
    %1111 = vmatmul.mubr.f32.gmra.mrb[0].mxu0 %v522
    %v1112 = vpop.f32.mrb[0].mxu0
    %v1113 = vadd.f32 %v739, %v1112
    %v1114 = vpop.f32.mrb[0].mxu0
    %v1115 = vadd.f32 %v743, %v1114
    %1116 = vmatprep.mubr.f32.mxu0 %v526
    %1117 = vmatmul.mubr.f32.gmra.mrb[0].mxu0 %v525
    %v1118 = vpop.f32.mrb[0].mxu0
    %v1119 = vadd.f32 %v739, %v1118
    %v1120 = vpop.f32.mrb[0].mxu0
    %v1121 = vadd.f32 %v743, %v1120
    %1122 = vmatprep.mubr.f32.mxu0 %v529
    %1123 = vmatmul.mubr.f32.gmra.mrb[0].mxu0 %v528
    %v1124 = vpop.f32.mrb[0].mxu0
    %v1125 = vadd.f32 %v739, %v1124
    %v1126 = vpop.f32.mrb[0].mxu0
    %v1127 = vadd.f32 %v743, %v1126
    %1128 = vmatprep.mubr.f32.mxu0 %v532
    %1129 = vmatmul.mubr.f32.gmra.mrb[0].mxu0 %v531
    %v1130 = vpop.f32.mrb[0].mxu0
    %v1131 = vadd.f32 %v739, %v1130
    %v1132 = vpop.f32.mrb[0].mxu0
    %v1133 = vadd.f32 %v743, %v1132
    %1134 = vmatprep.mubr.f32.mxu0 %v535
    %1135 = vmatmul.mubr.f32.gmra.mrb[0].mxu0 %v534
    %v1136 = vpop.f32.mrb[0].mxu0
    %v1137 = vadd.f32 %v739, %v1136
    %v1138 = vpop.f32.mrb[0].mxu0
    %v1139 = vadd.f32 %v743, %v1138
    %1140 = vmatprep.mubr.f32.mxu0 %v538
    %1141 = vmatmul.mubr.f32.gmra.mrb[0].mxu0 %v537
    %v1142 = vpop.f32.mrb[0].mxu0
    %v1143 = vadd.f32 %v739, %v1142
    %v1144 = vpop.f32.mrb[0].mxu0
    %v1145 = vadd.f32 %v743, %v1144
    %1146 = vmatprep.mubr.f32.mxu0 %v541
    %1147 = vmatmul.mubr.f32.gmra.mrb[0].mxu0 %v540
    %v1148 = vpop.f32.mrb[0].mxu0
    %v1149 = vadd.f32 %v739, %v1148
    %v1150 = vpop.f32.mrb[0].mxu0
    %v1151 = vadd.f32 %v743, %v1150
    %1152 = vmatprep.mubr.f32.mxu0 %v544
    %1153 = vmatmul.mubr.f32.gmra.mrb[0].mxu0 %v543
    %v1154 = vpop.f32.mrb[0].mxu0
    %v1155 = vadd.f32 %v739, %v1154
    %v1156 = vpop.f32.mrb[0].mxu0
    %v1157 = vadd.f32 %v743, %v1156
    %1158 = vdwg.mxu0
    %1159 = vmatprep.subr.mxu0 %v709
    %1160 = vmatpush1.msra.mxu0 %v708
    %1161 = vmatprep.subr.mxu0 %v714
    %1162 = vmatpush1.msra.mxu0 %v713
    %1163 = vmatprep.subr.mxu0 %v719
    %1164 = vmatpush1.msra.mxu0 %v718
    %1165 = vmatprep.subr.mxu0 %v724
    %1166 = vmatpush1.msra.mxu0 %v723
    %1167 = vmatprep.subr.mxu0 0.0
    %1168 = vmatpush1.msra.mxu0 0.0
    %1169 = vmatprep.subr.mxu0 0.0
    %1170 = vmatpush1.msra.mxu0 0.0
    %1171 = vmatprep.subr.mxu0 0.0
    %1172 = vmatpush1.msra.mxu0 0.0
    %1173 = vmatprep.subr.mxu0 0.0
    %1174 = vmatpush1.msra.mxu0 0.0
    %1175 = vmatprep.subr.mxu0 0.0
    %1176 = vmatpush1.msra.mxu0 0.0
    %1177 = vmatprep.subr.mxu0 0.0
    %1178 = vmatpush1.msra.mxu0 0.0
    %1179 = vmatprep.subr.mxu0 0.0
    %1180 = vmatpush1.msra.mxu0 0.0
    %1181 = vmatprep.subr.mxu0 0.0
    %1182 = vmatpush1.msra.mxu0 0.0
    %1183 = vmatprep.subr.mxu0 0.0
    %1184 = vmatpush1.msra.mxu0 0.0
    %1185 = vmatprep.subr.mxu0 0.0
    %1186 = vmatpush1.msra.mxu0 0.0
    %1187 = vmatprep.subr.mxu0 0.0
    %1188 = vmatpush1.msra.mxu0 0.0
    %1189 = vmatprep.subr.mxu0 0.0
    %1190 = vmatpush1.msra.mxu0 0.0
    %1191 = vmatprep.subr.mxu0 0.0
    %1192 = vmatpush1.msra.mxu0 0.0
    %1193 = vmatprep.subr.mxu0 0.0
    %1194 = vmatpush1.msra.mxu0 0.0
    %1195 = vmatprep.subr.mxu0 0.0
    %1196 = vmatpush1.msra.mxu0 0.0
    %1197 = vmatprep.subr.mxu0 0.0
    %1198 = vmatpush1.msra.mxu0 0.0
    %1199 = vmatprep.subr.mxu0 0.0
    %1200 = vmatpush1.msra.mxu0 0.0
    %1201 = vmatprep.subr.mxu0 0.0
    %1202 = vmatpush1.msra.mxu0 0.0
    %1203 = vmatprep.subr.mxu0 0.0
    %1204 = vmatpush1.msra.mxu0 0.0
    %1205 = vmatprep.subr.mxu0 0.0
    %1206 = vmatpush1.msra.mxu0 0.0
    %1207 = vmatprep.subr.mxu0 0.0
    %1208 = vmatpush1.msra.mxu0 0.0
    %1209 = vmatprep.subr.mxu0 0.0
    %1210 = vmatpush1.msra.mxu0 0.0
    %1211 = vmatprep.subr.mxu0 0.0
    %1212 = vmatpush1.msra.mxu0 0.0
    %1213 = vmatprep.subr.mxu0 0.0
    %1214 = vmatpush1.msra.mxu0 0.0
    %1215 = vmatprep.subr.mxu0 0.0
    %1216 = vmatpush1.msra.mxu0 0.0
    %1217 = vmatprep.subr.mxu0 0.0
    %1218 = vmatpush1.msra.mxu0 0.0
    %1219 = vmatprep.subr.mxu0 0.0
    %1220 = vmatpush1.msra.mxu0 0.0
    %1221 = vmatprep.subr.mxu0 0.0
    %1222 = vmatpush1.msra.mxu0 0.0
    %1223 = vmatprep.mubr.f32.mxu0 0.0
    %1224 = vmatmul.mubr.f32.gmra.mrb[0].mxu0 %v755
    %v1225 = vpop.f32.mrb[0].mxu0
    %v1226 = vadd.f32 %v1101, %v1225
    %v1227 = vpop.f32.mrb[0].mxu0
    %v1228 = vadd.f32 %v1103, %v1227
    %1229 = vmatprep.mubr.f32.mxu0 0.0
    %1230 = vmatmul.mubr.f32.gmra.mrb[0].mxu0 %v758
    %v1231 = vpop.f32.mrb[0].mxu0
    %v1232 = vadd.f32 %v1107, %v1231
    %v1233 = vpop.f32.mrb[0].mxu0
    %v1234 = vadd.f32 %v1109, %v1233
    %1235 = vmatprep.mubr.f32.mxu0 0.0
    %1236 = vmatmul.mubr.f32.gmra.mrb[0].mxu0 %v761
    %v1237 = vpop.f32.mrb[0].mxu0
    %v1238 = vadd.f32 %v1113, %v1237
    %v1239 = vpop.f32.mrb[0].mxu0
    %v1240 = vadd.f32 %v1115, %v1239
    %1241 = vmatprep.mubr.f32.mxu0 0.0
    %1242 = vmatmul.mubr.f32.gmra.mrb[0].mxu0 %v764
    %v1243 = vpop.f32.mrb[0].mxu0
    %v1244 = vadd.f32 %v1119, %v1243
    %v1245 = vpop.f32.mrb[0].mxu0
    %v1246 = vadd.f32 %v1121, %v1245
    %1247 = vmatprep.mubr.f32.mxu0 0.0
    %1248 = vmatmul.mubr.f32.gmra.mrb[0].mxu0 %v767
    %v1249 = vpop.f32.mrb[0].mxu0
    %v1250 = vadd.f32 %v1125, %v1249
    %v1251 = vpop.f32.mrb[0].mxu0
    %v1252 = vadd.f32 %v1127, %v1251
    %1253 = vmatprep.mubr.f32.mxu0 0.0
    %1254 = vmatmul.mubr.f32.gmra.mrb[0].mxu0 %v770
    %v1255 = vpop.f32.mrb[0].mxu0
    %v1256 = vadd.f32 %v1131, %v1255
    %v1257 = vpop.f32.mrb[0].mxu0
    %v1258 = vadd.f32 %v1133, %v1257
    %1259 = vmatprep.mubr.f32.mxu0 0.0
    %1260 = vmatmul.mubr.f32.gmra.mrb[0].mxu0 %v773
    %v1261 = vpop.f32.mrb[0].mxu0
    %v1262 = vadd.f32 %v1137, %v1261
    %v1263 = vpop.f32.mrb[0].mxu0
    %v1264 = vadd.f32 %v1139, %v1263
    %1265 = vmatprep.mubr.f32.mxu0 0.0
    %1266 = vmatmul.mubr.f32.gmra.mrb[0].mxu0 %v776
    %v1267 = vpop.f32.mrb[0].mxu0
    %v1268 = vadd.f32 %v1143, %v1267
    %v1269 = vpop.f32.mrb[0].mxu0
    %v1270 = vadd.f32 %v1145, %v1269
    %1271 = vmatprep.mubr.f32.mxu0 0.0
    %1272 = vmatmul.mubr.f32.gmra.mrb[0].mxu0 %v779
    %v1273 = vpop.f32.mrb[0].mxu0
    %v1274 = vadd.f32 %v1149, %v1273
    %v1275 = vpop.f32.mrb[0].mxu0
    %v1276 = vadd.f32 %v1151, %v1275
    %1277 = vmatprep.mubr.f32.mxu0 0.0
    %1278 = vmatmul.mubr.f32.gmra.mrb[0].mxu0 %v782
    %v1279 = vpop.f32.mrb[0].mxu0
    %v1280 = vadd.f32 %v1155, %v1279
    %v1281 = vpop.f32.mrb[0].mxu0
    %v1282 = vadd.f32 %v1157, %v1281
    %1283 = vdwg.mxu0
    %1284 = vmatprep.subr.mxu0 0.0
    %1285 = vmatpush1.msra.mxu0 %v550
    %1286 = vmatprep.subr.mxu0 0.0
    %1287 = vmatpush1.msra.mxu0 %v555
    %1288 = vmatprep.subr.mxu0 0.0
    %1289 = vmatpush1.msra.mxu0 %v560
    %1290 = vmatprep.subr.mxu0 0.0
    %1291 = vmatpush1.msra.mxu0 %v565
    %1292 = vmatprep.subr.mxu0 0.0
    %1293 = vmatpush1.msra.mxu0 %v570
    %1294 = vmatprep.subr.mxu0 0.0
    %1295 = vmatpush1.msra.mxu0 %v575
    %1296 = vmatprep.subr.mxu0 0.0
    %1297 = vmatpush1.msra.mxu0 %v580
    %1298 = vmatprep.subr.mxu0 0.0
    %1299 = vmatpush1.msra.mxu0 %v585
    %1300 = vmatprep.subr.mxu0 0.0
    %1301 = vmatpush1.msra.mxu0 %v590
    %1302 = vmatprep.subr.mxu0 0.0
    %1303 = vmatpush1.msra.mxu0 %v595
    %1304 = vmatprep.subr.mxu0 0.0
    %1305 = vmatpush1.msra.mxu0 %v600
    %1306 = vmatprep.subr.mxu0 0.0
    %1307 = vmatpush1.msra.mxu0 %v605
    %1308 = vmatprep.subr.mxu0 0.0
    %1309 = vmatpush1.msra.mxu0 %v610
    %1310 = vmatprep.subr.mxu0 0.0
    %1311 = vmatpush1.msra.mxu0 %v615
    %1312 = vmatprep.subr.mxu0 0.0
    %1313 = vmatpush1.msra.mxu0 %v620
    %1314 = vmatprep.subr.mxu0 0.0
    %1315 = vmatpush1.msra.mxu0 %v625
    %1316 = vmatprep.subr.mxu0 0.0
    %1317 = vmatpush1.msra.mxu0 %v630
    %1318 = vmatprep.subr.mxu0 0.0
    %1319 = vmatpush1.msra.mxu0 %v635
    %1320 = vmatprep.subr.mxu0 0.0
    %1321 = vmatpush1.msra.mxu0 %v640
    %1322 = vmatprep.subr.mxu0 0.0
    %1323 = vmatpush1.msra.mxu0 %v645
    %1324 = vmatprep.subr.mxu0 0.0
    %1325 = vmatpush1.msra.mxu0 %v650
    %1326 = vmatprep.subr.mxu0 0.0
    %1327 = vmatpush1.msra.mxu0 %v655
    %1328 = vmatprep.subr.mxu0 0.0
    %1329 = vmatpush1.msra.mxu0 %v660
    %1330 = vmatprep.subr.mxu0 0.0
    %1331 = vmatpush1.msra.mxu0 %v665
    %1332 = vmatprep.subr.mxu0 0.0
    %1333 = vmatpush1.msra.mxu0 %v670
    %1334 = vmatprep.subr.mxu0 0.0
    %1335 = vmatpush1.msra.mxu0 %v675
    %1336 = vmatprep.subr.mxu0 0.0
    %1337 = vmatpush1.msra.mxu0 %v680
    %1338 = vmatprep.subr.mxu0 0.0
    %1339 = vmatpush1.msra.mxu0 %v685
    %1340 = vmatprep.subr.mxu0 0.0
    %1341 = vmatpush1.msra.mxu0 %v690
    %1342 = vmatprep.subr.mxu0 0.0
    %1343 = vmatpush1.msra.mxu0 %v695
    %1344 = vmatprep.subr.mxu0 0.0
    %1345 = vmatpush1.msra.mxu0 %v700
    %1346 = vmatprep.subr.mxu0 0.0
    %1347 = vmatpush1.msra.mxu0 %v705
    %1348 = vmatprep.mubr.f32.mxu0 %v517
    %1349 = vmatmul.mubr.f32.gmra.mrb[0].mxu0 %v516
    %v1350 = vpop.f32.mrb[0].mxu0
    %v1351 = vadd.f32 %v747, %v1350
    %v1352 = vpop.f32.mrb[0].mxu0
    %1353 = vmatprep.mubr.f32.mxu0 %v520
    %1354 = vmatmul.mubr.f32.gmra.mrb[0].mxu0 %v519
    %v1355 = vpop.f32.mrb[0].mxu0
    %v1356 = vadd.f32 %v747, %v1355
    %v1357 = vpop.f32.mrb[0].mxu0
    %1358 = vmatprep.mubr.f32.mxu0 %v523
    %1359 = vmatmul.mubr.f32.gmra.mrb[0].mxu0 %v522
    %v1360 = vpop.f32.mrb[0].mxu0
    %v1361 = vadd.f32 %v747, %v1360
    %v1362 = vpop.f32.mrb[0].mxu0
    %1363 = vmatprep.mubr.f32.mxu0 %v526
    %1364 = vmatmul.mubr.f32.gmra.mrb[0].mxu0 %v525
    %v1365 = vpop.f32.mrb[0].mxu0
    %v1366 = vadd.f32 %v747, %v1365
    %v1367 = vpop.f32.mrb[0].mxu0
    %1368 = vmatprep.mubr.f32.mxu0 %v529
    %1369 = vmatmul.mubr.f32.gmra.mrb[0].mxu0 %v528
    %v1370 = vpop.f32.mrb[0].mxu0
    %v1371 = vadd.f32 %v747, %v1370
    %v1372 = vpop.f32.mrb[0].mxu0
    %1373 = vmatprep.mubr.f32.mxu0 %v532
    %1374 = vmatmul.mubr.f32.gmra.mrb[0].mxu0 %v531
    %v1375 = vpop.f32.mrb[0].mxu0
    %v1376 = vadd.f32 %v747, %v1375
    %v1377 = vpop.f32.mrb[0].mxu0
    %1378 = vmatprep.mubr.f32.mxu0 %v535
    %1379 = vmatmul.mubr.f32.gmra.mrb[0].mxu0 %v534
    %v1380 = vpop.f32.mrb[0].mxu0
    %v1381 = vadd.f32 %v747, %v1380
    %v1382 = vpop.f32.mrb[0].mxu0
    %1383 = vmatprep.mubr.f32.mxu0 %v538
    %1384 = vmatmul.mubr.f32.gmra.mrb[0].mxu0 %v537
    %v1385 = vpop.f32.mrb[0].mxu0
    %v1386 = vadd.f32 %v747, %v1385
    %v1387 = vpop.f32.mrb[0].mxu0
    %1388 = vmatprep.mubr.f32.mxu0 %v541
    %1389 = vmatmul.mubr.f32.gmra.mrb[0].mxu0 %v540
    %v1390 = vpop.f32.mrb[0].mxu0
    %v1391 = vadd.f32 %v747, %v1390
    %v1392 = vpop.f32.mrb[0].mxu0
    %1393 = vmatprep.mubr.f32.mxu0 %v544
    %1394 = vmatmul.mubr.f32.gmra.mrb[0].mxu0 %v543
    %v1395 = vpop.f32.mrb[0].mxu0
    %v1396 = vadd.f32 %v747, %v1395
    %v1397 = vpop.f32.mrb[0].mxu0
    %1398 = vdwg.mxu0
    %1399 = vmatprep.subr.mxu0 0.0
    %1400 = vmatpush1.msra.mxu0 %v710
    %1401 = vmatprep.subr.mxu0 0.0
    %1402 = vmatpush1.msra.mxu0 %v715
    %1403 = vmatprep.subr.mxu0 0.0
    %1404 = vmatpush1.msra.mxu0 %v720
    %1405 = vmatprep.subr.mxu0 0.0
    %1406 = vmatpush1.msra.mxu0 %v725
    %1407 = vmatprep.subr.mxu0 0.0
    %1408 = vmatpush1.msra.mxu0 0.0
    %1409 = vmatprep.subr.mxu0 0.0
    %1410 = vmatpush1.msra.mxu0 0.0
    %1411 = vmatprep.subr.mxu0 0.0
    %1412 = vmatpush1.msra.mxu0 0.0
    %1413 = vmatprep.subr.mxu0 0.0
    %1414 = vmatpush1.msra.mxu0 0.0
    %1415 = vmatprep.subr.mxu0 0.0
    %1416 = vmatpush1.msra.mxu0 0.0
    %1417 = vmatprep.subr.mxu0 0.0
    %1418 = vmatpush1.msra.mxu0 0.0
    %1419 = vmatprep.subr.mxu0 0.0
    %1420 = vmatpush1.msra.mxu0 0.0
    %1421 = vmatprep.subr.mxu0 0.0
    %1422 = vmatpush1.msra.mxu0 0.0
    %1423 = vmatprep.subr.mxu0 0.0
    %1424 = vmatpush1.msra.mxu0 0.0
    %1425 = vmatprep.subr.mxu0 0.0
    %1426 = vmatpush1.msra.mxu0 0.0
    %1427 = vmatprep.subr.mxu0 0.0
    %1428 = vmatpush1.msra.mxu0 0.0
    %1429 = vmatprep.subr.mxu0 0.0
    %1430 = vmatpush1.msra.mxu0 0.0
    %1431 = vmatprep.subr.mxu0 0.0
    %1432 = vmatpush1.msra.mxu0 0.0
    %1433 = vmatprep.subr.mxu0 0.0
    %1434 = vmatpush1.msra.mxu0 0.0
    %1435 = vmatprep.subr.mxu0 0.0
    %1436 = vmatpush1.msra.mxu0 0.0
    %1437 = vmatprep.subr.mxu0 0.0
    %1438 = vmatpush1.msra.mxu0 0.0
    %1439 = vmatprep.subr.mxu0 0.0
    %1440 = vmatpush1.msra.mxu0 0.0
    %1441 = vmatprep.subr.mxu0 0.0
    %1442 = vmatpush1.msra.mxu0 0.0
    %1443 = vmatprep.subr.mxu0 0.0
    %1444 = vmatpush1.msra.mxu0 0.0
    %1445 = vmatprep.subr.mxu0 0.0
    %1446 = vmatpush1.msra.mxu0 0.0
    %1447 = vmatprep.subr.mxu0 0.0
    %1448 = vmatpush1.msra.mxu0 0.0
    %1449 = vmatprep.subr.mxu0 0.0
    %1450 = vmatpush1.msra.mxu0 0.0
    %1451 = vmatprep.subr.mxu0 0.0
    %1452 = vmatpush1.msra.mxu0 0.0
    %1453 = vmatprep.subr.mxu0 0.0
    %1454 = vmatpush1.msra.mxu0 0.0
    %1455 = vmatprep.subr.mxu0 0.0
    %1456 = vmatpush1.msra.mxu0 0.0
    %1457 = vmatprep.subr.mxu0 0.0
    %1458 = vmatpush1.msra.mxu0 0.0
    %1459 = vmatprep.subr.mxu0 0.0
    %1460 = vmatpush1.msra.mxu0 0.0
    %1461 = vmatprep.subr.mxu0 0.0
    %1462 = vmatpush1.msra.mxu0 0.0
    %1463 = vmatprep.mubr.f32.mxu0 0.0
    %1464 = vmatmul.mubr.f32.gmra.mrb[0].mxu0 %v755
    %v1465 = vpop.f32.mrb[0].mxu0
    %v1466 = vadd.f32 %v1351, %v1465
    %v1467 = vpop.f32.mrb[0].mxu0
    %1468 = vmatprep.mubr.f32.mxu0 0.0
    %1469 = vmatmul.mubr.f32.gmra.mrb[0].mxu0 %v758
    %v1470 = vpop.f32.mrb[0].mxu0
    %v1471 = vadd.f32 %v1356, %v1470
    %v1472 = vpop.f32.mrb[0].mxu0
    %1473 = vmatprep.mubr.f32.mxu0 0.0
    %1474 = vmatmul.mubr.f32.gmra.mrb[0].mxu0 %v761
    %v1475 = vpop.f32.mrb[0].mxu0
    %v1476 = vadd.f32 %v1361, %v1475
    %v1477 = vpop.f32.mrb[0].mxu0
    %1478 = vmatprep.mubr.f32.mxu0 0.0
    %1479 = vmatmul.mubr.f32.gmra.mrb[0].mxu0 %v764
    %v1480 = vpop.f32.mrb[0].mxu0
    %v1481 = vadd.f32 %v1366, %v1480
    %v1482 = vpop.f32.mrb[0].mxu0
    %1483 = vmatprep.mubr.f32.mxu0 0.0
    %1484 = vmatmul.mubr.f32.gmra.mrb[0].mxu0 %v767
    %v1485 = vpop.f32.mrb[0].mxu0
    %v1486 = vadd.f32 %v1371, %v1485
    %v1487 = vpop.f32.mrb[0].mxu0
    %1488 = vmatprep.mubr.f32.mxu0 0.0
    %1489 = vmatmul.mubr.f32.gmra.mrb[0].mxu0 %v770
    %v1490 = vpop.f32.mrb[0].mxu0
    %v1491 = vadd.f32 %v1376, %v1490
    %v1492 = vpop.f32.mrb[0].mxu0
    %1493 = vmatprep.mubr.f32.mxu0 0.0
    %1494 = vmatmul.mubr.f32.gmra.mrb[0].mxu0 %v773
    %v1495 = vpop.f32.mrb[0].mxu0
    %v1496 = vadd.f32 %v1381, %v1495
    %v1497 = vpop.f32.mrb[0].mxu0
    %1498 = vmatprep.mubr.f32.mxu0 0.0
    %1499 = vmatmul.mubr.f32.gmra.mrb[0].mxu0 %v776
    %v1500 = vpop.f32.mrb[0].mxu0
    %v1501 = vadd.f32 %v1386, %v1500
    %v1502 = vpop.f32.mrb[0].mxu0
    %1503 = vmatprep.mubr.f32.mxu0 0.0
    %1504 = vmatmul.mubr.f32.gmra.mrb[0].mxu0 %v779
    %v1505 = vpop.f32.mrb[0].mxu0
    %v1506 = vadd.f32 %v1391, %v1505
    %v1507 = vpop.f32.mrb[0].mxu0
    %1508 = vmatprep.mubr.f32.mxu0 0.0
    %1509 = vmatmul.mubr.f32.gmra.mrb[0].mxu0 %v782
    %v1510 = vpop.f32.mrb[0].mxu0
    %v1511 = vadd.f32 %v1396, %v1510
    %v1512 = vpop.f32.mrb[0].mxu0
    %1513 = vdwg.mxu0
    %v1514 = vmax.f32 %v976, 0.0
    %v1515 = vmax.f32 %v978, 0.0
    %v1516 = vmax.f32 %v1226, 0.0
    %v1517 = vmax.f32 %v1228, 0.0
    %v1518 = vmax.f32 %v1466, 0.0
    %v1519 = vmax.f32 %v982, 0.0
    %v1520 = vmax.f32 %v984, 0.0
    %v1521 = vmax.f32 %v1232, 0.0
    %v1522 = vmax.f32 %v1234, 0.0
    %v1523 = vmax.f32 %v1471, 0.0
    %v1524 = vmax.f32 %v988, 0.0
    %v1525 = vmax.f32 %v990, 0.0
    %v1526 = vmax.f32 %v1238, 0.0
    %v1527 = vmax.f32 %v1240, 0.0
    %v1528 = vmax.f32 %v1476, 0.0
    %v1529 = vmax.f32 %v994, 0.0
    %v1530 = vmax.f32 %v996, 0.0
    %v1531 = vmax.f32 %v1244, 0.0
    %v1532 = vmax.f32 %v1246, 0.0
    %v1533 = vmax.f32 %v1481, 0.0
    %v1534 = vmax.f32 %v1000, 0.0
    %v1535 = vmax.f32 %v1002, 0.0
    %v1536 = vmax.f32 %v1250, 0.0
    %v1537 = vmax.f32 %v1252, 0.0
    %v1538 = vmax.f32 %v1486, 0.0
    %v1539 = vmax.f32 %v1006, 0.0
    %v1540 = vmax.f32 %v1008, 0.0
    %v1541 = vmax.f32 %v1256, 0.0
    %v1542 = vmax.f32 %v1258, 0.0
    %v1543 = vmax.f32 %v1491, 0.0
    %v1544 = vmax.f32 %v1012, 0.0
    %v1545 = vmax.f32 %v1014, 0.0
    %v1546 = vmax.f32 %v1262, 0.0
    %v1547 = vmax.f32 %v1264, 0.0
    %v1548 = vmax.f32 %v1496, 0.0
    %v1549 = vmax.f32 %v1018, 0.0
    %v1550 = vmax.f32 %v1020, 0.0
    %v1551 = vmax.f32 %v1268, 0.0
    %v1552 = vmax.f32 %v1270, 0.0
    %v1553 = vmax.f32 %v1501, 0.0
    %v1554 = vmax.f32 %v1024, 0.0
    %v1555 = vmax.f32 %v1026, 0.0
    %v1556 = vmax.f32 %v1274, 0.0
    %v1557 = vmax.f32 %v1276, 0.0
    %v1558 = vmax.f32 %v1506, 0.0
    %v1559 = vmax.f32 %v1030, 0.0
    %v1560 = vmax.f32 %v1032, 0.0
    %v1561 = vmax.f32 %v1280, 0.0
    %v1562 = vmax.f32 %v1282, 0.0
    %v1563 = vmax.f32 %v1511, 0.0
    %v1564 = vld [vmem:[#allocation11] sm:$0xff]
    %v1565 = vld [vmem:[#allocation11 + $0x8] sm:$0xff]
    %v1566 = vld [vmem:[#allocation11 + $0x10] sm:$0xff]
    %v1567 = vld [vmem:[#allocation11 + $0x18] sm:$0xff]
    %v1568 = vld [vmem:[#allocation11 + $0x20] sm:$0xff]
    %v1569 = vld [vmem:[#allocation11 + $0x28] sm:$0xff]
    %v1570 = vld [vmem:[#allocation11 + $0x30] sm:$0xff]
    %v1571 = vld [vmem:[#allocation11 + $0x38] sm:$0xff]
    %v1572 = vld [vmem:[#allocation11 + $0x40] sm:$0xff]
    %v1573 = vld [vmem:[#allocation11 + $0x48] sm:$0xff]
    %v1574 = vld [vmem:[#allocation11 + $0x50] sm:$0xff]
    %v1575 = vld [vmem:[#allocation11 + $0x58] sm:$0xff]
    %v1576 = vld [vmem:[#allocation11 + $0x60] sm:$0xff]
    %v1577 = vld [vmem:[#allocation11 + $0x68] sm:$0xff]
    %v1578 = vld [vmem:[#allocation11 + $0x70] sm:$0xff]
    %v1579 = vld [vmem:[#allocation11 + $0x78] sm:$0xff]
    %v1580 = vld [vmem:[#allocation11 + $0x80] sm:$0xff]
    %v1581 = vld [vmem:[#allocation11 + $0x88] sm:$0xff]
    %v1582 = vld [vmem:[#allocation11 + $0x90] sm:$0xff]
    %v1583 = vld [vmem:[#allocation11 + $0x98] sm:$0xff]
    %v1584 = vld [vmem:[#allocation11 + $0xa0] sm:$0xff]
    %v1585 = vld [vmem:[#allocation11 + $0xa8] sm:$0xff]
    %v1586 = vld [vmem:[#allocation11 + $0xb0] sm:$0xff]
    %v1587 = vld [vmem:[#allocation11 + $0xb8] sm:$0xff]
    %v1588 = vld [vmem:[#allocation11 + $0xc0] sm:$0xff]
    %v1589 = vld [vmem:[#allocation11 + $0xc8] sm:$0xff]
    %v1590 = vld [vmem:[#allocation11 + $0xd0] sm:$0xff]
    %v1591 = vld [vmem:[#allocation11 + $0xd8] sm:$0xff]
    %v1592 = vld [vmem:[#allocation11 + $0xe0] sm:$0xff]
    %v1593 = vld [vmem:[#allocation11 + $0xe8] sm:$0xff]
    %v1594 = vld [vmem:[#allocation11 + $0xf0] sm:$0xff]
    %v1595 = vld [vmem:[#allocation11 + $0xf8] sm:$0xff]
    %v1596 = vld [vmem:[#allocation11 + $0x100] sm:$0xff]
    %v1597 = vld [vmem:[#allocation11 + $0x108] sm:$0xff]
    %v1598 = vld [vmem:[#allocation11 + $0x110] sm:$0xff]
    %v1599 = vld [vmem:[#allocation11 + $0x118] sm:$0xff]
    %v1600 = vld [vmem:[#allocation11 + $0x120] sm:$0xff]
    %v1601 = vld [vmem:[#allocation11 + $0x128] sm:$0xff]
    %v1602 = vld [vmem:[#allocation11 + $0x130] sm:$0xff]
    %v1603 = vld [vmem:[#allocation11 + $0x138] sm:$0xff]
    %v1604 = vld [vmem:[#allocation11 + $0x140] sm:$0xff]
    %v1605 = vld [vmem:[#allocation11 + $0x148] sm:$0xff]
    %v1606 = vld [vmem:[#allocation11 + $0x150] sm:$0xff]
    %v1607 = vld [vmem:[#allocation11 + $0x158] sm:$0xff]
    %v1608 = vld [vmem:[#allocation11 + $0x160] sm:$0xff]
    %v1609 = vld [vmem:[#allocation11 + $0x168] sm:$0xff]
    %v1610 = vld [vmem:[#allocation11 + $0x170] sm:$0xff]
    %v1611 = vld [vmem:[#allocation11 + $0x178] sm:$0xff]
    %v1612 = vld [vmem:[#allocation11 + $0x180] sm:$0xff]
    %v1613 = vld [vmem:[#allocation11 + $0x188] sm:$0xff]
    %v1614 = vld [vmem:[#allocation11 + $0x190] sm:$0xff]
    %v1615 = vld [vmem:[#allocation11 + $0x198] sm:$0xff]
    %v1616 = vld [vmem:[#allocation11 + $0x1a0] sm:$0xff]
    %v1617 = vld [vmem:[#allocation11 + $0x1a8] sm:$0xff]
    %v1618 = vld [vmem:[#allocation11 + $0x1b0] sm:$0xff]
    %v1619 = vld [vmem:[#allocation11 + $0x1b8] sm:$0xff]
    %v1620 = vld [vmem:[#allocation11 + $0x1c0] sm:$0xff]
    %v1621 = vld [vmem:[#allocation11 + $0x1c8] sm:$0xff]
    %v1622 = vld [vmem:[#allocation11 + $0x1d0] sm:$0xff]
    %v1623 = vld [vmem:[#allocation11 + $0x1d8] sm:$0xff]
    %v1624 = vld [vmem:[#allocation11 + $0x1e0] sm:$0xff]
    %v1625 = vld [vmem:[#allocation11 + $0x1e8] sm:$0xff]
    %v1626 = vld [vmem:[#allocation11 + $0x1f0] sm:$0xff]
    %v1627 = vld [vmem:[#allocation11 + $0x1f8] sm:$0xff]
    %v1628 = vld [vmem:[#allocation11 + $0x200] sm:$0xff]
    %v1629 = vld [vmem:[#allocation11 + $0x208] sm:$0xff]
    %v1630 = vld [vmem:[#allocation11 + $0x210] sm:$0xff]
    %v1631 = vld [vmem:[#allocation11 + $0x218] sm:$0xff]
    %v1632 = vld [vmem:[#allocation11 + $0x220] sm:$0xff]
    %v1633 = vld [vmem:[#allocation11 + $0x228] sm:$0xff]
    %v1634 = vld [vmem:[#allocation11 + $0x230] sm:$0xff]
    %v1635 = vld [vmem:[#allocation11 + $0x238] sm:$0xff]
    %v1636 = vld [vmem:[#allocation11 + $0x240] sm:$0xff]
    %v1637 = vld [vmem:[#allocation11 + $0x248] sm:$0xff]
    %v1638 = vld [vmem:[#allocation11 + $0x250] sm:$0xff]
    %v1639 = vld [vmem:[#allocation11 + $0x258] sm:$0xff]
    %v1640 = vld [vmem:[#allocation11 + $0x260] sm:$0xff]
    %v1641 = vld [vmem:[#allocation11 + $0x268] sm:$0xff]
    %v1642 = vld [vmem:[#allocation11 + $0x270] sm:$0xff]
    %v1643 = vld [vmem:[#allocation11 + $0x278] sm:$0xff]
    %v1644 = vld [vmem:[#allocation11 + $0x280] sm:$0xff]
    %v1645 = vld [vmem:[#allocation11 + $0x288] sm:$0xff]
    %v1646 = vld [vmem:[#allocation11 + $0x290] sm:$0xff]
    %v1647 = vld [vmem:[#allocation11 + $0x298] sm:$0xff]
    %v1648 = vld [vmem:[#allocation11 + $0x2a0] sm:$0xff]
    %v1649 = vld [vmem:[#allocation11 + $0x2a8] sm:$0xff]
    %v1650 = vld [vmem:[#allocation11 + $0x2b0] sm:$0xff]
    %v1651 = vld [vmem:[#allocation11 + $0x2b8] sm:$0xff]
    %v1652 = vld [vmem:[#allocation11 + $0x2c0] sm:$0xff]
    %v1653 = vld [vmem:[#allocation11 + $0x2c8] sm:$0xff]
    %v1654 = vld [vmem:[#allocation11 + $0x2d0] sm:$0xff]
    %v1655 = vld [vmem:[#allocation11 + $0x2d8] sm:$0xff]
    %v1656 = vld [vmem:[#allocation11 + $0x2e0] sm:$0xff]
    %v1657 = vld [vmem:[#allocation11 + $0x2e8] sm:$0xff]
    %v1658 = vld [vmem:[#allocation11 + $0x2f0] sm:$0xff]
    %v1659 = vld [vmem:[#allocation11 + $0x2f8] sm:$0xff]
    %v1660 = vld [vmem:[#allocation11 + $0x300] sm:$0xff]
    %v1661 = vld [vmem:[#allocation11 + $0x308] sm:$0xff]
    %v1662 = vld [vmem:[#allocation11 + $0x310] sm:$0xff]
    %v1663 = vld [vmem:[#allocation11 + $0x318] sm:$0xff]
    %v1664 = vld [vmem:[#allocation11 + $0x320] sm:$0xff]
    %v1665 = vld [vmem:[#allocation11 + $0x328] sm:$0xff]
    %v1666 = vld [vmem:[#allocation11 + $0x330] sm:$0xff]
    %v1667 = vld [vmem:[#allocation11 + $0x338] sm:$0xff]
    %v1668 = vld [vmem:[#allocation11 + $0x340] sm:$0xff]
    %v1669 = vld [vmem:[#allocation11 + $0x348] sm:$0xff]
    %v1670 = vld [vmem:[#allocation11 + $0x350] sm:$0xff]
    %v1671 = vld [vmem:[#allocation11 + $0x358] sm:$0xff]
    %v1672 = vld [vmem:[#allocation11 + $0x360] sm:$0xff]
    %v1673 = vld [vmem:[#allocation11 + $0x368] sm:$0xff]
    %v1674 = vld [vmem:[#allocation11 + $0x370] sm:$0xff]
    %v1675 = vld [vmem:[#allocation11 + $0x378] sm:$0xff]
    %v1676 = vld [vmem:[#allocation11 + $0x380] sm:$0xff]
    %v1677 = vld [vmem:[#allocation11 + $0x388] sm:$0xff]
    %v1678 = vld [vmem:[#allocation11 + $0x390] sm:$0xff]
    %v1679 = vld [vmem:[#allocation11 + $0x398] sm:$0xff]
    %v1680 = vld [vmem:[#allocation11 + $0x3a0] sm:$0xff]
    %v1681 = vld [vmem:[#allocation11 + $0x3a8] sm:$0xff]
    %v1682 = vld [vmem:[#allocation11 + $0x3b0] sm:$0xff]
    %v1683 = vld [vmem:[#allocation11 + $0x3b8] sm:$0xff]
    %v1684 = vld [vmem:[#allocation11 + $0x3c0] sm:$0xff]
    %v1685 = vld [vmem:[#allocation11 + $0x3c8] sm:$0xff]
    %v1686 = vld [vmem:[#allocation11 + $0x3d0] sm:$0xff]
    %v1687 = vld [vmem:[#allocation11 + $0x3d8] sm:$0xff]
    %v1688 = vld [vmem:[#allocation11 + $0x3e0] sm:$0xff]
    %v1689 = vld [vmem:[#allocation11 + $0x3e8] sm:$0xff]
    %v1690 = vld [vmem:[#allocation11 + $0x3f0] sm:$0xff]
    %v1691 = vld [vmem:[#allocation11 + $0x3f8] sm:$0xff]
    %v1692 = vld [vmem:[#allocation11 + $0x400] sm:$0xff]
    %v1693 = vld [vmem:[#allocation11 + $0x408] sm:$0xff]
    %v1694 = vld [vmem:[#allocation11 + $0x410] sm:$0xff]
    %v1695 = vld [vmem:[#allocation11 + $0x418] sm:$0xff]
    %v1696 = vld [vmem:[#allocation11 + $0x420] sm:$0xff]
    %v1697 = vld [vmem:[#allocation11 + $0x428] sm:$0xff]
    %v1698 = vld [vmem:[#allocation11 + $0x430] sm:$0xff]
    %v1699 = vld [vmem:[#allocation11 + $0x438] sm:$0xff]
    %v1700 = vld [vmem:[#allocation11 + $0x440] sm:$0xff]
    %v1701 = vld [vmem:[#allocation11 + $0x448] sm:$0xff]
    %v1702 = vld [vmem:[#allocation11 + $0x450] sm:$0xff]
    %v1703 = vld [vmem:[#allocation11 + $0x458] sm:$0xff]
    %v1704 = vld [vmem:[#allocation11 + $0x460] sm:$0xff]
    %v1705 = vld [vmem:[#allocation11 + $0x468] sm:$0xff]
    %v1706 = vld [vmem:[#allocation11 + $0x470] sm:$0xff]
    %v1707 = vld [vmem:[#allocation11 + $0x478] sm:$0xff]
    %v1708 = vld [vmem:[#allocation11 + $0x480] sm:$0xff]
    %v1709 = vld [vmem:[#allocation11 + $0x488] sm:$0xff]
    %v1710 = vld [vmem:[#allocation11 + $0x490] sm:$0xff]
    %v1711 = vld [vmem:[#allocation11 + $0x498] sm:$0xff]
    %v1712 = vld [vmem:[#allocation11 + $0x4a0] sm:$0xff]
    %v1713 = vld [vmem:[#allocation11 + $0x4a8] sm:$0xff]
    %v1714 = vld [vmem:[#allocation11 + $0x4b0] sm:$0xff]
    %v1715 = vld [vmem:[#allocation11 + $0x4b8] sm:$0xff]
    %v1716 = vld [vmem:[#allocation11 + $0x4c0] sm:$0xff]
    %v1717 = vld [vmem:[#allocation11 + $0x4c8] sm:$0xff]
    %v1718 = vld [vmem:[#allocation11 + $0x4d0] sm:$0xff]
    %v1719 = vld [vmem:[#allocation11 + $0x4d8] sm:$0xff]
    %v1720 = vld [vmem:[#allocation11 + $0x4e0] sm:$0xff]
    %v1721 = vld [vmem:[#allocation11 + $0x4e8] sm:$0xff]
    %v1722 = vld [vmem:[#allocation11 + $0x4f0] sm:$0xff]
    %v1723 = vld [vmem:[#allocation11 + $0x4f8] sm:$0xff]
    %v1724 = vld [vmem:[#allocation11 + $0x500] sm:$0xff]
    %v1725 = vld [vmem:[#allocation11 + $0x508] sm:$0xff]
    %v1726 = vld [vmem:[#allocation11 + $0x510] sm:$0xff]
    %v1727 = vld [vmem:[#allocation11 + $0x518] sm:$0xff]
    %v1728 = vld [vmem:[#allocation11 + $0x520] sm:$0xff]
    %v1729 = vld [vmem:[#allocation11 + $0x528] sm:$0xff]
    %v1730 = vld [vmem:[#allocation11 + $0x530] sm:$0xff]
    %v1731 = vld [vmem:[#allocation11 + $0x538] sm:$0xff]
    %v1732 = vld [vmem:[#allocation11 + $0x540] sm:$0xff]
    %v1733 = vld [vmem:[#allocation11 + $0x548] sm:$0xff]
    %v1734 = vld [vmem:[#allocation11 + $0x550] sm:$0xff]
    %v1735 = vld [vmem:[#allocation11 + $0x558] sm:$0xff]
    %v1736 = vld [vmem:[#allocation11 + $0x560] sm:$0xff]
    %v1737 = vld [vmem:[#allocation11 + $0x568] sm:$0xff]
    %v1738 = vld [vmem:[#allocation11 + $0x570] sm:$0xff]
    %v1739 = vld [vmem:[#allocation11 + $0x578] sm:$0xff]
    %v1740 = vld [vmem:[#allocation11 + $0x580] sm:$0xff]
    %v1741 = vld [vmem:[#allocation11 + $0x588] sm:$0xff]
    %v1742 = vld [vmem:[#allocation11 + $0x590] sm:$0xff]
    %v1743 = vld [vmem:[#allocation11 + $0x598] sm:$0xff]
    %v1744 = vld [vmem:[#allocation11 + $0x5a0] sm:$0xff]
    %v1745 = vld [vmem:[#allocation11 + $0x5a8] sm:$0xff]
    %v1746 = vld [vmem:[#allocation11 + $0x5b0] sm:$0xff]
    %v1747 = vld [vmem:[#allocation11 + $0x5b8] sm:$0xff]
    %v1748 = vld [vmem:[#allocation11 + $0x5c0] sm:$0xff]
    %v1749 = vld [vmem:[#allocation11 + $0x5c8] sm:$0xff]
    %v1750 = vld [vmem:[#allocation11 + $0x5d0] sm:$0xff]
    %v1751 = vld [vmem:[#allocation11 + $0x5d8] sm:$0xff]
    %v1752 = vld [vmem:[#allocation11 + $0x5e0] sm:$0xff]
    %v1753 = vld [vmem:[#allocation11 + $0x5e8] sm:$0xff]
    %v1754 = vld [vmem:[#allocation11 + $0x5f0] sm:$0xff]
    %v1755 = vld [vmem:[#allocation11 + $0x5f8] sm:$0xff]
    %v1756 = vld [vmem:[#allocation11 + $0x600] sm:$0xff]
    %v1757 = vld [vmem:[#allocation11 + $0x608] sm:$0xff]
    %v1758 = vld [vmem:[#allocation11 + $0x610] sm:$0xff]
    %v1759 = vld [vmem:[#allocation11 + $0x618] sm:$0xff]
    %v1760 = vld [vmem:[#allocation11 + $0x620] sm:$0xff]
    %v1761 = vld [vmem:[#allocation11 + $0x628] sm:$0xff]
    %v1762 = vld [vmem:[#allocation11 + $0x630] sm:$0xff]
    %v1763 = vld [vmem:[#allocation11 + $0x638] sm:$0xff]
    %v1764 = vld [vmem:[#allocation11 + $0x640] sm:$0xff]
    %v1765 = vld [vmem:[#allocation11 + $0x648] sm:$0xff]
    %v1766 = vld [vmem:[#allocation11 + $0x650] sm:$0xff]
    %v1767 = vld [vmem:[#allocation11 + $0x658] sm:$0xff]
    %v1768 = vld [vmem:[#allocation11 + $0x660] sm:$0xff]
    %v1769 = vld [vmem:[#allocation11 + $0x668] sm:$0xff]
    %v1770 = vld [vmem:[#allocation11 + $0x670] sm:$0xff]
    %v1771 = vld [vmem:[#allocation11 + $0x678] sm:$0xff]
    %v1772 = vld [vmem:[#allocation11 + $0x680] sm:$0xff]
    %v1773 = vld [vmem:[#allocation11 + $0x688] sm:$0xff]
    %v1774 = vld [vmem:[#allocation11 + $0x690] sm:$0xff]
    %v1775 = vld [vmem:[#allocation11 + $0x698] sm:$0xff]
    %v1776 = vld [vmem:[#allocation11 + $0x6a0] sm:$0xff]
    %v1777 = vld [vmem:[#allocation11 + $0x6a8] sm:$0xff]
    %v1778 = vld [vmem:[#allocation11 + $0x6b0] sm:$0xff]
    %v1779 = vld [vmem:[#allocation11 + $0x6b8] sm:$0xff]
    %v1780 = vld [vmem:[#allocation11 + $0x6c0] sm:$0xff]
    %v1781 = vld [vmem:[#allocation11 + $0x6c8] sm:$0xff]
    %v1782 = vld [vmem:[#allocation11 + $0x6d0] sm:$0xff]
    %v1783 = vld [vmem:[#allocation11 + $0x6d8] sm:$0xff]
    %v1784 = vld [vmem:[#allocation11 + $0x6e0] sm:$0xff]
    %v1785 = vld [vmem:[#allocation11 + $0x6e8] sm:$0xff]
    %v1786 = vld [vmem:[#allocation11 + $0x6f0] sm:$0xff]
    %v1787 = vld [vmem:[#allocation11 + $0x6f8] sm:$0xff]
    %v1788 = vld [vmem:[#allocation11 + $0x700] sm:$0xff]
    %v1789 = vld [vmem:[#allocation11 + $0x708] sm:$0xff]
    %v1790 = vld [vmem:[#allocation11 + $0x710] sm:$0xff]
    %v1791 = vld [vmem:[#allocation11 + $0x718] sm:$0xff]
    %v1792 = vld [vmem:[#allocation11 + $0x720] sm:$0xff]
    %v1793 = vld [vmem:[#allocation11 + $0x728] sm:$0xff]
    %v1794 = vld [vmem:[#allocation11 + $0x730] sm:$0xff]
    %v1795 = vld [vmem:[#allocation11 + $0x738] sm:$0xff]
    %v1796 = vld [vmem:[#allocation11 + $0x740] sm:$0xff]
    %v1797 = vld [vmem:[#allocation11 + $0x748] sm:$0xff]
    %v1798 = vld [vmem:[#allocation11 + $0x750] sm:$0xff]
    %v1799 = vld [vmem:[#allocation11 + $0x758] sm:$0xff]
    %v1800 = vld [vmem:[#allocation11 + $0x760] sm:$0xff]
    %v1801 = vld [vmem:[#allocation11 + $0x768] sm:$0xff]
    %v1802 = vld [vmem:[#allocation11 + $0x770] sm:$0xff]
    %v1803 = vld [vmem:[#allocation11 + $0x778] sm:$0xff]
    %v1804 = vld [vmem:[#allocation11 + $0x780] sm:$0xff]
    %v1805 = vld [vmem:[#allocation11 + $0x788] sm:$0xff]
    %v1806 = vld [vmem:[#allocation11 + $0x790] sm:$0xff]
    %v1807 = vld [vmem:[#allocation11 + $0x798] sm:$0xff]
    %v1808 = vld [vmem:[#allocation11 + $0x7a0] sm:$0xff]
    %v1809 = vld [vmem:[#allocation11 + $0x7a8] sm:$0xff]
    %v1810 = vld [vmem:[#allocation11 + $0x7b0] sm:$0xff]
    %v1811 = vld [vmem:[#allocation11 + $0x7b8] sm:$0xff]
    %v1812 = vld [vmem:[#allocation11 + $0x7c0] sm:$0xff]
    %v1813 = vld [vmem:[#allocation11 + $0x7c8] sm:$0xff]
    %v1814 = vld [vmem:[#allocation11 + $0x7d0] sm:$0xff]
    %v1815 = vld [vmem:[#allocation11 + $0x7d8] sm:$0xff]
    %v1816 = vld [vmem:[#allocation11 + $0x7e0] sm:$0xff]
    %v1817 = vld [vmem:[#allocation11 + $0x7e8] sm:$0xff]
    %v1818 = vld [vmem:[#allocation11 + $0x7f0] sm:$0xff]
    %v1819 = vld [vmem:[#allocation11 + $0x7f8] sm:$0xff]
    %v1820 = vld [vmem:[#allocation11 + $0x800] sm:$0xff]
    %v1821 = vld [vmem:[#allocation11 + $0x808] sm:$0xff]
    %v1822 = vld [vmem:[#allocation11 + $0x810] sm:$0xff]
    %v1823 = vld [vmem:[#allocation11 + $0x818] sm:$0xff]
    %v1824 = vld [vmem:[#allocation11 + $0x820] sm:$0xff]
    %v1825 = vld [vmem:[#allocation11 + $0x828] sm:$0xff]
    %v1826 = vld [vmem:[#allocation11 + $0x830] sm:$0xff]
    %v1827 = vld [vmem:[#allocation11 + $0x838] sm:$0xff]
    %v1828 = vld [vmem:[#allocation11 + $0x840] sm:$0xff]
    %v1829 = vld [vmem:[#allocation11 + $0x848] sm:$0xff]
    %v1830 = vld [vmem:[#allocation11 + $0x850] sm:$0xff]
    %v1831 = vld [vmem:[#allocation11 + $0x858] sm:$0xff]
    %v1832 = vld [vmem:[#allocation11 + $0x860] sm:$0xff]
    %v1833 = vld [vmem:[#allocation11 + $0x868] sm:$0xff]
    %v1834 = vld [vmem:[#allocation11 + $0x870] sm:$0xff]
    %v1835 = vld [vmem:[#allocation11 + $0x878] sm:$0xff]
    %v1836 = vld [vmem:[#allocation11 + $0x880] sm:$0xff]
    %v1837 = vld [vmem:[#allocation11 + $0x888] sm:$0xff]
    %v1838 = vld [vmem:[#allocation11 + $0x890] sm:$0xff]
    %v1839 = vld [vmem:[#allocation11 + $0x898] sm:$0xff]
    %v1840 = vld [vmem:[#allocation11 + $0x8a0] sm:$0xff]
    %v1841 = vld [vmem:[#allocation11 + $0x8a8] sm:$0xff]
    %v1842 = vld [vmem:[#allocation11 + $0x8b0] sm:$0xff]
    %v1843 = vld [vmem:[#allocation11 + $0x8b8] sm:$0xff]
    %v1844 = vld [vmem:[#allocation11 + $0x8c0] sm:$0xff]
    %v1845 = vld [vmem:[#allocation11 + $0x8c8] sm:$0xff]
    %v1846 = vld [vmem:[#allocation11 + $0x8d0] sm:$0xff]
    %v1847 = vld [vmem:[#allocation11 + $0x8d8] sm:$0xff]
    %v1848 = vld [vmem:[#allocation11 + $0x8e0] sm:$0xff]
    %v1849 = vld [vmem:[#allocation11 + $0x8e8] sm:$0xff]
    %v1850 = vld [vmem:[#allocation11 + $0x8f0] sm:$0xff]
    %v1851 = vld [vmem:[#allocation11 + $0x8f8] sm:$0xff]
    %v1852 = vld [vmem:[#allocation11 + $0x900] sm:$0xff]
    %v1853 = vld [vmem:[#allocation11 + $0x908] sm:$0xff]
    %v1854 = vld [vmem:[#allocation11 + $0x910] sm:$0xff]
    %v1855 = vld [vmem:[#allocation11 + $0x918] sm:$0xff]
    %v1856 = vld [vmem:[#allocation11 + $0x920] sm:$0xff]
    %v1857 = vld [vmem:[#allocation11 + $0x928] sm:$0xff]
    %v1858 = vld [vmem:[#allocation11 + $0x930] sm:$0xff]
    %v1859 = vld [vmem:[#allocation11 + $0x938] sm:$0xff]
    %v1860 = vld [vmem:[#allocation11 + $0x940] sm:$0xff]
    %v1861 = vld [vmem:[#allocation11 + $0x948] sm:$0xff]
    %v1862 = vld [vmem:[#allocation11 + $0x950] sm:$0xff]
    %v1863 = vld [vmem:[#allocation11 + $0x958] sm:$0xff]
    %v1864 = vld [vmem:[#allocation11 + $0x960] sm:$0xff]
    %v1865 = vld [vmem:[#allocation11 + $0x968] sm:$0xff]
    %v1866 = vld [vmem:[#allocation11 + $0x970] sm:$0xff]
    %v1867 = vld [vmem:[#allocation11 + $0x978] sm:$0xff]
    %v1868 = vld [vmem:[#allocation11 + $0x980] sm:$0xff]
    %v1869 = vld [vmem:[#allocation11 + $0x988] sm:$0xff]
    %v1870 = vld [vmem:[#allocation11 + $0x990] sm:$0xff]
    %v1871 = vld [vmem:[#allocation11 + $0x998] sm:$0xff]
    %v1872 = vld [vmem:[#allocation11 + $0x9a0] sm:$0xff]
    %v1873 = vld [vmem:[#allocation11 + $0x9a8] sm:$0xff]
    %v1874 = vld [vmem:[#allocation11 + $0x9b0] sm:$0xff]
    %v1875 = vld [vmem:[#allocation11 + $0x9b8] sm:$0xff]
    %v1876 = vld [vmem:[#allocation11 + $0x9c0] sm:$0xff]
    %v1877 = vld [vmem:[#allocation11 + $0x9c8] sm:$0xff]
    %v1878 = vld [vmem:[#allocation11 + $0x9d0] sm:$0xff]
    %v1879 = vld [vmem:[#allocation11 + $0x9d8] sm:$0xff]
    %v1880 = vld [vmem:[#allocation11 + $0x9e0] sm:$0xff]
    %v1881 = vld [vmem:[#allocation11 + $0x9e8] sm:$0xff]
    %v1882 = vld [vmem:[#allocation11 + $0x9f0] sm:$0xff]
    %v1883 = vld [vmem:[#allocation11 + $0x9f8] sm:$0xff]
    %v1884 = vld [vmem:[#allocation11 + $0xa00] sm:$0xff]
    %v1885 = vld [vmem:[#allocation11 + $0xa08] sm:$0xff]
    %v1886 = vld [vmem:[#allocation11 + $0xa10] sm:$0xff]
    %v1887 = vld [vmem:[#allocation11 + $0xa18] sm:$0xff]
    %v1888 = vld [vmem:[#allocation11 + $0xa20] sm:$0xff]
    %v1889 = vld [vmem:[#allocation11 + $0xa28] sm:$0xff]
    %v1890 = vld [vmem:[#allocation11 + $0xa30] sm:$0xff]
    %v1891 = vld [vmem:[#allocation11 + $0xa38] sm:$0xff]
    %v1892 = vld [vmem:[#allocation11 + $0xa40] sm:$0xff]
    %v1893 = vld [vmem:[#allocation11 + $0xa48] sm:$0xff]
    %v1894 = vld [vmem:[#allocation11 + $0xa50] sm:$0xff]
    %v1895 = vld [vmem:[#allocation11 + $0xa58] sm:$0xff]
    %v1896 = vld [vmem:[#allocation11 + $0xa60] sm:$0xff]
    %v1897 = vld [vmem:[#allocation11 + $0xa68] sm:$0xff]
    %v1898 = vld [vmem:[#allocation11 + $0xa70] sm:$0xff]
    %v1899 = vld [vmem:[#allocation11 + $0xa78] sm:$0xff]
    %v1900 = vld [vmem:[#allocation11 + $0xa80] sm:$0xff]
    %v1901 = vld [vmem:[#allocation11 + $0xa88] sm:$0xff]
    %v1902 = vld [vmem:[#allocation11 + $0xa90] sm:$0xff]
    %v1903 = vld [vmem:[#allocation11 + $0xa98] sm:$0xff]
    %v1904 = vld [vmem:[#allocation11 + $0xaa0] sm:$0xff]
    %v1905 = vld [vmem:[#allocation11 + $0xaa8] sm:$0xff]
    %v1906 = vld [vmem:[#allocation11 + $0xab0] sm:$0xff]
    %v1907 = vld [vmem:[#allocation11 + $0xab8] sm:$0xff]
    %v1908 = vld [vmem:[#allocation11 + $0xac0] sm:$0xff]
    %v1909 = vld [vmem:[#allocation11 + $0xac8] sm:$0xff]
    %v1910 = vld [vmem:[#allocation11 + $0xad0] sm:$0xff]
    %v1911 = vld [vmem:[#allocation11 + $0xad8] sm:$0xff]
    %v1912 = vld [vmem:[#allocation11 + $0xae0] sm:$0xff]
    %v1913 = vld [vmem:[#allocation11 + $0xae8] sm:$0xff]
    %v1914 = vld [vmem:[#allocation11 + $0xaf0] sm:$0xff]
    %v1915 = vld [vmem:[#allocation11 + $0xaf8] sm:$0xff]
    %v1916 = vld [vmem:[#allocation11 + $0xb00] sm:$0xff]
    %v1917 = vld [vmem:[#allocation11 + $0xb08] sm:$0xff]
    %v1918 = vld [vmem:[#allocation11 + $0xb10] sm:$0xff]
    %v1919 = vld [vmem:[#allocation11 + $0xb18] sm:$0xff]
    %v1920 = vld [vmem:[#allocation11 + $0xb20] sm:$0xff]
    %v1921 = vld [vmem:[#allocation11 + $0xb28] sm:$0xff]
    %v1922 = vld [vmem:[#allocation11 + $0xb30] sm:$0xff]
    %v1923 = vld [vmem:[#allocation11 + $0xb38] sm:$0xff]
    %v1924 = vld [vmem:[#allocation11 + $0xb40] sm:$0xff]
    %v1925 = vld [vmem:[#allocation11 + $0xb48] sm:$0xff]
    %v1926 = vld [vmem:[#allocation11 + $0xb50] sm:$0xff]
    %v1927 = vld [vmem:[#allocation11 + $0xb58] sm:$0xff]
    %v1928 = vld [vmem:[#allocation11 + $0xb60] sm:$0xff]
    %v1929 = vld [vmem:[#allocation11 + $0xb68] sm:$0xff]
    %v1930 = vld [vmem:[#allocation11 + $0xb70] sm:$0xff]
    %v1931 = vld [vmem:[#allocation11 + $0xb78] sm:$0xff]
    %v1932 = vld [vmem:[#allocation11 + $0xb80] sm:$0xff]
    %v1933 = vld [vmem:[#allocation11 + $0xb88] sm:$0xff]
    %v1934 = vld [vmem:[#allocation11 + $0xb90] sm:$0xff]
    %v1935 = vld [vmem:[#allocation11 + $0xb98] sm:$0xff]
    %v1936 = vld [vmem:[#allocation11 + $0xba0] sm:$0xff]
    %v1937 = vld [vmem:[#allocation11 + $0xba8] sm:$0xff]
    %v1938 = vld [vmem:[#allocation11 + $0xbb0] sm:$0xff]
    %v1939 = vld [vmem:[#allocation11 + $0xbb8] sm:$0xff]
    %v1940 = vld [vmem:[#allocation11 + $0xbc0] sm:$0xff]
    %v1941 = vld [vmem:[#allocation11 + $0xbc8] sm:$0xff]
    %v1942 = vld [vmem:[#allocation11 + $0xbd0] sm:$0xff]
    %v1943 = vld [vmem:[#allocation11 + $0xbd8] sm:$0xff]
    %v1944 = vld [vmem:[#allocation11 + $0xbe0] sm:$0xff]
    %v1945 = vld [vmem:[#allocation11 + $0xbe8] sm:$0xff]
    %v1946 = vld [vmem:[#allocation11 + $0xbf0] sm:$0xff]
    %v1947 = vld [vmem:[#allocation11 + $0xbf8] sm:$0xff]
    %v1948 = vld [vmem:[#allocation11 + $0xc00] sm:$0xff]
    %v1949 = vld [vmem:[#allocation11 + $0xc08] sm:$0xff]
    %v1950 = vld [vmem:[#allocation11 + $0xc10] sm:$0xff]
    %v1951 = vld [vmem:[#allocation11 + $0xc18] sm:$0xff]
    %v1952 = vld [vmem:[#allocation11 + $0xc20] sm:$0xff]
    %v1953 = vld [vmem:[#allocation11 + $0xc28] sm:$0xff]
    %v1954 = vld [vmem:[#allocation11 + $0xc30] sm:$0xff]
    %v1955 = vld [vmem:[#allocation11 + $0xc38] sm:$0xff]
    %v1956 = vld [vmem:[#allocation11 + $0xc40] sm:$0xff]
    %v1957 = vld [vmem:[#allocation11 + $0xc48] sm:$0xff]
    %v1958 = vld [vmem:[#allocation11 + $0xc50] sm:$0xff]
    %v1959 = vld [vmem:[#allocation11 + $0xc58] sm:$0xff]
    %v1960 = vld [vmem:[#allocation11 + $0xc60] sm:$0xff]
    %v1961 = vld [vmem:[#allocation11 + $0xc68] sm:$0xff]
    %v1962 = vld [vmem:[#allocation11 + $0xc70] sm:$0xff]
    %v1963 = vld [vmem:[#allocation11 + $0xc78] sm:$0xff]
    %v1964 = vld [vmem:[#allocation11 + $0xc80] sm:$0xff]
    %v1965 = vld [vmem:[#allocation11 + $0xc88] sm:$0xff]
    %v1966 = vld [vmem:[#allocation11 + $0xc90] sm:$0xff]
    %v1967 = vld [vmem:[#allocation11 + $0xc98] sm:$0xff]
    %v1968 = vld [vmem:[#allocation11 + $0xca0] sm:$0xff]
    %v1969 = vld [vmem:[#allocation11 + $0xca8] sm:$0xff]
    %v1970 = vld [vmem:[#allocation11 + $0xcb0] sm:$0xff]
    %v1971 = vld [vmem:[#allocation11 + $0xcb8] sm:$0xff]
    %v1972 = vld [vmem:[#allocation11 + $0xcc0] sm:$0xff]
    %v1973 = vld [vmem:[#allocation11 + $0xcc8] sm:$0xff]
    %v1974 = vld [vmem:[#allocation11 + $0xcd0] sm:$0xff]
    %v1975 = vld [vmem:[#allocation11 + $0xcd8] sm:$0xff]
    %v1976 = vld [vmem:[#allocation11 + $0xce0] sm:$0xff]
    %v1977 = vld [vmem:[#allocation11 + $0xce8] sm:$0xff]
    %v1978 = vld [vmem:[#allocation11 + $0xcf0] sm:$0xff]
    %v1979 = vld [vmem:[#allocation11 + $0xcf8] sm:$0xff]
    %v1980 = vld [vmem:[#allocation11 + $0xd00] sm:$0xff]
    %v1981 = vld [vmem:[#allocation11 + $0xd08] sm:$0xff]
    %v1982 = vld [vmem:[#allocation11 + $0xd10] sm:$0xff]
    %v1983 = vld [vmem:[#allocation11 + $0xd18] sm:$0xff]
    %v1984 = vld [vmem:[#allocation11 + $0xd20] sm:$0xff]
    %v1985 = vld [vmem:[#allocation11 + $0xd28] sm:$0xff]
    %v1986 = vld [vmem:[#allocation11 + $0xd30] sm:$0xff]
    %v1987 = vld [vmem:[#allocation11 + $0xd38] sm:$0xff]
    %v1988 = vld [vmem:[#allocation11 + $0xd40] sm:$0xff]
    %v1989 = vld [vmem:[#allocation11 + $0xd48] sm:$0xff]
    %v1990 = vld [vmem:[#allocation11 + $0xd50] sm:$0xff]
    %v1991 = vld [vmem:[#allocation11 + $0xd58] sm:$0xff]
    %v1992 = vld [vmem:[#allocation11 + $0xd60] sm:$0xff]
    %v1993 = vld [vmem:[#allocation11 + $0xd68] sm:$0xff]
    %v1994 = vld [vmem:[#allocation11 + $0xd70] sm:$0xff]
    %v1995 = vld [vmem:[#allocation11 + $0xd78] sm:$0xff]
    %v1996 = vld [vmem:[#allocation11 + $0xd80] sm:$0xff]
    %v1997 = vld [vmem:[#allocation11 + $0xd88] sm:$0xff]
    %v1998 = vld [vmem:[#allocation11 + $0xd90] sm:$0xff]
    %v1999 = vld [vmem:[#allocation11 + $0xd98] sm:$0xff]
    %v2000 = vld [vmem:[#allocation11 + $0xda0] sm:$0xff]
    %v2001 = vld [vmem:[#allocation11 + $0xda8] sm:$0xff]
    %v2002 = vld [vmem:[#allocation11 + $0xdb0] sm:$0xff]
    %v2003 = vld [vmem:[#allocation11 + $0xdb8] sm:$0xff]
    %v2004 = vld [vmem:[#allocation11 + $0xdc0] sm:$0xff]
    %v2005 = vld [vmem:[#allocation11 + $0xdc8] sm:$0xff]
    %v2006 = vld [vmem:[#allocation11 + $0xdd0] sm:$0xff]
    %v2007 = vld [vmem:[#allocation11 + $0xdd8] sm:$0xff]
    %v2008 = vld [vmem:[#allocation11 + $0xde0] sm:$0xff]
    %v2009 = vld [vmem:[#allocation11 + $0xde8] sm:$0xff]
    %v2010 = vld [vmem:[#allocation11 + $0xdf0] sm:$0xff]
    %v2011 = vld [vmem:[#allocation11 + $0xdf8] sm:$0xff]
    %v2012 = vld [vmem:[#allocation11 + $0xe00] sm:$0xff]
    %v2013 = vld [vmem:[#allocation11 + $0xe08] sm:$0xff]
    %v2014 = vld [vmem:[#allocation11 + $0xe10] sm:$0xff]
    %v2015 = vld [vmem:[#allocation11 + $0xe18] sm:$0xff]
    %v2016 = vld [vmem:[#allocation11 + $0xe20] sm:$0xff]
    %v2017 = vld [vmem:[#allocation11 + $0xe28] sm:$0xff]
    %v2018 = vld [vmem:[#allocation11 + $0xe30] sm:$0xff]
    %v2019 = vld [vmem:[#allocation11 + $0xe38] sm:$0xff]
    %v2020 = vld [vmem:[#allocation11 + $0xe40] sm:$0xff]
    %v2021 = vld [vmem:[#allocation11 + $0xe48] sm:$0xff]
    %v2022 = vld [vmem:[#allocation11 + $0xe50] sm:$0xff]
    %v2023 = vld [vmem:[#allocation11 + $0xe58] sm:$0xff]
    %v2024 = vld [vmem:[#allocation11 + $0xe60] sm:$0xff]
    %v2025 = vld [vmem:[#allocation11 + $0xe68] sm:$0xff]
    %v2026 = vld [vmem:[#allocation11 + $0xe70] sm:$0xff]
    %v2027 = vld [vmem:[#allocation11 + $0xe78] sm:$0xff]
    %v2028 = vld [vmem:[#allocation11 + $0xe80] sm:$0xff]
    %v2029 = vld [vmem:[#allocation11 + $0xe88] sm:$0xff]
    %v2030 = vld [vmem:[#allocation11 + $0xe90] sm:$0xff]
    %v2031 = vld [vmem:[#allocation11 + $0xe98] sm:$0xff]
    %v2032 = vld [vmem:[#allocation11 + $0xea0] sm:$0xff]
    %v2033 = vld [vmem:[#allocation11 + $0xea8] sm:$0xff]
    %v2034 = vld [vmem:[#allocation11 + $0xeb0] sm:$0xff]
    %v2035 = vld [vmem:[#allocation11 + $0xeb8] sm:$0xff]
    %v2036 = vld [vmem:[#allocation11 + $0xec0] sm:$0xff]
    %v2037 = vld [vmem:[#allocation11 + $0xec8] sm:$0xff]
    %v2038 = vld [vmem:[#allocation11 + $0xed0] sm:$0xff]
    %v2039 = vld [vmem:[#allocation11 + $0xed8] sm:$0xff]
    %v2040 = vld [vmem:[#allocation11 + $0xee0] sm:$0xff]
    %v2041 = vld [vmem:[#allocation11 + $0xee8] sm:$0xff]
    %v2042 = vld [vmem:[#allocation11 + $0xef0] sm:$0xff]
    %v2043 = vld [vmem:[#allocation11 + $0xef8] sm:$0xff]
    %v2044 = vld [vmem:[#allocation11 + $0xf00] sm:$0xff]
    %v2045 = vld [vmem:[#allocation11 + $0xf08] sm:$0xff]
    %v2046 = vld [vmem:[#allocation11 + $0xf10] sm:$0xff]
    %v2047 = vld [vmem:[#allocation11 + $0xf18] sm:$0xff]
    %v2048 = vld [vmem:[#allocation11 + $0xf20] sm:$0xff]
    %v2049 = vld [vmem:[#allocation11 + $0xf28] sm:$0xff]
    %v2050 = vld [vmem:[#allocation11 + $0xf30] sm:$0xff]
    %v2051 = vld [vmem:[#allocation11 + $0xf38] sm:$0xff]
    %v2052 = vld [vmem:[#allocation11 + $0xf40] sm:$0xff]
    %v2053 = vld [vmem:[#allocation11 + $0xf48] sm:$0xff]
    %v2054 = vld [vmem:[#allocation11 + $0xf50] sm:$0xff]
    %v2055 = vld [vmem:[#allocation11 + $0xf58] sm:$0xff]
    %v2056 = vld [vmem:[#allocation11 + $0xf60] sm:$0xff]
    %v2057 = vld [vmem:[#allocation11 + $0xf68] sm:$0xff]
    %v2058 = vld [vmem:[#allocation11 + $0xf70] sm:$0xff]
    %v2059 = vld [vmem:[#allocation11 + $0xf78] sm:$0xff]
    %v2060 = vld [vmem:[#allocation11 + $0xf80] sm:$0xff]
    %v2061 = vld [vmem:[#allocation11 + $0xf88] sm:$0xff]
    %v2062 = vld [vmem:[#allocation11 + $0xf90] sm:$0xff]
    %v2063 = vld [vmem:[#allocation11 + $0xf98] sm:$0xff]
    %v2064 = vld [vmem:[#allocation11 + $0xfa0] sm:$0xff]
    %v2065 = vld [vmem:[#allocation11 + $0xfa8] sm:$0xff]
    %v2066 = vld [vmem:[#allocation11 + $0xfb0] sm:$0xff]
    %v2067 = vld [vmem:[#allocation11 + $0xfb8] sm:$0xff]
    %v2068 = vld [vmem:[#allocation11 + $0xfc0] sm:$0xff]
    %v2069 = vld [vmem:[#allocation11 + $0xfc8] sm:$0xff]
    %v2070 = vld [vmem:[#allocation11 + $0xfd0] sm:$0xff]
    %v2071 = vld [vmem:[#allocation11 + $0xfd8] sm:$0xff]
    %v2072 = vld [vmem:[#allocation11 + $0xfe0] sm:$0xff]
    %v2073 = vld [vmem:[#allocation11 + $0xfe8] sm:$0xff]
    %v2074 = vld [vmem:[#allocation11 + $0xff0] sm:$0xff]
    %v2075 = vld [vmem:[#allocation11 + $0xff8] sm:$0xff]
    %v2076 = vld [vmem:[#allocation11 + $0x1000] sm:$0xff]
    %v2077 = vld [vmem:[#allocation11 + $0x1008] sm:$0xff]
    %v2078 = vld [vmem:[#allocation11 + $0x1010] sm:$0xff]
    %v2079 = vld [vmem:[#allocation11 + $0x1018] sm:$0xff]
    %v2080 = vld [vmem:[#allocation11 + $0x1020] sm:$0xff]
    %v2081 = vld [vmem:[#allocation11 + $0x1028] sm:$0xff]
    %v2082 = vld [vmem:[#allocation11 + $0x1030] sm:$0xff]
    %v2083 = vld [vmem:[#allocation11 + $0x1038] sm:$0xff]
    %v2084 = vld [vmem:[#allocation11 + $0x1040] sm:$0xff]
    %v2085 = vld [vmem:[#allocation11 + $0x1048] sm:$0xff]
    %v2086 = vld [vmem:[#allocation11 + $0x1050] sm:$0xff]
    %v2087 = vld [vmem:[#allocation11 + $0x1058] sm:$0xff]
    %v2088 = vld [vmem:[#allocation11 + $0x1060] sm:$0xff]
    %v2089 = vld [vmem:[#allocation11 + $0x1068] sm:$0xff]
    %v2090 = vld [vmem:[#allocation11 + $0x1070] sm:$0xff]
    %v2091 = vld [vmem:[#allocation11 + $0x1078] sm:$0xff]
    %v2092 = vld [vmem:[#allocation11 + $0x1080] sm:$0xff]
    %v2093 = vld [vmem:[#allocation11 + $0x1088] sm:$0xff]
    %v2094 = vld [vmem:[#allocation11 + $0x1090] sm:$0xff]
    %v2095 = vld [vmem:[#allocation11 + $0x1098] sm:$0xff]
    %v2096 = vld [vmem:[#allocation11 + $0x10a0] sm:$0xff]
    %v2097 = vld [vmem:[#allocation11 + $0x10a8] sm:$0xff]
    %v2098 = vld [vmem:[#allocation11 + $0x10b0] sm:$0xff]
    %v2099 = vld [vmem:[#allocation11 + $0x10b8] sm:$0xff]
    %v2100 = vld [vmem:[#allocation11 + $0x10c0] sm:$0xff]
    %v2101 = vld [vmem:[#allocation11 + $0x10c8] sm:$0xff]
    %v2102 = vld [vmem:[#allocation11 + $0x10d0] sm:$0xff]
    %v2103 = vld [vmem:[#allocation11 + $0x10d8] sm:$0xff]
    %v2104 = vld [vmem:[#allocation11 + $0x10e0] sm:$0xff]
    %v2105 = vld [vmem:[#allocation11 + $0x10e8] sm:$0xff]
    %v2106 = vld [vmem:[#allocation11 + $0x10f0] sm:$0xff]
    %v2107 = vld [vmem:[#allocation11 + $0x10f8] sm:$0xff]
    %v2108 = vld [vmem:[#allocation12] sm:$0xff]
    %v2110 = vlaneseq
    %v2111 = vshrl.u32 %v2110, 7
    %v2112 = vsub.s32 0, %v2111
    %v2113 = vrot.slane %v2108, %v2112
    %v2114 = vlaneseq
    %v2115 = vshrl.u32 %v2114, 7
    %v2116 = vsub.s32 1, %v2115
    %v2117 = vrot.slane %v2108, %v2116
    %v2118 = vlaneseq
    %v2119 = vshrl.u32 %v2118, 7
    %v2120 = vsub.s32 2, %v2119
    %v2121 = vrot.slane %v2108, %v2120
    %v2122 = vlaneseq
    %v2123 = vshrl.u32 %v2122, 7
    %v2124 = vsub.s32 3, %v2123
    %v2125 = vrot.slane %v2108, %v2124
    %v2126 = vlaneseq
    %v2127 = vshrl.u32 %v2126, 7
    %v2128 = vsub.s32 4, %v2127
    %v2129 = vrot.slane %v2108, %v2128
    %v2130 = vlaneseq
    %v2131 = vshrl.u32 %v2130, 7
    %v2132 = vsub.s32 5, %v2131
    %v2133 = vrot.slane %v2108, %v2132
    %v2134 = vlaneseq
    %v2135 = vshrl.u32 %v2134, 7
    %v2136 = vsub.s32 6, %v2135
    %v2137 = vrot.slane %v2108, %v2136
    %v2138 = vlaneseq
    %v2139 = vshrl.u32 %v2138, 7
    %v2140 = vsub.s32 7, %v2139
    %v2141 = vrot.slane %v2108, %v2140
    %v2151 = vsel %vm753, %v1518, 0
    %v2154 = vsel %vm753, %v1523, 0
    %v2157 = vsel %vm753, %v1528, 0
    %v2160 = vsel %vm753, %v1533, 0
    %v2163 = vsel %vm753, %v1538, 0
    %v2166 = vsel %vm753, %v1543, 0
    %v2169 = vsel %vm753, %v1548, 0
    %v2172 = vsel %vm753, %v1553, 0
    %v2175 = vsel %vm753, %v1558, 0
    %v2178 = vsel %vm753, %v1563, 0
    %2180 = vmatprep.subr.mxu0 %v1565
    %2181 = vmatpush1.msra.mxu0 %v1564
    %2182 = vmatprep.subr.mxu0 %v1573
    %2183 = vmatpush1.msra.mxu0 %v1572
    %2184 = vmatprep.subr.mxu0 %v1581
    %2185 = vmatpush1.msra.mxu0 %v1580
    %2186 = vmatprep.subr.mxu0 %v1589
    %2187 = vmatpush1.msra.mxu0 %v1588
    %2188 = vmatprep.subr.mxu0 %v1597
    %2189 = vmatpush1.msra.mxu0 %v1596
    %2190 = vmatprep.subr.mxu0 %v1605
    %2191 = vmatpush1.msra.mxu0 %v1604
    %2192 = vmatprep.subr.mxu0 %v1613
    %2193 = vmatpush1.msra.mxu0 %v1612
    %2194 = vmatprep.subr.mxu0 %v1621
    %2195 = vmatpush1.msra.mxu0 %v1620
    %2196 = vmatprep.subr.mxu0 %v1629
    %2197 = vmatpush1.msra.mxu0 %v1628
    %2198 = vmatprep.subr.mxu0 %v1637
    %2199 = vmatpush1.msra.mxu0 %v1636
    %2200 = vmatprep.subr.mxu0 %v1645
    %2201 = vmatpush1.msra.mxu0 %v1644
    %2202 = vmatprep.subr.mxu0 %v1653
    %2203 = vmatpush1.msra.mxu0 %v1652
    %2204 = vmatprep.subr.mxu0 %v1661
    %2205 = vmatpush1.msra.mxu0 %v1660
    %2206 = vmatprep.subr.mxu0 %v1669
    %2207 = vmatpush1.msra.mxu0 %v1668
    %2208 = vmatprep.subr.mxu0 %v1677
    %2209 = vmatpush1.msra.mxu0 %v1676
    %2210 = vmatprep.subr.mxu0 %v1685
    %2211 = vmatpush1.msra.mxu0 %v1684
    %2212 = vmatprep.subr.mxu0 %v1693
    %2213 = vmatpush1.msra.mxu0 %v1692
    %2214 = vmatprep.subr.mxu0 %v1701
    %2215 = vmatpush1.msra.mxu0 %v1700
    %2216 = vmatprep.subr.mxu0 %v1709
    %2217 = vmatpush1.msra.mxu0 %v1708
    %2218 = vmatprep.subr.mxu0 %v1717
    %2219 = vmatpush1.msra.mxu0 %v1716
    %2220 = vmatprep.subr.mxu0 %v1725
    %2221 = vmatpush1.msra.mxu0 %v1724
    %2222 = vmatprep.subr.mxu0 %v1733
    %2223 = vmatpush1.msra.mxu0 %v1732
    %2224 = vmatprep.subr.mxu0 %v1741
    %2225 = vmatpush1.msra.mxu0 %v1740
    %2226 = vmatprep.subr.mxu0 %v1749
    %2227 = vmatpush1.msra.mxu0 %v1748
    %2228 = vmatprep.subr.mxu0 %v1757
    %2229 = vmatpush1.msra.mxu0 %v1756
    %2230 = vmatprep.subr.mxu0 %v1765
    %2231 = vmatpush1.msra.mxu0 %v1764
    %2232 = vmatprep.subr.mxu0 %v1773
    %2233 = vmatpush1.msra.mxu0 %v1772
    %2234 = vmatprep.subr.mxu0 %v1781
    %2235 = vmatpush1.msra.mxu0 %v1780
    %2236 = vmatprep.subr.mxu0 %v1789
    %2237 = vmatpush1.msra.mxu0 %v1788
    %2238 = vmatprep.subr.mxu0 %v1797
    %2239 = vmatpush1.msra.mxu0 %v1796
    %2240 = vmatprep.subr.mxu0 %v1805
    %2241 = vmatpush1.msra.mxu0 %v1804
    %2242 = vmatprep.subr.mxu0 %v1813
    %2243 = vmatpush1.msra.mxu0 %v1812
    %2244 = vmatprep.mubr.f32.mxu0 %v1515
    %2245 = vmatmul.mubr.f32.gmra.mrb[0].mxu0 %v1514
    %v2246 = vpop.f32.mrb[0].mxu0
    %v2247 = vadd.f32 %v2113, %v2246
    %v2248 = vpop.f32.mrb[0].mxu0
    %v2249 = vadd.f32 %v2117, %v2248
    %2250 = vmatprep.mubr.f32.mxu0 %v1520
    %2251 = vmatmul.mubr.f32.gmra.mrb[0].mxu0 %v1519
    %v2252 = vpop.f32.mrb[0].mxu0
    %v2253 = vadd.f32 %v2113, %v2252
    %v2254 = vpop.f32.mrb[0].mxu0
    %v2255 = vadd.f32 %v2117, %v2254
    %2256 = vmatprep.mubr.f32.mxu0 %v1525
    %2257 = vmatmul.mubr.f32.gmra.mrb[0].mxu0 %v1524
    %v2258 = vpop.f32.mrb[0].mxu0
    %v2259 = vadd.f32 %v2113, %v2258
    %v2260 = vpop.f32.mrb[0].mxu0
    %v2261 = vadd.f32 %v2117, %v2260
    %2262 = vmatprep.mubr.f32.mxu0 %v1530
    %2263 = vmatmul.mubr.f32.gmra.mrb[0].mxu0 %v1529
    %v2264 = vpop.f32.mrb[0].mxu0
    %v2265 = vadd.f32 %v2113, %v2264
    %v2266 = vpop.f32.mrb[0].mxu0
    %v2267 = vadd.f32 %v2117, %v2266
    %2268 = vmatprep.mubr.f32.mxu0 %v1535
    %2269 = vmatmul.mubr.f32.gmra.mrb[0].mxu0 %v1534
    %v2270 = vpop.f32.mrb[0].mxu0
    %v2271 = vadd.f32 %v2113, %v2270
    %v2272 = vpop.f32.mrb[0].mxu0
    %v2273 = vadd.f32 %v2117, %v2272
    %2274 = vmatprep.mubr.f32.mxu0 %v1540
    %2275 = vmatmul.mubr.f32.gmra.mrb[0].mxu0 %v1539
    %v2276 = vpop.f32.mrb[0].mxu0
    %v2277 = vadd.f32 %v2113, %v2276
    %v2278 = vpop.f32.mrb[0].mxu0
    %v2279 = vadd.f32 %v2117, %v2278
    %2280 = vmatprep.mubr.f32.mxu0 %v1545
    %2281 = vmatmul.mubr.f32.gmra.mrb[0].mxu0 %v1544
    %v2282 = vpop.f32.mrb[0].mxu0
    %v2283 = vadd.f32 %v2113, %v2282
    %v2284 = vpop.f32.mrb[0].mxu0
    %v2285 = vadd.f32 %v2117, %v2284
    %2286 = vmatprep.mubr.f32.mxu0 %v1550
    %2287 = vmatmul.mubr.f32.gmra.mrb[0].mxu0 %v1549
    %v2288 = vpop.f32.mrb[0].mxu0
    %v2289 = vadd.f32 %v2113, %v2288
    %v2290 = vpop.f32.mrb[0].mxu0
    %v2291 = vadd.f32 %v2117, %v2290
    %2292 = vmatprep.mubr.f32.mxu0 %v1555
    %2293 = vmatmul.mubr.f32.gmra.mrb[0].mxu0 %v1554
    %v2294 = vpop.f32.mrb[0].mxu0
    %v2295 = vadd.f32 %v2113, %v2294
    %v2296 = vpop.f32.mrb[0].mxu0
    %v2297 = vadd.f32 %v2117, %v2296
    %2298 = vmatprep.mubr.f32.mxu0 %v1560
    %2299 = vmatmul.mubr.f32.gmra.mrb[0].mxu0 %v1559
    %v2300 = vpop.f32.mrb[0].mxu0
    %v2301 = vadd.f32 %v2113, %v2300
    %v2302 = vpop.f32.mrb[0].mxu0
    %v2303 = vadd.f32 %v2117, %v2302
    %2304 = vdwg.mxu0
    %2305 = vmatprep.subr.mxu0 %v1821
    %2306 = vmatpush1.msra.mxu0 %v1820
    %2307 = vmatprep.subr.mxu0 %v1829
    %2308 = vmatpush1.msra.mxu0 %v1828
    %2309 = vmatprep.subr.mxu0 %v1837
    %2310 = vmatpush1.msra.mxu0 %v1836
    %2311 = vmatprep.subr.mxu0 %v1845
    %2312 = vmatpush1.msra.mxu0 %v1844
    %2313 = vmatprep.subr.mxu0 %v1853
    %2314 = vmatpush1.msra.mxu0 %v1852
    %2315 = vmatprep.subr.mxu0 %v1861
    %2316 = vmatpush1.msra.mxu0 %v1860
    %2317 = vmatprep.subr.mxu0 %v1869
    %2318 = vmatpush1.msra.mxu0 %v1868
    %2319 = vmatprep.subr.mxu0 %v1877
    %2320 = vmatpush1.msra.mxu0 %v1876
    %2321 = vmatprep.subr.mxu0 %v1885
    %2322 = vmatpush1.msra.mxu0 %v1884
    %2323 = vmatprep.subr.mxu0 %v1893
    %2324 = vmatpush1.msra.mxu0 %v1892
    %2325 = vmatprep.subr.mxu0 %v1901
    %2326 = vmatpush1.msra.mxu0 %v1900
    %2327 = vmatprep.subr.mxu0 %v1909
    %2328 = vmatpush1.msra.mxu0 %v1908
    %2329 = vmatprep.subr.mxu0 %v1917
    %2330 = vmatpush1.msra.mxu0 %v1916
    %2331 = vmatprep.subr.mxu0 %v1925
    %2332 = vmatpush1.msra.mxu0 %v1924
    %2333 = vmatprep.subr.mxu0 %v1933
    %2334 = vmatpush1.msra.mxu0 %v1932
    %2335 = vmatprep.subr.mxu0 %v1941
    %2336 = vmatpush1.msra.mxu0 %v1940
    %2337 = vmatprep.subr.mxu0 %v1949
    %2338 = vmatpush1.msra.mxu0 %v1948
    %2339 = vmatprep.subr.mxu0 %v1957
    %2340 = vmatpush1.msra.mxu0 %v1956
    %2341 = vmatprep.subr.mxu0 %v1965
    %2342 = vmatpush1.msra.mxu0 %v1964
    %2343 = vmatprep.subr.mxu0 %v1973
    %2344 = vmatpush1.msra.mxu0 %v1972
    %2345 = vmatprep.subr.mxu0 %v1981
    %2346 = vmatpush1.msra.mxu0 %v1980
    %2347 = vmatprep.subr.mxu0 %v1989
    %2348 = vmatpush1.msra.mxu0 %v1988
    %2349 = vmatprep.subr.mxu0 %v1997
    %2350 = vmatpush1.msra.mxu0 %v1996
    %2351 = vmatprep.subr.mxu0 %v2005
    %2352 = vmatpush1.msra.mxu0 %v2004
    %2353 = vmatprep.subr.mxu0 %v2013
    %2354 = vmatpush1.msra.mxu0 %v2012
    %2355 = vmatprep.subr.mxu0 %v2021
    %2356 = vmatpush1.msra.mxu0 %v2020
    %2357 = vmatprep.subr.mxu0 %v2029
    %2358 = vmatpush1.msra.mxu0 %v2028
    %2359 = vmatprep.subr.mxu0 %v2037
    %2360 = vmatpush1.msra.mxu0 %v2036
    %2361 = vmatprep.subr.mxu0 %v2045
    %2362 = vmatpush1.msra.mxu0 %v2044
    %2363 = vmatprep.subr.mxu0 %v2053
    %2364 = vmatpush1.msra.mxu0 %v2052
    %2365 = vmatprep.subr.mxu0 %v2061
    %2366 = vmatpush1.msra.mxu0 %v2060
    %2367 = vmatprep.subr.mxu0 %v2069
    %2368 = vmatpush1.msra.mxu0 %v2068
    %2369 = vmatprep.mubr.f32.mxu0 %v1517
    %2370 = vmatmul.mubr.f32.gmra.mrb[0].mxu0 %v1516
    %v2371 = vpop.f32.mrb[0].mxu0
    %v2372 = vadd.f32 %v2247, %v2371
    %v2373 = vpop.f32.mrb[0].mxu0
    %v2374 = vadd.f32 %v2249, %v2373
    %2375 = vmatprep.mubr.f32.mxu0 %v1522
    %2376 = vmatmul.mubr.f32.gmra.mrb[0].mxu0 %v1521
    %v2377 = vpop.f32.mrb[0].mxu0
    %v2378 = vadd.f32 %v2253, %v2377
    %v2379 = vpop.f32.mrb[0].mxu0
    %v2380 = vadd.f32 %v2255, %v2379
    %2381 = vmatprep.mubr.f32.mxu0 %v1527
    %2382 = vmatmul.mubr.f32.gmra.mrb[0].mxu0 %v1526
    %v2383 = vpop.f32.mrb[0].mxu0
    %v2384 = vadd.f32 %v2259, %v2383
    %v2385 = vpop.f32.mrb[0].mxu0
    %v2386 = vadd.f32 %v2261, %v2385
    %2387 = vmatprep.mubr.f32.mxu0 %v1532
    %2388 = vmatmul.mubr.f32.gmra.mrb[0].mxu0 %v1531
    %v2389 = vpop.f32.mrb[0].mxu0
    %v2390 = vadd.f32 %v2265, %v2389
    %v2391 = vpop.f32.mrb[0].mxu0
    %v2392 = vadd.f32 %v2267, %v2391
    %2393 = vmatprep.mubr.f32.mxu0 %v1537
    %2394 = vmatmul.mubr.f32.gmra.mrb[0].mxu0 %v1536
    %v2395 = vpop.f32.mrb[0].mxu0
    %v2396 = vadd.f32 %v2271, %v2395
    %v2397 = vpop.f32.mrb[0].mxu0
    %v2398 = vadd.f32 %v2273, %v2397
    %2399 = vmatprep.mubr.f32.mxu0 %v1542
    %2400 = vmatmul.mubr.f32.gmra.mrb[0].mxu0 %v1541
    %v2401 = vpop.f32.mrb[0].mxu0
    %v2402 = vadd.f32 %v2277, %v2401
    %v2403 = vpop.f32.mrb[0].mxu0
    %v2404 = vadd.f32 %v2279, %v2403
    %2405 = vmatprep.mubr.f32.mxu0 %v1547
    %2406 = vmatmul.mubr.f32.gmra.mrb[0].mxu0 %v1546
    %v2407 = vpop.f32.mrb[0].mxu0
    %v2408 = vadd.f32 %v2283, %v2407
    %v2409 = vpop.f32.mrb[0].mxu0
    %v2410 = vadd.f32 %v2285, %v2409
    %2411 = vmatprep.mubr.f32.mxu0 %v1552
    %2412 = vmatmul.mubr.f32.gmra.mrb[0].mxu0 %v1551
    %v2413 = vpop.f32.mrb[0].mxu0
    %v2414 = vadd.f32 %v2289, %v2413
    %v2415 = vpop.f32.mrb[0].mxu0
    %v2416 = vadd.f32 %v2291, %v2415
    %2417 = vmatprep.mubr.f32.mxu0 %v1557
    %2418 = vmatmul.mubr.f32.gmra.mrb[0].mxu0 %v1556
    %v2419 = vpop.f32.mrb[0].mxu0
    %v2420 = vadd.f32 %v2295, %v2419
    %v2421 = vpop.f32.mrb[0].mxu0
    %v2422 = vadd.f32 %v2297, %v2421
    %2423 = vmatprep.mubr.f32.mxu0 %v1562
    %2424 = vmatmul.mubr.f32.gmra.mrb[0].mxu0 %v1561
    %v2425 = vpop.f32.mrb[0].mxu0
    %v2426 = vadd.f32 %v2301, %v2425
    %v2427 = vpop.f32.mrb[0].mxu0
    %v2428 = vadd.f32 %v2303, %v2427
    %2429 = vdwg.mxu0
    %2430 = vmatprep.subr.mxu0 %v2077
    %2431 = vmatpush1.msra.mxu0 %v2076
    %2432 = vmatprep.subr.mxu0 %v2085
    %2433 = vmatpush1.msra.mxu0 %v2084
    %2434 = vmatprep.subr.mxu0 %v2093
    %2435 = vmatpush1.msra.mxu0 %v2092
    %2436 = vmatprep.subr.mxu0 %v2101
    %2437 = vmatpush1.msra.mxu0 %v2100
    %2438 = vmatprep.subr.mxu0 0.0
    %2439 = vmatpush1.msra.mxu0 0.0
    %2440 = vmatprep.subr.mxu0 0.0
    %2441 = vmatpush1.msra.mxu0 0.0
    %2442 = vmatprep.subr.mxu0 0.0
    %2443 = vmatpush1.msra.mxu0 0.0
    %2444 = vmatprep.subr.mxu0 0.0
    %2445 = vmatpush1.msra.mxu0 0.0
    %2446 = vmatprep.subr.mxu0 0.0
    %2447 = vmatpush1.msra.mxu0 0.0
    %2448 = vmatprep.subr.mxu0 0.0
    %2449 = vmatpush1.msra.mxu0 0.0
    %2450 = vmatprep.subr.mxu0 0.0
    %2451 = vmatpush1.msra.mxu0 0.0
    %2452 = vmatprep.subr.mxu0 0.0
    %2453 = vmatpush1.msra.mxu0 0.0
    %2454 = vmatprep.subr.mxu0 0.0
    %2455 = vmatpush1.msra.mxu0 0.0
    %2456 = vmatprep.subr.mxu0 0.0
    %2457 = vmatpush1.msra.mxu0 0.0
    %2458 = vmatprep.subr.mxu0 0.0
    %2459 = vmatpush1.msra.mxu0 0.0
    %2460 = vmatprep.subr.mxu0 0.0
    %2461 = vmatpush1.msra.mxu0 0.0
    %2462 = vmatprep.subr.mxu0 0.0
    %2463 = vmatpush1.msra.mxu0 0.0
    %2464 = vmatprep.subr.mxu0 0.0
    %2465 = vmatpush1.msra.mxu0 0.0
    %2466 = vmatprep.subr.mxu0 0.0
    %2467 = vmatpush1.msra.mxu0 0.0
    %2468 = vmatprep.subr.mxu0 0.0
    %2469 = vmatpush1.msra.mxu0 0.0
    %2470 = vmatprep.subr.mxu0 0.0
    %2471 = vmatpush1.msra.mxu0 0.0
    %2472 = vmatprep.subr.mxu0 0.0
    %2473 = vmatpush1.msra.mxu0 0.0
    %2474 = vmatprep.subr.mxu0 0.0
    %2475 = vmatpush1.msra.mxu0 0.0
    %2476 = vmatprep.subr.mxu0 0.0
    %2477 = vmatpush1.msra.mxu0 0.0
    %2478 = vmatprep.subr.mxu0 0.0
    %2479 = vmatpush1.msra.mxu0 0.0
    %2480 = vmatprep.subr.mxu0 0.0
    %2481 = vmatpush1.msra.mxu0 0.0
    %2482 = vmatprep.subr.mxu0 0.0
    %2483 = vmatpush1.msra.mxu0 0.0
    %2484 = vmatprep.subr.mxu0 0.0
    %2485 = vmatpush1.msra.mxu0 0.0
    %2486 = vmatprep.subr.mxu0 0.0
    %2487 = vmatpush1.msra.mxu0 0.0
    %2488 = vmatprep.subr.mxu0 0.0
    %2489 = vmatpush1.msra.mxu0 0.0
    %2490 = vmatprep.subr.mxu0 0.0
    %2491 = vmatpush1.msra.mxu0 0.0
    %2492 = vmatprep.subr.mxu0 0.0
    %2493 = vmatpush1.msra.mxu0 0.0
    %2494 = vmatprep.mubr.f32.mxu0 0.0
    %2495 = vmatmul.mubr.f32.gmra.mrb[0].mxu0 %v2151
    %v2496 = vpop.f32.mrb[0].mxu0
    %v2497 = vadd.f32 %v2372, %v2496
    %v2498 = vpop.f32.mrb[0].mxu0
    %v2499 = vadd.f32 %v2374, %v2498
    %2500 = vmatprep.mubr.f32.mxu0 0.0
    %2501 = vmatmul.mubr.f32.gmra.mrb[0].mxu0 %v2154
    %v2502 = vpop.f32.mrb[0].mxu0
    %v2503 = vadd.f32 %v2378, %v2502
    %v2504 = vpop.f32.mrb[0].mxu0
    %v2505 = vadd.f32 %v2380, %v2504
    %2506 = vmatprep.mubr.f32.mxu0 0.0
    %2507 = vmatmul.mubr.f32.gmra.mrb[0].mxu0 %v2157
    %v2508 = vpop.f32.mrb[0].mxu0
    %v2509 = vadd.f32 %v2384, %v2508
    %v2510 = vpop.f32.mrb[0].mxu0
    %v2511 = vadd.f32 %v2386, %v2510
    %2512 = vmatprep.mubr.f32.mxu0 0.0
    %2513 = vmatmul.mubr.f32.gmra.mrb[0].mxu0 %v2160
    %v2514 = vpop.f32.mrb[0].mxu0
    %v2515 = vadd.f32 %v2390, %v2514
    %v2516 = vpop.f32.mrb[0].mxu0
    %v2517 = vadd.f32 %v2392, %v2516
    %2518 = vmatprep.mubr.f32.mxu0 0.0
    %2519 = vmatmul.mubr.f32.gmra.mrb[0].mxu0 %v2163
    %v2520 = vpop.f32.mrb[0].mxu0
    %v2521 = vadd.f32 %v2396, %v2520
    %v2522 = vpop.f32.mrb[0].mxu0
    %v2523 = vadd.f32 %v2398, %v2522
    %2524 = vmatprep.mubr.f32.mxu0 0.0
    %2525 = vmatmul.mubr.f32.gmra.mrb[0].mxu0 %v2166
    %v2526 = vpop.f32.mrb[0].mxu0
    %v2527 = vadd.f32 %v2402, %v2526
    %v2528 = vpop.f32.mrb[0].mxu0
    %v2529 = vadd.f32 %v2404, %v2528
    %2530 = vmatprep.mubr.f32.mxu0 0.0
    %2531 = vmatmul.mubr.f32.gmra.mrb[0].mxu0 %v2169
    %v2532 = vpop.f32.mrb[0].mxu0
    %v2533 = vadd.f32 %v2408, %v2532
    %v2534 = vpop.f32.mrb[0].mxu0
    %v2535 = vadd.f32 %v2410, %v2534
    %2536 = vmatprep.mubr.f32.mxu0 0.0
    %2537 = vmatmul.mubr.f32.gmra.mrb[0].mxu0 %v2172
    %v2538 = vpop.f32.mrb[0].mxu0
    %v2539 = vadd.f32 %v2414, %v2538
    %v2540 = vpop.f32.mrb[0].mxu0
    %v2541 = vadd.f32 %v2416, %v2540
    %2542 = vmatprep.mubr.f32.mxu0 0.0
    %2543 = vmatmul.mubr.f32.gmra.mrb[0].mxu0 %v2175
    %v2544 = vpop.f32.mrb[0].mxu0
    %v2545 = vadd.f32 %v2420, %v2544
    %v2546 = vpop.f32.mrb[0].mxu0
    %v2547 = vadd.f32 %v2422, %v2546
    %2548 = vmatprep.mubr.f32.mxu0 0.0
    %2549 = vmatmul.mubr.f32.gmra.mrb[0].mxu0 %v2178
    %v2550 = vpop.f32.mrb[0].mxu0
    %v2551 = vadd.f32 %v2426, %v2550
    %v2552 = vpop.f32.mrb[0].mxu0
    %v2553 = vadd.f32 %v2428, %v2552
    %2554 = vdwg.mxu0
    %2555 = vmatprep.subr.mxu0 %v1567
    %2556 = vmatpush1.msra.mxu0 %v1566
    %2557 = vmatprep.subr.mxu0 %v1575
    %2558 = vmatpush1.msra.mxu0 %v1574
    %2559 = vmatprep.subr.mxu0 %v1583
    %2560 = vmatpush1.msra.mxu0 %v1582
    %2561 = vmatprep.subr.mxu0 %v1591
    %2562 = vmatpush1.msra.mxu0 %v1590
    %2563 = vmatprep.subr.mxu0 %v1599
    %2564 = vmatpush1.msra.mxu0 %v1598
    %2565 = vmatprep.subr.mxu0 %v1607
    %2566 = vmatpush1.msra.mxu0 %v1606
    %2567 = vmatprep.subr.mxu0 %v1615
    %2568 = vmatpush1.msra.mxu0 %v1614
    %2569 = vmatprep.subr.mxu0 %v1623
    %2570 = vmatpush1.msra.mxu0 %v1622
    %2571 = vmatprep.subr.mxu0 %v1631
    %2572 = vmatpush1.msra.mxu0 %v1630
    %2573 = vmatprep.subr.mxu0 %v1639
    %2574 = vmatpush1.msra.mxu0 %v1638
    %2575 = vmatprep.subr.mxu0 %v1647
    %2576 = vmatpush1.msra.mxu0 %v1646
    %2577 = vmatprep.subr.mxu0 %v1655
    %2578 = vmatpush1.msra.mxu0 %v1654
    %2579 = vmatprep.subr.mxu0 %v1663
    %2580 = vmatpush1.msra.mxu0 %v1662
    %2581 = vmatprep.subr.mxu0 %v1671
    %2582 = vmatpush1.msra.mxu0 %v1670
    %2583 = vmatprep.subr.mxu0 %v1679
    %2584 = vmatpush1.msra.mxu0 %v1678
    %2585 = vmatprep.subr.mxu0 %v1687
    %2586 = vmatpush1.msra.mxu0 %v1686
    %2587 = vmatprep.subr.mxu0 %v1695
    %2588 = vmatpush1.msra.mxu0 %v1694
    %2589 = vmatprep.subr.mxu0 %v1703
    %2590 = vmatpush1.msra.mxu0 %v1702
    %2591 = vmatprep.subr.mxu0 %v1711
    %2592 = vmatpush1.msra.mxu0 %v1710
    %2593 = vmatprep.subr.mxu0 %v1719
    %2594 = vmatpush1.msra.mxu0 %v1718
    %2595 = vmatprep.subr.mxu0 %v1727
    %2596 = vmatpush1.msra.mxu0 %v1726
    %2597 = vmatprep.subr.mxu0 %v1735
    %2598 = vmatpush1.msra.mxu0 %v1734
    %2599 = vmatprep.subr.mxu0 %v1743
    %2600 = vmatpush1.msra.mxu0 %v1742
    %2601 = vmatprep.subr.mxu0 %v1751
    %2602 = vmatpush1.msra.mxu0 %v1750
    %2603 = vmatprep.subr.mxu0 %v1759
    %2604 = vmatpush1.msra.mxu0 %v1758
    %2605 = vmatprep.subr.mxu0 %v1767
    %2606 = vmatpush1.msra.mxu0 %v1766
    %2607 = vmatprep.subr.mxu0 %v1775
    %2608 = vmatpush1.msra.mxu0 %v1774
    %2609 = vmatprep.subr.mxu0 %v1783
    %2610 = vmatpush1.msra.mxu0 %v1782
    %2611 = vmatprep.subr.mxu0 %v1791
    %2612 = vmatpush1.msra.mxu0 %v1790
    %2613 = vmatprep.subr.mxu0 %v1799
    %2614 = vmatpush1.msra.mxu0 %v1798
    %2615 = vmatprep.subr.mxu0 %v1807
    %2616 = vmatpush1.msra.mxu0 %v1806
    %2617 = vmatprep.subr.mxu0 %v1815
    %2618 = vmatpush1.msra.mxu0 %v1814
    %2619 = vmatprep.mubr.f32.mxu0 %v1515
    %2620 = vmatmul.mubr.f32.gmra.mrb[0].mxu0 %v1514
    %v2621 = vpop.f32.mrb[0].mxu0
    %v2622 = vadd.f32 %v2121, %v2621
    %v2623 = vpop.f32.mrb[0].mxu0
    %v2624 = vadd.f32 %v2125, %v2623
    %2625 = vmatprep.mubr.f32.mxu0 %v1520
    %2626 = vmatmul.mubr.f32.gmra.mrb[0].mxu0 %v1519
    %v2627 = vpop.f32.mrb[0].mxu0
    %v2628 = vadd.f32 %v2121, %v2627
    %v2629 = vpop.f32.mrb[0].mxu0
    %v2630 = vadd.f32 %v2125, %v2629
    %2631 = vmatprep.mubr.f32.mxu0 %v1525
    %2632 = vmatmul.mubr.f32.gmra.mrb[0].mxu0 %v1524
    %v2633 = vpop.f32.mrb[0].mxu0
    %v2634 = vadd.f32 %v2121, %v2633
    %v2635 = vpop.f32.mrb[0].mxu0
    %v2636 = vadd.f32 %v2125, %v2635
    %2637 = vmatprep.mubr.f32.mxu0 %v1530
    %2638 = vmatmul.mubr.f32.gmra.mrb[0].mxu0 %v1529
    %v2639 = vpop.f32.mrb[0].mxu0
    %v2640 = vadd.f32 %v2121, %v2639
    %v2641 = vpop.f32.mrb[0].mxu0
    %v2642 = vadd.f32 %v2125, %v2641
    %2643 = vmatprep.mubr.f32.mxu0 %v1535
    %2644 = vmatmul.mubr.f32.gmra.mrb[0].mxu0 %v1534
    %v2645 = vpop.f32.mrb[0].mxu0
    %v2646 = vadd.f32 %v2121, %v2645
    %v2647 = vpop.f32.mrb[0].mxu0
    %v2648 = vadd.f32 %v2125, %v2647
    %2649 = vmatprep.mubr.f32.mxu0 %v1540
    %2650 = vmatmul.mubr.f32.gmra.mrb[0].mxu0 %v1539
    %v2651 = vpop.f32.mrb[0].mxu0
    %v2652 = vadd.f32 %v2121, %v2651
    %v2653 = vpop.f32.mrb[0].mxu0
    %v2654 = vadd.f32 %v2125, %v2653
    %2655 = vmatprep.mubr.f32.mxu0 %v1545
    %2656 = vmatmul.mubr.f32.gmra.mrb[0].mxu0 %v1544
    %v2657 = vpop.f32.mrb[0].mxu0
    %v2658 = vadd.f32 %v2121, %v2657
    %v2659 = vpop.f32.mrb[0].mxu0
    %v2660 = vadd.f32 %v2125, %v2659
    %2661 = vmatprep.mubr.f32.mxu0 %v1550
    %2662 = vmatmul.mubr.f32.gmra.mrb[0].mxu0 %v1549
    %v2663 = vpop.f32.mrb[0].mxu0
    %v2664 = vadd.f32 %v2121, %v2663
    %v2665 = vpop.f32.mrb[0].mxu0
    %v2666 = vadd.f32 %v2125, %v2665
    %2667 = vmatprep.mubr.f32.mxu0 %v1555
    %2668 = vmatmul.mubr.f32.gmra.mrb[0].mxu0 %v1554
    %v2669 = vpop.f32.mrb[0].mxu0
    %v2670 = vadd.f32 %v2121, %v2669
    %v2671 = vpop.f32.mrb[0].mxu0
    %v2672 = vadd.f32 %v2125, %v2671
    %2673 = vmatprep.mubr.f32.mxu0 %v1560
    %2674 = vmatmul.mubr.f32.gmra.mrb[0].mxu0 %v1559
    %v2675 = vpop.f32.mrb[0].mxu0
    %v2676 = vadd.f32 %v2121, %v2675
    %v2677 = vpop.f32.mrb[0].mxu0
    %v2678 = vadd.f32 %v2125, %v2677
    %2679 = vdwg.mxu0
    %2680 = vmatprep.subr.mxu0 %v1823
    %2681 = vmatpush1.msra.mxu0 %v1822
    %2682 = vmatprep.subr.mxu0 %v1831
    %2683 = vmatpush1.msra.mxu0 %v1830
    %2684 = vmatprep.subr.mxu0 %v1839
    %2685 = vmatpush1.msra.mxu0 %v1838
    %2686 = vmatprep.subr.mxu0 %v1847
    %2687 = vmatpush1.msra.mxu0 %v1846
    %2688 = vmatprep.subr.mxu0 %v1855
    %2689 = vmatpush1.msra.mxu0 %v1854
    %2690 = vmatprep.subr.mxu0 %v1863
    %2691 = vmatpush1.msra.mxu0 %v1862
    %2692 = vmatprep.subr.mxu0 %v1871
    %2693 = vmatpush1.msra.mxu0 %v1870
    %2694 = vmatprep.subr.mxu0 %v1879
    %2695 = vmatpush1.msra.mxu0 %v1878
    %2696 = vmatprep.subr.mxu0 %v1887
    %2697 = vmatpush1.msra.mxu0 %v1886
    %2698 = vmatprep.subr.mxu0 %v1895
    %2699 = vmatpush1.msra.mxu0 %v1894
    %2700 = vmatprep.subr.mxu0 %v1903
    %2701 = vmatpush1.msra.mxu0 %v1902
    %2702 = vmatprep.subr.mxu0 %v1911
    %2703 = vmatpush1.msra.mxu0 %v1910
    %2704 = vmatprep.subr.mxu0 %v1919
    %2705 = vmatpush1.msra.mxu0 %v1918
    %2706 = vmatprep.subr.mxu0 %v1927
    %2707 = vmatpush1.msra.mxu0 %v1926
    %2708 = vmatprep.subr.mxu0 %v1935
    %2709 = vmatpush1.msra.mxu0 %v1934
    %2710 = vmatprep.subr.mxu0 %v1943
    %2711 = vmatpush1.msra.mxu0 %v1942
    %2712 = vmatprep.subr.mxu0 %v1951
    %2713 = vmatpush1.msra.mxu0 %v1950
    %2714 = vmatprep.subr.mxu0 %v1959
    %2715 = vmatpush1.msra.mxu0 %v1958
    %2716 = vmatprep.subr.mxu0 %v1967
    %2717 = vmatpush1.msra.mxu0 %v1966
    %2718 = vmatprep.subr.mxu0 %v1975
    %2719 = vmatpush1.msra.mxu0 %v1974
    %2720 = vmatprep.subr.mxu0 %v1983
    %2721 = vmatpush1.msra.mxu0 %v1982
    %2722 = vmatprep.subr.mxu0 %v1991
    %2723 = vmatpush1.msra.mxu0 %v1990
    %2724 = vmatprep.subr.mxu0 %v1999
    %2725 = vmatpush1.msra.mxu0 %v1998
    %2726 = vmatprep.subr.mxu0 %v2007
    %2727 = vmatpush1.msra.mxu0 %v2006
    %2728 = vmatprep.subr.mxu0 %v2015
    %2729 = vmatpush1.msra.mxu0 %v2014
    %2730 = vmatprep.subr.mxu0 %v2023
    %2731 = vmatpush1.msra.mxu0 %v2022
    %2732 = vmatprep.subr.mxu0 %v2031
    %2733 = vmatpush1.msra.mxu0 %v2030
    %2734 = vmatprep.subr.mxu0 %v2039
    %2735 = vmatpush1.msra.mxu0 %v2038
    %2736 = vmatprep.subr.mxu0 %v2047
    %2737 = vmatpush1.msra.mxu0 %v2046
    %2738 = vmatprep.subr.mxu0 %v2055
    %2739 = vmatpush1.msra.mxu0 %v2054
    %2740 = vmatprep.subr.mxu0 %v2063
    %2741 = vmatpush1.msra.mxu0 %v2062
    %2742 = vmatprep.subr.mxu0 %v2071
    %2743 = vmatpush1.msra.mxu0 %v2070
    %2744 = vmatprep.mubr.f32.mxu0 %v1517
    %2745 = vmatmul.mubr.f32.gmra.mrb[0].mxu0 %v1516
    %v2746 = vpop.f32.mrb[0].mxu0
    %v2747 = vadd.f32 %v2622, %v2746
    %v2748 = vpop.f32.mrb[0].mxu0
    %v2749 = vadd.f32 %v2624, %v2748
    %2750 = vmatprep.mubr.f32.mxu0 %v1522
    %2751 = vmatmul.mubr.f32.gmra.mrb[0].mxu0 %v1521
    %v2752 = vpop.f32.mrb[0].mxu0
    %v2753 = vadd.f32 %v2628, %v2752
    %v2754 = vpop.f32.mrb[0].mxu0
    %v2755 = vadd.f32 %v2630, %v2754
    %2756 = vmatprep.mubr.f32.mxu0 %v1527
    %2757 = vmatmul.mubr.f32.gmra.mrb[0].mxu0 %v1526
    %v2758 = vpop.f32.mrb[0].mxu0
    %v2759 = vadd.f32 %v2634, %v2758
    %v2760 = vpop.f32.mrb[0].mxu0
    %v2761 = vadd.f32 %v2636, %v2760
    %2762 = vmatprep.mubr.f32.mxu0 %v1532
    %2763 = vmatmul.mubr.f32.gmra.mrb[0].mxu0 %v1531
    %v2764 = vpop.f32.mrb[0].mxu0
    %v2765 = vadd.f32 %v2640, %v2764
    %v2766 = vpop.f32.mrb[0].mxu0
    %v2767 = vadd.f32 %v2642, %v2766
    %2768 = vmatprep.mubr.f32.mxu0 %v1537
    %2769 = vmatmul.mubr.f32.gmra.mrb[0].mxu0 %v1536
    %v2770 = vpop.f32.mrb[0].mxu0
    %v2771 = vadd.f32 %v2646, %v2770
    %v2772 = vpop.f32.mrb[0].mxu0
    %v2773 = vadd.f32 %v2648, %v2772
    %2774 = vmatprep.mubr.f32.mxu0 %v1542
    %2775 = vmatmul.mubr.f32.gmra.mrb[0].mxu0 %v1541
    %v2776 = vpop.f32.mrb[0].mxu0
    %v2777 = vadd.f32 %v2652, %v2776
    %v2778 = vpop.f32.mrb[0].mxu0
    %v2779 = vadd.f32 %v2654, %v2778
    %2780 = vmatprep.mubr.f32.mxu0 %v1547
    %2781 = vmatmul.mubr.f32.gmra.mrb[0].mxu0 %v1546
    %v2782 = vpop.f32.mrb[0].mxu0
    %v2783 = vadd.f32 %v2658, %v2782
    %v2784 = vpop.f32.mrb[0].mxu0
    %v2785 = vadd.f32 %v2660, %v2784
    %2786 = vmatprep.mubr.f32.mxu0 %v1552
    %2787 = vmatmul.mubr.f32.gmra.mrb[0].mxu0 %v1551
    %v2788 = vpop.f32.mrb[0].mxu0
    %v2789 = vadd.f32 %v2664, %v2788
    %v2790 = vpop.f32.mrb[0].mxu0
    %v2791 = vadd.f32 %v2666, %v2790
    %2792 = vmatprep.mubr.f32.mxu0 %v1557
    %2793 = vmatmul.mubr.f32.gmra.mrb[0].mxu0 %v1556
    %v2794 = vpop.f32.mrb[0].mxu0
    %v2795 = vadd.f32 %v2670, %v2794
    %v2796 = vpop.f32.mrb[0].mxu0
    %v2797 = vadd.f32 %v2672, %v2796
    %2798 = vmatprep.mubr.f32.mxu0 %v1562
    %2799 = vmatmul.mubr.f32.gmra.mrb[0].mxu0 %v1561
    %v2800 = vpop.f32.mrb[0].mxu0
    %v2801 = vadd.f32 %v2676, %v2800
    %v2802 = vpop.f32.mrb[0].mxu0
    %v2803 = vadd.f32 %v2678, %v2802
    %2804 = vdwg.mxu0
    %2805 = vmatprep.subr.mxu0 %v2079
    %2806 = vmatpush1.msra.mxu0 %v2078
    %2807 = vmatprep.subr.mxu0 %v2087
    %2808 = vmatpush1.msra.mxu0 %v2086
    %2809 = vmatprep.subr.mxu0 %v2095
    %2810 = vmatpush1.msra.mxu0 %v2094
    %2811 = vmatprep.subr.mxu0 %v2103
    %2812 = vmatpush1.msra.mxu0 %v2102
    %2813 = vmatprep.subr.mxu0 0.0
    %2814 = vmatpush1.msra.mxu0 0.0
    %2815 = vmatprep.subr.mxu0 0.0
    %2816 = vmatpush1.msra.mxu0 0.0
    %2817 = vmatprep.subr.mxu0 0.0
    %2818 = vmatpush1.msra.mxu0 0.0
    %2819 = vmatprep.subr.mxu0 0.0
    %2820 = vmatpush1.msra.mxu0 0.0
    %2821 = vmatprep.subr.mxu0 0.0
    %2822 = vmatpush1.msra.mxu0 0.0
    %2823 = vmatprep.subr.mxu0 0.0
    %2824 = vmatpush1.msra.mxu0 0.0
    %2825 = vmatprep.subr.mxu0 0.0
    %2826 = vmatpush1.msra.mxu0 0.0
    %2827 = vmatprep.subr.mxu0 0.0
    %2828 = vmatpush1.msra.mxu0 0.0
    %2829 = vmatprep.subr.mxu0 0.0
    %2830 = vmatpush1.msra.mxu0 0.0
    %2831 = vmatprep.subr.mxu0 0.0
    %2832 = vmatpush1.msra.mxu0 0.0
    %2833 = vmatprep.subr.mxu0 0.0
    %2834 = vmatpush1.msra.mxu0 0.0
    %2835 = vmatprep.subr.mxu0 0.0
    %2836 = vmatpush1.msra.mxu0 0.0
    %2837 = vmatprep.subr.mxu0 0.0
    %2838 = vmatpush1.msra.mxu0 0.0
    %2839 = vmatprep.subr.mxu0 0.0
    %2840 = vmatpush1.msra.mxu0 0.0
    %2841 = vmatprep.subr.mxu0 0.0
    %2842 = vmatpush1.msra.mxu0 0.0
    %2843 = vmatprep.subr.mxu0 0.0
    %2844 = vmatpush1.msra.mxu0 0.0
    %2845 = vmatprep.subr.mxu0 0.0
    %2846 = vmatpush1.msra.mxu0 0.0
    %2847 = vmatprep.subr.mxu0 0.0
    %2848 = vmatpush1.msra.mxu0 0.0
    %2849 = vmatprep.subr.mxu0 0.0
    %2850 = vmatpush1.msra.mxu0 0.0
    %2851 = vmatprep.subr.mxu0 0.0
    %2852 = vmatpush1.msra.mxu0 0.0
    %2853 = vmatprep.subr.mxu0 0.0
    %2854 = vmatpush1.msra.mxu0 0.0
    %2855 = vmatprep.subr.mxu0 0.0
    %2856 = vmatpush1.msra.mxu0 0.0
    %2857 = vmatprep.subr.mxu0 0.0
    %2858 = vmatpush1.msra.mxu0 0.0
    %2859 = vmatprep.subr.mxu0 0.0
    %2860 = vmatpush1.msra.mxu0 0.0
    %2861 = vmatprep.subr.mxu0 0.0
    %2862 = vmatpush1.msra.mxu0 0.0
    %2863 = vmatprep.subr.mxu0 0.0
    %2864 = vmatpush1.msra.mxu0 0.0
    %2865 = vmatprep.subr.mxu0 0.0
    %2866 = vmatpush1.msra.mxu0 0.0
    %2867 = vmatprep.subr.mxu0 0.0
    %2868 = vmatpush1.msra.mxu0 0.0
    %2869 = vmatprep.mubr.f32.mxu0 0.0
    %2870 = vmatmul.mubr.f32.gmra.mrb[0].mxu0 %v2151
    %v2871 = vpop.f32.mrb[0].mxu0
    %v2872 = vadd.f32 %v2747, %v2871
    %v2873 = vpop.f32.mrb[0].mxu0
    %v2874 = vadd.f32 %v2749, %v2873
    %2875 = vmatprep.mubr.f32.mxu0 0.0
    %2876 = vmatmul.mubr.f32.gmra.mrb[0].mxu0 %v2154
    %v2877 = vpop.f32.mrb[0].mxu0
    %v2878 = vadd.f32 %v2753, %v2877
    %v2879 = vpop.f32.mrb[0].mxu0
    %v2880 = vadd.f32 %v2755, %v2879
    %2881 = vmatprep.mubr.f32.mxu0 0.0
    %2882 = vmatmul.mubr.f32.gmra.mrb[0].mxu0 %v2157
    %v2883 = vpop.f32.mrb[0].mxu0
    %v2884 = vadd.f32 %v2759, %v2883
    %v2885 = vpop.f32.mrb[0].mxu0
    %v2886 = vadd.f32 %v2761, %v2885
    %2887 = vmatprep.mubr.f32.mxu0 0.0
    %2888 = vmatmul.mubr.f32.gmra.mrb[0].mxu0 %v2160
    %v2889 = vpop.f32.mrb[0].mxu0
    %v2890 = vadd.f32 %v2765, %v2889
    %v2891 = vpop.f32.mrb[0].mxu0
    %v2892 = vadd.f32 %v2767, %v2891
    %2893 = vmatprep.mubr.f32.mxu0 0.0
    %2894 = vmatmul.mubr.f32.gmra.mrb[0].mxu0 %v2163
    %v2895 = vpop.f32.mrb[0].mxu0
    %v2896 = vadd.f32 %v2771, %v2895
    %v2897 = vpop.f32.mrb[0].mxu0
    %v2898 = vadd.f32 %v2773, %v2897
    %2899 = vmatprep.mubr.f32.mxu0 0.0
    %2900 = vmatmul.mubr.f32.gmra.mrb[0].mxu0 %v2166
    %v2901 = vpop.f32.mrb[0].mxu0
    %v2902 = vadd.f32 %v2777, %v2901
    %v2903 = vpop.f32.mrb[0].mxu0
    %v2904 = vadd.f32 %v2779, %v2903
    %2905 = vmatprep.mubr.f32.mxu0 0.0
    %2906 = vmatmul.mubr.f32.gmra.mrb[0].mxu0 %v2169
    %v2907 = vpop.f32.mrb[0].mxu0
    %v2908 = vadd.f32 %v2783, %v2907
    %v2909 = vpop.f32.mrb[0].mxu0
    %v2910 = vadd.f32 %v2785, %v2909
    %2911 = vmatprep.mubr.f32.mxu0 0.0
    %2912 = vmatmul.mubr.f32.gmra.mrb[0].mxu0 %v2172
    %v2913 = vpop.f32.mrb[0].mxu0
    %v2914 = vadd.f32 %v2789, %v2913
    %v2915 = vpop.f32.mrb[0].mxu0
    %v2916 = vadd.f32 %v2791, %v2915
    %2917 = vmatprep.mubr.f32.mxu0 0.0
    %2918 = vmatmul.mubr.f32.gmra.mrb[0].mxu0 %v2175
    %v2919 = vpop.f32.mrb[0].mxu0
    %v2920 = vadd.f32 %v2795, %v2919
    %v2921 = vpop.f32.mrb[0].mxu0
    %v2922 = vadd.f32 %v2797, %v2921
    %2923 = vmatprep.mubr.f32.mxu0 0.0
    %2924 = vmatmul.mubr.f32.gmra.mrb[0].mxu0 %v2178
    %v2925 = vpop.f32.mrb[0].mxu0
    %v2926 = vadd.f32 %v2801, %v2925
    %v2927 = vpop.f32.mrb[0].mxu0
    %v2928 = vadd.f32 %v2803, %v2927
    %2929 = vdwg.mxu0
    %2930 = vmatprep.subr.mxu0 %v1569
    %2931 = vmatpush1.msra.mxu0 %v1568
    %2932 = vmatprep.subr.mxu0 %v1577
    %2933 = vmatpush1.msra.mxu0 %v1576
    %2934 = vmatprep.subr.mxu0 %v1585
    %2935 = vmatpush1.msra.mxu0 %v1584
    %2936 = vmatprep.subr.mxu0 %v1593
    %2937 = vmatpush1.msra.mxu0 %v1592
    %2938 = vmatprep.subr.mxu0 %v1601
    %2939 = vmatpush1.msra.mxu0 %v1600
    %2940 = vmatprep.subr.mxu0 %v1609
    %2941 = vmatpush1.msra.mxu0 %v1608
    %2942 = vmatprep.subr.mxu0 %v1617
    %2943 = vmatpush1.msra.mxu0 %v1616
    %2944 = vmatprep.subr.mxu0 %v1625
    %2945 = vmatpush1.msra.mxu0 %v1624
    %2946 = vmatprep.subr.mxu0 %v1633
    %2947 = vmatpush1.msra.mxu0 %v1632
    %2948 = vmatprep.subr.mxu0 %v1641
    %2949 = vmatpush1.msra.mxu0 %v1640
    %2950 = vmatprep.subr.mxu0 %v1649
    %2951 = vmatpush1.msra.mxu0 %v1648
    %2952 = vmatprep.subr.mxu0 %v1657
    %2953 = vmatpush1.msra.mxu0 %v1656
    %2954 = vmatprep.subr.mxu0 %v1665
    %2955 = vmatpush1.msra.mxu0 %v1664
    %2956 = vmatprep.subr.mxu0 %v1673
    %2957 = vmatpush1.msra.mxu0 %v1672
    %2958 = vmatprep.subr.mxu0 %v1681
    %2959 = vmatpush1.msra.mxu0 %v1680
    %2960 = vmatprep.subr.mxu0 %v1689
    %2961 = vmatpush1.msra.mxu0 %v1688
    %2962 = vmatprep.subr.mxu0 %v1697
    %2963 = vmatpush1.msra.mxu0 %v1696
    %2964 = vmatprep.subr.mxu0 %v1705
    %2965 = vmatpush1.msra.mxu0 %v1704
    %2966 = vmatprep.subr.mxu0 %v1713
    %2967 = vmatpush1.msra.mxu0 %v1712
    %2968 = vmatprep.subr.mxu0 %v1721
    %2969 = vmatpush1.msra.mxu0 %v1720
    %2970 = vmatprep.subr.mxu0 %v1729
    %2971 = vmatpush1.msra.mxu0 %v1728
    %2972 = vmatprep.subr.mxu0 %v1737
    %2973 = vmatpush1.msra.mxu0 %v1736
    %2974 = vmatprep.subr.mxu0 %v1745
    %2975 = vmatpush1.msra.mxu0 %v1744
    %2976 = vmatprep.subr.mxu0 %v1753
    %2977 = vmatpush1.msra.mxu0 %v1752
    %2978 = vmatprep.subr.mxu0 %v1761
    %2979 = vmatpush1.msra.mxu0 %v1760
    %2980 = vmatprep.subr.mxu0 %v1769
    %2981 = vmatpush1.msra.mxu0 %v1768
    %2982 = vmatprep.subr.mxu0 %v1777
    %2983 = vmatpush1.msra.mxu0 %v1776
    %2984 = vmatprep.subr.mxu0 %v1785
    %2985 = vmatpush1.msra.mxu0 %v1784
    %2986 = vmatprep.subr.mxu0 %v1793
    %2987 = vmatpush1.msra.mxu0 %v1792
    %2988 = vmatprep.subr.mxu0 %v1801
    %2989 = vmatpush1.msra.mxu0 %v1800
    %2990 = vmatprep.subr.mxu0 %v1809
    %2991 = vmatpush1.msra.mxu0 %v1808
    %2992 = vmatprep.subr.mxu0 %v1817
    %2993 = vmatpush1.msra.mxu0 %v1816
    %2994 = vmatprep.mubr.f32.mxu0 %v1515
    %2995 = vmatmul.mubr.f32.gmra.mrb[0].mxu0 %v1514
    %v2996 = vpop.f32.mrb[0].mxu0
    %v2997 = vadd.f32 %v2129, %v2996
    %v2998 = vpop.f32.mrb[0].mxu0
    %v2999 = vadd.f32 %v2133, %v2998
    %3000 = vmatprep.mubr.f32.mxu0 %v1520
    %3001 = vmatmul.mubr.f32.gmra.mrb[0].mxu0 %v1519
    %v3002 = vpop.f32.mrb[0].mxu0
    %v3003 = vadd.f32 %v2129, %v3002
    %v3004 = vpop.f32.mrb[0].mxu0
    %v3005 = vadd.f32 %v2133, %v3004
    %3006 = vmatprep.mubr.f32.mxu0 %v1525
    %3007 = vmatmul.mubr.f32.gmra.mrb[0].mxu0 %v1524
    %v3008 = vpop.f32.mrb[0].mxu0
    %v3009 = vadd.f32 %v2129, %v3008
    %v3010 = vpop.f32.mrb[0].mxu0
    %v3011 = vadd.f32 %v2133, %v3010
    %3012 = vmatprep.mubr.f32.mxu0 %v1530
    %3013 = vmatmul.mubr.f32.gmra.mrb[0].mxu0 %v1529
    %v3014 = vpop.f32.mrb[0].mxu0
    %v3015 = vadd.f32 %v2129, %v3014
    %v3016 = vpop.f32.mrb[0].mxu0
    %v3017 = vadd.f32 %v2133, %v3016
    %3018 = vmatprep.mubr.f32.mxu0 %v1535
    %3019 = vmatmul.mubr.f32.gmra.mrb[0].mxu0 %v1534
    %v3020 = vpop.f32.mrb[0].mxu0
    %v3021 = vadd.f32 %v2129, %v3020
    %v3022 = vpop.f32.mrb[0].mxu0
    %v3023 = vadd.f32 %v2133, %v3022
    %3024 = vmatprep.mubr.f32.mxu0 %v1540
    %3025 = vmatmul.mubr.f32.gmra.mrb[0].mxu0 %v1539
    %v3026 = vpop.f32.mrb[0].mxu0
    %v3027 = vadd.f32 %v2129, %v3026
    %v3028 = vpop.f32.mrb[0].mxu0
    %v3029 = vadd.f32 %v2133, %v3028
    %3030 = vmatprep.mubr.f32.mxu0 %v1545
    %3031 = vmatmul.mubr.f32.gmra.mrb[0].mxu0 %v1544
    %v3032 = vpop.f32.mrb[0].mxu0
    %v3033 = vadd.f32 %v2129, %v3032
    %v3034 = vpop.f32.mrb[0].mxu0
    %v3035 = vadd.f32 %v2133, %v3034
    %3036 = vmatprep.mubr.f32.mxu0 %v1550
    %3037 = vmatmul.mubr.f32.gmra.mrb[0].mxu0 %v1549
    %v3038 = vpop.f32.mrb[0].mxu0
    %v3039 = vadd.f32 %v2129, %v3038
    %v3040 = vpop.f32.mrb[0].mxu0
    %v3041 = vadd.f32 %v2133, %v3040
    %3042 = vmatprep.mubr.f32.mxu0 %v1555
    %3043 = vmatmul.mubr.f32.gmra.mrb[0].mxu0 %v1554
    %v3044 = vpop.f32.mrb[0].mxu0
    %v3045 = vadd.f32 %v2129, %v3044
    %v3046 = vpop.f32.mrb[0].mxu0
    %v3047 = vadd.f32 %v2133, %v3046
    %3048 = vmatprep.mubr.f32.mxu0 %v1560
    %3049 = vmatmul.mubr.f32.gmra.mrb[0].mxu0 %v1559
    %v3050 = vpop.f32.mrb[0].mxu0
    %v3051 = vadd.f32 %v2129, %v3050
    %v3052 = vpop.f32.mrb[0].mxu0
    %v3053 = vadd.f32 %v2133, %v3052
    %3054 = vdwg.mxu0
    %3055 = vmatprep.subr.mxu0 %v1825
    %3056 = vmatpush1.msra.mxu0 %v1824
    %3057 = vmatprep.subr.mxu0 %v1833
    %3058 = vmatpush1.msra.mxu0 %v1832
    %3059 = vmatprep.subr.mxu0 %v1841
    %3060 = vmatpush1.msra.mxu0 %v1840
    %3061 = vmatprep.subr.mxu0 %v1849
    %3062 = vmatpush1.msra.mxu0 %v1848
    %3063 = vmatprep.subr.mxu0 %v1857
    %3064 = vmatpush1.msra.mxu0 %v1856
    %3065 = vmatprep.subr.mxu0 %v1865
    %3066 = vmatpush1.msra.mxu0 %v1864
    %3067 = vmatprep.subr.mxu0 %v1873
    %3068 = vmatpush1.msra.mxu0 %v1872
    %3069 = vmatprep.subr.mxu0 %v1881
    %3070 = vmatpush1.msra.mxu0 %v1880
    %3071 = vmatprep.subr.mxu0 %v1889
    %3072 = vmatpush1.msra.mxu0 %v1888
    %3073 = vmatprep.subr.mxu0 %v1897
    %3074 = vmatpush1.msra.mxu0 %v1896
    %3075 = vmatprep.subr.mxu0 %v1905
    %3076 = vmatpush1.msra.mxu0 %v1904
    %3077 = vmatprep.subr.mxu0 %v1913
    %3078 = vmatpush1.msra.mxu0 %v1912
    %3079 = vmatprep.subr.mxu0 %v1921
    %3080 = vmatpush1.msra.mxu0 %v1920
    %3081 = vmatprep.subr.mxu0 %v1929
    %3082 = vmatpush1.msra.mxu0 %v1928
    %3083 = vmatprep.subr.mxu0 %v1937
    %3084 = vmatpush1.msra.mxu0 %v1936
    %3085 = vmatprep.subr.mxu0 %v1945
    %3086 = vmatpush1.msra.mxu0 %v1944
    %3087 = vmatprep.subr.mxu0 %v1953
    %3088 = vmatpush1.msra.mxu0 %v1952
    %3089 = vmatprep.subr.mxu0 %v1961
    %3090 = vmatpush1.msra.mxu0 %v1960
    %3091 = vmatprep.subr.mxu0 %v1969
    %3092 = vmatpush1.msra.mxu0 %v1968
    %3093 = vmatprep.subr.mxu0 %v1977
    %3094 = vmatpush1.msra.mxu0 %v1976
    %3095 = vmatprep.subr.mxu0 %v1985
    %3096 = vmatpush1.msra.mxu0 %v1984
    %3097 = vmatprep.subr.mxu0 %v1993
    %3098 = vmatpush1.msra.mxu0 %v1992
    %3099 = vmatprep.subr.mxu0 %v2001
    %3100 = vmatpush1.msra.mxu0 %v2000
    %3101 = vmatprep.subr.mxu0 %v2009
    %3102 = vmatpush1.msra.mxu0 %v2008
    %3103 = vmatprep.subr.mxu0 %v2017
    %3104 = vmatpush1.msra.mxu0 %v2016
    %3105 = vmatprep.subr.mxu0 %v2025
    %3106 = vmatpush1.msra.mxu0 %v2024
    %3107 = vmatprep.subr.mxu0 %v2033
    %3108 = vmatpush1.msra.mxu0 %v2032
    %3109 = vmatprep.subr.mxu0 %v2041
    %3110 = vmatpush1.msra.mxu0 %v2040
    %3111 = vmatprep.subr.mxu0 %v2049
    %3112 = vmatpush1.msra.mxu0 %v2048
    %3113 = vmatprep.subr.mxu0 %v2057
    %3114 = vmatpush1.msra.mxu0 %v2056
    %3115 = vmatprep.subr.mxu0 %v2065
    %3116 = vmatpush1.msra.mxu0 %v2064
    %3117 = vmatprep.subr.mxu0 %v2073
    %3118 = vmatpush1.msra.mxu0 %v2072
    %3119 = vmatprep.mubr.f32.mxu0 %v1517
    %3120 = vmatmul.mubr.f32.gmra.mrb[0].mxu0 %v1516
    %v3121 = vpop.f32.mrb[0].mxu0
    %v3122 = vadd.f32 %v2997, %v3121
    %v3123 = vpop.f32.mrb[0].mxu0
    %v3124 = vadd.f32 %v2999, %v3123
    %3125 = vmatprep.mubr.f32.mxu0 %v1522
    %3126 = vmatmul.mubr.f32.gmra.mrb[0].mxu0 %v1521
    %v3127 = vpop.f32.mrb[0].mxu0
    %v3128 = vadd.f32 %v3003, %v3127
    %v3129 = vpop.f32.mrb[0].mxu0
    %v3130 = vadd.f32 %v3005, %v3129
    %3131 = vmatprep.mubr.f32.mxu0 %v1527
    %3132 = vmatmul.mubr.f32.gmra.mrb[0].mxu0 %v1526
    %v3133 = vpop.f32.mrb[0].mxu0
    %v3134 = vadd.f32 %v3009, %v3133
    %v3135 = vpop.f32.mrb[0].mxu0
    %v3136 = vadd.f32 %v3011, %v3135
    %3137 = vmatprep.mubr.f32.mxu0 %v1532
    %3138 = vmatmul.mubr.f32.gmra.mrb[0].mxu0 %v1531
    %v3139 = vpop.f32.mrb[0].mxu0
    %v3140 = vadd.f32 %v3015, %v3139
    %v3141 = vpop.f32.mrb[0].mxu0
    %v3142 = vadd.f32 %v3017, %v3141
    %3143 = vmatprep.mubr.f32.mxu0 %v1537
    %3144 = vmatmul.mubr.f32.gmra.mrb[0].mxu0 %v1536
    %v3145 = vpop.f32.mrb[0].mxu0
    %v3146 = vadd.f32 %v3021, %v3145
    %v3147 = vpop.f32.mrb[0].mxu0
    %v3148 = vadd.f32 %v3023, %v3147
    %3149 = vmatprep.mubr.f32.mxu0 %v1542
    %3150 = vmatmul.mubr.f32.gmra.mrb[0].mxu0 %v1541
    %v3151 = vpop.f32.mrb[0].mxu0
    %v3152 = vadd.f32 %v3027, %v3151
    %v3153 = vpop.f32.mrb[0].mxu0
    %v3154 = vadd.f32 %v3029, %v3153
    %3155 = vmatprep.mubr.f32.mxu0 %v1547
    %3156 = vmatmul.mubr.f32.gmra.mrb[0].mxu0 %v1546
    %v3157 = vpop.f32.mrb[0].mxu0
    %v3158 = vadd.f32 %v3033, %v3157
    %v3159 = vpop.f32.mrb[0].mxu0
    %v3160 = vadd.f32 %v3035, %v3159
    %3161 = vmatprep.mubr.f32.mxu0 %v1552
    %3162 = vmatmul.mubr.f32.gmra.mrb[0].mxu0 %v1551
    %v3163 = vpop.f32.mrb[0].mxu0
    %v3164 = vadd.f32 %v3039, %v3163
    %v3165 = vpop.f32.mrb[0].mxu0
    %v3166 = vadd.f32 %v3041, %v3165
    %3167 = vmatprep.mubr.f32.mxu0 %v1557
    %3168 = vmatmul.mubr.f32.gmra.mrb[0].mxu0 %v1556
    %v3169 = vpop.f32.mrb[0].mxu0
    %v3170 = vadd.f32 %v3045, %v3169
    %v3171 = vpop.f32.mrb[0].mxu0
    %v3172 = vadd.f32 %v3047, %v3171
    %3173 = vmatprep.mubr.f32.mxu0 %v1562
    %3174 = vmatmul.mubr.f32.gmra.mrb[0].mxu0 %v1561
    %v3175 = vpop.f32.mrb[0].mxu0
    %v3176 = vadd.f32 %v3051, %v3175
    %v3177 = vpop.f32.mrb[0].mxu0
    %v3178 = vadd.f32 %v3053, %v3177
    %3179 = vdwg.mxu0
    %3180 = vmatprep.subr.mxu0 %v2081
    %3181 = vmatpush1.msra.mxu0 %v2080
    %3182 = vmatprep.subr.mxu0 %v2089
    %3183 = vmatpush1.msra.mxu0 %v2088
    %3184 = vmatprep.subr.mxu0 %v2097
    %3185 = vmatpush1.msra.mxu0 %v2096
    %3186 = vmatprep.subr.mxu0 %v2105
    %3187 = vmatpush1.msra.mxu0 %v2104
    %3188 = vmatprep.subr.mxu0 0.0
    %3189 = vmatpush1.msra.mxu0 0.0
    %3190 = vmatprep.subr.mxu0 0.0
    %3191 = vmatpush1.msra.mxu0 0.0
    %3192 = vmatprep.subr.mxu0 0.0
    %3193 = vmatpush1.msra.mxu0 0.0
    %3194 = vmatprep.subr.mxu0 0.0
    %3195 = vmatpush1.msra.mxu0 0.0
    %3196 = vmatprep.subr.mxu0 0.0
    %3197 = vmatpush1.msra.mxu0 0.0
    %3198 = vmatprep.subr.mxu0 0.0
    %3199 = vmatpush1.msra.mxu0 0.0
    %3200 = vmatprep.subr.mxu0 0.0
    %3201 = vmatpush1.msra.mxu0 0.0
    %3202 = vmatprep.subr.mxu0 0.0
    %3203 = vmatpush1.msra.mxu0 0.0
    %3204 = vmatprep.subr.mxu0 0.0
    %3205 = vmatpush1.msra.mxu0 0.0
    %3206 = vmatprep.subr.mxu0 0.0
    %3207 = vmatpush1.msra.mxu0 0.0
    %3208 = vmatprep.subr.mxu0 0.0
    %3209 = vmatpush1.msra.mxu0 0.0
    %3210 = vmatprep.subr.mxu0 0.0
    %3211 = vmatpush1.msra.mxu0 0.0
    %3212 = vmatprep.subr.mxu0 0.0
    %3213 = vmatpush1.msra.mxu0 0.0
    %3214 = vmatprep.subr.mxu0 0.0
    %3215 = vmatpush1.msra.mxu0 0.0
    %3216 = vmatprep.subr.mxu0 0.0
    %3217 = vmatpush1.msra.mxu0 0.0
    %3218 = vmatprep.subr.mxu0 0.0
    %3219 = vmatpush1.msra.mxu0 0.0
    %3220 = vmatprep.subr.mxu0 0.0
    %3221 = vmatpush1.msra.mxu0 0.0
    %3222 = vmatprep.subr.mxu0 0.0
    %3223 = vmatpush1.msra.mxu0 0.0
    %3224 = vmatprep.subr.mxu0 0.0
    %3225 = vmatpush1.msra.mxu0 0.0
    %3226 = vmatprep.subr.mxu0 0.0
    %3227 = vmatpush1.msra.mxu0 0.0
    %3228 = vmatprep.subr.mxu0 0.0
    %3229 = vmatpush1.msra.mxu0 0.0
    %3230 = vmatprep.subr.mxu0 0.0
    %3231 = vmatpush1.msra.mxu0 0.0
    %3232 = vmatprep.subr.mxu0 0.0
    %3233 = vmatpush1.msra.mxu0 0.0
    %3234 = vmatprep.subr.mxu0 0.0
    %3235 = vmatpush1.msra.mxu0 0.0
    %3236 = vmatprep.subr.mxu0 0.0
    %3237 = vmatpush1.msra.mxu0 0.0
    %3238 = vmatprep.subr.mxu0 0.0
    %3239 = vmatpush1.msra.mxu0 0.0
    %3240 = vmatprep.subr.mxu0 0.0
    %3241 = vmatpush1.msra.mxu0 0.0
    %3242 = vmatprep.subr.mxu0 0.0
    %3243 = vmatpush1.msra.mxu0 0.0
    %3244 = vmatprep.mubr.f32.mxu0 0.0
    %3245 = vmatmul.mubr.f32.gmra.mrb[0].mxu0 %v2151
    %v3246 = vpop.f32.mrb[0].mxu0
    %v3247 = vadd.f32 %v3122, %v3246
    %v3248 = vpop.f32.mrb[0].mxu0
    %v3249 = vadd.f32 %v3124, %v3248
    %3250 = vmatprep.mubr.f32.mxu0 0.0
    %3251 = vmatmul.mubr.f32.gmra.mrb[0].mxu0 %v2154
    %v3252 = vpop.f32.mrb[0].mxu0
    %v3253 = vadd.f32 %v3128, %v3252
    %v3254 = vpop.f32.mrb[0].mxu0
    %v3255 = vadd.f32 %v3130, %v3254
    %3256 = vmatprep.mubr.f32.mxu0 0.0
    %3257 = vmatmul.mubr.f32.gmra.mrb[0].mxu0 %v2157
    %v3258 = vpop.f32.mrb[0].mxu0
    %v3259 = vadd.f32 %v3134, %v3258
    %v3260 = vpop.f32.mrb[0].mxu0
    %v3261 = vadd.f32 %v3136, %v3260
    %3262 = vmatprep.mubr.f32.mxu0 0.0
    %3263 = vmatmul.mubr.f32.gmra.mrb[0].mxu0 %v2160
    %v3264 = vpop.f32.mrb[0].mxu0
    %v3265 = vadd.f32 %v3140, %v3264
    %v3266 = vpop.f32.mrb[0].mxu0
    %v3267 = vadd.f32 %v3142, %v3266
    %3268 = vmatprep.mubr.f32.mxu0 0.0
    %3269 = vmatmul.mubr.f32.gmra.mrb[0].mxu0 %v2163
    %v3270 = vpop.f32.mrb[0].mxu0
    %v3271 = vadd.f32 %v3146, %v3270
    %v3272 = vpop.f32.mrb[0].mxu0
    %v3273 = vadd.f32 %v3148, %v3272
    %3274 = vmatprep.mubr.f32.mxu0 0.0
    %3275 = vmatmul.mubr.f32.gmra.mrb[0].mxu0 %v2166
    %v3276 = vpop.f32.mrb[0].mxu0
    %v3277 = vadd.f32 %v3152, %v3276
    %v3278 = vpop.f32.mrb[0].mxu0
    %v3279 = vadd.f32 %v3154, %v3278
    %3280 = vmatprep.mubr.f32.mxu0 0.0
    %3281 = vmatmul.mubr.f32.gmra.mrb[0].mxu0 %v2169
    %v3282 = vpop.f32.mrb[0].mxu0
    %v3283 = vadd.f32 %v3158, %v3282
    %v3284 = vpop.f32.mrb[0].mxu0
    %v3285 = vadd.f32 %v3160, %v3284
    %3286 = vmatprep.mubr.f32.mxu0 0.0
    %3287 = vmatmul.mubr.f32.gmra.mrb[0].mxu0 %v2172
    %v3288 = vpop.f32.mrb[0].mxu0
    %v3289 = vadd.f32 %v3164, %v3288
    %v3290 = vpop.f32.mrb[0].mxu0
    %v3291 = vadd.f32 %v3166, %v3290
    %3292 = vmatprep.mubr.f32.mxu0 0.0
    %3293 = vmatmul.mubr.f32.gmra.mrb[0].mxu0 %v2175
    %v3294 = vpop.f32.mrb[0].mxu0
    %v3295 = vadd.f32 %v3170, %v3294
    %v3296 = vpop.f32.mrb[0].mxu0
    %v3297 = vadd.f32 %v3172, %v3296
    %3298 = vmatprep.mubr.f32.mxu0 0.0
    %3299 = vmatmul.mubr.f32.gmra.mrb[0].mxu0 %v2178
    %v3300 = vpop.f32.mrb[0].mxu0
    %v3301 = vadd.f32 %v3176, %v3300
    %v3302 = vpop.f32.mrb[0].mxu0
    %v3303 = vadd.f32 %v3178, %v3302
    %3304 = vdwg.mxu0
    %3305 = vmatprep.subr.mxu0 %v1571
    %3306 = vmatpush1.msra.mxu0 %v1570
    %3307 = vmatprep.subr.mxu0 %v1579
    %3308 = vmatpush1.msra.mxu0 %v1578
    %3309 = vmatprep.subr.mxu0 %v1587
    %3310 = vmatpush1.msra.mxu0 %v1586
    %3311 = vmatprep.subr.mxu0 %v1595
    %3312 = vmatpush1.msra.mxu0 %v1594
    %3313 = vmatprep.subr.mxu0 %v1603
    %3314 = vmatpush1.msra.mxu0 %v1602
    %3315 = vmatprep.subr.mxu0 %v1611
    %3316 = vmatpush1.msra.mxu0 %v1610
    %3317 = vmatprep.subr.mxu0 %v1619
    %3318 = vmatpush1.msra.mxu0 %v1618
    %3319 = vmatprep.subr.mxu0 %v1627
    %3320 = vmatpush1.msra.mxu0 %v1626
    %3321 = vmatprep.subr.mxu0 %v1635
    %3322 = vmatpush1.msra.mxu0 %v1634
    %3323 = vmatprep.subr.mxu0 %v1643
    %3324 = vmatpush1.msra.mxu0 %v1642
    %3325 = vmatprep.subr.mxu0 %v1651
    %3326 = vmatpush1.msra.mxu0 %v1650
    %3327 = vmatprep.subr.mxu0 %v1659
    %3328 = vmatpush1.msra.mxu0 %v1658
    %3329 = vmatprep.subr.mxu0 %v1667
    %3330 = vmatpush1.msra.mxu0 %v1666
    %3331 = vmatprep.subr.mxu0 %v1675
    %3332 = vmatpush1.msra.mxu0 %v1674
    %3333 = vmatprep.subr.mxu0 %v1683
    %3334 = vmatpush1.msra.mxu0 %v1682
    %3335 = vmatprep.subr.mxu0 %v1691
    %3336 = vmatpush1.msra.mxu0 %v1690
    %3337 = vmatprep.subr.mxu0 %v1699
    %3338 = vmatpush1.msra.mxu0 %v1698
    %3339 = vmatprep.subr.mxu0 %v1707
    %3340 = vmatpush1.msra.mxu0 %v1706
    %3341 = vmatprep.subr.mxu0 %v1715
    %3342 = vmatpush1.msra.mxu0 %v1714
    %3343 = vmatprep.subr.mxu0 %v1723
    %3344 = vmatpush1.msra.mxu0 %v1722
    %3345 = vmatprep.subr.mxu0 %v1731
    %3346 = vmatpush1.msra.mxu0 %v1730
    %3347 = vmatprep.subr.mxu0 %v1739
    %3348 = vmatpush1.msra.mxu0 %v1738
    %3349 = vmatprep.subr.mxu0 %v1747
    %3350 = vmatpush1.msra.mxu0 %v1746
    %3351 = vmatprep.subr.mxu0 %v1755
    %3352 = vmatpush1.msra.mxu0 %v1754
    %3353 = vmatprep.subr.mxu0 %v1763
    %3354 = vmatpush1.msra.mxu0 %v1762
    %3355 = vmatprep.subr.mxu0 %v1771
    %3356 = vmatpush1.msra.mxu0 %v1770
    %3357 = vmatprep.subr.mxu0 %v1779
    %3358 = vmatpush1.msra.mxu0 %v1778
    %3359 = vmatprep.subr.mxu0 %v1787
    %3360 = vmatpush1.msra.mxu0 %v1786
    %3361 = vmatprep.subr.mxu0 %v1795
    %3362 = vmatpush1.msra.mxu0 %v1794
    %3363 = vmatprep.subr.mxu0 %v1803
    %3364 = vmatpush1.msra.mxu0 %v1802
    %3365 = vmatprep.subr.mxu0 %v1811
    %3366 = vmatpush1.msra.mxu0 %v1810
    %3367 = vmatprep.subr.mxu0 %v1819
    %3368 = vmatpush1.msra.mxu0 %v1818
    %3369 = vmatprep.mubr.f32.mxu0 %v1515
    %3370 = vmatmul.mubr.f32.gmra.mrb[0].mxu0 %v1514
    %v3371 = vpop.f32.mrb[0].mxu0
    %v3372 = vadd.f32 %v2137, %v3371
    %v3373 = vpop.f32.mrb[0].mxu0
    %v3374 = vadd.f32 %v2141, %v3373
    %3375 = vmatprep.mubr.f32.mxu0 %v1520
    %3376 = vmatmul.mubr.f32.gmra.mrb[0].mxu0 %v1519
    %v3377 = vpop.f32.mrb[0].mxu0
    %v3378 = vadd.f32 %v2137, %v3377
    %v3379 = vpop.f32.mrb[0].mxu0
    %v3380 = vadd.f32 %v2141, %v3379
    %3381 = vmatprep.mubr.f32.mxu0 %v1525
    %3382 = vmatmul.mubr.f32.gmra.mrb[0].mxu0 %v1524
    %v3383 = vpop.f32.mrb[0].mxu0
    %v3384 = vadd.f32 %v2137, %v3383
    %v3385 = vpop.f32.mrb[0].mxu0
    %v3386 = vadd.f32 %v2141, %v3385
    %3387 = vmatprep.mubr.f32.mxu0 %v1530
    %3388 = vmatmul.mubr.f32.gmra.mrb[0].mxu0 %v1529
    %v3389 = vpop.f32.mrb[0].mxu0
    %v3390 = vadd.f32 %v2137, %v3389
    %v3391 = vpop.f32.mrb[0].mxu0
    %v3392 = vadd.f32 %v2141, %v3391
    %3393 = vmatprep.mubr.f32.mxu0 %v1535
    %3394 = vmatmul.mubr.f32.gmra.mrb[0].mxu0 %v1534
    %v3395 = vpop.f32.mrb[0].mxu0
    %v3396 = vadd.f32 %v2137, %v3395
    %v3397 = vpop.f32.mrb[0].mxu0
    %v3398 = vadd.f32 %v2141, %v3397
    %3399 = vmatprep.mubr.f32.mxu0 %v1540
    %3400 = vmatmul.mubr.f32.gmra.mrb[0].mxu0 %v1539
    %v3401 = vpop.f32.mrb[0].mxu0
    %v3402 = vadd.f32 %v2137, %v3401
    %v3403 = vpop.f32.mrb[0].mxu0
    %v3404 = vadd.f32 %v2141, %v3403
    %3405 = vmatprep.mubr.f32.mxu0 %v1545
    %3406 = vmatmul.mubr.f32.gmra.mrb[0].mxu0 %v1544
    %v3407 = vpop.f32.mrb[0].mxu0
    %v3408 = vadd.f32 %v2137, %v3407
    %v3409 = vpop.f32.mrb[0].mxu0
    %v3410 = vadd.f32 %v2141, %v3409
    %3411 = vmatprep.mubr.f32.mxu0 %v1550
    %3412 = vmatmul.mubr.f32.gmra.mrb[0].mxu0 %v1549
    %v3413 = vpop.f32.mrb[0].mxu0
    %v3414 = vadd.f32 %v2137, %v3413
    %v3415 = vpop.f32.mrb[0].mxu0
    %v3416 = vadd.f32 %v2141, %v3415
    %3417 = vmatprep.mubr.f32.mxu0 %v1555
    %3418 = vmatmul.mubr.f32.gmra.mrb[0].mxu0 %v1554
    %v3419 = vpop.f32.mrb[0].mxu0
    %v3420 = vadd.f32 %v2137, %v3419
    %v3421 = vpop.f32.mrb[0].mxu0
    %v3422 = vadd.f32 %v2141, %v3421
    %3423 = vmatprep.mubr.f32.mxu0 %v1560
    %3424 = vmatmul.mubr.f32.gmra.mrb[0].mxu0 %v1559
    %v3425 = vpop.f32.mrb[0].mxu0
    %v3426 = vadd.f32 %v2137, %v3425
    %v3427 = vpop.f32.mrb[0].mxu0
    %v3428 = vadd.f32 %v2141, %v3427
    %3429 = vdwg.mxu0
    %3430 = vmatprep.subr.mxu0 %v1827
    %3431 = vmatpush1.msra.mxu0 %v1826
    %3432 = vmatprep.subr.mxu0 %v1835
    %3433 = vmatpush1.msra.mxu0 %v1834
    %3434 = vmatprep.subr.mxu0 %v1843
    %3435 = vmatpush1.msra.mxu0 %v1842
    %3436 = vmatprep.subr.mxu0 %v1851
    %3437 = vmatpush1.msra.mxu0 %v1850
    %3438 = vmatprep.subr.mxu0 %v1859
    %3439 = vmatpush1.msra.mxu0 %v1858
    %3440 = vmatprep.subr.mxu0 %v1867
    %3441 = vmatpush1.msra.mxu0 %v1866
    %3442 = vmatprep.subr.mxu0 %v1875
    %3443 = vmatpush1.msra.mxu0 %v1874
    %3444 = vmatprep.subr.mxu0 %v1883
    %3445 = vmatpush1.msra.mxu0 %v1882
    %3446 = vmatprep.subr.mxu0 %v1891
    %3447 = vmatpush1.msra.mxu0 %v1890
    %3448 = vmatprep.subr.mxu0 %v1899
    %3449 = vmatpush1.msra.mxu0 %v1898
    %3450 = vmatprep.subr.mxu0 %v1907
    %3451 = vmatpush1.msra.mxu0 %v1906
    %3452 = vmatprep.subr.mxu0 %v1915
    %3453 = vmatpush1.msra.mxu0 %v1914
    %3454 = vmatprep.subr.mxu0 %v1923
    %3455 = vmatpush1.msra.mxu0 %v1922
    %3456 = vmatprep.subr.mxu0 %v1931
    %3457 = vmatpush1.msra.mxu0 %v1930
    %3458 = vmatprep.subr.mxu0 %v1939
    %3459 = vmatpush1.msra.mxu0 %v1938
    %3460 = vmatprep.subr.mxu0 %v1947
    %3461 = vmatpush1.msra.mxu0 %v1946
    %3462 = vmatprep.subr.mxu0 %v1955
    %3463 = vmatpush1.msra.mxu0 %v1954
    %3464 = vmatprep.subr.mxu0 %v1963
    %3465 = vmatpush1.msra.mxu0 %v1962
    %3466 = vmatprep.subr.mxu0 %v1971
    %3467 = vmatpush1.msra.mxu0 %v1970
    %3468 = vmatprep.subr.mxu0 %v1979
    %3469 = vmatpush1.msra.mxu0 %v1978
    %3470 = vmatprep.subr.mxu0 %v1987
    %3471 = vmatpush1.msra.mxu0 %v1986
    %3472 = vmatprep.subr.mxu0 %v1995
    %3473 = vmatpush1.msra.mxu0 %v1994
    %3474 = vmatprep.subr.mxu0 %v2003
    %3475 = vmatpush1.msra.mxu0 %v2002
    %3476 = vmatprep.subr.mxu0 %v2011
    %3477 = vmatpush1.msra.mxu0 %v2010
    %3478 = vmatprep.subr.mxu0 %v2019
    %3479 = vmatpush1.msra.mxu0 %v2018
    %3480 = vmatprep.subr.mxu0 %v2027
    %3481 = vmatpush1.msra.mxu0 %v2026
    %3482 = vmatprep.subr.mxu0 %v2035
    %3483 = vmatpush1.msra.mxu0 %v2034
    %3484 = vmatprep.subr.mxu0 %v2043
    %3485 = vmatpush1.msra.mxu0 %v2042
    %3486 = vmatprep.subr.mxu0 %v2051
    %3487 = vmatpush1.msra.mxu0 %v2050
    %3488 = vmatprep.subr.mxu0 %v2059
    %3489 = vmatpush1.msra.mxu0 %v2058
    %3490 = vmatprep.subr.mxu0 %v2067
    %3491 = vmatpush1.msra.mxu0 %v2066
    %3492 = vmatprep.subr.mxu0 %v2075
    %3493 = vmatpush1.msra.mxu0 %v2074
    %3494 = vmatprep.mubr.f32.mxu0 %v1517
    %3495 = vmatmul.mubr.f32.gmra.mrb[0].mxu0 %v1516
    %v3496 = vpop.f32.mrb[0].mxu0
    %v3497 = vadd.f32 %v3372, %v3496
    %v3498 = vpop.f32.mrb[0].mxu0
    %v3499 = vadd.f32 %v3374, %v3498
    %3500 = vmatprep.mubr.f32.mxu0 %v1522
    %3501 = vmatmul.mubr.f32.gmra.mrb[0].mxu0 %v1521
    %v3502 = vpop.f32.mrb[0].mxu0
    %v3503 = vadd.f32 %v3378, %v3502
    %v3504 = vpop.f32.mrb[0].mxu0
    %v3505 = vadd.f32 %v3380, %v3504
    %3506 = vmatprep.mubr.f32.mxu0 %v1527
    %3507 = vmatmul.mubr.f32.gmra.mrb[0].mxu0 %v1526
    %v3508 = vpop.f32.mrb[0].mxu0
    %v3509 = vadd.f32 %v3384, %v3508
    %v3510 = vpop.f32.mrb[0].mxu0
    %v3511 = vadd.f32 %v3386, %v3510
    %3512 = vmatprep.mubr.f32.mxu0 %v1532
    %3513 = vmatmul.mubr.f32.gmra.mrb[0].mxu0 %v1531
    %v3514 = vpop.f32.mrb[0].mxu0
    %v3515 = vadd.f32 %v3390, %v3514
    %v3516 = vpop.f32.mrb[0].mxu0
    %v3517 = vadd.f32 %v3392, %v3516
    %3518 = vmatprep.mubr.f32.mxu0 %v1537
    %3519 = vmatmul.mubr.f32.gmra.mrb[0].mxu0 %v1536
    %v3520 = vpop.f32.mrb[0].mxu0
    %v3521 = vadd.f32 %v3396, %v3520
    %v3522 = vpop.f32.mrb[0].mxu0
    %v3523 = vadd.f32 %v3398, %v3522
    %3524 = vmatprep.mubr.f32.mxu0 %v1542
    %3525 = vmatmul.mubr.f32.gmra.mrb[0].mxu0 %v1541
    %v3526 = vpop.f32.mrb[0].mxu0
    %v3527 = vadd.f32 %v3402, %v3526
    %v3528 = vpop.f32.mrb[0].mxu0
    %v3529 = vadd.f32 %v3404, %v3528
    %3530 = vmatprep.mubr.f32.mxu0 %v1547
    %3531 = vmatmul.mubr.f32.gmra.mrb[0].mxu0 %v1546
    %v3532 = vpop.f32.mrb[0].mxu0
    %v3533 = vadd.f32 %v3408, %v3532
    %v3534 = vpop.f32.mrb[0].mxu0
    %v3535 = vadd.f32 %v3410, %v3534
    %3536 = vmatprep.mubr.f32.mxu0 %v1552
    %3537 = vmatmul.mubr.f32.gmra.mrb[0].mxu0 %v1551
    %v3538 = vpop.f32.mrb[0].mxu0
    %v3539 = vadd.f32 %v3414, %v3538
    %v3540 = vpop.f32.mrb[0].mxu0
    %v3541 = vadd.f32 %v3416, %v3540
    %3542 = vmatprep.mubr.f32.mxu0 %v1557
    %3543 = vmatmul.mubr.f32.gmra.mrb[0].mxu0 %v1556
    %v3544 = vpop.f32.mrb[0].mxu0
    %v3545 = vadd.f32 %v3420, %v3544
    %v3546 = vpop.f32.mrb[0].mxu0
    %v3547 = vadd.f32 %v3422, %v3546
    %3548 = vmatprep.mubr.f32.mxu0 %v1562
    %3549 = vmatmul.mubr.f32.gmra.mrb[0].mxu0 %v1561
    %v3550 = vpop.f32.mrb[0].mxu0
    %v3551 = vadd.f32 %v3426, %v3550
    %v3552 = vpop.f32.mrb[0].mxu0
    %v3553 = vadd.f32 %v3428, %v3552
    %3554 = vdwg.mxu0
    %3555 = vmatprep.subr.mxu0 %v2083
    %3556 = vmatpush1.msra.mxu0 %v2082
    %3557 = vmatprep.subr.mxu0 %v2091
    %3558 = vmatpush1.msra.mxu0 %v2090
    %3559 = vmatprep.subr.mxu0 %v2099
    %3560 = vmatpush1.msra.mxu0 %v2098
    %3561 = vmatprep.subr.mxu0 %v2107
    %3562 = vmatpush1.msra.mxu0 %v2106
    %3563 = vmatprep.subr.mxu0 0.0
    %3564 = vmatpush1.msra.mxu0 0.0
    %3565 = vmatprep.subr.mxu0 0.0
    %3566 = vmatpush1.msra.mxu0 0.0
    %3567 = vmatprep.subr.mxu0 0.0
    %3568 = vmatpush1.msra.mxu0 0.0
    %3569 = vmatprep.subr.mxu0 0.0
    %3570 = vmatpush1.msra.mxu0 0.0
    %3571 = vmatprep.subr.mxu0 0.0
    %3572 = vmatpush1.msra.mxu0 0.0
    %3573 = vmatprep.subr.mxu0 0.0
    %3574 = vmatpush1.msra.mxu0 0.0
    %3575 = vmatprep.subr.mxu0 0.0
    %3576 = vmatpush1.msra.mxu0 0.0
    %3577 = vmatprep.subr.mxu0 0.0
    %3578 = vmatpush1.msra.mxu0 0.0
    %3579 = vmatprep.subr.mxu0 0.0
    %3580 = vmatpush1.msra.mxu0 0.0
    %3581 = vmatprep.subr.mxu0 0.0
    %3582 = vmatpush1.msra.mxu0 0.0
    %3583 = vmatprep.subr.mxu0 0.0
    %3584 = vmatpush1.msra.mxu0 0.0
    %3585 = vmatprep.subr.mxu0 0.0
    %3586 = vmatpush1.msra.mxu0 0.0
    %3587 = vmatprep.subr.mxu0 0.0
    %3588 = vmatpush1.msra.mxu0 0.0
    %3589 = vmatprep.subr.mxu0 0.0
    %3590 = vmatpush1.msra.mxu0 0.0
    %3591 = vmatprep.subr.mxu0 0.0
    %3592 = vmatpush1.msra.mxu0 0.0
    %3593 = vmatprep.subr.mxu0 0.0
    %3594 = vmatpush1.msra.mxu0 0.0
    %3595 = vmatprep.subr.mxu0 0.0
    %3596 = vmatpush1.msra.mxu0 0.0
    %3597 = vmatprep.subr.mxu0 0.0
    %3598 = vmatpush1.msra.mxu0 0.0
    %3599 = vmatprep.subr.mxu0 0.0
    %3600 = vmatpush1.msra.mxu0 0.0
    %3601 = vmatprep.subr.mxu0 0.0
    %3602 = vmatpush1.msra.mxu0 0.0
    %3603 = vmatprep.subr.mxu0 0.0
    %3604 = vmatpush1.msra.mxu0 0.0
    %3605 = vmatprep.subr.mxu0 0.0
    %3606 = vmatpush1.msra.mxu0 0.0
    %3607 = vmatprep.subr.mxu0 0.0
    %3608 = vmatpush1.msra.mxu0 0.0
    %3609 = vmatprep.subr.mxu0 0.0
    %3610 = vmatpush1.msra.mxu0 0.0
    %3611 = vmatprep.subr.mxu0 0.0
    %3612 = vmatpush1.msra.mxu0 0.0
    %3613 = vmatprep.subr.mxu0 0.0
    %3614 = vmatpush1.msra.mxu0 0.0
    %3615 = vmatprep.subr.mxu0 0.0
    %3616 = vmatpush1.msra.mxu0 0.0
    %3617 = vmatprep.subr.mxu0 0.0
    %3618 = vmatpush1.msra.mxu0 0.0
    %3619 = vmatprep.mubr.f32.mxu0 0.0
    %3620 = vmatmul.mubr.f32.gmra.mrb[0].mxu0 %v2151
    %v3621 = vpop.f32.mrb[0].mxu0
    %v3622 = vadd.f32 %v3497, %v3621
    %v3623 = vpop.f32.mrb[0].mxu0
    %v3624 = vadd.f32 %v3499, %v3623
    %3625 = vmatprep.mubr.f32.mxu0 0.0
    %3626 = vmatmul.mubr.f32.gmra.mrb[0].mxu0 %v2154
    %v3627 = vpop.f32.mrb[0].mxu0
    %v3628 = vadd.f32 %v3503, %v3627
    %v3629 = vpop.f32.mrb[0].mxu0
    %v3630 = vadd.f32 %v3505, %v3629
    %3631 = vmatprep.mubr.f32.mxu0 0.0
    %3632 = vmatmul.mubr.f32.gmra.mrb[0].mxu0 %v2157
    %v3633 = vpop.f32.mrb[0].mxu0
    %v3634 = vadd.f32 %v3509, %v3633
    %v3635 = vpop.f32.mrb[0].mxu0
    %v3636 = vadd.f32 %v3511, %v3635
    %3637 = vmatprep.mubr.f32.mxu0 0.0
    %3638 = vmatmul.mubr.f32.gmra.mrb[0].mxu0 %v2160
    %v3639 = vpop.f32.mrb[0].mxu0
    %v3640 = vadd.f32 %v3515, %v3639
    %v3641 = vpop.f32.mrb[0].mxu0
    %v3642 = vadd.f32 %v3517, %v3641
    %3643 = vmatprep.mubr.f32.mxu0 0.0
    %3644 = vmatmul.mubr.f32.gmra.mrb[0].mxu0 %v2163
    %v3645 = vpop.f32.mrb[0].mxu0
    %v3646 = vadd.f32 %v3521, %v3645
    %v3647 = vpop.f32.mrb[0].mxu0
    %v3648 = vadd.f32 %v3523, %v3647
    %3649 = vmatprep.mubr.f32.mxu0 0.0
    %3650 = vmatmul.mubr.f32.gmra.mrb[0].mxu0 %v2166
    %v3651 = vpop.f32.mrb[0].mxu0
    %v3652 = vadd.f32 %v3527, %v3651
    %v3653 = vpop.f32.mrb[0].mxu0
    %v3654 = vadd.f32 %v3529, %v3653
    %3655 = vmatprep.mubr.f32.mxu0 0.0
    %3656 = vmatmul.mubr.f32.gmra.mrb[0].mxu0 %v2169
    %v3657 = vpop.f32.mrb[0].mxu0
    %v3658 = vadd.f32 %v3533, %v3657
    %v3659 = vpop.f32.mrb[0].mxu0
    %v3660 = vadd.f32 %v3535, %v3659
    %3661 = vmatprep.mubr.f32.mxu0 0.0
    %3662 = vmatmul.mubr.f32.gmra.mrb[0].mxu0 %v2172
    %v3663 = vpop.f32.mrb[0].mxu0
    %v3664 = vadd.f32 %v3539, %v3663
    %v3665 = vpop.f32.mrb[0].mxu0
    %v3666 = vadd.f32 %v3541, %v3665
    %3667 = vmatprep.mubr.f32.mxu0 0.0
    %3668 = vmatmul.mubr.f32.gmra.mrb[0].mxu0 %v2175
    %v3669 = vpop.f32.mrb[0].mxu0
    %v3670 = vadd.f32 %v3545, %v3669
    %v3671 = vpop.f32.mrb[0].mxu0
    %v3672 = vadd.f32 %v3547, %v3671
    %3673 = vmatprep.mubr.f32.mxu0 0.0
    %3674 = vmatmul.mubr.f32.gmra.mrb[0].mxu0 %v2178
    %v3675 = vpop.f32.mrb[0].mxu0
    %v3676 = vadd.f32 %v3551, %v3675
    %v3677 = vpop.f32.mrb[0].mxu0
    %v3678 = vadd.f32 %v3553, %v3677
    %3679 = vdwg.mxu0
    %v3680 = vmax.f32 %v2497, 0.0
    %v3681 = vmax.f32 %v2499, 0.0
    %v3682 = vmax.f32 %v2872, 0.0
    %v3683 = vmax.f32 %v2874, 0.0
    %v3684 = vmax.f32 %v3247, 0.0
    %v3685 = vmax.f32 %v3249, 0.0
    %v3686 = vmax.f32 %v3622, 0.0
    %v3687 = vmax.f32 %v3624, 0.0
    %v3688 = vmax.f32 %v2503, 0.0
    %v3689 = vmax.f32 %v2505, 0.0
    %v3690 = vmax.f32 %v2878, 0.0
    %v3691 = vmax.f32 %v2880, 0.0
    %v3692 = vmax.f32 %v3253, 0.0
    %v3693 = vmax.f32 %v3255, 0.0
    %v3694 = vmax.f32 %v3628, 0.0
    %v3695 = vmax.f32 %v3630, 0.0
    %v3696 = vmax.f32 %v2509, 0.0
    %v3697 = vmax.f32 %v2511, 0.0
    %v3698 = vmax.f32 %v2884, 0.0
    %v3699 = vmax.f32 %v2886, 0.0
    %v3700 = vmax.f32 %v3259, 0.0
    %v3701 = vmax.f32 %v3261, 0.0
    %v3702 = vmax.f32 %v3634, 0.0
    %v3703 = vmax.f32 %v3636, 0.0
    %v3704 = vmax.f32 %v2515, 0.0
    %v3705 = vmax.f32 %v2517, 0.0
    %v3706 = vmax.f32 %v2890, 0.0
    %v3707 = vmax.f32 %v2892, 0.0
    %v3708 = vmax.f32 %v3265, 0.0
    %v3709 = vmax.f32 %v3267, 0.0
    %v3710 = vmax.f32 %v3640, 0.0
    %v3711 = vmax.f32 %v3642, 0.0
    %v3712 = vmax.f32 %v2521, 0.0
    %v3713 = vmax.f32 %v2523, 0.0
    %v3714 = vmax.f32 %v2896, 0.0
    %v3715 = vmax.f32 %v2898, 0.0
    %v3716 = vmax.f32 %v3271, 0.0
    %v3717 = vmax.f32 %v3273, 0.0
    %v3718 = vmax.f32 %v3646, 0.0
    %v3719 = vmax.f32 %v3648, 0.0
    %v3720 = vmax.f32 %v2527, 0.0
    %v3721 = vmax.f32 %v2529, 0.0
    %v3722 = vmax.f32 %v2902, 0.0
    %v3723 = vmax.f32 %v2904, 0.0
    %v3724 = vmax.f32 %v3277, 0.0
    %v3725 = vmax.f32 %v3279, 0.0
    %v3726 = vmax.f32 %v3652, 0.0
    %v3727 = vmax.f32 %v3654, 0.0
    %v3728 = vmax.f32 %v2533, 0.0
    %v3729 = vmax.f32 %v2535, 0.0
    %v3730 = vmax.f32 %v2908, 0.0
    %v3731 = vmax.f32 %v2910, 0.0
    %v3732 = vmax.f32 %v3283, 0.0
    %v3733 = vmax.f32 %v3285, 0.0
    %v3734 = vmax.f32 %v3658, 0.0
    %v3735 = vmax.f32 %v3660, 0.0
    %v3736 = vmax.f32 %v2539, 0.0
    %v3737 = vmax.f32 %v2541, 0.0
    %v3738 = vmax.f32 %v2914, 0.0
    %v3739 = vmax.f32 %v2916, 0.0
    %v3740 = vmax.f32 %v3289, 0.0
    %v3741 = vmax.f32 %v3291, 0.0
    %v3742 = vmax.f32 %v3664, 0.0
    %v3743 = vmax.f32 %v3666, 0.0
    %v3744 = vmax.f32 %v2545, 0.0
    %v3745 = vmax.f32 %v2547, 0.0
    %v3746 = vmax.f32 %v2920, 0.0
    %v3747 = vmax.f32 %v2922, 0.0
    %v3748 = vmax.f32 %v3295, 0.0
    %v3749 = vmax.f32 %v3297, 0.0
    %v3750 = vmax.f32 %v3670, 0.0
    %v3751 = vmax.f32 %v3672, 0.0
    %v3752 = vmax.f32 %v2551, 0.0
    %v3753 = vmax.f32 %v2553, 0.0
    %v3754 = vmax.f32 %v2926, 0.0
    %v3755 = vmax.f32 %v2928, 0.0
    %v3756 = vmax.f32 %v3301, 0.0
    %v3757 = vmax.f32 %v3303, 0.0
    %v3758 = vmax.f32 %v3676, 0.0
    %v3759 = vmax.f32 %v3678, 0.0
    %3760 = vst [vmem:[#allocation2] sm:$0xff] %v3680
    %3761 = vst [vmem:[#allocation2 + $0x8] sm:$0xff] %v3681
    %3762 = vst [vmem:[#allocation2 + $0x10] sm:$0xff] %v3682
    %3763 = vst [vmem:[#allocation2 + $0x18] sm:$0xff] %v3683
    %3764 = vst [vmem:[#allocation2 + $0x20] sm:$0xff] %v3684
    %3765 = vst [vmem:[#allocation2 + $0x28] sm:$0xff] %v3685
    %3766 = vst [vmem:[#allocation2 + $0x30] sm:$0xff] %v3686
    %3767 = vst [vmem:[#allocation2 + $0x38] sm:$0xff] %v3687
    %3768 = vst [vmem:[#allocation2 + $0x40] sm:$0xff] %v3688
    %3769 = vst [vmem:[#allocation2 + $0x48] sm:$0xff] %v3689
    %3770 = vst [vmem:[#allocation2 + $0x50] sm:$0xff] %v3690
    %3771 = vst [vmem:[#allocation2 + $0x58] sm:$0xff] %v3691
    %3772 = vst [vmem:[#allocation2 + $0x60] sm:$0xff] %v3692
    %3773 = vst [vmem:[#allocation2 + $0x68] sm:$0xff] %v3693
    %3774 = vst [vmem:[#allocation2 + $0x70] sm:$0xff] %v3694
    %3775 = vst [vmem:[#allocation2 + $0x78] sm:$0xff] %v3695
    %3776 = vst [vmem:[#allocation2 + $0x80] sm:$0xff] %v3696
    %3777 = vst [vmem:[#allocation2 + $0x88] sm:$0xff] %v3697
    %3778 = vst [vmem:[#allocation2 + $0x90] sm:$0xff] %v3698
    %3779 = vst [vmem:[#allocation2 + $0x98] sm:$0xff] %v3699
    %3780 = vst [vmem:[#allocation2 + $0xa0] sm:$0xff] %v3700
    %3781 = vst [vmem:[#allocation2 + $0xa8] sm:$0xff] %v3701
    %3782 = vst [vmem:[#allocation2 + $0xb0] sm:$0xff] %v3702
    %3783 = vst [vmem:[#allocation2 + $0xb8] sm:$0xff] %v3703
    %3784 = vst [vmem:[#allocation2 + $0xc0] sm:$0xff] %v3704
    %3785 = vst [vmem:[#allocation2 + $0xc8] sm:$0xff] %v3705
    %3786 = vst [vmem:[#allocation2 + $0xd0] sm:$0xff] %v3706
    %3787 = vst [vmem:[#allocation2 + $0xd8] sm:$0xff] %v3707
    %3788 = vst [vmem:[#allocation2 + $0xe0] sm:$0xff] %v3708
    %3789 = vst [vmem:[#allocation2 + $0xe8] sm:$0xff] %v3709
    %3790 = vst [vmem:[#allocation2 + $0xf0] sm:$0xff] %v3710
    %3791 = vst [vmem:[#allocation2 + $0xf8] sm:$0xff] %v3711
    %3792 = vst [vmem:[#allocation2 + $0x100] sm:$0xff] %v3712
    %3793 = vst [vmem:[#allocation2 + $0x108] sm:$0xff] %v3713
    %3794 = vst [vmem:[#allocation2 + $0x110] sm:$0xff] %v3714
    %3795 = vst [vmem:[#allocation2 + $0x118] sm:$0xff] %v3715
    %3796 = vst [vmem:[#allocation2 + $0x120] sm:$0xff] %v3716
    %3797 = vst [vmem:[#allocation2 + $0x128] sm:$0xff] %v3717
    %3798 = vst [vmem:[#allocation2 + $0x130] sm:$0xff] %v3718
    %3799 = vst [vmem:[#allocation2 + $0x138] sm:$0xff] %v3719
    %3800 = vst [vmem:[#allocation2 + $0x140] sm:$0xff] %v3720
    %3801 = vst [vmem:[#allocation2 + $0x148] sm:$0xff] %v3721
    %3802 = vst [vmem:[#allocation2 + $0x150] sm:$0xff] %v3722
    %3803 = vst [vmem:[#allocation2 + $0x158] sm:$0xff] %v3723
    %3804 = vst [vmem:[#allocation2 + $0x160] sm:$0xff] %v3724
    %3805 = vst [vmem:[#allocation2 + $0x168] sm:$0xff] %v3725
    %3806 = vst [vmem:[#allocation2 + $0x170] sm:$0xff] %v3726
    %3807 = vst [vmem:[#allocation2 + $0x178] sm:$0xff] %v3727
    %3808 = vst [vmem:[#allocation2 + $0x180] sm:$0xff] %v3728
    %3809 = vst [vmem:[#allocation2 + $0x188] sm:$0xff] %v3729
    %3810 = vst [vmem:[#allocation2 + $0x190] sm:$0xff] %v3730
    %3811 = vst [vmem:[#allocation2 + $0x198] sm:$0xff] %v3731
    %3812 = vst [vmem:[#allocation2 + $0x1a0] sm:$0xff] %v3732
    %3813 = vst [vmem:[#allocation2 + $0x1a8] sm:$0xff] %v3733
    %3814 = vst [vmem:[#allocation2 + $0x1b0] sm:$0xff] %v3734
    %3815 = vst [vmem:[#allocation2 + $0x1b8] sm:$0xff] %v3735
    %3816 = vst [vmem:[#allocation2 + $0x1c0] sm:$0xff] %v3736
    %3817 = vst [vmem:[#allocation2 + $0x1c8] sm:$0xff] %v3737
    %3818 = vst [vmem:[#allocation2 + $0x1d0] sm:$0xff] %v3738
    %3819 = vst [vmem:[#allocation2 + $0x1d8] sm:$0xff] %v3739
    %3820 = vst [vmem:[#allocation2 + $0x1e0] sm:$0xff] %v3740
    %3821 = vst [vmem:[#allocation2 + $0x1e8] sm:$0xff] %v3741
    %3822 = vst [vmem:[#allocation2 + $0x1f0] sm:$0xff] %v3742
    %3823 = vst [vmem:[#allocation2 + $0x1f8] sm:$0xff] %v3743
    %3824 = vst [vmem:[#allocation2 + $0x200] sm:$0xff] %v3744
    %3825 = vst [vmem:[#allocation2 + $0x208] sm:$0xff] %v3745
    %3826 = vst [vmem:[#allocation2 + $0x210] sm:$0xff] %v3746
    %3827 = vst [vmem:[#allocation2 + $0x218] sm:$0xff] %v3747
    %3828 = vst [vmem:[#allocation2 + $0x220] sm:$0xff] %v3748
    %3829 = vst [vmem:[#allocation2 + $0x228] sm:$0xff] %v3749
    %3830 = vst [vmem:[#allocation2 + $0x230] sm:$0xff] %v3750
    %3831 = vst [vmem:[#allocation2 + $0x238] sm:$0xff] %v3751
    %3832 = vst [vmem:[#allocation2 + $0x240] sm:$0xff] %v3752
    %3833 = vst [vmem:[#allocation2 + $0x248] sm:$0xff] %v3753
    %3834 = vst [vmem:[#allocation2 + $0x250] sm:$0xff] %v3754
    %3835 = vst [vmem:[#allocation2 + $0x258] sm:$0xff] %v3755
    %3836 = vst [vmem:[#allocation2 + $0x260] sm:$0xff] %v3756
    %3837 = vst [vmem:[#allocation2 + $0x268] sm:$0xff] %v3757
    %3838 = vst [vmem:[#allocation2 + $0x270] sm:$0xff] %v3758
    %3839 = vst [vmem:[#allocation2 + $0x278] sm:$0xff] %v3759
    %v3840 = vld [vmem:[#allocation2] sm:$0xff]
    %v3841 = vld [vmem:[#allocation2 + $0x8] sm:$0xff]
    %v3842 = vld [vmem:[#allocation2 + $0x10] sm:$0xff]
    %v3843 = vld [vmem:[#allocation2 + $0x18] sm:$0xff]
    %v3844 = vld [vmem:[#allocation2 + $0x20] sm:$0xff]
    %v3845 = vld [vmem:[#allocation2 + $0x28] sm:$0xff]
    %v3846 = vld [vmem:[#allocation2 + $0x30] sm:$0xff]
    %v3847 = vld [vmem:[#allocation2 + $0x38] sm:$0xff]
    %v3848 = vld [vmem:[#allocation14] sm:$0xff]
    %v3849 = vld [vmem:[#allocation14 + $0x8] sm:$0xff]
    %v3850 = vld [vmem:[#allocation14 + $0x10] sm:$0xff]
    %v3851 = vld [vmem:[#allocation14 + $0x18] sm:$0xff]
    %v3852 = vld [vmem:[#allocation14 + $0x20] sm:$0xff]
    %v3853 = vld [vmem:[#allocation14 + $0x28] sm:$0xff]
    %v3854 = vld [vmem:[#allocation14 + $0x30] sm:$0xff]
    %v3855 = vld [vmem:[#allocation14 + $0x38] sm:$0xff]
    %v3856 = vld [vmem:[#allocation14 + $0x40] sm:$0xff]
    %v3857 = vld [vmem:[#allocation14 + $0x48] sm:$0xff]
    %v3858 = vld [vmem:[#allocation14 + $0x50] sm:$0xff]
    %v3859 = vld [vmem:[#allocation14 + $0x58] sm:$0xff]
    %v3860 = vld [vmem:[#allocation14 + $0x60] sm:$0xff]
    %v3861 = vld [vmem:[#allocation14 + $0x68] sm:$0xff]
    %v3862 = vld [vmem:[#allocation14 + $0x70] sm:$0xff]
    %v3863 = vld [vmem:[#allocation14 + $0x78] sm:$0xff]
    %v3864 = vld [vmem:[#allocation14 + $0x80] sm:$0xff]
    %v3865 = vld [vmem:[#allocation14 + $0x88] sm:$0xff]
    %v3866 = vld [vmem:[#allocation14 + $0x90] sm:$0xff]
    %v3867 = vld [vmem:[#allocation14 + $0x98] sm:$0xff]
    %v3868 = vld [vmem:[#allocation14 + $0xa0] sm:$0xff]
    %v3869 = vld [vmem:[#allocation14 + $0xa8] sm:$0xff]
    %v3870 = vld [vmem:[#allocation14 + $0xb0] sm:$0xff]
    %v3871 = vld [vmem:[#allocation14 + $0xb8] sm:$0xff]
    %v3872 = vld [vmem:[#allocation14 + $0xc0] sm:$0xff]
    %v3873 = vld [vmem:[#allocation14 + $0xc8] sm:$0xff]
    %v3874 = vld [vmem:[#allocation14 + $0xd0] sm:$0xff]
    %v3875 = vld [vmem:[#allocation14 + $0xd8] sm:$0xff]
    %v3876 = vld [vmem:[#allocation14 + $0xe0] sm:$0xff]
    %v3877 = vld [vmem:[#allocation14 + $0xe8] sm:$0xff]
    %v3878 = vld [vmem:[#allocation14 + $0xf0] sm:$0xff]
    %v3879 = vld [vmem:[#allocation14 + $0xf8] sm:$0xff]
    %v3880 = vld [vmem:[#allocation14 + $0x100] sm:$0xff]
    %v3881 = vld [vmem:[#allocation14 + $0x108] sm:$0xff]
    %v3882 = vld [vmem:[#allocation14 + $0x110] sm:$0xff]
    %v3883 = vld [vmem:[#allocation14 + $0x118] sm:$0xff]
    %v3884 = vld [vmem:[#allocation14 + $0x120] sm:$0xff]
    %v3885 = vld [vmem:[#allocation14 + $0x128] sm:$0xff]
    %v3886 = vld [vmem:[#allocation14 + $0x130] sm:$0xff]
    %v3887 = vld [vmem:[#allocation14 + $0x138] sm:$0xff]
    %v3888 = vld [vmem:[#allocation14 + $0x140] sm:$0xff]
    %v3889 = vld [vmem:[#allocation14 + $0x148] sm:$0xff]
    %v3890 = vld [vmem:[#allocation14 + $0x150] sm:$0xff]
    %v3891 = vld [vmem:[#allocation14 + $0x158] sm:$0xff]
    %v3892 = vld [vmem:[#allocation14 + $0x160] sm:$0xff]
    %v3893 = vld [vmem:[#allocation14 + $0x168] sm:$0xff]
    %v3894 = vld [vmem:[#allocation14 + $0x170] sm:$0xff]
    %v3895 = vld [vmem:[#allocation14 + $0x178] sm:$0xff]
    %v3896 = vld [vmem:[#allocation14 + $0x180] sm:$0xff]
    %v3897 = vld [vmem:[#allocation14 + $0x188] sm:$0xff]
    %v3898 = vld [vmem:[#allocation14 + $0x190] sm:$0xff]
    %v3899 = vld [vmem:[#allocation14 + $0x198] sm:$0xff]
    %v3900 = vld [vmem:[#allocation14 + $0x1a0] sm:$0xff]
    %v3901 = vld [vmem:[#allocation14 + $0x1a8] sm:$0xff]
    %v3902 = vld [vmem:[#allocation14 + $0x1b0] sm:$0xff]
    %v3903 = vld [vmem:[#allocation14 + $0x1b8] sm:$0xff]
    %v3904 = vld [vmem:[#allocation14 + $0x1c0] sm:$0xff]
    %v3905 = vld [vmem:[#allocation14 + $0x1c8] sm:$0xff]
    %v3906 = vld [vmem:[#allocation14 + $0x1d0] sm:$0xff]
    %v3907 = vld [vmem:[#allocation14 + $0x1d8] sm:$0xff]
    %v3908 = vld [vmem:[#allocation14 + $0x1e0] sm:$0xff]
    %v3909 = vld [vmem:[#allocation14 + $0x1e8] sm:$0xff]
    %v3910 = vld [vmem:[#allocation14 + $0x1f0] sm:$0xff]
    %v3911 = vld [vmem:[#allocation14 + $0x1f8] sm:$0xff]
    %v3912 = vld [vmem:[#allocation14 + $0x200] sm:$0xff]
    %v3913 = vld [vmem:[#allocation14 + $0x208] sm:$0xff]
    %v3914 = vld [vmem:[#allocation14 + $0x210] sm:$0xff]
    %v3915 = vld [vmem:[#allocation14 + $0x218] sm:$0xff]
    %v3916 = vld [vmem:[#allocation14 + $0x220] sm:$0xff]
    %v3917 = vld [vmem:[#allocation14 + $0x228] sm:$0xff]
    %v3918 = vld [vmem:[#allocation14 + $0x230] sm:$0xff]
    %v3919 = vld [vmem:[#allocation14 + $0x238] sm:$0xff]
    %v3920 = vld [vmem:[#allocation14 + $0x240] sm:$0xff]
    %v3921 = vld [vmem:[#allocation14 + $0x248] sm:$0xff]
    %v3922 = vld [vmem:[#allocation14 + $0x250] sm:$0xff]
    %v3923 = vld [vmem:[#allocation14 + $0x258] sm:$0xff]
    %v3924 = vld [vmem:[#allocation14 + $0x260] sm:$0xff]
    %v3925 = vld [vmem:[#allocation14 + $0x268] sm:$0xff]
    %v3926 = vld [vmem:[#allocation14 + $0x270] sm:$0xff]
    %v3927 = vld [vmem:[#allocation14 + $0x278] sm:$0xff]
    %v3928 = vld [vmem:[#allocation14 + $0x280] sm:$0xff]
    %v3929 = vld [vmem:[#allocation14 + $0x288] sm:$0xff]
    %v3930 = vld [vmem:[#allocation14 + $0x290] sm:$0xff]
    %v3931 = vld [vmem:[#allocation14 + $0x298] sm:$0xff]
    %v3932 = vld [vmem:[#allocation14 + $0x2a0] sm:$0xff]
    %v3933 = vld [vmem:[#allocation14 + $0x2a8] sm:$0xff]
    %v3934 = vld [vmem:[#allocation14 + $0x2b0] sm:$0xff]
    %v3935 = vld [vmem:[#allocation14 + $0x2b8] sm:$0xff]
    %v3936 = vld [vmem:[#allocation14 + $0x2c0] sm:$0xff]
    %v3937 = vld [vmem:[#allocation14 + $0x2c8] sm:$0xff]
    %v3938 = vld [vmem:[#allocation14 + $0x2d0] sm:$0xff]
    %v3939 = vld [vmem:[#allocation14 + $0x2d8] sm:$0xff]
    %v3940 = vld [vmem:[#allocation14 + $0x2e0] sm:$0xff]
    %v3941 = vld [vmem:[#allocation14 + $0x2e8] sm:$0xff]
    %v3942 = vld [vmem:[#allocation14 + $0x2f0] sm:$0xff]
    %v3943 = vld [vmem:[#allocation14 + $0x2f8] sm:$0xff]
    %v3944 = vld [vmem:[#allocation14 + $0x300] sm:$0xff]
    %v3945 = vld [vmem:[#allocation14 + $0x308] sm:$0xff]
    %v3946 = vld [vmem:[#allocation14 + $0x310] sm:$0xff]
    %v3947 = vld [vmem:[#allocation14 + $0x318] sm:$0xff]
    %v3948 = vld [vmem:[#allocation14 + $0x320] sm:$0xff]
    %v3949 = vld [vmem:[#allocation14 + $0x328] sm:$0xff]
    %v3950 = vld [vmem:[#allocation14 + $0x330] sm:$0xff]
    %v3951 = vld [vmem:[#allocation14 + $0x338] sm:$0xff]
    %v3952 = vld [vmem:[#allocation14 + $0x340] sm:$0xff]
    %v3953 = vld [vmem:[#allocation14 + $0x348] sm:$0xff]
    %v3954 = vld [vmem:[#allocation14 + $0x350] sm:$0xff]
    %v3955 = vld [vmem:[#allocation14 + $0x358] sm:$0xff]
    %v3956 = vld [vmem:[#allocation14 + $0x360] sm:$0xff]
    %v3957 = vld [vmem:[#allocation14 + $0x368] sm:$0xff]
    %v3958 = vld [vmem:[#allocation14 + $0x370] sm:$0xff]
    %v3959 = vld [vmem:[#allocation14 + $0x378] sm:$0xff]
    %v3960 = vld [vmem:[#allocation14 + $0x380] sm:$0xff]
    %v3961 = vld [vmem:[#allocation14 + $0x388] sm:$0xff]
    %v3962 = vld [vmem:[#allocation14 + $0x390] sm:$0xff]
    %v3963 = vld [vmem:[#allocation14 + $0x398] sm:$0xff]
    %v3964 = vld [vmem:[#allocation14 + $0x3a0] sm:$0xff]
    %v3965 = vld [vmem:[#allocation14 + $0x3a8] sm:$0xff]
    %v3966 = vld [vmem:[#allocation14 + $0x3b0] sm:$0xff]
    %v3967 = vld [vmem:[#allocation14 + $0x3b8] sm:$0xff]
    %v3968 = vld [vmem:[#allocation14 + $0x3c0] sm:$0xff]
    %v3969 = vld [vmem:[#allocation14 + $0x3c8] sm:$0xff]
    %v3970 = vld [vmem:[#allocation14 + $0x3d0] sm:$0xff]
    %v3971 = vld [vmem:[#allocation14 + $0x3d8] sm:$0xff]
    %v3972 = vld [vmem:[#allocation14 + $0x3e0] sm:$0xff]
    %v3973 = vld [vmem:[#allocation14 + $0x3e8] sm:$0xff]
    %v3974 = vld [vmem:[#allocation14 + $0x3f0] sm:$0xff]
    %v3975 = vld [vmem:[#allocation14 + $0x3f8] sm:$0xff]
    %v3976 = vld [vmem:[#allocation14 + $0x400] sm:$0xff]
    %v3977 = vld [vmem:[#allocation14 + $0x408] sm:$0xff]
    %v3978 = vld [vmem:[#allocation14 + $0x410] sm:$0xff]
    %v3979 = vld [vmem:[#allocation14 + $0x418] sm:$0xff]
    %v3980 = vld [vmem:[#allocation14 + $0x420] sm:$0xff]
    %v3981 = vld [vmem:[#allocation14 + $0x428] sm:$0xff]
    %v3982 = vld [vmem:[#allocation14 + $0x430] sm:$0xff]
    %v3983 = vld [vmem:[#allocation14 + $0x438] sm:$0xff]
    %v3984 = vld [vmem:[#allocation14 + $0x440] sm:$0xff]
    %v3985 = vld [vmem:[#allocation14 + $0x448] sm:$0xff]
    %v3986 = vld [vmem:[#allocation14 + $0x450] sm:$0xff]
    %v3987 = vld [vmem:[#allocation14 + $0x458] sm:$0xff]
    %v3988 = vld [vmem:[#allocation14 + $0x460] sm:$0xff]
    %v3989 = vld [vmem:[#allocation14 + $0x468] sm:$0xff]
    %v3990 = vld [vmem:[#allocation14 + $0x470] sm:$0xff]
    %v3991 = vld [vmem:[#allocation14 + $0x478] sm:$0xff]
    %v3992 = vld [vmem:[#allocation14 + $0x480] sm:$0xff]
    %v3993 = vld [vmem:[#allocation14 + $0x488] sm:$0xff]
    %v3994 = vld [vmem:[#allocation14 + $0x490] sm:$0xff]
    %v3995 = vld [vmem:[#allocation14 + $0x498] sm:$0xff]
    %v3996 = vld [vmem:[#allocation14 + $0x4a0] sm:$0xff]
    %v3997 = vld [vmem:[#allocation14 + $0x4a8] sm:$0xff]
    %v3998 = vld [vmem:[#allocation14 + $0x4b0] sm:$0xff]
    %v3999 = vld [vmem:[#allocation14 + $0x4b8] sm:$0xff]
    %v4000 = vld [vmem:[#allocation14 + $0x4c0] sm:$0xff]
    %v4001 = vld [vmem:[#allocation14 + $0x4c8] sm:$0xff]
    %v4002 = vld [vmem:[#allocation14 + $0x4d0] sm:$0xff]
    %v4003 = vld [vmem:[#allocation14 + $0x4d8] sm:$0xff]
    %v4004 = vld [vmem:[#allocation14 + $0x4e0] sm:$0xff]
    %v4005 = vld [vmem:[#allocation14 + $0x4e8] sm:$0xff]
    %v4006 = vld [vmem:[#allocation14 + $0x4f0] sm:$0xff]
    %v4007 = vld [vmem:[#allocation14 + $0x4f8] sm:$0xff]
    %v4008 = vld [vmem:[#allocation14 + $0x500] sm:$0xff]
    %v4009 = vld [vmem:[#allocation14 + $0x508] sm:$0xff]
    %v4010 = vld [vmem:[#allocation14 + $0x510] sm:$0xff]
    %v4011 = vld [vmem:[#allocation14 + $0x518] sm:$0xff]
    %v4012 = vld [vmem:[#allocation14 + $0x520] sm:$0xff]
    %v4013 = vld [vmem:[#allocation14 + $0x528] sm:$0xff]
    %v4014 = vld [vmem:[#allocation14 + $0x530] sm:$0xff]
    %v4015 = vld [vmem:[#allocation14 + $0x538] sm:$0xff]
    %v4016 = vld [vmem:[#allocation14 + $0x540] sm:$0xff]
    %v4017 = vld [vmem:[#allocation14 + $0x548] sm:$0xff]
    %v4018 = vld [vmem:[#allocation14 + $0x550] sm:$0xff]
    %v4019 = vld [vmem:[#allocation14 + $0x558] sm:$0xff]
    %v4020 = vld [vmem:[#allocation14 + $0x560] sm:$0xff]
    %v4021 = vld [vmem:[#allocation14 + $0x568] sm:$0xff]
    %v4022 = vld [vmem:[#allocation14 + $0x570] sm:$0xff]
    %v4023 = vld [vmem:[#allocation14 + $0x578] sm:$0xff]
    %v4024 = vld [vmem:[#allocation14 + $0x580] sm:$0xff]
    %v4025 = vld [vmem:[#allocation14 + $0x588] sm:$0xff]
    %v4026 = vld [vmem:[#allocation14 + $0x590] sm:$0xff]
    %v4027 = vld [vmem:[#allocation14 + $0x598] sm:$0xff]
    %v4028 = vld [vmem:[#allocation14 + $0x5a0] sm:$0xff]
    %v4029 = vld [vmem:[#allocation14 + $0x5a8] sm:$0xff]
    %v4030 = vld [vmem:[#allocation14 + $0x5b0] sm:$0xff]
    %v4031 = vld [vmem:[#allocation14 + $0x5b8] sm:$0xff]
    %v4032 = vld [vmem:[#allocation14 + $0x5c0] sm:$0xff]
    %v4033 = vld [vmem:[#allocation14 + $0x5c8] sm:$0xff]
    %v4034 = vld [vmem:[#allocation14 + $0x5d0] sm:$0xff]
    %v4035 = vld [vmem:[#allocation14 + $0x5d8] sm:$0xff]
    %v4036 = vld [vmem:[#allocation14 + $0x5e0] sm:$0xff]
    %v4037 = vld [vmem:[#allocation14 + $0x5e8] sm:$0xff]
    %v4038 = vld [vmem:[#allocation14 + $0x5f0] sm:$0xff]
    %v4039 = vld [vmem:[#allocation14 + $0x5f8] sm:$0xff]
    %v4040 = vld [vmem:[#allocation14 + $0x600] sm:$0xff]
    %v4041 = vld [vmem:[#allocation14 + $0x608] sm:$0xff]
    %v4042 = vld [vmem:[#allocation14 + $0x610] sm:$0xff]
    %v4043 = vld [vmem:[#allocation14 + $0x618] sm:$0xff]
    %v4044 = vld [vmem:[#allocation14 + $0x620] sm:$0xff]
    %v4045 = vld [vmem:[#allocation14 + $0x628] sm:$0xff]
    %v4046 = vld [vmem:[#allocation14 + $0x630] sm:$0xff]
    %v4047 = vld [vmem:[#allocation14 + $0x638] sm:$0xff]
    %v4048 = vld [vmem:[#allocation14 + $0x640] sm:$0xff]
    %v4049 = vld [vmem:[#allocation14 + $0x648] sm:$0xff]
    %v4050 = vld [vmem:[#allocation14 + $0x650] sm:$0xff]
    %v4051 = vld [vmem:[#allocation14 + $0x658] sm:$0xff]
    %v4052 = vld [vmem:[#allocation14 + $0x660] sm:$0xff]
    %v4053 = vld [vmem:[#allocation14 + $0x668] sm:$0xff]
    %v4054 = vld [vmem:[#allocation14 + $0x670] sm:$0xff]
    %v4055 = vld [vmem:[#allocation14 + $0x678] sm:$0xff]
    %v4056 = vld [vmem:[#allocation14 + $0x680] sm:$0xff]
    %v4057 = vld [vmem:[#allocation14 + $0x688] sm:$0xff]
    %v4058 = vld [vmem:[#allocation14 + $0x690] sm:$0xff]
    %v4059 = vld [vmem:[#allocation14 + $0x698] sm:$0xff]
    %v4060 = vld [vmem:[#allocation14 + $0x6a0] sm:$0xff]
    %v4061 = vld [vmem:[#allocation14 + $0x6a8] sm:$0xff]
    %v4062 = vld [vmem:[#allocation14 + $0x6b0] sm:$0xff]
    %v4063 = vld [vmem:[#allocation14 + $0x6b8] sm:$0xff]
    %v4064 = vld [vmem:[#allocation14 + $0x6c0] sm:$0xff]
    %v4065 = vld [vmem:[#allocation14 + $0x6c8] sm:$0xff]
    %v4066 = vld [vmem:[#allocation14 + $0x6d0] sm:$0xff]
    %v4067 = vld [vmem:[#allocation14 + $0x6d8] sm:$0xff]
    %v4068 = vld [vmem:[#allocation14 + $0x6e0] sm:$0xff]
    %v4069 = vld [vmem:[#allocation14 + $0x6e8] sm:$0xff]
    %v4070 = vld [vmem:[#allocation14 + $0x6f0] sm:$0xff]
    %v4071 = vld [vmem:[#allocation14 + $0x6f8] sm:$0xff]
    %v4072 = vld [vmem:[#allocation14 + $0x700] sm:$0xff]
    %v4073 = vld [vmem:[#allocation14 + $0x708] sm:$0xff]
    %v4074 = vld [vmem:[#allocation14 + $0x710] sm:$0xff]
    %v4075 = vld [vmem:[#allocation14 + $0x718] sm:$0xff]
    %v4076 = vld [vmem:[#allocation14 + $0x720] sm:$0xff]
    %v4077 = vld [vmem:[#allocation14 + $0x728] sm:$0xff]
    %v4078 = vld [vmem:[#allocation14 + $0x730] sm:$0xff]
    %v4079 = vld [vmem:[#allocation14 + $0x738] sm:$0xff]
    %v4080 = vld [vmem:[#allocation14 + $0x740] sm:$0xff]
    %v4081 = vld [vmem:[#allocation14 + $0x748] sm:$0xff]
    %v4082 = vld [vmem:[#allocation14 + $0x750] sm:$0xff]
    %v4083 = vld [vmem:[#allocation14 + $0x758] sm:$0xff]
    %v4084 = vld [vmem:[#allocation14 + $0x760] sm:$0xff]
    %v4085 = vld [vmem:[#allocation14 + $0x768] sm:$0xff]
    %v4086 = vld [vmem:[#allocation14 + $0x770] sm:$0xff]
    %v4087 = vld [vmem:[#allocation14 + $0x778] sm:$0xff]
    %v4088 = vld [vmem:[#allocation14 + $0x780] sm:$0xff]
    %v4089 = vld [vmem:[#allocation14 + $0x788] sm:$0xff]
    %v4090 = vld [vmem:[#allocation14 + $0x790] sm:$0xff]
    %v4091 = vld [vmem:[#allocation14 + $0x798] sm:$0xff]
    %v4092 = vld [vmem:[#allocation14 + $0x7a0] sm:$0xff]
    %v4093 = vld [vmem:[#allocation14 + $0x7a8] sm:$0xff]
    %v4094 = vld [vmem:[#allocation14 + $0x7b0] sm:$0xff]
    %v4095 = vld [vmem:[#allocation14 + $0x7b8] sm:$0xff]
    %v4096 = vld [vmem:[#allocation14 + $0x7c0] sm:$0xff]
    %v4097 = vld [vmem:[#allocation14 + $0x7c8] sm:$0xff]
    %v4098 = vld [vmem:[#allocation14 + $0x7d0] sm:$0xff]
    %v4099 = vld [vmem:[#allocation14 + $0x7d8] sm:$0xff]
    %v4100 = vld [vmem:[#allocation14 + $0x7e0] sm:$0xff]
    %v4101 = vld [vmem:[#allocation14 + $0x7e8] sm:$0xff]
    %v4102 = vld [vmem:[#allocation14 + $0x7f0] sm:$0xff]
    %v4103 = vld [vmem:[#allocation14 + $0x7f8] sm:$0xff]
    %4104 = vmatprep.subr.mxu0 %v3849
    %4105 = vmatpush1.msra.mxu0 %v3848
    %4106 = vmatprep.subr.mxu0 %v3851
    %4107 = vmatpush1.msra.mxu0 %v3850
    %4108 = vmatprep.subr.mxu0 %v3853
    %4109 = vmatpush1.msra.mxu0 %v3852
    %4110 = vmatprep.subr.mxu0 %v3855
    %4111 = vmatpush1.msra.mxu0 %v3854
    %4112 = vmatprep.subr.mxu0 %v3857
    %4113 = vmatpush1.msra.mxu0 %v3856
    %4114 = vmatprep.subr.mxu0 %v3859
    %4115 = vmatpush1.msra.mxu0 %v3858
    %4116 = vmatprep.subr.mxu0 %v3861
    %4117 = vmatpush1.msra.mxu0 %v3860
    %4118 = vmatprep.subr.mxu0 %v3863
    %4119 = vmatpush1.msra.mxu0 %v3862
    %4120 = vmatprep.subr.mxu0 %v3865
    %4121 = vmatpush1.msra.mxu0 %v3864
    %4122 = vmatprep.subr.mxu0 %v3867
    %4123 = vmatpush1.msra.mxu0 %v3866
    %4124 = vmatprep.subr.mxu0 %v3869
    %4125 = vmatpush1.msra.mxu0 %v3868
    %4126 = vmatprep.subr.mxu0 %v3871
    %4127 = vmatpush1.msra.mxu0 %v3870
    %4128 = vmatprep.subr.mxu0 %v3873
    %4129 = vmatpush1.msra.mxu0 %v3872
    %4130 = vmatprep.subr.mxu0 %v3875
    %4131 = vmatpush1.msra.mxu0 %v3874
    %4132 = vmatprep.subr.mxu0 %v3877
    %4133 = vmatpush1.msra.mxu0 %v3876
    %4134 = vmatprep.subr.mxu0 %v3879
    %4135 = vmatpush1.msra.mxu0 %v3878
    %4136 = vmatprep.subr.mxu0 %v3881
    %4137 = vmatpush1.msra.mxu0 %v3880
    %4138 = vmatprep.subr.mxu0 %v3883
    %4139 = vmatpush1.msra.mxu0 %v3882
    %4140 = vmatprep.subr.mxu0 %v3885
    %4141 = vmatpush1.msra.mxu0 %v3884
    %4142 = vmatprep.subr.mxu0 %v3887
    %4143 = vmatpush1.msra.mxu0 %v3886
    %4144 = vmatprep.subr.mxu0 %v3889
    %4145 = vmatpush1.msra.mxu0 %v3888
    %4146 = vmatprep.subr.mxu0 %v3891
    %4147 = vmatpush1.msra.mxu0 %v3890
    %4148 = vmatprep.subr.mxu0 %v3893
    %4149 = vmatpush1.msra.mxu0 %v3892
    %4150 = vmatprep.subr.mxu0 %v3895
    %4151 = vmatpush1.msra.mxu0 %v3894
    %4152 = vmatprep.subr.mxu0 %v3897
    %4153 = vmatpush1.msra.mxu0 %v3896
    %4154 = vmatprep.subr.mxu0 %v3899
    %4155 = vmatpush1.msra.mxu0 %v3898
    %4156 = vmatprep.subr.mxu0 %v3901
    %4157 = vmatpush1.msra.mxu0 %v3900
    %4158 = vmatprep.subr.mxu0 %v3903
    %4159 = vmatpush1.msra.mxu0 %v3902
    %4160 = vmatprep.subr.mxu0 %v3905
    %4161 = vmatpush1.msra.mxu0 %v3904
    %4162 = vmatprep.subr.mxu0 %v3907
    %4163 = vmatpush1.msra.mxu0 %v3906
    %4164 = vmatprep.subr.mxu0 %v3909
    %4165 = vmatpush1.msra.mxu0 %v3908
    %4166 = vmatprep.subr.mxu0 %v3911
    %4167 = vmatpush1.msra.mxu0 %v3910
    %4168 = vmatprep.mubr.f32.mxu0 %v3841
    %4169 = vmatmul.mubr.f32.gmra.mrb[0].mxu0 %v3840
    %v4170 = vpop.f32.mrb[0].mxu0
    %v4171 = vadd.f32 0.0, %v4170
    %v4172 = vpop.f32.mrb[0].mxu0
    %v4173 = vadd.f32 0.0, %v4172
    %4174 = vdwg.mxu0
    %4175 = vmatprep.subr.mxu0 %v3913
    %4176 = vmatpush1.msra.mxu0 %v3912
    %4177 = vmatprep.subr.mxu0 %v3915
    %4178 = vmatpush1.msra.mxu0 %v3914
    %4179 = vmatprep.subr.mxu0 %v3917
    %4180 = vmatpush1.msra.mxu0 %v3916
    %4181 = vmatprep.subr.mxu0 %v3919
    %4182 = vmatpush1.msra.mxu0 %v3918
    %4183 = vmatprep.subr.mxu0 %v3921
    %4184 = vmatpush1.msra.mxu0 %v3920
    %4185 = vmatprep.subr.mxu0 %v3923
    %4186 = vmatpush1.msra.mxu0 %v3922
    %4187 = vmatprep.subr.mxu0 %v3925
    %4188 = vmatpush1.msra.mxu0 %v3924
    %4189 = vmatprep.subr.mxu0 %v3927
    %4190 = vmatpush1.msra.mxu0 %v3926
    %4191 = vmatprep.subr.mxu0 %v3929
    %4192 = vmatpush1.msra.mxu0 %v3928
    %4193 = vmatprep.subr.mxu0 %v3931
    %4194 = vmatpush1.msra.mxu0 %v3930
    %4195 = vmatprep.subr.mxu0 %v3933
    %4196 = vmatpush1.msra.mxu0 %v3932
    %4197 = vmatprep.subr.mxu0 %v3935
    %4198 = vmatpush1.msra.mxu0 %v3934
    %4199 = vmatprep.subr.mxu0 %v3937
    %4200 = vmatpush1.msra.mxu0 %v3936
    %4201 = vmatprep.subr.mxu0 %v3939
    %4202 = vmatpush1.msra.mxu0 %v3938
    %4203 = vmatprep.subr.mxu0 %v3941
    %4204 = vmatpush1.msra.mxu0 %v3940
    %4205 = vmatprep.subr.mxu0 %v3943
    %4206 = vmatpush1.msra.mxu0 %v3942
    %4207 = vmatprep.subr.mxu0 %v3945
    %4208 = vmatpush1.msra.mxu0 %v3944
    %4209 = vmatprep.subr.mxu0 %v3947
    %4210 = vmatpush1.msra.mxu0 %v3946
    %4211 = vmatprep.subr.mxu0 %v3949
    %4212 = vmatpush1.msra.mxu0 %v3948
    %4213 = vmatprep.subr.mxu0 %v3951
    %4214 = vmatpush1.msra.mxu0 %v3950
    %4215 = vmatprep.subr.mxu0 %v3953
    %4216 = vmatpush1.msra.mxu0 %v3952
    %4217 = vmatprep.subr.mxu0 %v3955
    %4218 = vmatpush1.msra.mxu0 %v3954
    %4219 = vmatprep.subr.mxu0 %v3957
    %4220 = vmatpush1.msra.mxu0 %v3956
    %4221 = vmatprep.subr.mxu0 %v3959
    %4222 = vmatpush1.msra.mxu0 %v3958
    %4223 = vmatprep.subr.mxu0 %v3961
    %4224 = vmatpush1.msra.mxu0 %v3960
    %4225 = vmatprep.subr.mxu0 %v3963
    %4226 = vmatpush1.msra.mxu0 %v3962
    %4227 = vmatprep.subr.mxu0 %v3965
    %4228 = vmatpush1.msra.mxu0 %v3964
    %4229 = vmatprep.subr.mxu0 %v3967
    %4230 = vmatpush1.msra.mxu0 %v3966
    %4231 = vmatprep.subr.mxu0 %v3969
    %4232 = vmatpush1.msra.mxu0 %v3968
    %4233 = vmatprep.subr.mxu0 %v3971
    %4234 = vmatpush1.msra.mxu0 %v3970
    %4235 = vmatprep.subr.mxu0 %v3973
    %4236 = vmatpush1.msra.mxu0 %v3972
    %4237 = vmatprep.subr.mxu0 %v3975
    %4238 = vmatpush1.msra.mxu0 %v3974
    %4239 = vmatprep.mubr.f32.mxu0 %v3843
    %4240 = vmatmul.mubr.f32.gmra.mrb[0].mxu0 %v3842
    %v4241 = vpop.f32.mrb[0].mxu0
    %v4242 = vadd.f32 %v4171, %v4241
    %v4243 = vpop.f32.mrb[0].mxu0
    %v4244 = vadd.f32 %v4173, %v4243
    %4245 = vdwg.mxu0
    %4246 = vmatprep.subr.mxu0 %v3977
    %4247 = vmatpush1.msra.mxu0 %v3976
    %4248 = vmatprep.subr.mxu0 %v3979
    %4249 = vmatpush1.msra.mxu0 %v3978
    %4250 = vmatprep.subr.mxu0 %v3981
    %4251 = vmatpush1.msra.mxu0 %v3980
    %4252 = vmatprep.subr.mxu0 %v3983
    %4253 = vmatpush1.msra.mxu0 %v3982
    %4254 = vmatprep.subr.mxu0 %v3985
    %4255 = vmatpush1.msra.mxu0 %v3984
    %4256 = vmatprep.subr.mxu0 %v3987
    %4257 = vmatpush1.msra.mxu0 %v3986
    %4258 = vmatprep.subr.mxu0 %v3989
    %4259 = vmatpush1.msra.mxu0 %v3988
    %4260 = vmatprep.subr.mxu0 %v3991
    %4261 = vmatpush1.msra.mxu0 %v3990
    %4262 = vmatprep.subr.mxu0 %v3993
    %4263 = vmatpush1.msra.mxu0 %v3992
    %4264 = vmatprep.subr.mxu0 %v3995
    %4265 = vmatpush1.msra.mxu0 %v3994
    %4266 = vmatprep.subr.mxu0 %v3997
    %4267 = vmatpush1.msra.mxu0 %v3996
    %4268 = vmatprep.subr.mxu0 %v3999
    %4269 = vmatpush1.msra.mxu0 %v3998
    %4270 = vmatprep.subr.mxu0 %v4001
    %4271 = vmatpush1.msra.mxu0 %v4000
    %4272 = vmatprep.subr.mxu0 %v4003
    %4273 = vmatpush1.msra.mxu0 %v4002
    %4274 = vmatprep.subr.mxu0 %v4005
    %4275 = vmatpush1.msra.mxu0 %v4004
    %4276 = vmatprep.subr.mxu0 %v4007
    %4277 = vmatpush1.msra.mxu0 %v4006
    %4278 = vmatprep.subr.mxu0 %v4009
    %4279 = vmatpush1.msra.mxu0 %v4008
    %4280 = vmatprep.subr.mxu0 %v4011
    %4281 = vmatpush1.msra.mxu0 %v4010
    %4282 = vmatprep.subr.mxu0 %v4013
    %4283 = vmatpush1.msra.mxu0 %v4012
    %4284 = vmatprep.subr.mxu0 %v4015
    %4285 = vmatpush1.msra.mxu0 %v4014
    %4286 = vmatprep.subr.mxu0 %v4017
    %4287 = vmatpush1.msra.mxu0 %v4016
    %4288 = vmatprep.subr.mxu0 %v4019
    %4289 = vmatpush1.msra.mxu0 %v4018
    %4290 = vmatprep.subr.mxu0 %v4021
    %4291 = vmatpush1.msra.mxu0 %v4020
    %4292 = vmatprep.subr.mxu0 %v4023
    %4293 = vmatpush1.msra.mxu0 %v4022
    %4294 = vmatprep.subr.mxu0 %v4025
    %4295 = vmatpush1.msra.mxu0 %v4024
    %4296 = vmatprep.subr.mxu0 %v4027
    %4297 = vmatpush1.msra.mxu0 %v4026
    %4298 = vmatprep.subr.mxu0 %v4029
    %4299 = vmatpush1.msra.mxu0 %v4028
    %4300 = vmatprep.subr.mxu0 %v4031
    %4301 = vmatpush1.msra.mxu0 %v4030
    %4302 = vmatprep.subr.mxu0 %v4033
    %4303 = vmatpush1.msra.mxu0 %v4032
    %4304 = vmatprep.subr.mxu0 %v4035
    %4305 = vmatpush1.msra.mxu0 %v4034
    %4306 = vmatprep.subr.mxu0 %v4037
    %4307 = vmatpush1.msra.mxu0 %v4036
    %4308 = vmatprep.subr.mxu0 %v4039
    %4309 = vmatpush1.msra.mxu0 %v4038
    %4310 = vmatprep.mubr.f32.mxu0 %v3845
    %4311 = vmatmul.mubr.f32.gmra.mrb[0].mxu0 %v3844
    %v4312 = vpop.f32.mrb[0].mxu0
    %v4313 = vadd.f32 %v4242, %v4312
    %v4314 = vpop.f32.mrb[0].mxu0
    %v4315 = vadd.f32 %v4244, %v4314
    %4316 = vdwg.mxu0
    %4317 = vmatprep.subr.mxu0 %v4041
    %4318 = vmatpush1.msra.mxu0 %v4040
    %4319 = vmatprep.subr.mxu0 %v4043
    %4320 = vmatpush1.msra.mxu0 %v4042
    %4321 = vmatprep.subr.mxu0 %v4045
    %4322 = vmatpush1.msra.mxu0 %v4044
    %4323 = vmatprep.subr.mxu0 %v4047
    %4324 = vmatpush1.msra.mxu0 %v4046
    %4325 = vmatprep.subr.mxu0 %v4049
    %4326 = vmatpush1.msra.mxu0 %v4048
    %4327 = vmatprep.subr.mxu0 %v4051
    %4328 = vmatpush1.msra.mxu0 %v4050
    %4329 = vmatprep.subr.mxu0 %v4053
    %4330 = vmatpush1.msra.mxu0 %v4052
    %4331 = vmatprep.subr.mxu0 %v4055
    %4332 = vmatpush1.msra.mxu0 %v4054
    %4333 = vmatprep.subr.mxu0 %v4057
    %4334 = vmatpush1.msra.mxu0 %v4056
    %4335 = vmatprep.subr.mxu0 %v4059
    %4336 = vmatpush1.msra.mxu0 %v4058
    %4337 = vmatprep.subr.mxu0 %v4061
    %4338 = vmatpush1.msra.mxu0 %v4060
    %4339 = vmatprep.subr.mxu0 %v4063
    %4340 = vmatpush1.msra.mxu0 %v4062
    %4341 = vmatprep.subr.mxu0 %v4065
    %4342 = vmatpush1.msra.mxu0 %v4064
    %4343 = vmatprep.subr.mxu0 %v4067
    %4344 = vmatpush1.msra.mxu0 %v4066
    %4345 = vmatprep.subr.mxu0 %v4069
    %4346 = vmatpush1.msra.mxu0 %v4068
    %4347 = vmatprep.subr.mxu0 %v4071
    %4348 = vmatpush1.msra.mxu0 %v4070
    %4349 = vmatprep.subr.mxu0 %v4073
    %4350 = vmatpush1.msra.mxu0 %v4072
    %4351 = vmatprep.subr.mxu0 %v4075
    %4352 = vmatpush1.msra.mxu0 %v4074
    %4353 = vmatprep.subr.mxu0 %v4077
    %4354 = vmatpush1.msra.mxu0 %v4076
    %4355 = vmatprep.subr.mxu0 %v4079
    %4356 = vmatpush1.msra.mxu0 %v4078
    %4357 = vmatprep.subr.mxu0 %v4081
    %4358 = vmatpush1.msra.mxu0 %v4080
    %4359 = vmatprep.subr.mxu0 %v4083
    %4360 = vmatpush1.msra.mxu0 %v4082
    %4361 = vmatprep.subr.mxu0 %v4085
    %4362 = vmatpush1.msra.mxu0 %v4084
    %4363 = vmatprep.subr.mxu0 %v4087
    %4364 = vmatpush1.msra.mxu0 %v4086
    %4365 = vmatprep.subr.mxu0 %v4089
    %4366 = vmatpush1.msra.mxu0 %v4088
    %4367 = vmatprep.subr.mxu0 %v4091
    %4368 = vmatpush1.msra.mxu0 %v4090
    %4369 = vmatprep.subr.mxu0 %v4093
    %4370 = vmatpush1.msra.mxu0 %v4092
    %4371 = vmatprep.subr.mxu0 %v4095
    %4372 = vmatpush1.msra.mxu0 %v4094
    %4373 = vmatprep.subr.mxu0 %v4097
    %4374 = vmatpush1.msra.mxu0 %v4096
    %4375 = vmatprep.subr.mxu0 %v4099
    %4376 = vmatpush1.msra.mxu0 %v4098
    %4377 = vmatprep.subr.mxu0 %v4101
    %4378 = vmatpush1.msra.mxu0 %v4100
    %4379 = vmatprep.subr.mxu0 %v4103
    %4380 = vmatpush1.msra.mxu0 %v4102
    %4381 = vmatprep.mubr.f32.mxu0 %v3847
    %4382 = vmatmul.mubr.f32.gmra.mrb[0].mxu0 %v3846
    %v4383 = vpop.f32.mrb[0].mxu0
    %v4384 = vadd.f32 %v4313, %v4383
    %v4385 = vpop.f32.mrb[0].mxu0
    %v4386 = vadd.f32 %v4315, %v4385
    %4387 = vdwg.mxu0
    %4388 = vst [vmem:[#allocation3] sm:$0xff] %v4384
    %4389 = vst [vmem:[#allocation3 + $0x8] sm:$0xff] %v4386
    %v4390 = vld [vmem:[#allocation3] sm:$0xff]
    %v4391 = vld [vmem:[#allocation3 + $0x8] sm:$0xff]
    %s4392 = scalar_lea.vmem [#allocation2], 64
    %v4393 = vld [vmem:[%s4392] sm:$0xff]
    %v4394 = vld [vmem:[%s4392 + $0x8] sm:$0xff]
    %v4395 = vld [vmem:[%s4392 + $0x10] sm:$0xff]
    %v4396 = vld [vmem:[%s4392 + $0x18] sm:$0xff]
    %v4397 = vld [vmem:[%s4392 + $0x20] sm:$0xff]
    %v4398 = vld [vmem:[%s4392 + $0x28] sm:$0xff]
    %v4399 = vld [vmem:[%s4392 + $0x30] sm:$0xff]
    %v4400 = vld [vmem:[%s4392 + $0x38] sm:$0xff]
    %s4401 = scalar_lea.vmem [#allocation14], 2048
    %v4402 = vld [vmem:[%s4401] sm:$0xff]
    %v4403 = vld [vmem:[%s4401 + $0x8] sm:$0xff]
    %v4404 = vld [vmem:[%s4401 + $0x10] sm:$0xff]
    %v4405 = vld [vmem:[%s4401 + $0x18] sm:$0xff]
    %v4406 = vld [vmem:[%s4401 + $0x20] sm:$0xff]
    %v4407 = vld [vmem:[%s4401 + $0x28] sm:$0xff]
    %v4408 = vld [vmem:[%s4401 + $0x30] sm:$0xff]
    %v4409 = vld [vmem:[%s4401 + $0x38] sm:$0xff]
    %v4410 = vld [vmem:[%s4401 + $0x40] sm:$0xff]
    %v4411 = vld [vmem:[%s4401 + $0x48] sm:$0xff]
    %v4412 = vld [vmem:[%s4401 + $0x50] sm:$0xff]
    %v4413 = vld [vmem:[%s4401 + $0x58] sm:$0xff]
    %v4414 = vld [vmem:[%s4401 + $0x60] sm:$0xff]
    %v4415 = vld [vmem:[%s4401 + $0x68] sm:$0xff]
    %v4416 = vld [vmem:[%s4401 + $0x70] sm:$0xff]
    %v4417 = vld [vmem:[%s4401 + $0x78] sm:$0xff]
    %v4418 = vld [vmem:[%s4401 + $0x80] sm:$0xff]
    %v4419 = vld [vmem:[%s4401 + $0x88] sm:$0xff]
    %v4420 = vld [vmem:[%s4401 + $0x90] sm:$0xff]
    %v4421 = vld [vmem:[%s4401 + $0x98] sm:$0xff]
    %v4422 = vld [vmem:[%s4401 + $0xa0] sm:$0xff]
    %v4423 = vld [vmem:[%s4401 + $0xa8] sm:$0xff]
    %v4424 = vld [vmem:[%s4401 + $0xb0] sm:$0xff]
    %v4425 = vld [vmem:[%s4401 + $0xb8] sm:$0xff]
    %v4426 = vld [vmem:[%s4401 + $0xc0] sm:$0xff]
    %v4427 = vld [vmem:[%s4401 + $0xc8] sm:$0xff]
    %v4428 = vld [vmem:[%s4401 + $0xd0] sm:$0xff]
    %v4429 = vld [vmem:[%s4401 + $0xd8] sm:$0xff]
    %v4430 = vld [vmem:[%s4401 + $0xe0] sm:$0xff]
    %v4431 = vld [vmem:[%s4401 + $0xe8] sm:$0xff]
    %v4432 = vld [vmem:[%s4401 + $0xf0] sm:$0xff]
    %v4433 = vld [vmem:[%s4401 + $0xf8] sm:$0xff]
    %v4434 = vld [vmem:[%s4401 + $0x100] sm:$0xff]
    %v4435 = vld [vmem:[%s4401 + $0x108] sm:$0xff]
    %v4436 = vld [vmem:[%s4401 + $0x110] sm:$0xff]
    %v4437 = vld [vmem:[%s4401 + $0x118] sm:$0xff]
    %v4438 = vld [vmem:[%s4401 + $0x120] sm:$0xff]
    %v4439 = vld [vmem:[%s4401 + $0x128] sm:$0xff]
    %v4440 = vld [vmem:[%s4401 + $0x130] sm:$0xff]
    %v4441 = vld [vmem:[%s4401 + $0x138] sm:$0xff]
    %v4442 = vld [vmem:[%s4401 + $0x140] sm:$0xff]
    %v4443 = vld [vmem:[%s4401 + $0x148] sm:$0xff]
    %v4444 = vld [vmem:[%s4401 + $0x150] sm:$0xff]
    %v4445 = vld [vmem:[%s4401 + $0x158] sm:$0xff]
    %v4446 = vld [vmem:[%s4401 + $0x160] sm:$0xff]
    %v4447 = vld [vmem:[%s4401 + $0x168] sm:$0xff]
    %v4448 = vld [vmem:[%s4401 + $0x170] sm:$0xff]
    %v4449 = vld [vmem:[%s4401 + $0x178] sm:$0xff]
    %v4450 = vld [vmem:[%s4401 + $0x180] sm:$0xff]
    %v4451 = vld [vmem:[%s4401 + $0x188] sm:$0xff]
    %v4452 = vld [vmem:[%s4401 + $0x190] sm:$0xff]
    %v4453 = vld [vmem:[%s4401 + $0x198] sm:$0xff]
    %v4454 = vld [vmem:[%s4401 + $0x1a0] sm:$0xff]
    %v4455 = vld [vmem:[%s4401 + $0x1a8] sm:$0xff]
    %v4456 = vld [vmem:[%s4401 + $0x1b0] sm:$0xff]
    %v4457 = vld [vmem:[%s4401 + $0x1b8] sm:$0xff]
    %v4458 = vld [vmem:[%s4401 + $0x1c0] sm:$0xff]
    %v4459 = vld [vmem:[%s4401 + $0x1c8] sm:$0xff]
    %v4460 = vld [vmem:[%s4401 + $0x1d0] sm:$0xff]
    %v4461 = vld [vmem:[%s4401 + $0x1d8] sm:$0xff]
    %v4462 = vld [vmem:[%s4401 + $0x1e0] sm:$0xff]
    %v4463 = vld [vmem:[%s4401 + $0x1e8] sm:$0xff]
    %v4464 = vld [vmem:[%s4401 + $0x1f0] sm:$0xff]
    %v4465 = vld [vmem:[%s4401 + $0x1f8] sm:$0xff]
    %v4466 = vld [vmem:[%s4401 + $0x200] sm:$0xff]
    %v4467 = vld [vmem:[%s4401 + $0x208] sm:$0xff]
    %v4468 = vld [vmem:[%s4401 + $0x210] sm:$0xff]
    %v4469 = vld [vmem:[%s4401 + $0x218] sm:$0xff]
    %v4470 = vld [vmem:[%s4401 + $0x220] sm:$0xff]
    %v4471 = vld [vmem:[%s4401 + $0x228] sm:$0xff]
    %v4472 = vld [vmem:[%s4401 + $0x230] sm:$0xff]
    %v4473 = vld [vmem:[%s4401 + $0x238] sm:$0xff]
    %v4474 = vld [vmem:[%s4401 + $0x240] sm:$0xff]
    %v4475 = vld [vmem:[%s4401 + $0x248] sm:$0xff]
    %v4476 = vld [vmem:[%s4401 + $0x250] sm:$0xff]
    %v4477 = vld [vmem:[%s4401 + $0x258] sm:$0xff]
    %v4478 = vld [vmem:[%s4401 + $0x260] sm:$0xff]
    %v4479 = vld [vmem:[%s4401 + $0x268] sm:$0xff]
    %v4480 = vld [vmem:[%s4401 + $0x270] sm:$0xff]
    %v4481 = vld [vmem:[%s4401 + $0x278] sm:$0xff]
    %v4482 = vld [vmem:[%s4401 + $0x280] sm:$0xff]
    %v4483 = vld [vmem:[%s4401 + $0x288] sm:$0xff]
    %v4484 = vld [vmem:[%s4401 + $0x290] sm:$0xff]
    %v4485 = vld [vmem:[%s4401 + $0x298] sm:$0xff]
    %v4486 = vld [vmem:[%s4401 + $0x2a0] sm:$0xff]
    %v4487 = vld [vmem:[%s4401 + $0x2a8] sm:$0xff]
    %v4488 = vld [vmem:[%s4401 + $0x2b0] sm:$0xff]
    %v4489 = vld [vmem:[%s4401 + $0x2b8] sm:$0xff]
    %v4490 = vld [vmem:[%s4401 + $0x2c0] sm:$0xff]
    %v4491 = vld [vmem:[%s4401 + $0x2c8] sm:$0xff]
    %v4492 = vld [vmem:[%s4401 + $0x2d0] sm:$0xff]
    %v4493 = vld [vmem:[%s4401 + $0x2d8] sm:$0xff]
    %v4494 = vld [vmem:[%s4401 + $0x2e0] sm:$0xff]
    %v4495 = vld [vmem:[%s4401 + $0x2e8] sm:$0xff]
    %v4496 = vld [vmem:[%s4401 + $0x2f0] sm:$0xff]
    %v4497 = vld [vmem:[%s4401 + $0x2f8] sm:$0xff]
    %v4498 = vld [vmem:[%s4401 + $0x300] sm:$0xff]
    %v4499 = vld [vmem:[%s4401 + $0x308] sm:$0xff]
    %v4500 = vld [vmem:[%s4401 + $0x310] sm:$0xff]
    %v4501 = vld [vmem:[%s4401 + $0x318] sm:$0xff]
    %v4502 = vld [vmem:[%s4401 + $0x320] sm:$0xff]
    %v4503 = vld [vmem:[%s4401 + $0x328] sm:$0xff]
    %v4504 = vld [vmem:[%s4401 + $0x330] sm:$0xff]
    %v4505 = vld [vmem:[%s4401 + $0x338] sm:$0xff]
    %v4506 = vld [vmem:[%s4401 + $0x340] sm:$0xff]
    %v4507 = vld [vmem:[%s4401 + $0x348] sm:$0xff]
    %v4508 = vld [vmem:[%s4401 + $0x350] sm:$0xff]
    %v4509 = vld [vmem:[%s4401 + $0x358] sm:$0xff]
    %v4510 = vld [vmem:[%s4401 + $0x360] sm:$0xff]
    %v4511 = vld [vmem:[%s4401 + $0x368] sm:$0xff]
    %v4512 = vld [vmem:[%s4401 + $0x370] sm:$0xff]
    %v4513 = vld [vmem:[%s4401 + $0x378] sm:$0xff]
    %v4514 = vld [vmem:[%s4401 + $0x380] sm:$0xff]
    %v4515 = vld [vmem:[%s4401 + $0x388] sm:$0xff]
    %v4516 = vld [vmem:[%s4401 + $0x390] sm:$0xff]
    %v4517 = vld [vmem:[%s4401 + $0x398] sm:$0xff]
    %v4518 = vld [vmem:[%s4401 + $0x3a0] sm:$0xff]
    %v4519 = vld [vmem:[%s4401 + $0x3a8] sm:$0xff]
    %v4520 = vld [vmem:[%s4401 + $0x3b0] sm:$0xff]
    %v4521 = vld [vmem:[%s4401 + $0x3b8] sm:$0xff]
    %v4522 = vld [vmem:[%s4401 + $0x3c0] sm:$0xff]
    %v4523 = vld [vmem:[%s4401 + $0x3c8] sm:$0xff]
    %v4524 = vld [vmem:[%s4401 + $0x3d0] sm:$0xff]
    %v4525 = vld [vmem:[%s4401 + $0x3d8] sm:$0xff]
    %v4526 = vld [vmem:[%s4401 + $0x3e0] sm:$0xff]
    %v4527 = vld [vmem:[%s4401 + $0x3e8] sm:$0xff]
    %v4528 = vld [vmem:[%s4401 + $0x3f0] sm:$0xff]
    %v4529 = vld [vmem:[%s4401 + $0x3f8] sm:$0xff]
    %v4530 = vld [vmem:[%s4401 + $0x400] sm:$0xff]
    %v4531 = vld [vmem:[%s4401 + $0x408] sm:$0xff]
    %v4532 = vld [vmem:[%s4401 + $0x410] sm:$0xff]
    %v4533 = vld [vmem:[%s4401 + $0x418] sm:$0xff]
    %v4534 = vld [vmem:[%s4401 + $0x420] sm:$0xff]
    %v4535 = vld [vmem:[%s4401 + $0x428] sm:$0xff]
    %v4536 = vld [vmem:[%s4401 + $0x430] sm:$0xff]
    %v4537 = vld [vmem:[%s4401 + $0x438] sm:$0xff]
    %v4538 = vld [vmem:[%s4401 + $0x440] sm:$0xff]
    %v4539 = vld [vmem:[%s4401 + $0x448] sm:$0xff]
    %v4540 = vld [vmem:[%s4401 + $0x450] sm:$0xff]
    %v4541 = vld [vmem:[%s4401 + $0x458] sm:$0xff]
    %v4542 = vld [vmem:[%s4401 + $0x460] sm:$0xff]
    %v4543 = vld [vmem:[%s4401 + $0x468] sm:$0xff]
    %v4544 = vld [vmem:[%s4401 + $0x470] sm:$0xff]
    %v4545 = vld [vmem:[%s4401 + $0x478] sm:$0xff]
    %v4546 = vld [vmem:[%s4401 + $0x480] sm:$0xff]
    %v4547 = vld [vmem:[%s4401 + $0x488] sm:$0xff]
    %v4548 = vld [vmem:[%s4401 + $0x490] sm:$0xff]
    %v4549 = vld [vmem:[%s4401 + $0x498] sm:$0xff]
    %v4550 = vld [vmem:[%s4401 + $0x4a0] sm:$0xff]
    %v4551 = vld [vmem:[%s4401 + $0x4a8] sm:$0xff]
    %v4552 = vld [vmem:[%s4401 + $0x4b0] sm:$0xff]
    %v4553 = vld [vmem:[%s4401 + $0x4b8] sm:$0xff]
    %v4554 = vld [vmem:[%s4401 + $0x4c0] sm:$0xff]
    %v4555 = vld [vmem:[%s4401 + $0x4c8] sm:$0xff]
    %v4556 = vld [vmem:[%s4401 + $0x4d0] sm:$0xff]
    %v4557 = vld [vmem:[%s4401 + $0x4d8] sm:$0xff]
    %v4558 = vld [vmem:[%s4401 + $0x4e0] sm:$0xff]
    %v4559 = vld [vmem:[%s4401 + $0x4e8] sm:$0xff]
    %v4560 = vld [vmem:[%s4401 + $0x4f0] sm:$0xff]
    %v4561 = vld [vmem:[%s4401 + $0x4f8] sm:$0xff]
    %v4562 = vld [vmem:[%s4401 + $0x500] sm:$0xff]
    %v4563 = vld [vmem:[%s4401 + $0x508] sm:$0xff]
    %v4564 = vld [vmem:[%s4401 + $0x510] sm:$0xff]
    %v4565 = vld [vmem:[%s4401 + $0x518] sm:$0xff]
    %v4566 = vld [vmem:[%s4401 + $0x520] sm:$0xff]
    %v4567 = vld [vmem:[%s4401 + $0x528] sm:$0xff]
    %v4568 = vld [vmem:[%s4401 + $0x530] sm:$0xff]
    %v4569 = vld [vmem:[%s4401 + $0x538] sm:$0xff]
    %v4570 = vld [vmem:[%s4401 + $0x540] sm:$0xff]
    %v4571 = vld [vmem:[%s4401 + $0x548] sm:$0xff]
    %v4572 = vld [vmem:[%s4401 + $0x550] sm:$0xff]
    %v4573 = vld [vmem:[%s4401 + $0x558] sm:$0xff]
    %v4574 = vld [vmem:[%s4401 + $0x560] sm:$0xff]
    %v4575 = vld [vmem:[%s4401 + $0x568] sm:$0xff]
    %v4576 = vld [vmem:[%s4401 + $0x570] sm:$0xff]
    %v4577 = vld [vmem:[%s4401 + $0x578] sm:$0xff]
    %v4578 = vld [vmem:[%s4401 + $0x580] sm:$0xff]
    %v4579 = vld [vmem:[%s4401 + $0x588] sm:$0xff]
    %v4580 = vld [vmem:[%s4401 + $0x590] sm:$0xff]
    %v4581 = vld [vmem:[%s4401 + $0x598] sm:$0xff]
    %v4582 = vld [vmem:[%s4401 + $0x5a0] sm:$0xff]
    %v4583 = vld [vmem:[%s4401 + $0x5a8] sm:$0xff]
    %v4584 = vld [vmem:[%s4401 + $0x5b0] sm:$0xff]
    %v4585 = vld [vmem:[%s4401 + $0x5b8] sm:$0xff]
    %v4586 = vld [vmem:[%s4401 + $0x5c0] sm:$0xff]
    %v4587 = vld [vmem:[%s4401 + $0x5c8] sm:$0xff]
    %v4588 = vld [vmem:[%s4401 + $0x5d0] sm:$0xff]
    %v4589 = vld [vmem:[%s4401 + $0x5d8] sm:$0xff]
    %v4590 = vld [vmem:[%s4401 + $0x5e0] sm:$0xff]
    %v4591 = vld [vmem:[%s4401 + $0x5e8] sm:$0xff]
    %v4592 = vld [vmem:[%s4401 + $0x5f0] sm:$0xff]
    %v4593 = vld [vmem:[%s4401 + $0x5f8] sm:$0xff]
    %v4594 = vld [vmem:[%s4401 + $0x600] sm:$0xff]
    %v4595 = vld [vmem:[%s4401 + $0x608] sm:$0xff]
    %v4596 = vld [vmem:[%s4401 + $0x610] sm:$0xff]
    %v4597 = vld [vmem:[%s4401 + $0x618] sm:$0xff]
    %v4598 = vld [vmem:[%s4401 + $0x620] sm:$0xff]
    %v4599 = vld [vmem:[%s4401 + $0x628] sm:$0xff]
    %v4600 = vld [vmem:[%s4401 + $0x630] sm:$0xff]
    %v4601 = vld [vmem:[%s4401 + $0x638] sm:$0xff]
    %v4602 = vld [vmem:[%s4401 + $0x640] sm:$0xff]
    %v4603 = vld [vmem:[%s4401 + $0x648] sm:$0xff]
    %v4604 = vld [vmem:[%s4401 + $0x650] sm:$0xff]
    %v4605 = vld [vmem:[%s4401 + $0x658] sm:$0xff]
    %v4606 = vld [vmem:[%s4401 + $0x660] sm:$0xff]
    %v4607 = vld [vmem:[%s4401 + $0x668] sm:$0xff]
    %v4608 = vld [vmem:[%s4401 + $0x670] sm:$0xff]
    %v4609 = vld [vmem:[%s4401 + $0x678] sm:$0xff]
    %v4610 = vld [vmem:[%s4401 + $0x680] sm:$0xff]
    %v4611 = vld [vmem:[%s4401 + $0x688] sm:$0xff]
    %v4612 = vld [vmem:[%s4401 + $0x690] sm:$0xff]
    %v4613 = vld [vmem:[%s4401 + $0x698] sm:$0xff]
    %v4614 = vld [vmem:[%s4401 + $0x6a0] sm:$0xff]
    %v4615 = vld [vmem:[%s4401 + $0x6a8] sm:$0xff]
    %v4616 = vld [vmem:[%s4401 + $0x6b0] sm:$0xff]
    %v4617 = vld [vmem:[%s4401 + $0x6b8] sm:$0xff]
    %v4618 = vld [vmem:[%s4401 + $0x6c0] sm:$0xff]
    %v4619 = vld [vmem:[%s4401 + $0x6c8] sm:$0xff]
    %v4620 = vld [vmem:[%s4401 + $0x6d0] sm:$0xff]
    %v4621 = vld [vmem:[%s4401 + $0x6d8] sm:$0xff]
    %v4622 = vld [vmem:[%s4401 + $0x6e0] sm:$0xff]
    %v4623 = vld [vmem:[%s4401 + $0x6e8] sm:$0xff]
    %v4624 = vld [vmem:[%s4401 + $0x6f0] sm:$0xff]
    %v4625 = vld [vmem:[%s4401 + $0x6f8] sm:$0xff]
    %v4626 = vld [vmem:[%s4401 + $0x700] sm:$0xff]
    %v4627 = vld [vmem:[%s4401 + $0x708] sm:$0xff]
    %v4628 = vld [vmem:[%s4401 + $0x710] sm:$0xff]
    %v4629 = vld [vmem:[%s4401 + $0x718] sm:$0xff]
    %v4630 = vld [vmem:[%s4401 + $0x720] sm:$0xff]
    %v4631 = vld [vmem:[%s4401 + $0x728] sm:$0xff]
    %v4632 = vld [vmem:[%s4401 + $0x730] sm:$0xff]
    %v4633 = vld [vmem:[%s4401 + $0x738] sm:$0xff]
    %v4634 = vld [vmem:[%s4401 + $0x740] sm:$0xff]
    %v4635 = vld [vmem:[%s4401 + $0x748] sm:$0xff]
    %v4636 = vld [vmem:[%s4401 + $0x750] sm:$0xff]
    %v4637 = vld [vmem:[%s4401 + $0x758] sm:$0xff]
    %v4638 = vld [vmem:[%s4401 + $0x760] sm:$0xff]
    %v4639 = vld [vmem:[%s4401 + $0x768] sm:$0xff]
    %v4640 = vld [vmem:[%s4401 + $0x770] sm:$0xff]
    %v4641 = vld [vmem:[%s4401 + $0x778] sm:$0xff]
    %v4642 = vld [vmem:[%s4401 + $0x780] sm:$0xff]
    %v4643 = vld [vmem:[%s4401 + $0x788] sm:$0xff]
    %v4644 = vld [vmem:[%s4401 + $0x790] sm:$0xff]
    %v4645 = vld [vmem:[%s4401 + $0x798] sm:$0xff]
    %v4646 = vld [vmem:[%s4401 + $0x7a0] sm:$0xff]
    %v4647 = vld [vmem:[%s4401 + $0x7a8] sm:$0xff]
    %v4648 = vld [vmem:[%s4401 + $0x7b0] sm:$0xff]
    %v4649 = vld [vmem:[%s4401 + $0x7b8] sm:$0xff]
    %v4650 = vld [vmem:[%s4401 + $0x7c0] sm:$0xff]
    %v4651 = vld [vmem:[%s4401 + $0x7c8] sm:$0xff]
    %v4652 = vld [vmem:[%s4401 + $0x7d0] sm:$0xff]
    %v4653 = vld [vmem:[%s4401 + $0x7d8] sm:$0xff]
    %v4654 = vld [vmem:[%s4401 + $0x7e0] sm:$0xff]
    %v4655 = vld [vmem:[%s4401 + $0x7e8] sm:$0xff]
    %v4656 = vld [vmem:[%s4401 + $0x7f0] sm:$0xff]
    %v4657 = vld [vmem:[%s4401 + $0x7f8] sm:$0xff]
    %4658 = vmatprep.subr.mxu0 %v4403
    %4659 = vmatpush1.msra.mxu0 %v4402
    %4660 = vmatprep.subr.mxu0 %v4405
    %4661 = vmatpush1.msra.mxu0 %v4404
    %4662 = vmatprep.subr.mxu0 %v4407
    %4663 = vmatpush1.msra.mxu0 %v4406
    %4664 = vmatprep.subr.mxu0 %v4409
    %4665 = vmatpush1.msra.mxu0 %v4408
    %4666 = vmatprep.subr.mxu0 %v4411
    %4667 = vmatpush1.msra.mxu0 %v4410
    %4668 = vmatprep.subr.mxu0 %v4413
    %4669 = vmatpush1.msra.mxu0 %v4412
    %4670 = vmatprep.subr.mxu0 %v4415
    %4671 = vmatpush1.msra.mxu0 %v4414
    %4672 = vmatprep.subr.mxu0 %v4417
    %4673 = vmatpush1.msra.mxu0 %v4416
    %4674 = vmatprep.subr.mxu0 %v4419
    %4675 = vmatpush1.msra.mxu0 %v4418
    %4676 = vmatprep.subr.mxu0 %v4421
    %4677 = vmatpush1.msra.mxu0 %v4420
    %4678 = vmatprep.subr.mxu0 %v4423
    %4679 = vmatpush1.msra.mxu0 %v4422
    %4680 = vmatprep.subr.mxu0 %v4425
    %4681 = vmatpush1.msra.mxu0 %v4424
    %4682 = vmatprep.subr.mxu0 %v4427
    %4683 = vmatpush1.msra.mxu0 %v4426
    %4684 = vmatprep.subr.mxu0 %v4429
    %4685 = vmatpush1.msra.mxu0 %v4428
    %4686 = vmatprep.subr.mxu0 %v4431
    %4687 = vmatpush1.msra.mxu0 %v4430
    %4688 = vmatprep.subr.mxu0 %v4433
    %4689 = vmatpush1.msra.mxu0 %v4432
    %4690 = vmatprep.subr.mxu0 %v4435
    %4691 = vmatpush1.msra.mxu0 %v4434
    %4692 = vmatprep.subr.mxu0 %v4437
    %4693 = vmatpush1.msra.mxu0 %v4436
    %4694 = vmatprep.subr.mxu0 %v4439
    %4695 = vmatpush1.msra.mxu0 %v4438
    %4696 = vmatprep.subr.mxu0 %v4441
    %4697 = vmatpush1.msra.mxu0 %v4440
    %4698 = vmatprep.subr.mxu0 %v4443
    %4699 = vmatpush1.msra.mxu0 %v4442
    %4700 = vmatprep.subr.mxu0 %v4445
    %4701 = vmatpush1.msra.mxu0 %v4444
    %4702 = vmatprep.subr.mxu0 %v4447
    %4703 = vmatpush1.msra.mxu0 %v4446
    %4704 = vmatprep.subr.mxu0 %v4449
    %4705 = vmatpush1.msra.mxu0 %v4448
    %4706 = vmatprep.subr.mxu0 %v4451
    %4707 = vmatpush1.msra.mxu0 %v4450
    %4708 = vmatprep.subr.mxu0 %v4453
    %4709 = vmatpush1.msra.mxu0 %v4452
    %4710 = vmatprep.subr.mxu0 %v4455
    %4711 = vmatpush1.msra.mxu0 %v4454
    %4712 = vmatprep.subr.mxu0 %v4457
    %4713 = vmatpush1.msra.mxu0 %v4456
    %4714 = vmatprep.subr.mxu0 %v4459
    %4715 = vmatpush1.msra.mxu0 %v4458
    %4716 = vmatprep.subr.mxu0 %v4461
    %4717 = vmatpush1.msra.mxu0 %v4460
    %4718 = vmatprep.subr.mxu0 %v4463
    %4719 = vmatpush1.msra.mxu0 %v4462
    %4720 = vmatprep.subr.mxu0 %v4465
    %4721 = vmatpush1.msra.mxu0 %v4464
    %4722 = vmatprep.mubr.f32.mxu0 %v4394
    %4723 = vmatmul.mubr.f32.gmra.mrb[0].mxu0 %v4393
    %v4724 = vpop.f32.mrb[0].mxu0
    %v4725 = vadd.f32 0.0, %v4724
    %v4726 = vpop.f32.mrb[0].mxu0
    %v4727 = vadd.f32 0.0, %v4726
    %4728 = vdwg.mxu0
    %4729 = vmatprep.subr.mxu0 %v4467
    %4730 = vmatpush1.msra.mxu0 %v4466
    %4731 = vmatprep.subr.mxu0 %v4469
    %4732 = vmatpush1.msra.mxu0 %v4468
    %4733 = vmatprep.subr.mxu0 %v4471
    %4734 = vmatpush1.msra.mxu0 %v4470
    %4735 = vmatprep.subr.mxu0 %v4473
    %4736 = vmatpush1.msra.mxu0 %v4472
    %4737 = vmatprep.subr.mxu0 %v4475
    %4738 = vmatpush1.msra.mxu0 %v4474
    %4739 = vmatprep.subr.mxu0 %v4477
    %4740 = vmatpush1.msra.mxu0 %v4476
    %4741 = vmatprep.subr.mxu0 %v4479
    %4742 = vmatpush1.msra.mxu0 %v4478
    %4743 = vmatprep.subr.mxu0 %v4481
    %4744 = vmatpush1.msra.mxu0 %v4480
    %4745 = vmatprep.subr.mxu0 %v4483
    %4746 = vmatpush1.msra.mxu0 %v4482
    %4747 = vmatprep.subr.mxu0 %v4485
    %4748 = vmatpush1.msra.mxu0 %v4484
    %4749 = vmatprep.subr.mxu0 %v4487
    %4750 = vmatpush1.msra.mxu0 %v4486
    %4751 = vmatprep.subr.mxu0 %v4489
    %4752 = vmatpush1.msra.mxu0 %v4488
    %4753 = vmatprep.subr.mxu0 %v4491
    %4754 = vmatpush1.msra.mxu0 %v4490
    %4755 = vmatprep.subr.mxu0 %v4493
    %4756 = vmatpush1.msra.mxu0 %v4492
    %4757 = vmatprep.subr.mxu0 %v4495
    %4758 = vmatpush1.msra.mxu0 %v4494
    %4759 = vmatprep.subr.mxu0 %v4497
    %4760 = vmatpush1.msra.mxu0 %v4496
    %4761 = vmatprep.subr.mxu0 %v4499
    %4762 = vmatpush1.msra.mxu0 %v4498
    %4763 = vmatprep.subr.mxu0 %v4501
    %4764 = vmatpush1.msra.mxu0 %v4500
    %4765 = vmatprep.subr.mxu0 %v4503
    %4766 = vmatpush1.msra.mxu0 %v4502
    %4767 = vmatprep.subr.mxu0 %v4505
    %4768 = vmatpush1.msra.mxu0 %v4504
    %4769 = vmatprep.subr.mxu0 %v4507
    %4770 = vmatpush1.msra.mxu0 %v4506
    %4771 = vmatprep.subr.mxu0 %v4509
    %4772 = vmatpush1.msra.mxu0 %v4508
    %4773 = vmatprep.subr.mxu0 %v4511
    %4774 = vmatpush1.msra.mxu0 %v4510
    %4775 = vmatprep.subr.mxu0 %v4513
    %4776 = vmatpush1.msra.mxu0 %v4512
    %4777 = vmatprep.subr.mxu0 %v4515
    %4778 = vmatpush1.msra.mxu0 %v4514
    %4779 = vmatprep.subr.mxu0 %v4517
    %4780 = vmatpush1.msra.mxu0 %v4516
    %4781 = vmatprep.subr.mxu0 %v4519
    %4782 = vmatpush1.msra.mxu0 %v4518
    %4783 = vmatprep.subr.mxu0 %v4521
    %4784 = vmatpush1.msra.mxu0 %v4520
    %4785 = vmatprep.subr.mxu0 %v4523
    %4786 = vmatpush1.msra.mxu0 %v4522
    %4787 = vmatprep.subr.mxu0 %v4525
    %4788 = vmatpush1.msra.mxu0 %v4524
    %4789 = vmatprep.subr.mxu0 %v4527
    %4790 = vmatpush1.msra.mxu0 %v4526
    %4791 = vmatprep.subr.mxu0 %v4529
    %4792 = vmatpush1.msra.mxu0 %v4528
    %4793 = vmatprep.mubr.f32.mxu0 %v4396
    %4794 = vmatmul.mubr.f32.gmra.mrb[0].mxu0 %v4395
    %v4795 = vpop.f32.mrb[0].mxu0
    %v4796 = vadd.f32 %v4725, %v4795
    %v4797 = vpop.f32.mrb[0].mxu0
    %v4798 = vadd.f32 %v4727, %v4797
    %4799 = vdwg.mxu0
    %4800 = vmatprep.subr.mxu0 %v4531
    %4801 = vmatpush1.msra.mxu0 %v4530
    %4802 = vmatprep.subr.mxu0 %v4533
    %4803 = vmatpush1.msra.mxu0 %v4532
    %4804 = vmatprep.subr.mxu0 %v4535
    %4805 = vmatpush1.msra.mxu0 %v4534
    %4806 = vmatprep.subr.mxu0 %v4537
    %4807 = vmatpush1.msra.mxu0 %v4536
    %4808 = vmatprep.subr.mxu0 %v4539
    %4809 = vmatpush1.msra.mxu0 %v4538
    %4810 = vmatprep.subr.mxu0 %v4541
    %4811 = vmatpush1.msra.mxu0 %v4540
    %4812 = vmatprep.subr.mxu0 %v4543
    %4813 = vmatpush1.msra.mxu0 %v4542
    %4814 = vmatprep.subr.mxu0 %v4545
    %4815 = vmatpush1.msra.mxu0 %v4544
    %4816 = vmatprep.subr.mxu0 %v4547
    %4817 = vmatpush1.msra.mxu0 %v4546
    %4818 = vmatprep.subr.mxu0 %v4549
    %4819 = vmatpush1.msra.mxu0 %v4548
    %4820 = vmatprep.subr.mxu0 %v4551
    %4821 = vmatpush1.msra.mxu0 %v4550
    %4822 = vmatprep.subr.mxu0 %v4553
    %4823 = vmatpush1.msra.mxu0 %v4552
    %4824 = vmatprep.subr.mxu0 %v4555
    %4825 = vmatpush1.msra.mxu0 %v4554
    %4826 = vmatprep.subr.mxu0 %v4557
    %4827 = vmatpush1.msra.mxu0 %v4556
    %4828 = vmatprep.subr.mxu0 %v4559
    %4829 = vmatpush1.msra.mxu0 %v4558
    %4830 = vmatprep.subr.mxu0 %v4561
    %4831 = vmatpush1.msra.mxu0 %v4560
    %4832 = vmatprep.subr.mxu0 %v4563
    %4833 = vmatpush1.msra.mxu0 %v4562
    %4834 = vmatprep.subr.mxu0 %v4565
    %4835 = vmatpush1.msra.mxu0 %v4564
    %4836 = vmatprep.subr.mxu0 %v4567
    %4837 = vmatpush1.msra.mxu0 %v4566
    %4838 = vmatprep.subr.mxu0 %v4569
    %4839 = vmatpush1.msra.mxu0 %v4568
    %4840 = vmatprep.subr.mxu0 %v4571
    %4841 = vmatpush1.msra.mxu0 %v4570
    %4842 = vmatprep.subr.mxu0 %v4573
    %4843 = vmatpush1.msra.mxu0 %v4572
    %4844 = vmatprep.subr.mxu0 %v4575
    %4845 = vmatpush1.msra.mxu0 %v4574
    %4846 = vmatprep.subr.mxu0 %v4577
    %4847 = vmatpush1.msra.mxu0 %v4576
    %4848 = vmatprep.subr.mxu0 %v4579
    %4849 = vmatpush1.msra.mxu0 %v4578
    %4850 = vmatprep.subr.mxu0 %v4581
    %4851 = vmatpush1.msra.mxu0 %v4580
    %4852 = vmatprep.subr.mxu0 %v4583
    %4853 = vmatpush1.msra.mxu0 %v4582
    %4854 = vmatprep.subr.mxu0 %v4585
    %4855 = vmatpush1.msra.mxu0 %v4584
    %4856 = vmatprep.subr.mxu0 %v4587
    %4857 = vmatpush1.msra.mxu0 %v4586
    %4858 = vmatprep.subr.mxu0 %v4589
    %4859 = vmatpush1.msra.mxu0 %v4588
    %4860 = vmatprep.subr.mxu0 %v4591
    %4861 = vmatpush1.msra.mxu0 %v4590
    %4862 = vmatprep.subr.mxu0 %v4593
    %4863 = vmatpush1.msra.mxu0 %v4592
    %4864 = vmatprep.mubr.f32.mxu0 %v4398
    %4865 = vmatmul.mubr.f32.gmra.mrb[0].mxu0 %v4397
    %v4866 = vpop.f32.mrb[0].mxu0
    %v4867 = vadd.f32 %v4796, %v4866
    %v4868 = vpop.f32.mrb[0].mxu0
    %v4869 = vadd.f32 %v4798, %v4868
    %4870 = vdwg.mxu0
    %4871 = vmatprep.subr.mxu0 %v4595
    %4872 = vmatpush1.msra.mxu0 %v4594
    %4873 = vmatprep.subr.mxu0 %v4597
    %4874 = vmatpush1.msra.mxu0 %v4596
    %4875 = vmatprep.subr.mxu0 %v4599
    %4876 = vmatpush1.msra.mxu0 %v4598
    %4877 = vmatprep.subr.mxu0 %v4601
    %4878 = vmatpush1.msra.mxu0 %v4600
    %4879 = vmatprep.subr.mxu0 %v4603
    %4880 = vmatpush1.msra.mxu0 %v4602
    %4881 = vmatprep.subr.mxu0 %v4605
    %4882 = vmatpush1.msra.mxu0 %v4604
    %4883 = vmatprep.subr.mxu0 %v4607
    %4884 = vmatpush1.msra.mxu0 %v4606
    %4885 = vmatprep.subr.mxu0 %v4609
    %4886 = vmatpush1.msra.mxu0 %v4608
    %4887 = vmatprep.subr.mxu0 %v4611
    %4888 = vmatpush1.msra.mxu0 %v4610
    %4889 = vmatprep.subr.mxu0 %v4613
    %4890 = vmatpush1.msra.mxu0 %v4612
    %4891 = vmatprep.subr.mxu0 %v4615
    %4892 = vmatpush1.msra.mxu0 %v4614
    %4893 = vmatprep.subr.mxu0 %v4617
    %4894 = vmatpush1.msra.mxu0 %v4616
    %4895 = vmatprep.subr.mxu0 %v4619
    %4896 = vmatpush1.msra.mxu0 %v4618
    %4897 = vmatprep.subr.mxu0 %v4621
    %4898 = vmatpush1.msra.mxu0 %v4620
    %4899 = vmatprep.subr.mxu0 %v4623
    %4900 = vmatpush1.msra.mxu0 %v4622
    %4901 = vmatprep.subr.mxu0 %v4625
    %4902 = vmatpush1.msra.mxu0 %v4624
    %4903 = vmatprep.subr.mxu0 %v4627
    %4904 = vmatpush1.msra.mxu0 %v4626
    %4905 = vmatprep.subr.mxu0 %v4629
    %4906 = vmatpush1.msra.mxu0 %v4628
    %4907 = vmatprep.subr.mxu0 %v4631
    %4908 = vmatpush1.msra.mxu0 %v4630
    %4909 = vmatprep.subr.mxu0 %v4633
    %4910 = vmatpush1.msra.mxu0 %v4632
    %4911 = vmatprep.subr.mxu0 %v4635
    %4912 = vmatpush1.msra.mxu0 %v4634
    %4913 = vmatprep.subr.mxu0 %v4637
    %4914 = vmatpush1.msra.mxu0 %v4636
    %4915 = vmatprep.subr.mxu0 %v4639
    %4916 = vmatpush1.msra.mxu0 %v4638
    %4917 = vmatprep.subr.mxu0 %v4641
    %4918 = vmatpush1.msra.mxu0 %v4640
    %4919 = vmatprep.subr.mxu0 %v4643
    %4920 = vmatpush1.msra.mxu0 %v4642
    %4921 = vmatprep.subr.mxu0 %v4645
    %4922 = vmatpush1.msra.mxu0 %v4644
    %4923 = vmatprep.subr.mxu0 %v4647
    %4924 = vmatpush1.msra.mxu0 %v4646
    %4925 = vmatprep.subr.mxu0 %v4649
    %4926 = vmatpush1.msra.mxu0 %v4648
    %4927 = vmatprep.subr.mxu0 %v4651
    %4928 = vmatpush1.msra.mxu0 %v4650
    %4929 = vmatprep.subr.mxu0 %v4653
    %4930 = vmatpush1.msra.mxu0 %v4652
    %4931 = vmatprep.subr.mxu0 %v4655
    %4932 = vmatpush1.msra.mxu0 %v4654
    %4933 = vmatprep.subr.mxu0 %v4657
    %4934 = vmatpush1.msra.mxu0 %v4656
    %4935 = vmatprep.mubr.f32.mxu0 %v4400
    %4936 = vmatmul.mubr.f32.gmra.mrb[0].mxu0 %v4399
    %v4937 = vpop.f32.mrb[0].mxu0
    %v4938 = vadd.f32 %v4867, %v4937
    %v4939 = vpop.f32.mrb[0].mxu0
    %v4940 = vadd.f32 %v4869, %v4939
    %4941 = vdwg.mxu0
    %v4942 = vadd.f32 %v4390, %v4938
    %v4943 = vadd.f32 %v4391, %v4940
    %4944 = vst [vmem:[#allocation3] sm:$0xff] %v4942
    %4945 = vst [vmem:[#allocation3 + $0x8] sm:$0xff] %v4943
    %v4946 = vld [vmem:[#allocation3] sm:$0xff]
    %v4947 = vld [vmem:[#allocation3 + $0x8] sm:$0xff]
    %s4948 = scalar_lea.vmem [#allocation2], 128
    %v4949 = vld [vmem:[%s4948] sm:$0xff]
    %v4950 = vld [vmem:[%s4948 + $0x8] sm:$0xff]
    %v4951 = vld [vmem:[%s4948 + $0x10] sm:$0xff]
    %v4952 = vld [vmem:[%s4948 + $0x18] sm:$0xff]
    %v4953 = vld [vmem:[%s4948 + $0x20] sm:$0xff]
    %v4954 = vld [vmem:[%s4948 + $0x28] sm:$0xff]
    %v4955 = vld [vmem:[%s4948 + $0x30] sm:$0xff]
    %v4956 = vld [vmem:[%s4948 + $0x38] sm:$0xff]
    %s4957 = scalar_lea.vmem [#allocation14], 4096
    %v4958 = vld [vmem:[%s4957] sm:$0xff]
    %v4959 = vld [vmem:[%s4957 + $0x8] sm:$0xff]
    %v4960 = vld [vmem:[%s4957 + $0x10] sm:$0xff]
    %v4961 = vld [vmem:[%s4957 + $0x18] sm:$0xff]
    %v4962 = vld [vmem:[%s4957 + $0x20] sm:$0xff]
    %v4963 = vld [vmem:[%s4957 + $0x28] sm:$0xff]
    %v4964 = vld [vmem:[%s4957 + $0x30] sm:$0xff]
    %v4965 = vld [vmem:[%s4957 + $0x38] sm:$0xff]
    %v4966 = vld [vmem:[%s4957 + $0x40] sm:$0xff]
    %v4967 = vld [vmem:[%s4957 + $0x48] sm:$0xff]
    %v4968 = vld [vmem:[%s4957 + $0x50] sm:$0xff]
    %v4969 = vld [vmem:[%s4957 + $0x58] sm:$0xff]
    %v4970 = vld [vmem:[%s4957 + $0x60] sm:$0xff]
    %v4971 = vld [vmem:[%s4957 + $0x68] sm:$0xff]
    %v4972 = vld [vmem:[%s4957 + $0x70] sm:$0xff]
    %v4973 = vld [vmem:[%s4957 + $0x78] sm:$0xff]
    %v4974 = vld [vmem:[%s4957 + $0x80] sm:$0xff]
    %v4975 = vld [vmem:[%s4957 + $0x88] sm:$0xff]
    %v4976 = vld [vmem:[%s4957 + $0x90] sm:$0xff]
    %v4977 = vld [vmem:[%s4957 + $0x98] sm:$0xff]
    %v4978 = vld [vmem:[%s4957 + $0xa0] sm:$0xff]
    %v4979 = vld [vmem:[%s4957 + $0xa8] sm:$0xff]
    %v4980 = vld [vmem:[%s4957 + $0xb0] sm:$0xff]
    %v4981 = vld [vmem:[%s4957 + $0xb8] sm:$0xff]
    %v4982 = vld [vmem:[%s4957 + $0xc0] sm:$0xff]
    %v4983 = vld [vmem:[%s4957 + $0xc8] sm:$0xff]
    %v4984 = vld [vmem:[%s4957 + $0xd0] sm:$0xff]
    %v4985 = vld [vmem:[%s4957 + $0xd8] sm:$0xff]
    %v4986 = vld [vmem:[%s4957 + $0xe0] sm:$0xff]
    %v4987 = vld [vmem:[%s4957 + $0xe8] sm:$0xff]
    %v4988 = vld [vmem:[%s4957 + $0xf0] sm:$0xff]
    %v4989 = vld [vmem:[%s4957 + $0xf8] sm:$0xff]
    %v4990 = vld [vmem:[%s4957 + $0x100] sm:$0xff]
    %v4991 = vld [vmem:[%s4957 + $0x108] sm:$0xff]
    %v4992 = vld [vmem:[%s4957 + $0x110] sm:$0xff]
    %v4993 = vld [vmem:[%s4957 + $0x118] sm:$0xff]
    %v4994 = vld [vmem:[%s4957 + $0x120] sm:$0xff]
    %v4995 = vld [vmem:[%s4957 + $0x128] sm:$0xff]
    %v4996 = vld [vmem:[%s4957 + $0x130] sm:$0xff]
    %v4997 = vld [vmem:[%s4957 + $0x138] sm:$0xff]
    %v4998 = vld [vmem:[%s4957 + $0x140] sm:$0xff]
    %v4999 = vld [vmem:[%s4957 + $0x148] sm:$0xff]
    %v5000 = vld [vmem:[%s4957 + $0x150] sm:$0xff]
    %v5001 = vld [vmem:[%s4957 + $0x158] sm:$0xff]
    %v5002 = vld [vmem:[%s4957 + $0x160] sm:$0xff]
    %v5003 = vld [vmem:[%s4957 + $0x168] sm:$0xff]
    %v5004 = vld [vmem:[%s4957 + $0x170] sm:$0xff]
    %v5005 = vld [vmem:[%s4957 + $0x178] sm:$0xff]
    %v5006 = vld [vmem:[%s4957 + $0x180] sm:$0xff]
    %v5007 = vld [vmem:[%s4957 + $0x188] sm:$0xff]
    %v5008 = vld [vmem:[%s4957 + $0x190] sm:$0xff]
    %v5009 = vld [vmem:[%s4957 + $0x198] sm:$0xff]
    %v5010 = vld [vmem:[%s4957 + $0x1a0] sm:$0xff]
    %v5011 = vld [vmem:[%s4957 + $0x1a8] sm:$0xff]
    %v5012 = vld [vmem:[%s4957 + $0x1b0] sm:$0xff]
    %v5013 = vld [vmem:[%s4957 + $0x1b8] sm:$0xff]
    %v5014 = vld [vmem:[%s4957 + $0x1c0] sm:$0xff]
    %v5015 = vld [vmem:[%s4957 + $0x1c8] sm:$0xff]
    %v5016 = vld [vmem:[%s4957 + $0x1d0] sm:$0xff]
    %v5017 = vld [vmem:[%s4957 + $0x1d8] sm:$0xff]
    %v5018 = vld [vmem:[%s4957 + $0x1e0] sm:$0xff]
    %v5019 = vld [vmem:[%s4957 + $0x1e8] sm:$0xff]
    %v5020 = vld [vmem:[%s4957 + $0x1f0] sm:$0xff]
    %v5021 = vld [vmem:[%s4957 + $0x1f8] sm:$0xff]
    %v5022 = vld [vmem:[%s4957 + $0x200] sm:$0xff]
    %v5023 = vld [vmem:[%s4957 + $0x208] sm:$0xff]
    %v5024 = vld [vmem:[%s4957 + $0x210] sm:$0xff]
    %v5025 = vld [vmem:[%s4957 + $0x218] sm:$0xff]
    %v5026 = vld [vmem:[%s4957 + $0x220] sm:$0xff]
    %v5027 = vld [vmem:[%s4957 + $0x228] sm:$0xff]
    %v5028 = vld [vmem:[%s4957 + $0x230] sm:$0xff]
    %v5029 = vld [vmem:[%s4957 + $0x238] sm:$0xff]
    %v5030 = vld [vmem:[%s4957 + $0x240] sm:$0xff]
    %v5031 = vld [vmem:[%s4957 + $0x248] sm:$0xff]
    %v5032 = vld [vmem:[%s4957 + $0x250] sm:$0xff]
    %v5033 = vld [vmem:[%s4957 + $0x258] sm:$0xff]
    %v5034 = vld [vmem:[%s4957 + $0x260] sm:$0xff]
    %v5035 = vld [vmem:[%s4957 + $0x268] sm:$0xff]
    %v5036 = vld [vmem:[%s4957 + $0x270] sm:$0xff]
    %v5037 = vld [vmem:[%s4957 + $0x278] sm:$0xff]
    %v5038 = vld [vmem:[%s4957 + $0x280] sm:$0xff]
    %v5039 = vld [vmem:[%s4957 + $0x288] sm:$0xff]
    %v5040 = vld [vmem:[%s4957 + $0x290] sm:$0xff]
    %v5041 = vld [vmem:[%s4957 + $0x298] sm:$0xff]
    %v5042 = vld [vmem:[%s4957 + $0x2a0] sm:$0xff]
    %v5043 = vld [vmem:[%s4957 + $0x2a8] sm:$0xff]
    %v5044 = vld [vmem:[%s4957 + $0x2b0] sm:$0xff]
    %v5045 = vld [vmem:[%s4957 + $0x2b8] sm:$0xff]
    %v5046 = vld [vmem:[%s4957 + $0x2c0] sm:$0xff]
    %v5047 = vld [vmem:[%s4957 + $0x2c8] sm:$0xff]
    %v5048 = vld [vmem:[%s4957 + $0x2d0] sm:$0xff]
    %v5049 = vld [vmem:[%s4957 + $0x2d8] sm:$0xff]
    %v5050 = vld [vmem:[%s4957 + $0x2e0] sm:$0xff]
    %v5051 = vld [vmem:[%s4957 + $0x2e8] sm:$0xff]
    %v5052 = vld [vmem:[%s4957 + $0x2f0] sm:$0xff]
    %v5053 = vld [vmem:[%s4957 + $0x2f8] sm:$0xff]
    %v5054 = vld [vmem:[%s4957 + $0x300] sm:$0xff]
    %v5055 = vld [vmem:[%s4957 + $0x308] sm:$0xff]
    %v5056 = vld [vmem:[%s4957 + $0x310] sm:$0xff]
    %v5057 = vld [vmem:[%s4957 + $0x318] sm:$0xff]
    %v5058 = vld [vmem:[%s4957 + $0x320] sm:$0xff]
    %v5059 = vld [vmem:[%s4957 + $0x328] sm:$0xff]
    %v5060 = vld [vmem:[%s4957 + $0x330] sm:$0xff]
    %v5061 = vld [vmem:[%s4957 + $0x338] sm:$0xff]
    %v5062 = vld [vmem:[%s4957 + $0x340] sm:$0xff]
    %v5063 = vld [vmem:[%s4957 + $0x348] sm:$0xff]
    %v5064 = vld [vmem:[%s4957 + $0x350] sm:$0xff]
    %v5065 = vld [vmem:[%s4957 + $0x358] sm:$0xff]
    %v5066 = vld [vmem:[%s4957 + $0x360] sm:$0xff]
    %v5067 = vld [vmem:[%s4957 + $0x368] sm:$0xff]
    %v5068 = vld [vmem:[%s4957 + $0x370] sm:$0xff]
    %v5069 = vld [vmem:[%s4957 + $0x378] sm:$0xff]
    %v5070 = vld [vmem:[%s4957 + $0x380] sm:$0xff]
    %v5071 = vld [vmem:[%s4957 + $0x388] sm:$0xff]
    %v5072 = vld [vmem:[%s4957 + $0x390] sm:$0xff]
    %v5073 = vld [vmem:[%s4957 + $0x398] sm:$0xff]
    %v5074 = vld [vmem:[%s4957 + $0x3a0] sm:$0xff]
    %v5075 = vld [vmem:[%s4957 + $0x3a8] sm:$0xff]
    %v5076 = vld [vmem:[%s4957 + $0x3b0] sm:$0xff]
    %v5077 = vld [vmem:[%s4957 + $0x3b8] sm:$0xff]
    %v5078 = vld [vmem:[%s4957 + $0x3c0] sm:$0xff]
    %v5079 = vld [vmem:[%s4957 + $0x3c8] sm:$0xff]
    %v5080 = vld [vmem:[%s4957 + $0x3d0] sm:$0xff]
    %v5081 = vld [vmem:[%s4957 + $0x3d8] sm:$0xff]
    %v5082 = vld [vmem:[%s4957 + $0x3e0] sm:$0xff]
    %v5083 = vld [vmem:[%s4957 + $0x3e8] sm:$0xff]
    %v5084 = vld [vmem:[%s4957 + $0x3f0] sm:$0xff]
    %v5085 = vld [vmem:[%s4957 + $0x3f8] sm:$0xff]
    %v5086 = vld [vmem:[%s4957 + $0x400] sm:$0xff]
    %v5087 = vld [vmem:[%s4957 + $0x408] sm:$0xff]
    %v5088 = vld [vmem:[%s4957 + $0x410] sm:$0xff]
    %v5089 = vld [vmem:[%s4957 + $0x418] sm:$0xff]
    %v5090 = vld [vmem:[%s4957 + $0x420] sm:$0xff]
    %v5091 = vld [vmem:[%s4957 + $0x428] sm:$0xff]
    %v5092 = vld [vmem:[%s4957 + $0x430] sm:$0xff]
    %v5093 = vld [vmem:[%s4957 + $0x438] sm:$0xff]
    %v5094 = vld [vmem:[%s4957 + $0x440] sm:$0xff]
    %v5095 = vld [vmem:[%s4957 + $0x448] sm:$0xff]
    %v5096 = vld [vmem:[%s4957 + $0x450] sm:$0xff]
    %v5097 = vld [vmem:[%s4957 + $0x458] sm:$0xff]
    %v5098 = vld [vmem:[%s4957 + $0x460] sm:$0xff]
    %v5099 = vld [vmem:[%s4957 + $0x468] sm:$0xff]
    %v5100 = vld [vmem:[%s4957 + $0x470] sm:$0xff]
    %v5101 = vld [vmem:[%s4957 + $0x478] sm:$0xff]
    %v5102 = vld [vmem:[%s4957 + $0x480] sm:$0xff]
    %v5103 = vld [vmem:[%s4957 + $0x488] sm:$0xff]
    %v5104 = vld [vmem:[%s4957 + $0x490] sm:$0xff]
    %v5105 = vld [vmem:[%s4957 + $0x498] sm:$0xff]
    %v5106 = vld [vmem:[%s4957 + $0x4a0] sm:$0xff]
    %v5107 = vld [vmem:[%s4957 + $0x4a8] sm:$0xff]
    %v5108 = vld [vmem:[%s4957 + $0x4b0] sm:$0xff]
    %v5109 = vld [vmem:[%s4957 + $0x4b8] sm:$0xff]
    %v5110 = vld [vmem:[%s4957 + $0x4c0] sm:$0xff]
    %v5111 = vld [vmem:[%s4957 + $0x4c8] sm:$0xff]
    %v5112 = vld [vmem:[%s4957 + $0x4d0] sm:$0xff]
    %v5113 = vld [vmem:[%s4957 + $0x4d8] sm:$0xff]
    %v5114 = vld [vmem:[%s4957 + $0x4e0] sm:$0xff]
    %v5115 = vld [vmem:[%s4957 + $0x4e8] sm:$0xff]
    %v5116 = vld [vmem:[%s4957 + $0x4f0] sm:$0xff]
    %v5117 = vld [vmem:[%s4957 + $0x4f8] sm:$0xff]
    %v5118 = vld [vmem:[%s4957 + $0x500] sm:$0xff]
    %v5119 = vld [vmem:[%s4957 + $0x508] sm:$0xff]
    %v5120 = vld [vmem:[%s4957 + $0x510] sm:$0xff]
    %v5121 = vld [vmem:[%s4957 + $0x518] sm:$0xff]
    %v5122 = vld [vmem:[%s4957 + $0x520] sm:$0xff]
    %v5123 = vld [vmem:[%s4957 + $0x528] sm:$0xff]
    %v5124 = vld [vmem:[%s4957 + $0x530] sm:$0xff]
    %v5125 = vld [vmem:[%s4957 + $0x538] sm:$0xff]
    %v5126 = vld [vmem:[%s4957 + $0x540] sm:$0xff]
    %v5127 = vld [vmem:[%s4957 + $0x548] sm:$0xff]
    %v5128 = vld [vmem:[%s4957 + $0x550] sm:$0xff]
    %v5129 = vld [vmem:[%s4957 + $0x558] sm:$0xff]
    %v5130 = vld [vmem:[%s4957 + $0x560] sm:$0xff]
    %v5131 = vld [vmem:[%s4957 + $0x568] sm:$0xff]
    %v5132 = vld [vmem:[%s4957 + $0x570] sm:$0xff]
    %v5133 = vld [vmem:[%s4957 + $0x578] sm:$0xff]
    %v5134 = vld [vmem:[%s4957 + $0x580] sm:$0xff]
    %v5135 = vld [vmem:[%s4957 + $0x588] sm:$0xff]
    %v5136 = vld [vmem:[%s4957 + $0x590] sm:$0xff]
    %v5137 = vld [vmem:[%s4957 + $0x598] sm:$0xff]
    %v5138 = vld [vmem:[%s4957 + $0x5a0] sm:$0xff]
    %v5139 = vld [vmem:[%s4957 + $0x5a8] sm:$0xff]
    %v5140 = vld [vmem:[%s4957 + $0x5b0] sm:$0xff]
    %v5141 = vld [vmem:[%s4957 + $0x5b8] sm:$0xff]
    %v5142 = vld [vmem:[%s4957 + $0x5c0] sm:$0xff]
    %v5143 = vld [vmem:[%s4957 + $0x5c8] sm:$0xff]
    %v5144 = vld [vmem:[%s4957 + $0x5d0] sm:$0xff]
    %v5145 = vld [vmem:[%s4957 + $0x5d8] sm:$0xff]
    %v5146 = vld [vmem:[%s4957 + $0x5e0] sm:$0xff]
    %v5147 = vld [vmem:[%s4957 + $0x5e8] sm:$0xff]
    %v5148 = vld [vmem:[%s4957 + $0x5f0] sm:$0xff]
    %v5149 = vld [vmem:[%s4957 + $0x5f8] sm:$0xff]
    %v5150 = vld [vmem:[%s4957 + $0x600] sm:$0xff]
    %v5151 = vld [vmem:[%s4957 + $0x608] sm:$0xff]
    %v5152 = vld [vmem:[%s4957 + $0x610] sm:$0xff]
    %v5153 = vld [vmem:[%s4957 + $0x618] sm:$0xff]
    %v5154 = vld [vmem:[%s4957 + $0x620] sm:$0xff]
    %v5155 = vld [vmem:[%s4957 + $0x628] sm:$0xff]
    %v5156 = vld [vmem:[%s4957 + $0x630] sm:$0xff]
    %v5157 = vld [vmem:[%s4957 + $0x638] sm:$0xff]
    %v5158 = vld [vmem:[%s4957 + $0x640] sm:$0xff]
    %v5159 = vld [vmem:[%s4957 + $0x648] sm:$0xff]
    %v5160 = vld [vmem:[%s4957 + $0x650] sm:$0xff]
    %v5161 = vld [vmem:[%s4957 + $0x658] sm:$0xff]
    %v5162 = vld [vmem:[%s4957 + $0x660] sm:$0xff]
    %v5163 = vld [vmem:[%s4957 + $0x668] sm:$0xff]
    %v5164 = vld [vmem:[%s4957 + $0x670] sm:$0xff]
    %v5165 = vld [vmem:[%s4957 + $0x678] sm:$0xff]
    %v5166 = vld [vmem:[%s4957 + $0x680] sm:$0xff]
    %v5167 = vld [vmem:[%s4957 + $0x688] sm:$0xff]
    %v5168 = vld [vmem:[%s4957 + $0x690] sm:$0xff]
    %v5169 = vld [vmem:[%s4957 + $0x698] sm:$0xff]
    %v5170 = vld [vmem:[%s4957 + $0x6a0] sm:$0xff]
    %v5171 = vld [vmem:[%s4957 + $0x6a8] sm:$0xff]
    %v5172 = vld [vmem:[%s4957 + $0x6b0] sm:$0xff]
    %v5173 = vld [vmem:[%s4957 + $0x6b8] sm:$0xff]
    %v5174 = vld [vmem:[%s4957 + $0x6c0] sm:$0xff]
    %v5175 = vld [vmem:[%s4957 + $0x6c8] sm:$0xff]
    %v5176 = vld [vmem:[%s4957 + $0x6d0] sm:$0xff]
    %v5177 = vld [vmem:[%s4957 + $0x6d8] sm:$0xff]
    %v5178 = vld [vmem:[%s4957 + $0x6e0] sm:$0xff]
    %v5179 = vld [vmem:[%s4957 + $0x6e8] sm:$0xff]
    %v5180 = vld [vmem:[%s4957 + $0x6f0] sm:$0xff]
    %v5181 = vld [vmem:[%s4957 + $0x6f8] sm:$0xff]
    %v5182 = vld [vmem:[%s4957 + $0x700] sm:$0xff]
    %v5183 = vld [vmem:[%s4957 + $0x708] sm:$0xff]
    %v5184 = vld [vmem:[%s4957 + $0x710] sm:$0xff]
    %v5185 = vld [vmem:[%s4957 + $0x718] sm:$0xff]
    %v5186 = vld [vmem:[%s4957 + $0x720] sm:$0xff]
    %v5187 = vld [vmem:[%s4957 + $0x728] sm:$0xff]
    %v5188 = vld [vmem:[%s4957 + $0x730] sm:$0xff]
    %v5189 = vld [vmem:[%s4957 + $0x738] sm:$0xff]
    %v5190 = vld [vmem:[%s4957 + $0x740] sm:$0xff]
    %v5191 = vld [vmem:[%s4957 + $0x748] sm:$0xff]
    %v5192 = vld [vmem:[%s4957 + $0x750] sm:$0xff]
    %v5193 = vld [vmem:[%s4957 + $0x758] sm:$0xff]
    %v5194 = vld [vmem:[%s4957 + $0x760] sm:$0xff]
    %v5195 = vld [vmem:[%s4957 + $0x768] sm:$0xff]
    %v5196 = vld [vmem:[%s4957 + $0x770] sm:$0xff]
    %v5197 = vld [vmem:[%s4957 + $0x778] sm:$0xff]
    %v5198 = vld [vmem:[%s4957 + $0x780] sm:$0xff]
    %v5199 = vld [vmem:[%s4957 + $0x788] sm:$0xff]
    %v5200 = vld [vmem:[%s4957 + $0x790] sm:$0xff]
    %v5201 = vld [vmem:[%s4957 + $0x798] sm:$0xff]
    %v5202 = vld [vmem:[%s4957 + $0x7a0] sm:$0xff]
    %v5203 = vld [vmem:[%s4957 + $0x7a8] sm:$0xff]
    %v5204 = vld [vmem:[%s4957 + $0x7b0] sm:$0xff]
    %v5205 = vld [vmem:[%s4957 + $0x7b8] sm:$0xff]
    %v5206 = vld [vmem:[%s4957 + $0x7c0] sm:$0xff]
    %v5207 = vld [vmem:[%s4957 + $0x7c8] sm:$0xff]
    %v5208 = vld [vmem:[%s4957 + $0x7d0] sm:$0xff]
    %v5209 = vld [vmem:[%s4957 + $0x7d8] sm:$0xff]
    %v5210 = vld [vmem:[%s4957 + $0x7e0] sm:$0xff]
    %v5211 = vld [vmem:[%s4957 + $0x7e8] sm:$0xff]
    %v5212 = vld [vmem:[%s4957 + $0x7f0] sm:$0xff]
    %v5213 = vld [vmem:[%s4957 + $0x7f8] sm:$0xff]
    %5214 = vmatprep.subr.mxu0 %v4959
    %5215 = vmatpush1.msra.mxu0 %v4958
    %5216 = vmatprep.subr.mxu0 %v4961
    %5217 = vmatpush1.msra.mxu0 %v4960
    %5218 = vmatprep.subr.mxu0 %v4963
    %5219 = vmatpush1.msra.mxu0 %v4962
    %5220 = vmatprep.subr.mxu0 %v4965
    %5221 = vmatpush1.msra.mxu0 %v4964
    %5222 = vmatprep.subr.mxu0 %v4967
    %5223 = vmatpush1.msra.mxu0 %v4966
    %5224 = vmatprep.subr.mxu0 %v4969
    %5225 = vmatpush1.msra.mxu0 %v4968
    %5226 = vmatprep.subr.mxu0 %v4971
    %5227 = vmatpush1.msra.mxu0 %v4970
    %5228 = vmatprep.subr.mxu0 %v4973
    %5229 = vmatpush1.msra.mxu0 %v4972
    %5230 = vmatprep.subr.mxu0 %v4975
    %5231 = vmatpush1.msra.mxu0 %v4974
    %5232 = vmatprep.subr.mxu0 %v4977
    %5233 = vmatpush1.msra.mxu0 %v4976
    %5234 = vmatprep.subr.mxu0 %v4979
    %5235 = vmatpush1.msra.mxu0 %v4978
    %5236 = vmatprep.subr.mxu0 %v4981
    %5237 = vmatpush1.msra.mxu0 %v4980
    %5238 = vmatprep.subr.mxu0 %v4983
    %5239 = vmatpush1.msra.mxu0 %v4982
    %5240 = vmatprep.subr.mxu0 %v4985
    %5241 = vmatpush1.msra.mxu0 %v4984
    %5242 = vmatprep.subr.mxu0 %v4987
    %5243 = vmatpush1.msra.mxu0 %v4986
    %5244 = vmatprep.subr.mxu0 %v4989
    %5245 = vmatpush1.msra.mxu0 %v4988
    %5246 = vmatprep.subr.mxu0 %v4991
    %5247 = vmatpush1.msra.mxu0 %v4990
    %5248 = vmatprep.subr.mxu0 %v4993
    %5249 = vmatpush1.msra.mxu0 %v4992
    %5250 = vmatprep.subr.mxu0 %v4995
    %5251 = vmatpush1.msra.mxu0 %v4994
    %5252 = vmatprep.subr.mxu0 %v4997
    %5253 = vmatpush1.msra.mxu0 %v4996
    %5254 = vmatprep.subr.mxu0 %v4999
    %5255 = vmatpush1.msra.mxu0 %v4998
    %5256 = vmatprep.subr.mxu0 %v5001
    %5257 = vmatpush1.msra.mxu0 %v5000
    %5258 = vmatprep.subr.mxu0 %v5003
    %5259 = vmatpush1.msra.mxu0 %v5002
    %5260 = vmatprep.subr.mxu0 %v5005
    %5261 = vmatpush1.msra.mxu0 %v5004
    %5262 = vmatprep.subr.mxu0 %v5007
    %5263 = vmatpush1.msra.mxu0 %v5006
    %5264 = vmatprep.subr.mxu0 %v5009
    %5265 = vmatpush1.msra.mxu0 %v5008
    %5266 = vmatprep.subr.mxu0 %v5011
    %5267 = vmatpush1.msra.mxu0 %v5010
    %5268 = vmatprep.subr.mxu0 %v5013
    %5269 = vmatpush1.msra.mxu0 %v5012
    %5270 = vmatprep.subr.mxu0 %v5015
    %5271 = vmatpush1.msra.mxu0 %v5014
    %5272 = vmatprep.subr.mxu0 %v5017
    %5273 = vmatpush1.msra.mxu0 %v5016
    %5274 = vmatprep.subr.mxu0 %v5019
    %5275 = vmatpush1.msra.mxu0 %v5018
    %5276 = vmatprep.subr.mxu0 %v5021
    %5277 = vmatpush1.msra.mxu0 %v5020
    %5278 = vmatprep.mubr.f32.mxu0 %v4950
    %5279 = vmatmul.mubr.f32.gmra.mrb[0].mxu0 %v4949
    %v5280 = vpop.f32.mrb[0].mxu0
    %v5281 = vadd.f32 0.0, %v5280
    %v5282 = vpop.f32.mrb[0].mxu0
    %v5283 = vadd.f32 0.0, %v5282
    %5284 = vdwg.mxu0
    %5285 = vmatprep.subr.mxu0 %v5023
    %5286 = vmatpush1.msra.mxu0 %v5022
    %5287 = vmatprep.subr.mxu0 %v5025
    %5288 = vmatpush1.msra.mxu0 %v5024
    %5289 = vmatprep.subr.mxu0 %v5027
    %5290 = vmatpush1.msra.mxu0 %v5026
    %5291 = vmatprep.subr.mxu0 %v5029
    %5292 = vmatpush1.msra.mxu0 %v5028
    %5293 = vmatprep.subr.mxu0 %v5031
    %5294 = vmatpush1.msra.mxu0 %v5030
    %5295 = vmatprep.subr.mxu0 %v5033
    %5296 = vmatpush1.msra.mxu0 %v5032
    %5297 = vmatprep.subr.mxu0 %v5035
    %5298 = vmatpush1.msra.mxu0 %v5034
    %5299 = vmatprep.subr.mxu0 %v5037
    %5300 = vmatpush1.msra.mxu0 %v5036
    %5301 = vmatprep.subr.mxu0 %v5039
    %5302 = vmatpush1.msra.mxu0 %v5038
    %5303 = vmatprep.subr.mxu0 %v5041
    %5304 = vmatpush1.msra.mxu0 %v5040
    %5305 = vmatprep.subr.mxu0 %v5043
    %5306 = vmatpush1.msra.mxu0 %v5042
    %5307 = vmatprep.subr.mxu0 %v5045
    %5308 = vmatpush1.msra.mxu0 %v5044
    %5309 = vmatprep.subr.mxu0 %v5047
    %5310 = vmatpush1.msra.mxu0 %v5046
    %5311 = vmatprep.subr.mxu0 %v5049
    %5312 = vmatpush1.msra.mxu0 %v5048
    %5313 = vmatprep.subr.mxu0 %v5051
    %5314 = vmatpush1.msra.mxu0 %v5050
    %5315 = vmatprep.subr.mxu0 %v5053
    %5316 = vmatpush1.msra.mxu0 %v5052
    %5317 = vmatprep.subr.mxu0 %v5055
    %5318 = vmatpush1.msra.mxu0 %v5054
    %5319 = vmatprep.subr.mxu0 %v5057
    %5320 = vmatpush1.msra.mxu0 %v5056
    %5321 = vmatprep.subr.mxu0 %v5059
    %5322 = vmatpush1.msra.mxu0 %v5058
    %5323 = vmatprep.subr.mxu0 %v5061
    %5324 = vmatpush1.msra.mxu0 %v5060
    %5325 = vmatprep.subr.mxu0 %v5063
    %5326 = vmatpush1.msra.mxu0 %v5062
    %5327 = vmatprep.subr.mxu0 %v5065
    %5328 = vmatpush1.msra.mxu0 %v5064
    %5329 = vmatprep.subr.mxu0 %v5067
    %5330 = vmatpush1.msra.mxu0 %v5066
    %5331 = vmatprep.subr.mxu0 %v5069
    %5332 = vmatpush1.msra.mxu0 %v5068
    %5333 = vmatprep.subr.mxu0 %v5071
    %5334 = vmatpush1.msra.mxu0 %v5070
    %5335 = vmatprep.subr.mxu0 %v5073
    %5336 = vmatpush1.msra.mxu0 %v5072
    %5337 = vmatprep.subr.mxu0 %v5075
    %5338 = vmatpush1.msra.mxu0 %v5074
    %5339 = vmatprep.subr.mxu0 %v5077
    %5340 = vmatpush1.msra.mxu0 %v5076
    %5341 = vmatprep.subr.mxu0 %v5079
    %5342 = vmatpush1.msra.mxu0 %v5078
    %5343 = vmatprep.subr.mxu0 %v5081
    %5344 = vmatpush1.msra.mxu0 %v5080
    %5345 = vmatprep.subr.mxu0 %v5083
    %5346 = vmatpush1.msra.mxu0 %v5082
    %5347 = vmatprep.subr.mxu0 %v5085
    %5348 = vmatpush1.msra.mxu0 %v5084
    %5349 = vmatprep.mubr.f32.mxu0 %v4952
    %5350 = vmatmul.mubr.f32.gmra.mrb[0].mxu0 %v4951
    %v5351 = vpop.f32.mrb[0].mxu0
    %v5352 = vadd.f32 %v5281, %v5351
    %v5353 = vpop.f32.mrb[0].mxu0
    %v5354 = vadd.f32 %v5283, %v5353
    %5355 = vdwg.mxu0
    %5356 = vmatprep.subr.mxu0 %v5087
    %5357 = vmatpush1.msra.mxu0 %v5086
    %5358 = vmatprep.subr.mxu0 %v5089
    %5359 = vmatpush1.msra.mxu0 %v5088
    %5360 = vmatprep.subr.mxu0 %v5091
    %5361 = vmatpush1.msra.mxu0 %v5090
    %5362 = vmatprep.subr.mxu0 %v5093
    %5363 = vmatpush1.msra.mxu0 %v5092
    %5364 = vmatprep.subr.mxu0 %v5095
    %5365 = vmatpush1.msra.mxu0 %v5094
    %5366 = vmatprep.subr.mxu0 %v5097
    %5367 = vmatpush1.msra.mxu0 %v5096
    %5368 = vmatprep.subr.mxu0 %v5099
    %5369 = vmatpush1.msra.mxu0 %v5098
    %5370 = vmatprep.subr.mxu0 %v5101
    %5371 = vmatpush1.msra.mxu0 %v5100
    %5372 = vmatprep.subr.mxu0 %v5103
    %5373 = vmatpush1.msra.mxu0 %v5102
    %5374 = vmatprep.subr.mxu0 %v5105
    %5375 = vmatpush1.msra.mxu0 %v5104
    %5376 = vmatprep.subr.mxu0 %v5107
    %5377 = vmatpush1.msra.mxu0 %v5106
    %5378 = vmatprep.subr.mxu0 %v5109
    %5379 = vmatpush1.msra.mxu0 %v5108
    %5380 = vmatprep.subr.mxu0 %v5111
    %5381 = vmatpush1.msra.mxu0 %v5110
    %5382 = vmatprep.subr.mxu0 %v5113
    %5383 = vmatpush1.msra.mxu0 %v5112
    %5384 = vmatprep.subr.mxu0 %v5115
    %5385 = vmatpush1.msra.mxu0 %v5114
    %5386 = vmatprep.subr.mxu0 %v5117
    %5387 = vmatpush1.msra.mxu0 %v5116
    %5388 = vmatprep.subr.mxu0 %v5119
    %5389 = vmatpush1.msra.mxu0 %v5118
    %5390 = vmatprep.subr.mxu0 %v5121
    %5391 = vmatpush1.msra.mxu0 %v5120
    %5392 = vmatprep.subr.mxu0 %v5123
    %5393 = vmatpush1.msra.mxu0 %v5122
    %5394 = vmatprep.subr.mxu0 %v5125
    %5395 = vmatpush1.msra.mxu0 %v5124
    %5396 = vmatprep.subr.mxu0 %v5127
    %5397 = vmatpush1.msra.mxu0 %v5126
    %5398 = vmatprep.subr.mxu0 %v5129
    %5399 = vmatpush1.msra.mxu0 %v5128
    %5400 = vmatprep.subr.mxu0 %v5131
    %5401 = vmatpush1.msra.mxu0 %v5130
    %5402 = vmatprep.subr.mxu0 %v5133
    %5403 = vmatpush1.msra.mxu0 %v5132
    %5404 = vmatprep.subr.mxu0 %v5135
    %5405 = vmatpush1.msra.mxu0 %v5134
    %5406 = vmatprep.subr.mxu0 %v5137
    %5407 = vmatpush1.msra.mxu0 %v5136
    %5408 = vmatprep.subr.mxu0 %v5139
    %5409 = vmatpush1.msra.mxu0 %v5138
    %5410 = vmatprep.subr.mxu0 %v5141
    %5411 = vmatpush1.msra.mxu0 %v5140
    %5412 = vmatprep.subr.mxu0 %v5143
    %5413 = vmatpush1.msra.mxu0 %v5142
    %5414 = vmatprep.subr.mxu0 %v5145
    %5415 = vmatpush1.msra.mxu0 %v5144
    %5416 = vmatprep.subr.mxu0 %v5147
    %5417 = vmatpush1.msra.mxu0 %v5146
    %5418 = vmatprep.subr.mxu0 %v5149
    %5419 = vmatpush1.msra.mxu0 %v5148
    %5420 = vmatprep.mubr.f32.mxu0 %v4954
    %5421 = vmatmul.mubr.f32.gmra.mrb[0].mxu0 %v4953
    %v5422 = vpop.f32.mrb[0].mxu0
    %v5423 = vadd.f32 %v5352, %v5422
    %v5424 = vpop.f32.mrb[0].mxu0
    %v5425 = vadd.f32 %v5354, %v5424
    %5426 = vdwg.mxu0
    %5427 = vmatprep.subr.mxu0 %v5151
    %5428 = vmatpush1.msra.mxu0 %v5150
    %5429 = vmatprep.subr.mxu0 %v5153
    %5430 = vmatpush1.msra.mxu0 %v5152
    %5431 = vmatprep.subr.mxu0 %v5155
    %5432 = vmatpush1.msra.mxu0 %v5154
    %5433 = vmatprep.subr.mxu0 %v5157
    %5434 = vmatpush1.msra.mxu0 %v5156
    %5435 = vmatprep.subr.mxu0 %v5159
    %5436 = vmatpush1.msra.mxu0 %v5158
    %5437 = vmatprep.subr.mxu0 %v5161
    %5438 = vmatpush1.msra.mxu0 %v5160
    %5439 = vmatprep.subr.mxu0 %v5163
    %5440 = vmatpush1.msra.mxu0 %v5162
    %5441 = vmatprep.subr.mxu0 %v5165
    %5442 = vmatpush1.msra.mxu0 %v5164
    %5443 = vmatprep.subr.mxu0 %v5167
    %5444 = vmatpush1.msra.mxu0 %v5166
    %5445 = vmatprep.subr.mxu0 %v5169
    %5446 = vmatpush1.msra.mxu0 %v5168
    %5447 = vmatprep.subr.mxu0 %v5171
    %5448 = vmatpush1.msra.mxu0 %v5170
    %5449 = vmatprep.subr.mxu0 %v5173
    %5450 = vmatpush1.msra.mxu0 %v5172
    %5451 = vmatprep.subr.mxu0 %v5175
    %5452 = vmatpush1.msra.mxu0 %v5174
    %5453 = vmatprep.subr.mxu0 %v5177
    %5454 = vmatpush1.msra.mxu0 %v5176
    %5455 = vmatprep.subr.mxu0 %v5179
    %5456 = vmatpush1.msra.mxu0 %v5178
    %5457 = vmatprep.subr.mxu0 %v5181
    %5458 = vmatpush1.msra.mxu0 %v5180
    %5459 = vmatprep.subr.mxu0 %v5183
    %5460 = vmatpush1.msra.mxu0 %v5182
    %5461 = vmatprep.subr.mxu0 %v5185
    %5462 = vmatpush1.msra.mxu0 %v5184
    %5463 = vmatprep.subr.mxu0 %v5187
    %5464 = vmatpush1.msra.mxu0 %v5186
    %5465 = vmatprep.subr.mxu0 %v5189
    %5466 = vmatpush1.msra.mxu0 %v5188
    %5467 = vmatprep.subr.mxu0 %v5191
    %5468 = vmatpush1.msra.mxu0 %v5190
    %5469 = vmatprep.subr.mxu0 %v5193
    %5470 = vmatpush1.msra.mxu0 %v5192
    %5471 = vmatprep.subr.mxu0 %v5195
    %5472 = vmatpush1.msra.mxu0 %v5194
    %5473 = vmatprep.subr.mxu0 %v5197
    %5474 = vmatpush1.msra.mxu0 %v5196
    %5475 = vmatprep.subr.mxu0 %v5199
    %5476 = vmatpush1.msra.mxu0 %v5198
    %5477 = vmatprep.subr.mxu0 %v5201
    %5478 = vmatpush1.msra.mxu0 %v5200
    %5479 = vmatprep.subr.mxu0 %v5203
    %5480 = vmatpush1.msra.mxu0 %v5202
    %5481 = vmatprep.subr.mxu0 %v5205
    %5482 = vmatpush1.msra.mxu0 %v5204
    %5483 = vmatprep.subr.mxu0 %v5207
    %5484 = vmatpush1.msra.mxu0 %v5206
    %5485 = vmatprep.subr.mxu0 %v5209
    %5486 = vmatpush1.msra.mxu0 %v5208
    %5487 = vmatprep.subr.mxu0 %v5211
    %5488 = vmatpush1.msra.mxu0 %v5210
    %5489 = vmatprep.subr.mxu0 %v5213
    %5490 = vmatpush1.msra.mxu0 %v5212
    %5491 = vmatprep.mubr.f32.mxu0 %v4956
    %5492 = vmatmul.mubr.f32.gmra.mrb[0].mxu0 %v4955
    %v5493 = vpop.f32.mrb[0].mxu0
    %v5494 = vadd.f32 %v5423, %v5493
    %v5495 = vpop.f32.mrb[0].mxu0
    %v5496 = vadd.f32 %v5425, %v5495
    %5497 = vdwg.mxu0
    %v5498 = vadd.f32 %v4946, %v5494
    %v5499 = vadd.f32 %v4947, %v5496
    %5500 = vst [vmem:[#allocation3] sm:$0xff] %v5498
    %5501 = vst [vmem:[#allocation3 + $0x8] sm:$0xff] %v5499
    %v5502 = vld [vmem:[#allocation3] sm:$0xff]
    %v5503 = vld [vmem:[#allocation3 + $0x8] sm:$0xff]
    %s5504 = scalar_lea.vmem [#allocation2], 192
    %v5505 = vld [vmem:[%s5504] sm:$0xff]
    %v5506 = vld [vmem:[%s5504 + $0x8] sm:$0xff]
    %v5507 = vld [vmem:[%s5504 + $0x10] sm:$0xff]
    %v5508 = vld [vmem:[%s5504 + $0x18] sm:$0xff]
    %v5509 = vld [vmem:[%s5504 + $0x20] sm:$0xff]
    %v5510 = vld [vmem:[%s5504 + $0x28] sm:$0xff]
    %v5511 = vld [vmem:[%s5504 + $0x30] sm:$0xff]
    %v5512 = vld [vmem:[%s5504 + $0x38] sm:$0xff]
    %s5513 = scalar_lea.vmem [#allocation14], 6144
    %v5514 = vld [vmem:[%s5513] sm:$0xff]
    %v5515 = vld [vmem:[%s5513 + $0x8] sm:$0xff]
    %v5516 = vld [vmem:[%s5513 + $0x10] sm:$0xff]
    %v5517 = vld [vmem:[%s5513 + $0x18] sm:$0xff]
    %v5518 = vld [vmem:[%s5513 + $0x20] sm:$0xff]
    %v5519 = vld [vmem:[%s5513 + $0x28] sm:$0xff]
    %v5520 = vld [vmem:[%s5513 + $0x30] sm:$0xff]
    %v5521 = vld [vmem:[%s5513 + $0x38] sm:$0xff]
    %v5522 = vld [vmem:[%s5513 + $0x40] sm:$0xff]
    %v5523 = vld [vmem:[%s5513 + $0x48] sm:$0xff]
    %v5524 = vld [vmem:[%s5513 + $0x50] sm:$0xff]
    %v5525 = vld [vmem:[%s5513 + $0x58] sm:$0xff]
    %v5526 = vld [vmem:[%s5513 + $0x60] sm:$0xff]
    %v5527 = vld [vmem:[%s5513 + $0x68] sm:$0xff]
    %v5528 = vld [vmem:[%s5513 + $0x70] sm:$0xff]
    %v5529 = vld [vmem:[%s5513 + $0x78] sm:$0xff]
    %v5530 = vld [vmem:[%s5513 + $0x80] sm:$0xff]
    %v5531 = vld [vmem:[%s5513 + $0x88] sm:$0xff]
    %v5532 = vld [vmem:[%s5513 + $0x90] sm:$0xff]
    %v5533 = vld [vmem:[%s5513 + $0x98] sm:$0xff]
    %v5534 = vld [vmem:[%s5513 + $0xa0] sm:$0xff]
    %v5535 = vld [vmem:[%s5513 + $0xa8] sm:$0xff]
    %v5536 = vld [vmem:[%s5513 + $0xb0] sm:$0xff]
    %v5537 = vld [vmem:[%s5513 + $0xb8] sm:$0xff]
    %v5538 = vld [vmem:[%s5513 + $0xc0] sm:$0xff]
    %v5539 = vld [vmem:[%s5513 + $0xc8] sm:$0xff]
    %v5540 = vld [vmem:[%s5513 + $0xd0] sm:$0xff]
    %v5541 = vld [vmem:[%s5513 + $0xd8] sm:$0xff]
    %v5542 = vld [vmem:[%s5513 + $0xe0] sm:$0xff]
    %v5543 = vld [vmem:[%s5513 + $0xe8] sm:$0xff]
    %v5544 = vld [vmem:[%s5513 + $0xf0] sm:$0xff]
    %v5545 = vld [vmem:[%s5513 + $0xf8] sm:$0xff]
    %v5546 = vld [vmem:[%s5513 + $0x100] sm:$0xff]
    %v5547 = vld [vmem:[%s5513 + $0x108] sm:$0xff]
    %v5548 = vld [vmem:[%s5513 + $0x110] sm:$0xff]
    %v5549 = vld [vmem:[%s5513 + $0x118] sm:$0xff]
    %v5550 = vld [vmem:[%s5513 + $0x120] sm:$0xff]
    %v5551 = vld [vmem:[%s5513 + $0x128] sm:$0xff]
    %v5552 = vld [vmem:[%s5513 + $0x130] sm:$0xff]
    %v5553 = vld [vmem:[%s5513 + $0x138] sm:$0xff]
    %v5554 = vld [vmem:[%s5513 + $0x140] sm:$0xff]
    %v5555 = vld [vmem:[%s5513 + $0x148] sm:$0xff]
    %v5556 = vld [vmem:[%s5513 + $0x150] sm:$0xff]
    %v5557 = vld [vmem:[%s5513 + $0x158] sm:$0xff]
    %v5558 = vld [vmem:[%s5513 + $0x160] sm:$0xff]
    %v5559 = vld [vmem:[%s5513 + $0x168] sm:$0xff]
    %v5560 = vld [vmem:[%s5513 + $0x170] sm:$0xff]
    %v5561 = vld [vmem:[%s5513 + $0x178] sm:$0xff]
    %v5562 = vld [vmem:[%s5513 + $0x180] sm:$0xff]
    %v5563 = vld [vmem:[%s5513 + $0x188] sm:$0xff]
    %v5564 = vld [vmem:[%s5513 + $0x190] sm:$0xff]
    %v5565 = vld [vmem:[%s5513 + $0x198] sm:$0xff]
    %v5566 = vld [vmem:[%s5513 + $0x1a0] sm:$0xff]
    %v5567 = vld [vmem:[%s5513 + $0x1a8] sm:$0xff]
    %v5568 = vld [vmem:[%s5513 + $0x1b0] sm:$0xff]
    %v5569 = vld [vmem:[%s5513 + $0x1b8] sm:$0xff]
    %v5570 = vld [vmem:[%s5513 + $0x1c0] sm:$0xff]
    %v5571 = vld [vmem:[%s5513 + $0x1c8] sm:$0xff]
    %v5572 = vld [vmem:[%s5513 + $0x1d0] sm:$0xff]
    %v5573 = vld [vmem:[%s5513 + $0x1d8] sm:$0xff]
    %v5574 = vld [vmem:[%s5513 + $0x1e0] sm:$0xff]
    %v5575 = vld [vmem:[%s5513 + $0x1e8] sm:$0xff]
    %v5576 = vld [vmem:[%s5513 + $0x1f0] sm:$0xff]
    %v5577 = vld [vmem:[%s5513 + $0x1f8] sm:$0xff]
    %v5578 = vld [vmem:[%s5513 + $0x200] sm:$0xff]
    %v5579 = vld [vmem:[%s5513 + $0x208] sm:$0xff]
    %v5580 = vld [vmem:[%s5513 + $0x210] sm:$0xff]
    %v5581 = vld [vmem:[%s5513 + $0x218] sm:$0xff]
    %v5582 = vld [vmem:[%s5513 + $0x220] sm:$0xff]
    %v5583 = vld [vmem:[%s5513 + $0x228] sm:$0xff]
    %v5584 = vld [vmem:[%s5513 + $0x230] sm:$0xff]
    %v5585 = vld [vmem:[%s5513 + $0x238] sm:$0xff]
    %v5586 = vld [vmem:[%s5513 + $0x240] sm:$0xff]
    %v5587 = vld [vmem:[%s5513 + $0x248] sm:$0xff]
    %v5588 = vld [vmem:[%s5513 + $0x250] sm:$0xff]
    %v5589 = vld [vmem:[%s5513 + $0x258] sm:$0xff]
    %v5590 = vld [vmem:[%s5513 + $0x260] sm:$0xff]
    %v5591 = vld [vmem:[%s5513 + $0x268] sm:$0xff]
    %v5592 = vld [vmem:[%s5513 + $0x270] sm:$0xff]
    %v5593 = vld [vmem:[%s5513 + $0x278] sm:$0xff]
    %v5594 = vld [vmem:[%s5513 + $0x280] sm:$0xff]
    %v5595 = vld [vmem:[%s5513 + $0x288] sm:$0xff]
    %v5596 = vld [vmem:[%s5513 + $0x290] sm:$0xff]
    %v5597 = vld [vmem:[%s5513 + $0x298] sm:$0xff]
    %v5598 = vld [vmem:[%s5513 + $0x2a0] sm:$0xff]
    %v5599 = vld [vmem:[%s5513 + $0x2a8] sm:$0xff]
    %v5600 = vld [vmem:[%s5513 + $0x2b0] sm:$0xff]
    %v5601 = vld [vmem:[%s5513 + $0x2b8] sm:$0xff]
    %v5602 = vld [vmem:[%s5513 + $0x2c0] sm:$0xff]
    %v5603 = vld [vmem:[%s5513 + $0x2c8] sm:$0xff]
    %v5604 = vld [vmem:[%s5513 + $0x2d0] sm:$0xff]
    %v5605 = vld [vmem:[%s5513 + $0x2d8] sm:$0xff]
    %v5606 = vld [vmem:[%s5513 + $0x2e0] sm:$0xff]
    %v5607 = vld [vmem:[%s5513 + $0x2e8] sm:$0xff]
    %v5608 = vld [vmem:[%s5513 + $0x2f0] sm:$0xff]
    %v5609 = vld [vmem:[%s5513 + $0x2f8] sm:$0xff]
    %v5610 = vld [vmem:[%s5513 + $0x300] sm:$0xff]
    %v5611 = vld [vmem:[%s5513 + $0x308] sm:$0xff]
    %v5612 = vld [vmem:[%s5513 + $0x310] sm:$0xff]
    %v5613 = vld [vmem:[%s5513 + $0x318] sm:$0xff]
    %v5614 = vld [vmem:[%s5513 + $0x320] sm:$0xff]
    %v5615 = vld [vmem:[%s5513 + $0x328] sm:$0xff]
    %v5616 = vld [vmem:[%s5513 + $0x330] sm:$0xff]
    %v5617 = vld [vmem:[%s5513 + $0x338] sm:$0xff]
    %v5618 = vld [vmem:[%s5513 + $0x340] sm:$0xff]
    %v5619 = vld [vmem:[%s5513 + $0x348] sm:$0xff]
    %v5620 = vld [vmem:[%s5513 + $0x350] sm:$0xff]
    %v5621 = vld [vmem:[%s5513 + $0x358] sm:$0xff]
    %v5622 = vld [vmem:[%s5513 + $0x360] sm:$0xff]
    %v5623 = vld [vmem:[%s5513 + $0x368] sm:$0xff]
    %v5624 = vld [vmem:[%s5513 + $0x370] sm:$0xff]
    %v5625 = vld [vmem:[%s5513 + $0x378] sm:$0xff]
    %v5626 = vld [vmem:[%s5513 + $0x380] sm:$0xff]
    %v5627 = vld [vmem:[%s5513 + $0x388] sm:$0xff]
    %v5628 = vld [vmem:[%s5513 + $0x390] sm:$0xff]
    %v5629 = vld [vmem:[%s5513 + $0x398] sm:$0xff]
    %v5630 = vld [vmem:[%s5513 + $0x3a0] sm:$0xff]
    %v5631 = vld [vmem:[%s5513 + $0x3a8] sm:$0xff]
    %v5632 = vld [vmem:[%s5513 + $0x3b0] sm:$0xff]
    %v5633 = vld [vmem:[%s5513 + $0x3b8] sm:$0xff]
    %v5634 = vld [vmem:[%s5513 + $0x3c0] sm:$0xff]
    %v5635 = vld [vmem:[%s5513 + $0x3c8] sm:$0xff]
    %v5636 = vld [vmem:[%s5513 + $0x3d0] sm:$0xff]
    %v5637 = vld [vmem:[%s5513 + $0x3d8] sm:$0xff]
    %v5638 = vld [vmem:[%s5513 + $0x3e0] sm:$0xff]
    %v5639 = vld [vmem:[%s5513 + $0x3e8] sm:$0xff]
    %v5640 = vld [vmem:[%s5513 + $0x3f0] sm:$0xff]
    %v5641 = vld [vmem:[%s5513 + $0x3f8] sm:$0xff]
    %v5642 = vld [vmem:[%s5513 + $0x400] sm:$0xff]
    %v5643 = vld [vmem:[%s5513 + $0x408] sm:$0xff]
    %v5644 = vld [vmem:[%s5513 + $0x410] sm:$0xff]
    %v5645 = vld [vmem:[%s5513 + $0x418] sm:$0xff]
    %v5646 = vld [vmem:[%s5513 + $0x420] sm:$0xff]
    %v5647 = vld [vmem:[%s5513 + $0x428] sm:$0xff]
    %v5648 = vld [vmem:[%s5513 + $0x430] sm:$0xff]
    %v5649 = vld [vmem:[%s5513 + $0x438] sm:$0xff]
    %v5650 = vld [vmem:[%s5513 + $0x440] sm:$0xff]
    %v5651 = vld [vmem:[%s5513 + $0x448] sm:$0xff]
    %v5652 = vld [vmem:[%s5513 + $0x450] sm:$0xff]
    %v5653 = vld [vmem:[%s5513 + $0x458] sm:$0xff]
    %v5654 = vld [vmem:[%s5513 + $0x460] sm:$0xff]
    %v5655 = vld [vmem:[%s5513 + $0x468] sm:$0xff]
    %v5656 = vld [vmem:[%s5513 + $0x470] sm:$0xff]
    %v5657 = vld [vmem:[%s5513 + $0x478] sm:$0xff]
    %v5658 = vld [vmem:[%s5513 + $0x480] sm:$0xff]
    %v5659 = vld [vmem:[%s5513 + $0x488] sm:$0xff]
    %v5660 = vld [vmem:[%s5513 + $0x490] sm:$0xff]
    %v5661 = vld [vmem:[%s5513 + $0x498] sm:$0xff]
    %v5662 = vld [vmem:[%s5513 + $0x4a0] sm:$0xff]
    %v5663 = vld [vmem:[%s5513 + $0x4a8] sm:$0xff]
    %v5664 = vld [vmem:[%s5513 + $0x4b0] sm:$0xff]
    %v5665 = vld [vmem:[%s5513 + $0x4b8] sm:$0xff]
    %v5666 = vld [vmem:[%s5513 + $0x4c0] sm:$0xff]
    %v5667 = vld [vmem:[%s5513 + $0x4c8] sm:$0xff]
    %v5668 = vld [vmem:[%s5513 + $0x4d0] sm:$0xff]
    %v5669 = vld [vmem:[%s5513 + $0x4d8] sm:$0xff]
    %v5670 = vld [vmem:[%s5513 + $0x4e0] sm:$0xff]
    %v5671 = vld [vmem:[%s5513 + $0x4e8] sm:$0xff]
    %v5672 = vld [vmem:[%s5513 + $0x4f0] sm:$0xff]
    %v5673 = vld [vmem:[%s5513 + $0x4f8] sm:$0xff]
    %v5674 = vld [vmem:[%s5513 + $0x500] sm:$0xff]
    %v5675 = vld [vmem:[%s5513 + $0x508] sm:$0xff]
    %v5676 = vld [vmem:[%s5513 + $0x510] sm:$0xff]
    %v5677 = vld [vmem:[%s5513 + $0x518] sm:$0xff]
    %v5678 = vld [vmem:[%s5513 + $0x520] sm:$0xff]
    %v5679 = vld [vmem:[%s5513 + $0x528] sm:$0xff]
    %v5680 = vld [vmem:[%s5513 + $0x530] sm:$0xff]
    %v5681 = vld [vmem:[%s5513 + $0x538] sm:$0xff]
    %v5682 = vld [vmem:[%s5513 + $0x540] sm:$0xff]
    %v5683 = vld [vmem:[%s5513 + $0x548] sm:$0xff]
    %v5684 = vld [vmem:[%s5513 + $0x550] sm:$0xff]
    %v5685 = vld [vmem:[%s5513 + $0x558] sm:$0xff]
    %v5686 = vld [vmem:[%s5513 + $0x560] sm:$0xff]
    %v5687 = vld [vmem:[%s5513 + $0x568] sm:$0xff]
    %v5688 = vld [vmem:[%s5513 + $0x570] sm:$0xff]
    %v5689 = vld [vmem:[%s5513 + $0x578] sm:$0xff]
    %v5690 = vld [vmem:[%s5513 + $0x580] sm:$0xff]
    %v5691 = vld [vmem:[%s5513 + $0x588] sm:$0xff]
    %v5692 = vld [vmem:[%s5513 + $0x590] sm:$0xff]
    %v5693 = vld [vmem:[%s5513 + $0x598] sm:$0xff]
    %v5694 = vld [vmem:[%s5513 + $0x5a0] sm:$0xff]
    %v5695 = vld [vmem:[%s5513 + $0x5a8] sm:$0xff]
    %v5696 = vld [vmem:[%s5513 + $0x5b0] sm:$0xff]
    %v5697 = vld [vmem:[%s5513 + $0x5b8] sm:$0xff]
    %v5698 = vld [vmem:[%s5513 + $0x5c0] sm:$0xff]
    %v5699 = vld [vmem:[%s5513 + $0x5c8] sm:$0xff]
    %v5700 = vld [vmem:[%s5513 + $0x5d0] sm:$0xff]
    %v5701 = vld [vmem:[%s5513 + $0x5d8] sm:$0xff]
    %v5702 = vld [vmem:[%s5513 + $0x5e0] sm:$0xff]
    %v5703 = vld [vmem:[%s5513 + $0x5e8] sm:$0xff]
    %v5704 = vld [vmem:[%s5513 + $0x5f0] sm:$0xff]
    %v5705 = vld [vmem:[%s5513 + $0x5f8] sm:$0xff]
    %v5706 = vld [vmem:[%s5513 + $0x600] sm:$0xff]
    %v5707 = vld [vmem:[%s5513 + $0x608] sm:$0xff]
    %v5708 = vld [vmem:[%s5513 + $0x610] sm:$0xff]
    %v5709 = vld [vmem:[%s5513 + $0x618] sm:$0xff]
    %v5710 = vld [vmem:[%s5513 + $0x620] sm:$0xff]
    %v5711 = vld [vmem:[%s5513 + $0x628] sm:$0xff]
    %v5712 = vld [vmem:[%s5513 + $0x630] sm:$0xff]
    %v5713 = vld [vmem:[%s5513 + $0x638] sm:$0xff]
    %v5714 = vld [vmem:[%s5513 + $0x640] sm:$0xff]
    %v5715 = vld [vmem:[%s5513 + $0x648] sm:$0xff]
    %v5716 = vld [vmem:[%s5513 + $0x650] sm:$0xff]
    %v5717 = vld [vmem:[%s5513 + $0x658] sm:$0xff]
    %v5718 = vld [vmem:[%s5513 + $0x660] sm:$0xff]
    %v5719 = vld [vmem:[%s5513 + $0x668] sm:$0xff]
    %v5720 = vld [vmem:[%s5513 + $0x670] sm:$0xff]
    %v5721 = vld [vmem:[%s5513 + $0x678] sm:$0xff]
    %v5722 = vld [vmem:[%s5513 + $0x680] sm:$0xff]
    %v5723 = vld [vmem:[%s5513 + $0x688] sm:$0xff]
    %v5724 = vld [vmem:[%s5513 + $0x690] sm:$0xff]
    %v5725 = vld [vmem:[%s5513 + $0x698] sm:$0xff]
    %v5726 = vld [vmem:[%s5513 + $0x6a0] sm:$0xff]
    %v5727 = vld [vmem:[%s5513 + $0x6a8] sm:$0xff]
    %v5728 = vld [vmem:[%s5513 + $0x6b0] sm:$0xff]
    %v5729 = vld [vmem:[%s5513 + $0x6b8] sm:$0xff]
    %v5730 = vld [vmem:[%s5513 + $0x6c0] sm:$0xff]
    %v5731 = vld [vmem:[%s5513 + $0x6c8] sm:$0xff]
    %v5732 = vld [vmem:[%s5513 + $0x6d0] sm:$0xff]
    %v5733 = vld [vmem:[%s5513 + $0x6d8] sm:$0xff]
    %v5734 = vld [vmem:[%s5513 + $0x6e0] sm:$0xff]
    %v5735 = vld [vmem:[%s5513 + $0x6e8] sm:$0xff]
    %v5736 = vld [vmem:[%s5513 + $0x6f0] sm:$0xff]
    %v5737 = vld [vmem:[%s5513 + $0x6f8] sm:$0xff]
    %v5738 = vld [vmem:[%s5513 + $0x700] sm:$0xff]
    %v5739 = vld [vmem:[%s5513 + $0x708] sm:$0xff]
    %v5740 = vld [vmem:[%s5513 + $0x710] sm:$0xff]
    %v5741 = vld [vmem:[%s5513 + $0x718] sm:$0xff]
    %v5742 = vld [vmem:[%s5513 + $0x720] sm:$0xff]
    %v5743 = vld [vmem:[%s5513 + $0x728] sm:$0xff]
    %v5744 = vld [vmem:[%s5513 + $0x730] sm:$0xff]
    %v5745 = vld [vmem:[%s5513 + $0x738] sm:$0xff]
    %v5746 = vld [vmem:[%s5513 + $0x740] sm:$0xff]
    %v5747 = vld [vmem:[%s5513 + $0x748] sm:$0xff]
    %v5748 = vld [vmem:[%s5513 + $0x750] sm:$0xff]
    %v5749 = vld [vmem:[%s5513 + $0x758] sm:$0xff]
    %v5750 = vld [vmem:[%s5513 + $0x760] sm:$0xff]
    %v5751 = vld [vmem:[%s5513 + $0x768] sm:$0xff]
    %v5752 = vld [vmem:[%s5513 + $0x770] sm:$0xff]
    %v5753 = vld [vmem:[%s5513 + $0x778] sm:$0xff]
    %v5754 = vld [vmem:[%s5513 + $0x780] sm:$0xff]
    %v5755 = vld [vmem:[%s5513 + $0x788] sm:$0xff]
    %v5756 = vld [vmem:[%s5513 + $0x790] sm:$0xff]
    %v5757 = vld [vmem:[%s5513 + $0x798] sm:$0xff]
    %v5758 = vld [vmem:[%s5513 + $0x7a0] sm:$0xff]
    %v5759 = vld [vmem:[%s5513 + $0x7a8] sm:$0xff]
    %v5760 = vld [vmem:[%s5513 + $0x7b0] sm:$0xff]
    %v5761 = vld [vmem:[%s5513 + $0x7b8] sm:$0xff]
    %v5762 = vld [vmem:[%s5513 + $0x7c0] sm:$0xff]
    %v5763 = vld [vmem:[%s5513 + $0x7c8] sm:$0xff]
    %v5764 = vld [vmem:[%s5513 + $0x7d0] sm:$0xff]
    %v5765 = vld [vmem:[%s5513 + $0x7d8] sm:$0xff]
    %v5766 = vld [vmem:[%s5513 + $0x7e0] sm:$0xff]
    %v5767 = vld [vmem:[%s5513 + $0x7e8] sm:$0xff]
    %v5768 = vld [vmem:[%s5513 + $0x7f0] sm:$0xff]
    %v5769 = vld [vmem:[%s5513 + $0x7f8] sm:$0xff]
    %5770 = vmatprep.subr.mxu0 %v5515
    %5771 = vmatpush1.msra.mxu0 %v5514
    %5772 = vmatprep.subr.mxu0 %v5517
    %5773 = vmatpush1.msra.mxu0 %v5516
    %5774 = vmatprep.subr.mxu0 %v5519
    %5775 = vmatpush1.msra.mxu0 %v5518
    %5776 = vmatprep.subr.mxu0 %v5521
    %5777 = vmatpush1.msra.mxu0 %v5520
    %5778 = vmatprep.subr.mxu0 %v5523
    %5779 = vmatpush1.msra.mxu0 %v5522
    %5780 = vmatprep.subr.mxu0 %v5525
    %5781 = vmatpush1.msra.mxu0 %v5524
    %5782 = vmatprep.subr.mxu0 %v5527
    %5783 = vmatpush1.msra.mxu0 %v5526
    %5784 = vmatprep.subr.mxu0 %v5529
    %5785 = vmatpush1.msra.mxu0 %v5528
    %5786 = vmatprep.subr.mxu0 %v5531
    %5787 = vmatpush1.msra.mxu0 %v5530
    %5788 = vmatprep.subr.mxu0 %v5533
    %5789 = vmatpush1.msra.mxu0 %v5532
    %5790 = vmatprep.subr.mxu0 %v5535
    %5791 = vmatpush1.msra.mxu0 %v5534
    %5792 = vmatprep.subr.mxu0 %v5537
    %5793 = vmatpush1.msra.mxu0 %v5536
    %5794 = vmatprep.subr.mxu0 %v5539
    %5795 = vmatpush1.msra.mxu0 %v5538
    %5796 = vmatprep.subr.mxu0 %v5541
    %5797 = vmatpush1.msra.mxu0 %v5540
    %5798 = vmatprep.subr.mxu0 %v5543
    %5799 = vmatpush1.msra.mxu0 %v5542
    %5800 = vmatprep.subr.mxu0 %v5545
    %5801 = vmatpush1.msra.mxu0 %v5544
    %5802 = vmatprep.subr.mxu0 %v5547
    %5803 = vmatpush1.msra.mxu0 %v5546
    %5804 = vmatprep.subr.mxu0 %v5549
    %5805 = vmatpush1.msra.mxu0 %v5548
    %5806 = vmatprep.subr.mxu0 %v5551
    %5807 = vmatpush1.msra.mxu0 %v5550
    %5808 = vmatprep.subr.mxu0 %v5553
    %5809 = vmatpush1.msra.mxu0 %v5552
    %5810 = vmatprep.subr.mxu0 %v5555
    %5811 = vmatpush1.msra.mxu0 %v5554
    %5812 = vmatprep.subr.mxu0 %v5557
    %5813 = vmatpush1.msra.mxu0 %v5556
    %5814 = vmatprep.subr.mxu0 %v5559
    %5815 = vmatpush1.msra.mxu0 %v5558
    %5816 = vmatprep.subr.mxu0 %v5561
    %5817 = vmatpush1.msra.mxu0 %v5560
    %5818 = vmatprep.subr.mxu0 %v5563
    %5819 = vmatpush1.msra.mxu0 %v5562
    %5820 = vmatprep.subr.mxu0 %v5565
    %5821 = vmatpush1.msra.mxu0 %v5564
    %5822 = vmatprep.subr.mxu0 %v5567
    %5823 = vmatpush1.msra.mxu0 %v5566
    %5824 = vmatprep.subr.mxu0 %v5569
    %5825 = vmatpush1.msra.mxu0 %v5568
    %5826 = vmatprep.subr.mxu0 %v5571
    %5827 = vmatpush1.msra.mxu0 %v5570
    %5828 = vmatprep.subr.mxu0 %v5573
    %5829 = vmatpush1.msra.mxu0 %v5572
    %5830 = vmatprep.subr.mxu0 %v5575
    %5831 = vmatpush1.msra.mxu0 %v5574
    %5832 = vmatprep.subr.mxu0 %v5577
    %5833 = vmatpush1.msra.mxu0 %v5576
    %5834 = vmatprep.mubr.f32.mxu0 %v5506
    %5835 = vmatmul.mubr.f32.gmra.mrb[0].mxu0 %v5505
    %v5836 = vpop.f32.mrb[0].mxu0
    %v5837 = vadd.f32 0.0, %v5836
    %v5838 = vpop.f32.mrb[0].mxu0
    %v5839 = vadd.f32 0.0, %v5838
    %5840 = vdwg.mxu0
    %5841 = vmatprep.subr.mxu0 %v5579
    %5842 = vmatpush1.msra.mxu0 %v5578
    %5843 = vmatprep.subr.mxu0 %v5581
    %5844 = vmatpush1.msra.mxu0 %v5580
    %5845 = vmatprep.subr.mxu0 %v5583
    %5846 = vmatpush1.msra.mxu0 %v5582
    %5847 = vmatprep.subr.mxu0 %v5585
    %5848 = vmatpush1.msra.mxu0 %v5584
    %5849 = vmatprep.subr.mxu0 %v5587
    %5850 = vmatpush1.msra.mxu0 %v5586
    %5851 = vmatprep.subr.mxu0 %v5589
    %5852 = vmatpush1.msra.mxu0 %v5588
    %5853 = vmatprep.subr.mxu0 %v5591
    %5854 = vmatpush1.msra.mxu0 %v5590
    %5855 = vmatprep.subr.mxu0 %v5593
    %5856 = vmatpush1.msra.mxu0 %v5592
    %5857 = vmatprep.subr.mxu0 %v5595
    %5858 = vmatpush1.msra.mxu0 %v5594
    %5859 = vmatprep.subr.mxu0 %v5597
    %5860 = vmatpush1.msra.mxu0 %v5596
    %5861 = vmatprep.subr.mxu0 %v5599
    %5862 = vmatpush1.msra.mxu0 %v5598
    %5863 = vmatprep.subr.mxu0 %v5601
    %5864 = vmatpush1.msra.mxu0 %v5600
    %5865 = vmatprep.subr.mxu0 %v5603
    %5866 = vmatpush1.msra.mxu0 %v5602
    %5867 = vmatprep.subr.mxu0 %v5605
    %5868 = vmatpush1.msra.mxu0 %v5604
    %5869 = vmatprep.subr.mxu0 %v5607
    %5870 = vmatpush1.msra.mxu0 %v5606
    %5871 = vmatprep.subr.mxu0 %v5609
    %5872 = vmatpush1.msra.mxu0 %v5608
    %5873 = vmatprep.subr.mxu0 %v5611
    %5874 = vmatpush1.msra.mxu0 %v5610
    %5875 = vmatprep.subr.mxu0 %v5613
    %5876 = vmatpush1.msra.mxu0 %v5612
    %5877 = vmatprep.subr.mxu0 %v5615
    %5878 = vmatpush1.msra.mxu0 %v5614
    %5879 = vmatprep.subr.mxu0 %v5617
    %5880 = vmatpush1.msra.mxu0 %v5616
    %5881 = vmatprep.subr.mxu0 %v5619
    %5882 = vmatpush1.msra.mxu0 %v5618
    %5883 = vmatprep.subr.mxu0 %v5621
    %5884 = vmatpush1.msra.mxu0 %v5620
    %5885 = vmatprep.subr.mxu0 %v5623
    %5886 = vmatpush1.msra.mxu0 %v5622
    %5887 = vmatprep.subr.mxu0 %v5625
    %5888 = vmatpush1.msra.mxu0 %v5624
    %5889 = vmatprep.subr.mxu0 %v5627
    %5890 = vmatpush1.msra.mxu0 %v5626
    %5891 = vmatprep.subr.mxu0 %v5629
    %5892 = vmatpush1.msra.mxu0 %v5628
    %5893 = vmatprep.subr.mxu0 %v5631
    %5894 = vmatpush1.msra.mxu0 %v5630
    %5895 = vmatprep.subr.mxu0 %v5633
    %5896 = vmatpush1.msra.mxu0 %v5632
    %5897 = vmatprep.subr.mxu0 %v5635
    %5898 = vmatpush1.msra.mxu0 %v5634
    %5899 = vmatprep.subr.mxu0 %v5637
    %5900 = vmatpush1.msra.mxu0 %v5636
    %5901 = vmatprep.subr.mxu0 %v5639
    %5902 = vmatpush1.msra.mxu0 %v5638
    %5903 = vmatprep.subr.mxu0 %v5641
    %5904 = vmatpush1.msra.mxu0 %v5640
    %5905 = vmatprep.mubr.f32.mxu0 %v5508
    %5906 = vmatmul.mubr.f32.gmra.mrb[0].mxu0 %v5507
    %v5907 = vpop.f32.mrb[0].mxu0
    %v5908 = vadd.f32 %v5837, %v5907
    %v5909 = vpop.f32.mrb[0].mxu0
    %v5910 = vadd.f32 %v5839, %v5909
    %5911 = vdwg.mxu0
    %5912 = vmatprep.subr.mxu0 %v5643
    %5913 = vmatpush1.msra.mxu0 %v5642
    %5914 = vmatprep.subr.mxu0 %v5645
    %5915 = vmatpush1.msra.mxu0 %v5644
    %5916 = vmatprep.subr.mxu0 %v5647
    %5917 = vmatpush1.msra.mxu0 %v5646
    %5918 = vmatprep.subr.mxu0 %v5649
    %5919 = vmatpush1.msra.mxu0 %v5648
    %5920 = vmatprep.subr.mxu0 %v5651
    %5921 = vmatpush1.msra.mxu0 %v5650
    %5922 = vmatprep.subr.mxu0 %v5653
    %5923 = vmatpush1.msra.mxu0 %v5652
    %5924 = vmatprep.subr.mxu0 %v5655
    %5925 = vmatpush1.msra.mxu0 %v5654
    %5926 = vmatprep.subr.mxu0 %v5657
    %5927 = vmatpush1.msra.mxu0 %v5656
    %5928 = vmatprep.subr.mxu0 %v5659
    %5929 = vmatpush1.msra.mxu0 %v5658
    %5930 = vmatprep.subr.mxu0 %v5661
    %5931 = vmatpush1.msra.mxu0 %v5660
    %5932 = vmatprep.subr.mxu0 %v5663
    %5933 = vmatpush1.msra.mxu0 %v5662
    %5934 = vmatprep.subr.mxu0 %v5665
    %5935 = vmatpush1.msra.mxu0 %v5664
    %5936 = vmatprep.subr.mxu0 %v5667
    %5937 = vmatpush1.msra.mxu0 %v5666
    %5938 = vmatprep.subr.mxu0 %v5669
    %5939 = vmatpush1.msra.mxu0 %v5668
    %5940 = vmatprep.subr.mxu0 %v5671
    %5941 = vmatpush1.msra.mxu0 %v5670
    %5942 = vmatprep.subr.mxu0 %v5673
    %5943 = vmatpush1.msra.mxu0 %v5672
    %5944 = vmatprep.subr.mxu0 %v5675
    %5945 = vmatpush1.msra.mxu0 %v5674
    %5946 = vmatprep.subr.mxu0 %v5677
    %5947 = vmatpush1.msra.mxu0 %v5676
    %5948 = vmatprep.subr.mxu0 %v5679
    %5949 = vmatpush1.msra.mxu0 %v5678
    %5950 = vmatprep.subr.mxu0 %v5681
    %5951 = vmatpush1.msra.mxu0 %v5680
    %5952 = vmatprep.subr.mxu0 %v5683
    %5953 = vmatpush1.msra.mxu0 %v5682
    %5954 = vmatprep.subr.mxu0 %v5685
    %5955 = vmatpush1.msra.mxu0 %v5684
    %5956 = vmatprep.subr.mxu0 %v5687
    %5957 = vmatpush1.msra.mxu0 %v5686
    %5958 = vmatprep.subr.mxu0 %v5689
    %5959 = vmatpush1.msra.mxu0 %v5688
    %5960 = vmatprep.subr.mxu0 %v5691
    %5961 = vmatpush1.msra.mxu0 %v5690
    %5962 = vmatprep.subr.mxu0 %v5693
    %5963 = vmatpush1.msra.mxu0 %v5692
    %5964 = vmatprep.subr.mxu0 %v5695
    %5965 = vmatpush1.msra.mxu0 %v5694
    %5966 = vmatprep.subr.mxu0 %v5697
    %5967 = vmatpush1.msra.mxu0 %v5696
    %5968 = vmatprep.subr.mxu0 %v5699
    %5969 = vmatpush1.msra.mxu0 %v5698
    %5970 = vmatprep.subr.mxu0 %v5701
    %5971 = vmatpush1.msra.mxu0 %v5700
    %5972 = vmatprep.subr.mxu0 %v5703
    %5973 = vmatpush1.msra.mxu0 %v5702
    %5974 = vmatprep.subr.mxu0 %v5705
    %5975 = vmatpush1.msra.mxu0 %v5704
    %5976 = vmatprep.mubr.f32.mxu0 %v5510
    %5977 = vmatmul.mubr.f32.gmra.mrb[0].mxu0 %v5509
    %v5978 = vpop.f32.mrb[0].mxu0
    %v5979 = vadd.f32 %v5908, %v5978
    %v5980 = vpop.f32.mrb[0].mxu0
    %v5981 = vadd.f32 %v5910, %v5980
    %5982 = vdwg.mxu0
    %5983 = vmatprep.subr.mxu0 %v5707
    %5984 = vmatpush1.msra.mxu0 %v5706
    %5985 = vmatprep.subr.mxu0 %v5709
    %5986 = vmatpush1.msra.mxu0 %v5708
    %5987 = vmatprep.subr.mxu0 %v5711
    %5988 = vmatpush1.msra.mxu0 %v5710
    %5989 = vmatprep.subr.mxu0 %v5713
    %5990 = vmatpush1.msra.mxu0 %v5712
    %5991 = vmatprep.subr.mxu0 %v5715
    %5992 = vmatpush1.msra.mxu0 %v5714
    %5993 = vmatprep.subr.mxu0 %v5717
    %5994 = vmatpush1.msra.mxu0 %v5716
    %5995 = vmatprep.subr.mxu0 %v5719
    %5996 = vmatpush1.msra.mxu0 %v5718
    %5997 = vmatprep.subr.mxu0 %v5721
    %5998 = vmatpush1.msra.mxu0 %v5720
    %5999 = vmatprep.subr.mxu0 %v5723
    %6000 = vmatpush1.msra.mxu0 %v5722
    %6001 = vmatprep.subr.mxu0 %v5725
    %6002 = vmatpush1.msra.mxu0 %v5724
    %6003 = vmatprep.subr.mxu0 %v5727
    %6004 = vmatpush1.msra.mxu0 %v5726
    %6005 = vmatprep.subr.mxu0 %v5729
    %6006 = vmatpush1.msra.mxu0 %v5728
    %6007 = vmatprep.subr.mxu0 %v5731
    %6008 = vmatpush1.msra.mxu0 %v5730
    %6009 = vmatprep.subr.mxu0 %v5733
    %6010 = vmatpush1.msra.mxu0 %v5732
    %6011 = vmatprep.subr.mxu0 %v5735
    %6012 = vmatpush1.msra.mxu0 %v5734
    %6013 = vmatprep.subr.mxu0 %v5737
    %6014 = vmatpush1.msra.mxu0 %v5736
    %6015 = vmatprep.subr.mxu0 %v5739
    %6016 = vmatpush1.msra.mxu0 %v5738
    %6017 = vmatprep.subr.mxu0 %v5741
    %6018 = vmatpush1.msra.mxu0 %v5740
    %6019 = vmatprep.subr.mxu0 %v5743
    %6020 = vmatpush1.msra.mxu0 %v5742
    %6021 = vmatprep.subr.mxu0 %v5745
    %6022 = vmatpush1.msra.mxu0 %v5744
    %6023 = vmatprep.subr.mxu0 %v5747
    %6024 = vmatpush1.msra.mxu0 %v5746
    %6025 = vmatprep.subr.mxu0 %v5749
    %6026 = vmatpush1.msra.mxu0 %v5748
    %6027 = vmatprep.subr.mxu0 %v5751
    %6028 = vmatpush1.msra.mxu0 %v5750
    %6029 = vmatprep.subr.mxu0 %v5753
    %6030 = vmatpush1.msra.mxu0 %v5752
    %6031 = vmatprep.subr.mxu0 %v5755
    %6032 = vmatpush1.msra.mxu0 %v5754
    %6033 = vmatprep.subr.mxu0 %v5757
    %6034 = vmatpush1.msra.mxu0 %v5756
    %6035 = vmatprep.subr.mxu0 %v5759
    %6036 = vmatpush1.msra.mxu0 %v5758
    %6037 = vmatprep.subr.mxu0 %v5761
    %6038 = vmatpush1.msra.mxu0 %v5760
    %6039 = vmatprep.subr.mxu0 %v5763
    %6040 = vmatpush1.msra.mxu0 %v5762
    %6041 = vmatprep.subr.mxu0 %v5765
    %6042 = vmatpush1.msra.mxu0 %v5764
    %6043 = vmatprep.subr.mxu0 %v5767
    %6044 = vmatpush1.msra.mxu0 %v5766
    %6045 = vmatprep.subr.mxu0 %v5769
    %6046 = vmatpush1.msra.mxu0 %v5768
    %6047 = vmatprep.mubr.f32.mxu0 %v5512
    %6048 = vmatmul.mubr.f32.gmra.mrb[0].mxu0 %v5511
    %v6049 = vpop.f32.mrb[0].mxu0
    %v6050 = vadd.f32 %v5979, %v6049
    %v6051 = vpop.f32.mrb[0].mxu0
    %v6052 = vadd.f32 %v5981, %v6051
    %6053 = vdwg.mxu0
    %v6054 = vadd.f32 %v5502, %v6050
    %v6055 = vadd.f32 %v5503, %v6052
    %6056 = vst [vmem:[#allocation3] sm:$0xff] %v6054
    %6057 = vst [vmem:[#allocation3 + $0x8] sm:$0xff] %v6055
    %v6058 = vld [vmem:[#allocation3] sm:$0xff]
    %v6059 = vld [vmem:[#allocation3 + $0x8] sm:$0xff]
    %s6060 = scalar_lea.vmem [#allocation2], 256
    %v6061 = vld [vmem:[%s6060] sm:$0xff]
    %v6062 = vld [vmem:[%s6060 + $0x8] sm:$0xff]
    %v6063 = vld [vmem:[%s6060 + $0x10] sm:$0xff]
    %v6064 = vld [vmem:[%s6060 + $0x18] sm:$0xff]
    %v6065 = vld [vmem:[%s6060 + $0x20] sm:$0xff]
    %v6066 = vld [vmem:[%s6060 + $0x28] sm:$0xff]
    %v6067 = vld [vmem:[%s6060 + $0x30] sm:$0xff]
    %v6068 = vld [vmem:[%s6060 + $0x38] sm:$0xff]
    %s6069 = scalar_lea.vmem [#allocation14], 8192
    %v6070 = vld [vmem:[%s6069] sm:$0xff]
    %v6071 = vld [vmem:[%s6069 + $0x8] sm:$0xff]
    %v6072 = vld [vmem:[%s6069 + $0x10] sm:$0xff]
    %v6073 = vld [vmem:[%s6069 + $0x18] sm:$0xff]
    %v6074 = vld [vmem:[%s6069 + $0x20] sm:$0xff]
    %v6075 = vld [vmem:[%s6069 + $0x28] sm:$0xff]
    %v6076 = vld [vmem:[%s6069 + $0x30] sm:$0xff]
    %v6077 = vld [vmem:[%s6069 + $0x38] sm:$0xff]
    %v6078 = vld [vmem:[%s6069 + $0x40] sm:$0xff]
    %v6079 = vld [vmem:[%s6069 + $0x48] sm:$0xff]
    %v6080 = vld [vmem:[%s6069 + $0x50] sm:$0xff]
    %v6081 = vld [vmem:[%s6069 + $0x58] sm:$0xff]
    %v6082 = vld [vmem:[%s6069 + $0x60] sm:$0xff]
    %v6083 = vld [vmem:[%s6069 + $0x68] sm:$0xff]
    %v6084 = vld [vmem:[%s6069 + $0x70] sm:$0xff]
    %v6085 = vld [vmem:[%s6069 + $0x78] sm:$0xff]
    %v6086 = vld [vmem:[%s6069 + $0x80] sm:$0xff]
    %v6087 = vld [vmem:[%s6069 + $0x88] sm:$0xff]
    %v6088 = vld [vmem:[%s6069 + $0x90] sm:$0xff]
    %v6089 = vld [vmem:[%s6069 + $0x98] sm:$0xff]
    %v6090 = vld [vmem:[%s6069 + $0xa0] sm:$0xff]
    %v6091 = vld [vmem:[%s6069 + $0xa8] sm:$0xff]
    %v6092 = vld [vmem:[%s6069 + $0xb0] sm:$0xff]
    %v6093 = vld [vmem:[%s6069 + $0xb8] sm:$0xff]
    %v6094 = vld [vmem:[%s6069 + $0xc0] sm:$0xff]
    %v6095 = vld [vmem:[%s6069 + $0xc8] sm:$0xff]
    %v6096 = vld [vmem:[%s6069 + $0xd0] sm:$0xff]
    %v6097 = vld [vmem:[%s6069 + $0xd8] sm:$0xff]
    %v6098 = vld [vmem:[%s6069 + $0xe0] sm:$0xff]
    %v6099 = vld [vmem:[%s6069 + $0xe8] sm:$0xff]
    %v6100 = vld [vmem:[%s6069 + $0xf0] sm:$0xff]
    %v6101 = vld [vmem:[%s6069 + $0xf8] sm:$0xff]
    %v6102 = vld [vmem:[%s6069 + $0x100] sm:$0xff]
    %v6103 = vld [vmem:[%s6069 + $0x108] sm:$0xff]
    %v6104 = vld [vmem:[%s6069 + $0x110] sm:$0xff]
    %v6105 = vld [vmem:[%s6069 + $0x118] sm:$0xff]
    %v6106 = vld [vmem:[%s6069 + $0x120] sm:$0xff]
    %v6107 = vld [vmem:[%s6069 + $0x128] sm:$0xff]
    %v6108 = vld [vmem:[%s6069 + $0x130] sm:$0xff]
    %v6109 = vld [vmem:[%s6069 + $0x138] sm:$0xff]
    %v6110 = vld [vmem:[%s6069 + $0x140] sm:$0xff]
    %v6111 = vld [vmem:[%s6069 + $0x148] sm:$0xff]
    %v6112 = vld [vmem:[%s6069 + $0x150] sm:$0xff]
    %v6113 = vld [vmem:[%s6069 + $0x158] sm:$0xff]
    %v6114 = vld [vmem:[%s6069 + $0x160] sm:$0xff]
    %v6115 = vld [vmem:[%s6069 + $0x168] sm:$0xff]
    %v6116 = vld [vmem:[%s6069 + $0x170] sm:$0xff]
    %v6117 = vld [vmem:[%s6069 + $0x178] sm:$0xff]
    %v6118 = vld [vmem:[%s6069 + $0x180] sm:$0xff]
    %v6119 = vld [vmem:[%s6069 + $0x188] sm:$0xff]
    %v6120 = vld [vmem:[%s6069 + $0x190] sm:$0xff]
    %v6121 = vld [vmem:[%s6069 + $0x198] sm:$0xff]
    %v6122 = vld [vmem:[%s6069 + $0x1a0] sm:$0xff]
    %v6123 = vld [vmem:[%s6069 + $0x1a8] sm:$0xff]
    %v6124 = vld [vmem:[%s6069 + $0x1b0] sm:$0xff]
    %v6125 = vld [vmem:[%s6069 + $0x1b8] sm:$0xff]
    %v6126 = vld [vmem:[%s6069 + $0x1c0] sm:$0xff]
    %v6127 = vld [vmem:[%s6069 + $0x1c8] sm:$0xff]
    %v6128 = vld [vmem:[%s6069 + $0x1d0] sm:$0xff]
    %v6129 = vld [vmem:[%s6069 + $0x1d8] sm:$0xff]
    %v6130 = vld [vmem:[%s6069 + $0x1e0] sm:$0xff]
    %v6131 = vld [vmem:[%s6069 + $0x1e8] sm:$0xff]
    %v6132 = vld [vmem:[%s6069 + $0x1f0] sm:$0xff]
    %v6133 = vld [vmem:[%s6069 + $0x1f8] sm:$0xff]
    %v6134 = vld [vmem:[%s6069 + $0x200] sm:$0xff]
    %v6135 = vld [vmem:[%s6069 + $0x208] sm:$0xff]
    %v6136 = vld [vmem:[%s6069 + $0x210] sm:$0xff]
    %v6137 = vld [vmem:[%s6069 + $0x218] sm:$0xff]
    %v6138 = vld [vmem:[%s6069 + $0x220] sm:$0xff]
    %v6139 = vld [vmem:[%s6069 + $0x228] sm:$0xff]
    %v6140 = vld [vmem:[%s6069 + $0x230] sm:$0xff]
    %v6141 = vld [vmem:[%s6069 + $0x238] sm:$0xff]
    %v6142 = vld [vmem:[%s6069 + $0x240] sm:$0xff]
    %v6143 = vld [vmem:[%s6069 + $0x248] sm:$0xff]
    %v6144 = vld [vmem:[%s6069 + $0x250] sm:$0xff]
    %v6145 = vld [vmem:[%s6069 + $0x258] sm:$0xff]
    %v6146 = vld [vmem:[%s6069 + $0x260] sm:$0xff]
    %v6147 = vld [vmem:[%s6069 + $0x268] sm:$0xff]
    %v6148 = vld [vmem:[%s6069 + $0x270] sm:$0xff]
    %v6149 = vld [vmem:[%s6069 + $0x278] sm:$0xff]
    %v6150 = vld [vmem:[%s6069 + $0x280] sm:$0xff]
    %v6151 = vld [vmem:[%s6069 + $0x288] sm:$0xff]
    %v6152 = vld [vmem:[%s6069 + $0x290] sm:$0xff]
    %v6153 = vld [vmem:[%s6069 + $0x298] sm:$0xff]
    %v6154 = vld [vmem:[%s6069 + $0x2a0] sm:$0xff]
    %v6155 = vld [vmem:[%s6069 + $0x2a8] sm:$0xff]
    %v6156 = vld [vmem:[%s6069 + $0x2b0] sm:$0xff]
    %v6157 = vld [vmem:[%s6069 + $0x2b8] sm:$0xff]
    %v6158 = vld [vmem:[%s6069 + $0x2c0] sm:$0xff]
    %v6159 = vld [vmem:[%s6069 + $0x2c8] sm:$0xff]
    %v6160 = vld [vmem:[%s6069 + $0x2d0] sm:$0xff]
    %v6161 = vld [vmem:[%s6069 + $0x2d8] sm:$0xff]
    %v6162 = vld [vmem:[%s6069 + $0x2e0] sm:$0xff]
    %v6163 = vld [vmem:[%s6069 + $0x2e8] sm:$0xff]
    %v6164 = vld [vmem:[%s6069 + $0x2f0] sm:$0xff]
    %v6165 = vld [vmem:[%s6069 + $0x2f8] sm:$0xff]
    %v6166 = vld [vmem:[%s6069 + $0x300] sm:$0xff]
    %v6167 = vld [vmem:[%s6069 + $0x308] sm:$0xff]
    %v6168 = vld [vmem:[%s6069 + $0x310] sm:$0xff]
    %v6169 = vld [vmem:[%s6069 + $0x318] sm:$0xff]
    %v6170 = vld [vmem:[%s6069 + $0x320] sm:$0xff]
    %v6171 = vld [vmem:[%s6069 + $0x328] sm:$0xff]
    %v6172 = vld [vmem:[%s6069 + $0x330] sm:$0xff]
    %v6173 = vld [vmem:[%s6069 + $0x338] sm:$0xff]
    %v6174 = vld [vmem:[%s6069 + $0x340] sm:$0xff]
    %v6175 = vld [vmem:[%s6069 + $0x348] sm:$0xff]
    %v6176 = vld [vmem:[%s6069 + $0x350] sm:$0xff]
    %v6177 = vld [vmem:[%s6069 + $0x358] sm:$0xff]
    %v6178 = vld [vmem:[%s6069 + $0x360] sm:$0xff]
    %v6179 = vld [vmem:[%s6069 + $0x368] sm:$0xff]
    %v6180 = vld [vmem:[%s6069 + $0x370] sm:$0xff]
    %v6181 = vld [vmem:[%s6069 + $0x378] sm:$0xff]
    %v6182 = vld [vmem:[%s6069 + $0x380] sm:$0xff]
    %v6183 = vld [vmem:[%s6069 + $0x388] sm:$0xff]
    %v6184 = vld [vmem:[%s6069 + $0x390] sm:$0xff]
    %v6185 = vld [vmem:[%s6069 + $0x398] sm:$0xff]
    %v6186 = vld [vmem:[%s6069 + $0x3a0] sm:$0xff]
    %v6187 = vld [vmem:[%s6069 + $0x3a8] sm:$0xff]
    %v6188 = vld [vmem:[%s6069 + $0x3b0] sm:$0xff]
    %v6189 = vld [vmem:[%s6069 + $0x3b8] sm:$0xff]
    %v6190 = vld [vmem:[%s6069 + $0x3c0] sm:$0xff]
    %v6191 = vld [vmem:[%s6069 + $0x3c8] sm:$0xff]
    %v6192 = vld [vmem:[%s6069 + $0x3d0] sm:$0xff]
    %v6193 = vld [vmem:[%s6069 + $0x3d8] sm:$0xff]
    %v6194 = vld [vmem:[%s6069 + $0x3e0] sm:$0xff]
    %v6195 = vld [vmem:[%s6069 + $0x3e8] sm:$0xff]
    %v6196 = vld [vmem:[%s6069 + $0x3f0] sm:$0xff]
    %v6197 = vld [vmem:[%s6069 + $0x3f8] sm:$0xff]
    %v6198 = vld [vmem:[%s6069 + $0x400] sm:$0xff]
    %v6199 = vld [vmem:[%s6069 + $0x408] sm:$0xff]
    %v6200 = vld [vmem:[%s6069 + $0x410] sm:$0xff]
    %v6201 = vld [vmem:[%s6069 + $0x418] sm:$0xff]
    %v6202 = vld [vmem:[%s6069 + $0x420] sm:$0xff]
    %v6203 = vld [vmem:[%s6069 + $0x428] sm:$0xff]
    %v6204 = vld [vmem:[%s6069 + $0x430] sm:$0xff]
    %v6205 = vld [vmem:[%s6069 + $0x438] sm:$0xff]
    %v6206 = vld [vmem:[%s6069 + $0x440] sm:$0xff]
    %v6207 = vld [vmem:[%s6069 + $0x448] sm:$0xff]
    %v6208 = vld [vmem:[%s6069 + $0x450] sm:$0xff]
    %v6209 = vld [vmem:[%s6069 + $0x458] sm:$0xff]
    %v6210 = vld [vmem:[%s6069 + $0x460] sm:$0xff]
    %v6211 = vld [vmem:[%s6069 + $0x468] sm:$0xff]
    %v6212 = vld [vmem:[%s6069 + $0x470] sm:$0xff]
    %v6213 = vld [vmem:[%s6069 + $0x478] sm:$0xff]
    %v6214 = vld [vmem:[%s6069 + $0x480] sm:$0xff]
    %v6215 = vld [vmem:[%s6069 + $0x488] sm:$0xff]
    %v6216 = vld [vmem:[%s6069 + $0x490] sm:$0xff]
    %v6217 = vld [vmem:[%s6069 + $0x498] sm:$0xff]
    %v6218 = vld [vmem:[%s6069 + $0x4a0] sm:$0xff]
    %v6219 = vld [vmem:[%s6069 + $0x4a8] sm:$0xff]
    %v6220 = vld [vmem:[%s6069 + $0x4b0] sm:$0xff]
    %v6221 = vld [vmem:[%s6069 + $0x4b8] sm:$0xff]
    %v6222 = vld [vmem:[%s6069 + $0x4c0] sm:$0xff]
    %v6223 = vld [vmem:[%s6069 + $0x4c8] sm:$0xff]
    %v6224 = vld [vmem:[%s6069 + $0x4d0] sm:$0xff]
    %v6225 = vld [vmem:[%s6069 + $0x4d8] sm:$0xff]
    %v6226 = vld [vmem:[%s6069 + $0x4e0] sm:$0xff]
    %v6227 = vld [vmem:[%s6069 + $0x4e8] sm:$0xff]
    %v6228 = vld [vmem:[%s6069 + $0x4f0] sm:$0xff]
    %v6229 = vld [vmem:[%s6069 + $0x4f8] sm:$0xff]
    %v6230 = vld [vmem:[%s6069 + $0x500] sm:$0xff]
    %v6231 = vld [vmem:[%s6069 + $0x508] sm:$0xff]
    %v6232 = vld [vmem:[%s6069 + $0x510] sm:$0xff]
    %v6233 = vld [vmem:[%s6069 + $0x518] sm:$0xff]
    %v6234 = vld [vmem:[%s6069 + $0x520] sm:$0xff]
    %v6235 = vld [vmem:[%s6069 + $0x528] sm:$0xff]
    %v6236 = vld [vmem:[%s6069 + $0x530] sm:$0xff]
    %v6237 = vld [vmem:[%s6069 + $0x538] sm:$0xff]
    %v6238 = vld [vmem:[%s6069 + $0x540] sm:$0xff]
    %v6239 = vld [vmem:[%s6069 + $0x548] sm:$0xff]
    %v6240 = vld [vmem:[%s6069 + $0x550] sm:$0xff]
    %v6241 = vld [vmem:[%s6069 + $0x558] sm:$0xff]
    %v6242 = vld [vmem:[%s6069 + $0x560] sm:$0xff]
    %v6243 = vld [vmem:[%s6069 + $0x568] sm:$0xff]
    %v6244 = vld [vmem:[%s6069 + $0x570] sm:$0xff]
    %v6245 = vld [vmem:[%s6069 + $0x578] sm:$0xff]
    %v6246 = vld [vmem:[%s6069 + $0x580] sm:$0xff]
    %v6247 = vld [vmem:[%s6069 + $0x588] sm:$0xff]
    %v6248 = vld [vmem:[%s6069 + $0x590] sm:$0xff]
    %v6249 = vld [vmem:[%s6069 + $0x598] sm:$0xff]
    %v6250 = vld [vmem:[%s6069 + $0x5a0] sm:$0xff]
    %v6251 = vld [vmem:[%s6069 + $0x5a8] sm:$0xff]
    %v6252 = vld [vmem:[%s6069 + $0x5b0] sm:$0xff]
    %v6253 = vld [vmem:[%s6069 + $0x5b8] sm:$0xff]
    %v6254 = vld [vmem:[%s6069 + $0x5c0] sm:$0xff]
    %v6255 = vld [vmem:[%s6069 + $0x5c8] sm:$0xff]
    %v6256 = vld [vmem:[%s6069 + $0x5d0] sm:$0xff]
    %v6257 = vld [vmem:[%s6069 + $0x5d8] sm:$0xff]
    %v6258 = vld [vmem:[%s6069 + $0x5e0] sm:$0xff]
    %v6259 = vld [vmem:[%s6069 + $0x5e8] sm:$0xff]
    %v6260 = vld [vmem:[%s6069 + $0x5f0] sm:$0xff]
    %v6261 = vld [vmem:[%s6069 + $0x5f8] sm:$0xff]
    %v6262 = vld [vmem:[%s6069 + $0x600] sm:$0xff]
    %v6263 = vld [vmem:[%s6069 + $0x608] sm:$0xff]
    %v6264 = vld [vmem:[%s6069 + $0x610] sm:$0xff]
    %v6265 = vld [vmem:[%s6069 + $0x618] sm:$0xff]
    %v6266 = vld [vmem:[%s6069 + $0x620] sm:$0xff]
    %v6267 = vld [vmem:[%s6069 + $0x628] sm:$0xff]
    %v6268 = vld [vmem:[%s6069 + $0x630] sm:$0xff]
    %v6269 = vld [vmem:[%s6069 + $0x638] sm:$0xff]
    %v6270 = vld [vmem:[%s6069 + $0x640] sm:$0xff]
    %v6271 = vld [vmem:[%s6069 + $0x648] sm:$0xff]
    %v6272 = vld [vmem:[%s6069 + $0x650] sm:$0xff]
    %v6273 = vld [vmem:[%s6069 + $0x658] sm:$0xff]
    %v6274 = vld [vmem:[%s6069 + $0x660] sm:$0xff]
    %v6275 = vld [vmem:[%s6069 + $0x668] sm:$0xff]
    %v6276 = vld [vmem:[%s6069 + $0x670] sm:$0xff]
    %v6277 = vld [vmem:[%s6069 + $0x678] sm:$0xff]
    %v6278 = vld [vmem:[%s6069 + $0x680] sm:$0xff]
    %v6279 = vld [vmem:[%s6069 + $0x688] sm:$0xff]
    %v6280 = vld [vmem:[%s6069 + $0x690] sm:$0xff]
    %v6281 = vld [vmem:[%s6069 + $0x698] sm:$0xff]
    %v6282 = vld [vmem:[%s6069 + $0x6a0] sm:$0xff]
    %v6283 = vld [vmem:[%s6069 + $0x6a8] sm:$0xff]
    %v6284 = vld [vmem:[%s6069 + $0x6b0] sm:$0xff]
    %v6285 = vld [vmem:[%s6069 + $0x6b8] sm:$0xff]
    %v6286 = vld [vmem:[%s6069 + $0x6c0] sm:$0xff]
    %v6287 = vld [vmem:[%s6069 + $0x6c8] sm:$0xff]
    %v6288 = vld [vmem:[%s6069 + $0x6d0] sm:$0xff]
    %v6289 = vld [vmem:[%s6069 + $0x6d8] sm:$0xff]
    %v6290 = vld [vmem:[%s6069 + $0x6e0] sm:$0xff]
    %v6291 = vld [vmem:[%s6069 + $0x6e8] sm:$0xff]
    %v6292 = vld [vmem:[%s6069 + $0x6f0] sm:$0xff]
    %v6293 = vld [vmem:[%s6069 + $0x6f8] sm:$0xff]
    %v6294 = vld [vmem:[%s6069 + $0x700] sm:$0xff]
    %v6295 = vld [vmem:[%s6069 + $0x708] sm:$0xff]
    %v6296 = vld [vmem:[%s6069 + $0x710] sm:$0xff]
    %v6297 = vld [vmem:[%s6069 + $0x718] sm:$0xff]
    %v6298 = vld [vmem:[%s6069 + $0x720] sm:$0xff]
    %v6299 = vld [vmem:[%s6069 + $0x728] sm:$0xff]
    %v6300 = vld [vmem:[%s6069 + $0x730] sm:$0xff]
    %v6301 = vld [vmem:[%s6069 + $0x738] sm:$0xff]
    %v6302 = vld [vmem:[%s6069 + $0x740] sm:$0xff]
    %v6303 = vld [vmem:[%s6069 + $0x748] sm:$0xff]
    %v6304 = vld [vmem:[%s6069 + $0x750] sm:$0xff]
    %v6305 = vld [vmem:[%s6069 + $0x758] sm:$0xff]
    %v6306 = vld [vmem:[%s6069 + $0x760] sm:$0xff]
    %v6307 = vld [vmem:[%s6069 + $0x768] sm:$0xff]
    %v6308 = vld [vmem:[%s6069 + $0x770] sm:$0xff]
    %v6309 = vld [vmem:[%s6069 + $0x778] sm:$0xff]
    %v6310 = vld [vmem:[%s6069 + $0x780] sm:$0xff]
    %v6311 = vld [vmem:[%s6069 + $0x788] sm:$0xff]
    %v6312 = vld [vmem:[%s6069 + $0x790] sm:$0xff]
    %v6313 = vld [vmem:[%s6069 + $0x798] sm:$0xff]
    %v6314 = vld [vmem:[%s6069 + $0x7a0] sm:$0xff]
    %v6315 = vld [vmem:[%s6069 + $0x7a8] sm:$0xff]
    %v6316 = vld [vmem:[%s6069 + $0x7b0] sm:$0xff]
    %v6317 = vld [vmem:[%s6069 + $0x7b8] sm:$0xff]
    %v6318 = vld [vmem:[%s6069 + $0x7c0] sm:$0xff]
    %v6319 = vld [vmem:[%s6069 + $0x7c8] sm:$0xff]
    %v6320 = vld [vmem:[%s6069 + $0x7d0] sm:$0xff]
    %v6321 = vld [vmem:[%s6069 + $0x7d8] sm:$0xff]
    %v6322 = vld [vmem:[%s6069 + $0x7e0] sm:$0xff]
    %v6323 = vld [vmem:[%s6069 + $0x7e8] sm:$0xff]
    %v6324 = vld [vmem:[%s6069 + $0x7f0] sm:$0xff]
    %v6325 = vld [vmem:[%s6069 + $0x7f8] sm:$0xff]
    %6326 = vmatprep.subr.mxu0 %v6071
    %6327 = vmatpush1.msra.mxu0 %v6070
    %6328 = vmatprep.subr.mxu0 %v6073
    %6329 = vmatpush1.msra.mxu0 %v6072
    %6330 = vmatprep.subr.mxu0 %v6075
    %6331 = vmatpush1.msra.mxu0 %v6074
    %6332 = vmatprep.subr.mxu0 %v6077
    %6333 = vmatpush1.msra.mxu0 %v6076
    %6334 = vmatprep.subr.mxu0 %v6079
    %6335 = vmatpush1.msra.mxu0 %v6078
    %6336 = vmatprep.subr.mxu0 %v6081
    %6337 = vmatpush1.msra.mxu0 %v6080
    %6338 = vmatprep.subr.mxu0 %v6083
    %6339 = vmatpush1.msra.mxu0 %v6082
    %6340 = vmatprep.subr.mxu0 %v6085
    %6341 = vmatpush1.msra.mxu0 %v6084
    %6342 = vmatprep.subr.mxu0 %v6087
    %6343 = vmatpush1.msra.mxu0 %v6086
    %6344 = vmatprep.subr.mxu0 %v6089
    %6345 = vmatpush1.msra.mxu0 %v6088
    %6346 = vmatprep.subr.mxu0 %v6091
    %6347 = vmatpush1.msra.mxu0 %v6090
    %6348 = vmatprep.subr.mxu0 %v6093
    %6349 = vmatpush1.msra.mxu0 %v6092
    %6350 = vmatprep.subr.mxu0 %v6095
    %6351 = vmatpush1.msra.mxu0 %v6094
    %6352 = vmatprep.subr.mxu0 %v6097
    %6353 = vmatpush1.msra.mxu0 %v6096
    %6354 = vmatprep.subr.mxu0 %v6099
    %6355 = vmatpush1.msra.mxu0 %v6098
    %6356 = vmatprep.subr.mxu0 %v6101
    %6357 = vmatpush1.msra.mxu0 %v6100
    %6358 = vmatprep.subr.mxu0 %v6103
    %6359 = vmatpush1.msra.mxu0 %v6102
    %6360 = vmatprep.subr.mxu0 %v6105
    %6361 = vmatpush1.msra.mxu0 %v6104
    %6362 = vmatprep.subr.mxu0 %v6107
    %6363 = vmatpush1.msra.mxu0 %v6106
    %6364 = vmatprep.subr.mxu0 %v6109
    %6365 = vmatpush1.msra.mxu0 %v6108
    %6366 = vmatprep.subr.mxu0 %v6111
    %6367 = vmatpush1.msra.mxu0 %v6110
    %6368 = vmatprep.subr.mxu0 %v6113
    %6369 = vmatpush1.msra.mxu0 %v6112
    %6370 = vmatprep.subr.mxu0 %v6115
    %6371 = vmatpush1.msra.mxu0 %v6114
    %6372 = vmatprep.subr.mxu0 %v6117
    %6373 = vmatpush1.msra.mxu0 %v6116
    %6374 = vmatprep.subr.mxu0 %v6119
    %6375 = vmatpush1.msra.mxu0 %v6118
    %6376 = vmatprep.subr.mxu0 %v6121
    %6377 = vmatpush1.msra.mxu0 %v6120
    %6378 = vmatprep.subr.mxu0 %v6123
    %6379 = vmatpush1.msra.mxu0 %v6122
    %6380 = vmatprep.subr.mxu0 %v6125
    %6381 = vmatpush1.msra.mxu0 %v6124
    %6382 = vmatprep.subr.mxu0 %v6127
    %6383 = vmatpush1.msra.mxu0 %v6126
    %6384 = vmatprep.subr.mxu0 %v6129
    %6385 = vmatpush1.msra.mxu0 %v6128
    %6386 = vmatprep.subr.mxu0 %v6131
    %6387 = vmatpush1.msra.mxu0 %v6130
    %6388 = vmatprep.subr.mxu0 %v6133
    %6389 = vmatpush1.msra.mxu0 %v6132
    %6390 = vmatprep.mubr.f32.mxu0 %v6062
    %6391 = vmatmul.mubr.f32.gmra.mrb[0].mxu0 %v6061
    %v6392 = vpop.f32.mrb[0].mxu0
    %v6393 = vadd.f32 0.0, %v6392
    %v6394 = vpop.f32.mrb[0].mxu0
    %v6395 = vadd.f32 0.0, %v6394
    %6396 = vdwg.mxu0
    %6397 = vmatprep.subr.mxu0 %v6135
    %6398 = vmatpush1.msra.mxu0 %v6134
    %6399 = vmatprep.subr.mxu0 %v6137
    %6400 = vmatpush1.msra.mxu0 %v6136
    %6401 = vmatprep.subr.mxu0 %v6139
    %6402 = vmatpush1.msra.mxu0 %v6138
    %6403 = vmatprep.subr.mxu0 %v6141
    %6404 = vmatpush1.msra.mxu0 %v6140
    %6405 = vmatprep.subr.mxu0 %v6143
    %6406 = vmatpush1.msra.mxu0 %v6142
    %6407 = vmatprep.subr.mxu0 %v6145
    %6408 = vmatpush1.msra.mxu0 %v6144
    %6409 = vmatprep.subr.mxu0 %v6147
    %6410 = vmatpush1.msra.mxu0 %v6146
    %6411 = vmatprep.subr.mxu0 %v6149
    %6412 = vmatpush1.msra.mxu0 %v6148
    %6413 = vmatprep.subr.mxu0 %v6151
    %6414 = vmatpush1.msra.mxu0 %v6150
    %6415 = vmatprep.subr.mxu0 %v6153
    %6416 = vmatpush1.msra.mxu0 %v6152
    %6417 = vmatprep.subr.mxu0 %v6155
    %6418 = vmatpush1.msra.mxu0 %v6154
    %6419 = vmatprep.subr.mxu0 %v6157
    %6420 = vmatpush1.msra.mxu0 %v6156
    %6421 = vmatprep.subr.mxu0 %v6159
    %6422 = vmatpush1.msra.mxu0 %v6158
    %6423 = vmatprep.subr.mxu0 %v6161
    %6424 = vmatpush1.msra.mxu0 %v6160
    %6425 = vmatprep.subr.mxu0 %v6163
    %6426 = vmatpush1.msra.mxu0 %v6162
    %6427 = vmatprep.subr.mxu0 %v6165
    %6428 = vmatpush1.msra.mxu0 %v6164
    %6429 = vmatprep.subr.mxu0 %v6167
    %6430 = vmatpush1.msra.mxu0 %v6166
    %6431 = vmatprep.subr.mxu0 %v6169
    %6432 = vmatpush1.msra.mxu0 %v6168
    %6433 = vmatprep.subr.mxu0 %v6171
    %6434 = vmatpush1.msra.mxu0 %v6170
    %6435 = vmatprep.subr.mxu0 %v6173
    %6436 = vmatpush1.msra.mxu0 %v6172
    %6437 = vmatprep.subr.mxu0 %v6175
    %6438 = vmatpush1.msra.mxu0 %v6174
    %6439 = vmatprep.subr.mxu0 %v6177
    %6440 = vmatpush1.msra.mxu0 %v6176
    %6441 = vmatprep.subr.mxu0 %v6179
    %6442 = vmatpush1.msra.mxu0 %v6178
    %6443 = vmatprep.subr.mxu0 %v6181
    %6444 = vmatpush1.msra.mxu0 %v6180
    %6445 = vmatprep.subr.mxu0 %v6183
    %6446 = vmatpush1.msra.mxu0 %v6182
    %6447 = vmatprep.subr.mxu0 %v6185
    %6448 = vmatpush1.msra.mxu0 %v6184
    %6449 = vmatprep.subr.mxu0 %v6187
    %6450 = vmatpush1.msra.mxu0 %v6186
    %6451 = vmatprep.subr.mxu0 %v6189
    %6452 = vmatpush1.msra.mxu0 %v6188
    %6453 = vmatprep.subr.mxu0 %v6191
    %6454 = vmatpush1.msra.mxu0 %v6190
    %6455 = vmatprep.subr.mxu0 %v6193
    %6456 = vmatpush1.msra.mxu0 %v6192
    %6457 = vmatprep.subr.mxu0 %v6195
    %6458 = vmatpush1.msra.mxu0 %v6194
    %6459 = vmatprep.subr.mxu0 %v6197
    %6460 = vmatpush1.msra.mxu0 %v6196
    %6461 = vmatprep.mubr.f32.mxu0 %v6064
    %6462 = vmatmul.mubr.f32.gmra.mrb[0].mxu0 %v6063
    %v6463 = vpop.f32.mrb[0].mxu0
    %v6464 = vadd.f32 %v6393, %v6463
    %v6465 = vpop.f32.mrb[0].mxu0
    %v6466 = vadd.f32 %v6395, %v6465
    %6467 = vdwg.mxu0
    %6468 = vmatprep.subr.mxu0 %v6199
    %6469 = vmatpush1.msra.mxu0 %v6198
    %6470 = vmatprep.subr.mxu0 %v6201
    %6471 = vmatpush1.msra.mxu0 %v6200
    %6472 = vmatprep.subr.mxu0 %v6203
    %6473 = vmatpush1.msra.mxu0 %v6202
    %6474 = vmatprep.subr.mxu0 %v6205
    %6475 = vmatpush1.msra.mxu0 %v6204
    %6476 = vmatprep.subr.mxu0 %v6207
    %6477 = vmatpush1.msra.mxu0 %v6206
    %6478 = vmatprep.subr.mxu0 %v6209
    %6479 = vmatpush1.msra.mxu0 %v6208
    %6480 = vmatprep.subr.mxu0 %v6211
    %6481 = vmatpush1.msra.mxu0 %v6210
    %6482 = vmatprep.subr.mxu0 %v6213
    %6483 = vmatpush1.msra.mxu0 %v6212
    %6484 = vmatprep.subr.mxu0 %v6215
    %6485 = vmatpush1.msra.mxu0 %v6214
    %6486 = vmatprep.subr.mxu0 %v6217
    %6487 = vmatpush1.msra.mxu0 %v6216
    %6488 = vmatprep.subr.mxu0 %v6219
    %6489 = vmatpush1.msra.mxu0 %v6218
    %6490 = vmatprep.subr.mxu0 %v6221
    %6491 = vmatpush1.msra.mxu0 %v6220
    %6492 = vmatprep.subr.mxu0 %v6223
    %6493 = vmatpush1.msra.mxu0 %v6222
    %6494 = vmatprep.subr.mxu0 %v6225
    %6495 = vmatpush1.msra.mxu0 %v6224
    %6496 = vmatprep.subr.mxu0 %v6227
    %6497 = vmatpush1.msra.mxu0 %v6226
    %6498 = vmatprep.subr.mxu0 %v6229
    %6499 = vmatpush1.msra.mxu0 %v6228
    %6500 = vmatprep.subr.mxu0 %v6231
    %6501 = vmatpush1.msra.mxu0 %v6230
    %6502 = vmatprep.subr.mxu0 %v6233
    %6503 = vmatpush1.msra.mxu0 %v6232
    %6504 = vmatprep.subr.mxu0 %v6235
    %6505 = vmatpush1.msra.mxu0 %v6234
    %6506 = vmatprep.subr.mxu0 %v6237
    %6507 = vmatpush1.msra.mxu0 %v6236
    %6508 = vmatprep.subr.mxu0 %v6239
    %6509 = vmatpush1.msra.mxu0 %v6238
    %6510 = vmatprep.subr.mxu0 %v6241
    %6511 = vmatpush1.msra.mxu0 %v6240
    %6512 = vmatprep.subr.mxu0 %v6243
    %6513 = vmatpush1.msra.mxu0 %v6242
    %6514 = vmatprep.subr.mxu0 %v6245
    %6515 = vmatpush1.msra.mxu0 %v6244
    %6516 = vmatprep.subr.mxu0 %v6247
    %6517 = vmatpush1.msra.mxu0 %v6246
    %6518 = vmatprep.subr.mxu0 %v6249
    %6519 = vmatpush1.msra.mxu0 %v6248
    %6520 = vmatprep.subr.mxu0 %v6251
    %6521 = vmatpush1.msra.mxu0 %v6250
    %6522 = vmatprep.subr.mxu0 %v6253
    %6523 = vmatpush1.msra.mxu0 %v6252
    %6524 = vmatprep.subr.mxu0 %v6255
    %6525 = vmatpush1.msra.mxu0 %v6254
    %6526 = vmatprep.subr.mxu0 %v6257
    %6527 = vmatpush1.msra.mxu0 %v6256
    %6528 = vmatprep.subr.mxu0 %v6259
    %6529 = vmatpush1.msra.mxu0 %v6258
    %6530 = vmatprep.subr.mxu0 %v6261
    %6531 = vmatpush1.msra.mxu0 %v6260
    %6532 = vmatprep.mubr.f32.mxu0 %v6066
    %6533 = vmatmul.mubr.f32.gmra.mrb[0].mxu0 %v6065
    %v6534 = vpop.f32.mrb[0].mxu0
    %v6535 = vadd.f32 %v6464, %v6534
    %v6536 = vpop.f32.mrb[0].mxu0
    %v6537 = vadd.f32 %v6466, %v6536
    %6538 = vdwg.mxu0
    %6539 = vmatprep.subr.mxu0 %v6263
    %6540 = vmatpush1.msra.mxu0 %v6262
    %6541 = vmatprep.subr.mxu0 %v6265
    %6542 = vmatpush1.msra.mxu0 %v6264
    %6543 = vmatprep.subr.mxu0 %v6267
    %6544 = vmatpush1.msra.mxu0 %v6266
    %6545 = vmatprep.subr.mxu0 %v6269
    %6546 = vmatpush1.msra.mxu0 %v6268
    %6547 = vmatprep.subr.mxu0 %v6271
    %6548 = vmatpush1.msra.mxu0 %v6270
    %6549 = vmatprep.subr.mxu0 %v6273
    %6550 = vmatpush1.msra.mxu0 %v6272
    %6551 = vmatprep.subr.mxu0 %v6275
    %6552 = vmatpush1.msra.mxu0 %v6274
    %6553 = vmatprep.subr.mxu0 %v6277
    %6554 = vmatpush1.msra.mxu0 %v6276
    %6555 = vmatprep.subr.mxu0 %v6279
    %6556 = vmatpush1.msra.mxu0 %v6278
    %6557 = vmatprep.subr.mxu0 %v6281
    %6558 = vmatpush1.msra.mxu0 %v6280
    %6559 = vmatprep.subr.mxu0 %v6283
    %6560 = vmatpush1.msra.mxu0 %v6282
    %6561 = vmatprep.subr.mxu0 %v6285
    %6562 = vmatpush1.msra.mxu0 %v6284
    %6563 = vmatprep.subr.mxu0 %v6287
    %6564 = vmatpush1.msra.mxu0 %v6286
    %6565 = vmatprep.subr.mxu0 %v6289
    %6566 = vmatpush1.msra.mxu0 %v6288
    %6567 = vmatprep.subr.mxu0 %v6291
    %6568 = vmatpush1.msra.mxu0 %v6290
    %6569 = vmatprep.subr.mxu0 %v6293
    %6570 = vmatpush1.msra.mxu0 %v6292
    %6571 = vmatprep.subr.mxu0 %v6295
    %6572 = vmatpush1.msra.mxu0 %v6294
    %6573 = vmatprep.subr.mxu0 %v6297
    %6574 = vmatpush1.msra.mxu0 %v6296
    %6575 = vmatprep.subr.mxu0 %v6299
    %6576 = vmatpush1.msra.mxu0 %v6298
    %6577 = vmatprep.subr.mxu0 %v6301
    %6578 = vmatpush1.msra.mxu0 %v6300
    %6579 = vmatprep.subr.mxu0 %v6303
    %6580 = vmatpush1.msra.mxu0 %v6302
    %6581 = vmatprep.subr.mxu0 %v6305
    %6582 = vmatpush1.msra.mxu0 %v6304
    %6583 = vmatprep.subr.mxu0 %v6307
    %6584 = vmatpush1.msra.mxu0 %v6306
    %6585 = vmatprep.subr.mxu0 %v6309
    %6586 = vmatpush1.msra.mxu0 %v6308
    %6587 = vmatprep.subr.mxu0 %v6311
    %6588 = vmatpush1.msra.mxu0 %v6310
    %6589 = vmatprep.subr.mxu0 %v6313
    %6590 = vmatpush1.msra.mxu0 %v6312
    %6591 = vmatprep.subr.mxu0 %v6315
    %6592 = vmatpush1.msra.mxu0 %v6314
    %6593 = vmatprep.subr.mxu0 %v6317
    %6594 = vmatpush1.msra.mxu0 %v6316
    %6595 = vmatprep.subr.mxu0 %v6319
    %6596 = vmatpush1.msra.mxu0 %v6318
    %6597 = vmatprep.subr.mxu0 %v6321
    %6598 = vmatpush1.msra.mxu0 %v6320
    %6599 = vmatprep.subr.mxu0 %v6323
    %6600 = vmatpush1.msra.mxu0 %v6322
    %6601 = vmatprep.subr.mxu0 %v6325
    %6602 = vmatpush1.msra.mxu0 %v6324
    %6603 = vmatprep.mubr.f32.mxu0 %v6068
    %6604 = vmatmul.mubr.f32.gmra.mrb[0].mxu0 %v6067
    %v6605 = vpop.f32.mrb[0].mxu0
    %v6606 = vadd.f32 %v6535, %v6605
    %v6607 = vpop.f32.mrb[0].mxu0
    %v6608 = vadd.f32 %v6537, %v6607
    %6609 = vdwg.mxu0
    %v6610 = vadd.f32 %v6058, %v6606
    %v6611 = vadd.f32 %v6059, %v6608
    %6612 = vst [vmem:[#allocation3] sm:$0xff] %v6610
    %6613 = vst [vmem:[#allocation3 + $0x8] sm:$0xff] %v6611
    %v6614 = vld [vmem:[#allocation3] sm:$0xff]
    %v6615 = vld [vmem:[#allocation3 + $0x8] sm:$0xff]
    %s6616 = scalar_lea.vmem [#allocation2], 320
    %v6617 = vld [vmem:[%s6616] sm:$0xff]
    %v6618 = vld [vmem:[%s6616 + $0x8] sm:$0xff]
    %v6619 = vld [vmem:[%s6616 + $0x10] sm:$0xff]
    %v6620 = vld [vmem:[%s6616 + $0x18] sm:$0xff]
    %v6621 = vld [vmem:[%s6616 + $0x20] sm:$0xff]
    %v6622 = vld [vmem:[%s6616 + $0x28] sm:$0xff]
    %v6623 = vld [vmem:[%s6616 + $0x30] sm:$0xff]
    %v6624 = vld [vmem:[%s6616 + $0x38] sm:$0xff]
    %s6625 = scalar_lea.vmem [#allocation14], 10240
    %v6626 = vld [vmem:[%s6625] sm:$0xff]
    %v6627 = vld [vmem:[%s6625 + $0x8] sm:$0xff]
    %v6628 = vld [vmem:[%s6625 + $0x10] sm:$0xff]
    %v6629 = vld [vmem:[%s6625 + $0x18] sm:$0xff]
    %v6630 = vld [vmem:[%s6625 + $0x20] sm:$0xff]
    %v6631 = vld [vmem:[%s6625 + $0x28] sm:$0xff]
    %v6632 = vld [vmem:[%s6625 + $0x30] sm:$0xff]
    %v6633 = vld [vmem:[%s6625 + $0x38] sm:$0xff]
    %v6634 = vld [vmem:[%s6625 + $0x40] sm:$0xff]
    %v6635 = vld [vmem:[%s6625 + $0x48] sm:$0xff]
    %v6636 = vld [vmem:[%s6625 + $0x50] sm:$0xff]
    %v6637 = vld [vmem:[%s6625 + $0x58] sm:$0xff]
    %v6638 = vld [vmem:[%s6625 + $0x60] sm:$0xff]
    %v6639 = vld [vmem:[%s6625 + $0x68] sm:$0xff]
    %v6640 = vld [vmem:[%s6625 + $0x70] sm:$0xff]
    %v6641 = vld [vmem:[%s6625 + $0x78] sm:$0xff]
    %v6642 = vld [vmem:[%s6625 + $0x80] sm:$0xff]
    %v6643 = vld [vmem:[%s6625 + $0x88] sm:$0xff]
    %v6644 = vld [vmem:[%s6625 + $0x90] sm:$0xff]
    %v6645 = vld [vmem:[%s6625 + $0x98] sm:$0xff]
    %v6646 = vld [vmem:[%s6625 + $0xa0] sm:$0xff]
    %v6647 = vld [vmem:[%s6625 + $0xa8] sm:$0xff]
    %v6648 = vld [vmem:[%s6625 + $0xb0] sm:$0xff]
    %v6649 = vld [vmem:[%s6625 + $0xb8] sm:$0xff]
    %v6650 = vld [vmem:[%s6625 + $0xc0] sm:$0xff]
    %v6651 = vld [vmem:[%s6625 + $0xc8] sm:$0xff]
    %v6652 = vld [vmem:[%s6625 + $0xd0] sm:$0xff]
    %v6653 = vld [vmem:[%s6625 + $0xd8] sm:$0xff]
    %v6654 = vld [vmem:[%s6625 + $0xe0] sm:$0xff]
    %v6655 = vld [vmem:[%s6625 + $0xe8] sm:$0xff]
    %v6656 = vld [vmem:[%s6625 + $0xf0] sm:$0xff]
    %v6657 = vld [vmem:[%s6625 + $0xf8] sm:$0xff]
    %v6658 = vld [vmem:[%s6625 + $0x100] sm:$0xff]
    %v6659 = vld [vmem:[%s6625 + $0x108] sm:$0xff]
    %v6660 = vld [vmem:[%s6625 + $0x110] sm:$0xff]
    %v6661 = vld [vmem:[%s6625 + $0x118] sm:$0xff]
    %v6662 = vld [vmem:[%s6625 + $0x120] sm:$0xff]
    %v6663 = vld [vmem:[%s6625 + $0x128] sm:$0xff]
    %v6664 = vld [vmem:[%s6625 + $0x130] sm:$0xff]
    %v6665 = vld [vmem:[%s6625 + $0x138] sm:$0xff]
    %v6666 = vld [vmem:[%s6625 + $0x140] sm:$0xff]
    %v6667 = vld [vmem:[%s6625 + $0x148] sm:$0xff]
    %v6668 = vld [vmem:[%s6625 + $0x150] sm:$0xff]
    %v6669 = vld [vmem:[%s6625 + $0x158] sm:$0xff]
    %v6670 = vld [vmem:[%s6625 + $0x160] sm:$0xff]
    %v6671 = vld [vmem:[%s6625 + $0x168] sm:$0xff]
    %v6672 = vld [vmem:[%s6625 + $0x170] sm:$0xff]
    %v6673 = vld [vmem:[%s6625 + $0x178] sm:$0xff]
    %v6674 = vld [vmem:[%s6625 + $0x180] sm:$0xff]
    %v6675 = vld [vmem:[%s6625 + $0x188] sm:$0xff]
    %v6676 = vld [vmem:[%s6625 + $0x190] sm:$0xff]
    %v6677 = vld [vmem:[%s6625 + $0x198] sm:$0xff]
    %v6678 = vld [vmem:[%s6625 + $0x1a0] sm:$0xff]
    %v6679 = vld [vmem:[%s6625 + $0x1a8] sm:$0xff]
    %v6680 = vld [vmem:[%s6625 + $0x1b0] sm:$0xff]
    %v6681 = vld [vmem:[%s6625 + $0x1b8] sm:$0xff]
    %v6682 = vld [vmem:[%s6625 + $0x1c0] sm:$0xff]
    %v6683 = vld [vmem:[%s6625 + $0x1c8] sm:$0xff]
    %v6684 = vld [vmem:[%s6625 + $0x1d0] sm:$0xff]
    %v6685 = vld [vmem:[%s6625 + $0x1d8] sm:$0xff]
    %v6686 = vld [vmem:[%s6625 + $0x1e0] sm:$0xff]
    %v6687 = vld [vmem:[%s6625 + $0x1e8] sm:$0xff]
    %v6688 = vld [vmem:[%s6625 + $0x1f0] sm:$0xff]
    %v6689 = vld [vmem:[%s6625 + $0x1f8] sm:$0xff]
    %v6690 = vld [vmem:[%s6625 + $0x200] sm:$0xff]
    %v6691 = vld [vmem:[%s6625 + $0x208] sm:$0xff]
    %v6692 = vld [vmem:[%s6625 + $0x210] sm:$0xff]
    %v6693 = vld [vmem:[%s6625 + $0x218] sm:$0xff]
    %v6694 = vld [vmem:[%s6625 + $0x220] sm:$0xff]
    %v6695 = vld [vmem:[%s6625 + $0x228] sm:$0xff]
    %v6696 = vld [vmem:[%s6625 + $0x230] sm:$0xff]
    %v6697 = vld [vmem:[%s6625 + $0x238] sm:$0xff]
    %v6698 = vld [vmem:[%s6625 + $0x240] sm:$0xff]
    %v6699 = vld [vmem:[%s6625 + $0x248] sm:$0xff]
    %v6700 = vld [vmem:[%s6625 + $0x250] sm:$0xff]
    %v6701 = vld [vmem:[%s6625 + $0x258] sm:$0xff]
    %v6702 = vld [vmem:[%s6625 + $0x260] sm:$0xff]
    %v6703 = vld [vmem:[%s6625 + $0x268] sm:$0xff]
    %v6704 = vld [vmem:[%s6625 + $0x270] sm:$0xff]
    %v6705 = vld [vmem:[%s6625 + $0x278] sm:$0xff]
    %v6706 = vld [vmem:[%s6625 + $0x280] sm:$0xff]
    %v6707 = vld [vmem:[%s6625 + $0x288] sm:$0xff]
    %v6708 = vld [vmem:[%s6625 + $0x290] sm:$0xff]
    %v6709 = vld [vmem:[%s6625 + $0x298] sm:$0xff]
    %v6710 = vld [vmem:[%s6625 + $0x2a0] sm:$0xff]
    %v6711 = vld [vmem:[%s6625 + $0x2a8] sm:$0xff]
    %v6712 = vld [vmem:[%s6625 + $0x2b0] sm:$0xff]
    %v6713 = vld [vmem:[%s6625 + $0x2b8] sm:$0xff]
    %v6714 = vld [vmem:[%s6625 + $0x2c0] sm:$0xff]
    %v6715 = vld [vmem:[%s6625 + $0x2c8] sm:$0xff]
    %v6716 = vld [vmem:[%s6625 + $0x2d0] sm:$0xff]
    %v6717 = vld [vmem:[%s6625 + $0x2d8] sm:$0xff]
    %v6718 = vld [vmem:[%s6625 + $0x2e0] sm:$0xff]
    %v6719 = vld [vmem:[%s6625 + $0x2e8] sm:$0xff]
    %v6720 = vld [vmem:[%s6625 + $0x2f0] sm:$0xff]
    %v6721 = vld [vmem:[%s6625 + $0x2f8] sm:$0xff]
    %v6722 = vld [vmem:[%s6625 + $0x300] sm:$0xff]
    %v6723 = vld [vmem:[%s6625 + $0x308] sm:$0xff]
    %v6724 = vld [vmem:[%s6625 + $0x310] sm:$0xff]
    %v6725 = vld [vmem:[%s6625 + $0x318] sm:$0xff]
    %v6726 = vld [vmem:[%s6625 + $0x320] sm:$0xff]
    %v6727 = vld [vmem:[%s6625 + $0x328] sm:$0xff]
    %v6728 = vld [vmem:[%s6625 + $0x330] sm:$0xff]
    %v6729 = vld [vmem:[%s6625 + $0x338] sm:$0xff]
    %v6730 = vld [vmem:[%s6625 + $0x340] sm:$0xff]
    %v6731 = vld [vmem:[%s6625 + $0x348] sm:$0xff]
    %v6732 = vld [vmem:[%s6625 + $0x350] sm:$0xff]
    %v6733 = vld [vmem:[%s6625 + $0x358] sm:$0xff]
    %v6734 = vld [vmem:[%s6625 + $0x360] sm:$0xff]
    %v6735 = vld [vmem:[%s6625 + $0x368] sm:$0xff]
    %v6736 = vld [vmem:[%s6625 + $0x370] sm:$0xff]
    %v6737 = vld [vmem:[%s6625 + $0x378] sm:$0xff]
    %v6738 = vld [vmem:[%s6625 + $0x380] sm:$0xff]
    %v6739 = vld [vmem:[%s6625 + $0x388] sm:$0xff]
    %v6740 = vld [vmem:[%s6625 + $0x390] sm:$0xff]
    %v6741 = vld [vmem:[%s6625 + $0x398] sm:$0xff]
    %v6742 = vld [vmem:[%s6625 + $0x3a0] sm:$0xff]
    %v6743 = vld [vmem:[%s6625 + $0x3a8] sm:$0xff]
    %v6744 = vld [vmem:[%s6625 + $0x3b0] sm:$0xff]
    %v6745 = vld [vmem:[%s6625 + $0x3b8] sm:$0xff]
    %v6746 = vld [vmem:[%s6625 + $0x3c0] sm:$0xff]
    %v6747 = vld [vmem:[%s6625 + $0x3c8] sm:$0xff]
    %v6748 = vld [vmem:[%s6625 + $0x3d0] sm:$0xff]
    %v6749 = vld [vmem:[%s6625 + $0x3d8] sm:$0xff]
    %v6750 = vld [vmem:[%s6625 + $0x3e0] sm:$0xff]
    %v6751 = vld [vmem:[%s6625 + $0x3e8] sm:$0xff]
    %v6752 = vld [vmem:[%s6625 + $0x3f0] sm:$0xff]
    %v6753 = vld [vmem:[%s6625 + $0x3f8] sm:$0xff]
    %v6754 = vld [vmem:[%s6625 + $0x400] sm:$0xff]
    %v6755 = vld [vmem:[%s6625 + $0x408] sm:$0xff]
    %v6756 = vld [vmem:[%s6625 + $0x410] sm:$0xff]
    %v6757 = vld [vmem:[%s6625 + $0x418] sm:$0xff]
    %v6758 = vld [vmem:[%s6625 + $0x420] sm:$0xff]
    %v6759 = vld [vmem:[%s6625 + $0x428] sm:$0xff]
    %v6760 = vld [vmem:[%s6625 + $0x430] sm:$0xff]
    %v6761 = vld [vmem:[%s6625 + $0x438] sm:$0xff]
    %v6762 = vld [vmem:[%s6625 + $0x440] sm:$0xff]
    %v6763 = vld [vmem:[%s6625 + $0x448] sm:$0xff]
    %v6764 = vld [vmem:[%s6625 + $0x450] sm:$0xff]
    %v6765 = vld [vmem:[%s6625 + $0x458] sm:$0xff]
    %v6766 = vld [vmem:[%s6625 + $0x460] sm:$0xff]
    %v6767 = vld [vmem:[%s6625 + $0x468] sm:$0xff]
    %v6768 = vld [vmem:[%s6625 + $0x470] sm:$0xff]
    %v6769 = vld [vmem:[%s6625 + $0x478] sm:$0xff]
    %v6770 = vld [vmem:[%s6625 + $0x480] sm:$0xff]
    %v6771 = vld [vmem:[%s6625 + $0x488] sm:$0xff]
    %v6772 = vld [vmem:[%s6625 + $0x490] sm:$0xff]
    %v6773 = vld [vmem:[%s6625 + $0x498] sm:$0xff]
    %v6774 = vld [vmem:[%s6625 + $0x4a0] sm:$0xff]
    %v6775 = vld [vmem:[%s6625 + $0x4a8] sm:$0xff]
    %v6776 = vld [vmem:[%s6625 + $0x4b0] sm:$0xff]
    %v6777 = vld [vmem:[%s6625 + $0x4b8] sm:$0xff]
    %v6778 = vld [vmem:[%s6625 + $0x4c0] sm:$0xff]
    %v6779 = vld [vmem:[%s6625 + $0x4c8] sm:$0xff]
    %v6780 = vld [vmem:[%s6625 + $0x4d0] sm:$0xff]
    %v6781 = vld [vmem:[%s6625 + $0x4d8] sm:$0xff]
    %v6782 = vld [vmem:[%s6625 + $0x4e0] sm:$0xff]
    %v6783 = vld [vmem:[%s6625 + $0x4e8] sm:$0xff]
    %v6784 = vld [vmem:[%s6625 + $0x4f0] sm:$0xff]
    %v6785 = vld [vmem:[%s6625 + $0x4f8] sm:$0xff]
    %v6786 = vld [vmem:[%s6625 + $0x500] sm:$0xff]
    %v6787 = vld [vmem:[%s6625 + $0x508] sm:$0xff]
    %v6788 = vld [vmem:[%s6625 + $0x510] sm:$0xff]
    %v6789 = vld [vmem:[%s6625 + $0x518] sm:$0xff]
    %v6790 = vld [vmem:[%s6625 + $0x520] sm:$0xff]
    %v6791 = vld [vmem:[%s6625 + $0x528] sm:$0xff]
    %v6792 = vld [vmem:[%s6625 + $0x530] sm:$0xff]
    %v6793 = vld [vmem:[%s6625 + $0x538] sm:$0xff]
    %v6794 = vld [vmem:[%s6625 + $0x540] sm:$0xff]
    %v6795 = vld [vmem:[%s6625 + $0x548] sm:$0xff]
    %v6796 = vld [vmem:[%s6625 + $0x550] sm:$0xff]
    %v6797 = vld [vmem:[%s6625 + $0x558] sm:$0xff]
    %v6798 = vld [vmem:[%s6625 + $0x560] sm:$0xff]
    %v6799 = vld [vmem:[%s6625 + $0x568] sm:$0xff]
    %v6800 = vld [vmem:[%s6625 + $0x570] sm:$0xff]
    %v6801 = vld [vmem:[%s6625 + $0x578] sm:$0xff]
    %v6802 = vld [vmem:[%s6625 + $0x580] sm:$0xff]
    %v6803 = vld [vmem:[%s6625 + $0x588] sm:$0xff]
    %v6804 = vld [vmem:[%s6625 + $0x590] sm:$0xff]
    %v6805 = vld [vmem:[%s6625 + $0x598] sm:$0xff]
    %v6806 = vld [vmem:[%s6625 + $0x5a0] sm:$0xff]
    %v6807 = vld [vmem:[%s6625 + $0x5a8] sm:$0xff]
    %v6808 = vld [vmem:[%s6625 + $0x5b0] sm:$0xff]
    %v6809 = vld [vmem:[%s6625 + $0x5b8] sm:$0xff]
    %v6810 = vld [vmem:[%s6625 + $0x5c0] sm:$0xff]
    %v6811 = vld [vmem:[%s6625 + $0x5c8] sm:$0xff]
    %v6812 = vld [vmem:[%s6625 + $0x5d0] sm:$0xff]
    %v6813 = vld [vmem:[%s6625 + $0x5d8] sm:$0xff]
    %v6814 = vld [vmem:[%s6625 + $0x5e0] sm:$0xff]
    %v6815 = vld [vmem:[%s6625 + $0x5e8] sm:$0xff]
    %v6816 = vld [vmem:[%s6625 + $0x5f0] sm:$0xff]
    %v6817 = vld [vmem:[%s6625 + $0x5f8] sm:$0xff]
    %v6818 = vld [vmem:[%s6625 + $0x600] sm:$0xff]
    %v6819 = vld [vmem:[%s6625 + $0x608] sm:$0xff]
    %v6820 = vld [vmem:[%s6625 + $0x610] sm:$0xff]
    %v6821 = vld [vmem:[%s6625 + $0x618] sm:$0xff]
    %v6822 = vld [vmem:[%s6625 + $0x620] sm:$0xff]
    %v6823 = vld [vmem:[%s6625 + $0x628] sm:$0xff]
    %v6824 = vld [vmem:[%s6625 + $0x630] sm:$0xff]
    %v6825 = vld [vmem:[%s6625 + $0x638] sm:$0xff]
    %v6826 = vld [vmem:[%s6625 + $0x640] sm:$0xff]
    %v6827 = vld [vmem:[%s6625 + $0x648] sm:$0xff]
    %v6828 = vld [vmem:[%s6625 + $0x650] sm:$0xff]
    %v6829 = vld [vmem:[%s6625 + $0x658] sm:$0xff]
    %v6830 = vld [vmem:[%s6625 + $0x660] sm:$0xff]
    %v6831 = vld [vmem:[%s6625 + $0x668] sm:$0xff]
    %v6832 = vld [vmem:[%s6625 + $0x670] sm:$0xff]
    %v6833 = vld [vmem:[%s6625 + $0x678] sm:$0xff]
    %v6834 = vld [vmem:[%s6625 + $0x680] sm:$0xff]
    %v6835 = vld [vmem:[%s6625 + $0x688] sm:$0xff]
    %v6836 = vld [vmem:[%s6625 + $0x690] sm:$0xff]
    %v6837 = vld [vmem:[%s6625 + $0x698] sm:$0xff]
    %v6838 = vld [vmem:[%s6625 + $0x6a0] sm:$0xff]
    %v6839 = vld [vmem:[%s6625 + $0x6a8] sm:$0xff]
    %v6840 = vld [vmem:[%s6625 + $0x6b0] sm:$0xff]
    %v6841 = vld [vmem:[%s6625 + $0x6b8] sm:$0xff]
    %v6842 = vld [vmem:[%s6625 + $0x6c0] sm:$0xff]
    %v6843 = vld [vmem:[%s6625 + $0x6c8] sm:$0xff]
    %v6844 = vld [vmem:[%s6625 + $0x6d0] sm:$0xff]
    %v6845 = vld [vmem:[%s6625 + $0x6d8] sm:$0xff]
    %v6846 = vld [vmem:[%s6625 + $0x6e0] sm:$0xff]
    %v6847 = vld [vmem:[%s6625 + $0x6e8] sm:$0xff]
    %v6848 = vld [vmem:[%s6625 + $0x6f0] sm:$0xff]
    %v6849 = vld [vmem:[%s6625 + $0x6f8] sm:$0xff]
    %v6850 = vld [vmem:[%s6625 + $0x700] sm:$0xff]
    %v6851 = vld [vmem:[%s6625 + $0x708] sm:$0xff]
    %v6852 = vld [vmem:[%s6625 + $0x710] sm:$0xff]
    %v6853 = vld [vmem:[%s6625 + $0x718] sm:$0xff]
    %v6854 = vld [vmem:[%s6625 + $0x720] sm:$0xff]
    %v6855 = vld [vmem:[%s6625 + $0x728] sm:$0xff]
    %v6856 = vld [vmem:[%s6625 + $0x730] sm:$0xff]
    %v6857 = vld [vmem:[%s6625 + $0x738] sm:$0xff]
    %v6858 = vld [vmem:[%s6625 + $0x740] sm:$0xff]
    %v6859 = vld [vmem:[%s6625 + $0x748] sm:$0xff]
    %v6860 = vld [vmem:[%s6625 + $0x750] sm:$0xff]
    %v6861 = vld [vmem:[%s6625 + $0x758] sm:$0xff]
    %v6862 = vld [vmem:[%s6625 + $0x760] sm:$0xff]
    %v6863 = vld [vmem:[%s6625 + $0x768] sm:$0xff]
    %v6864 = vld [vmem:[%s6625 + $0x770] sm:$0xff]
    %v6865 = vld [vmem:[%s6625 + $0x778] sm:$0xff]
    %v6866 = vld [vmem:[%s6625 + $0x780] sm:$0xff]
    %v6867 = vld [vmem:[%s6625 + $0x788] sm:$0xff]
    %v6868 = vld [vmem:[%s6625 + $0x790] sm:$0xff]
    %v6869 = vld [vmem:[%s6625 + $0x798] sm:$0xff]
    %v6870 = vld [vmem:[%s6625 + $0x7a0] sm:$0xff]
    %v6871 = vld [vmem:[%s6625 + $0x7a8] sm:$0xff]
    %v6872 = vld [vmem:[%s6625 + $0x7b0] sm:$0xff]
    %v6873 = vld [vmem:[%s6625 + $0x7b8] sm:$0xff]
    %v6874 = vld [vmem:[%s6625 + $0x7c0] sm:$0xff]
    %v6875 = vld [vmem:[%s6625 + $0x7c8] sm:$0xff]
    %v6876 = vld [vmem:[%s6625 + $0x7d0] sm:$0xff]
    %v6877 = vld [vmem:[%s6625 + $0x7d8] sm:$0xff]
    %v6878 = vld [vmem:[%s6625 + $0x7e0] sm:$0xff]
    %v6879 = vld [vmem:[%s6625 + $0x7e8] sm:$0xff]
    %v6880 = vld [vmem:[%s6625 + $0x7f0] sm:$0xff]
    %v6881 = vld [vmem:[%s6625 + $0x7f8] sm:$0xff]
    %6882 = vmatprep.subr.mxu0 %v6627
    %6883 = vmatpush1.msra.mxu0 %v6626
    %6884 = vmatprep.subr.mxu0 %v6629
    %6885 = vmatpush1.msra.mxu0 %v6628
    %6886 = vmatprep.subr.mxu0 %v6631
    %6887 = vmatpush1.msra.mxu0 %v6630
    %6888 = vmatprep.subr.mxu0 %v6633
    %6889 = vmatpush1.msra.mxu0 %v6632
    %6890 = vmatprep.subr.mxu0 %v6635
    %6891 = vmatpush1.msra.mxu0 %v6634
    %6892 = vmatprep.subr.mxu0 %v6637
    %6893 = vmatpush1.msra.mxu0 %v6636
    %6894 = vmatprep.subr.mxu0 %v6639
    %6895 = vmatpush1.msra.mxu0 %v6638
    %6896 = vmatprep.subr.mxu0 %v6641
    %6897 = vmatpush1.msra.mxu0 %v6640
    %6898 = vmatprep.subr.mxu0 %v6643
    %6899 = vmatpush1.msra.mxu0 %v6642
    %6900 = vmatprep.subr.mxu0 %v6645
    %6901 = vmatpush1.msra.mxu0 %v6644
    %6902 = vmatprep.subr.mxu0 %v6647
    %6903 = vmatpush1.msra.mxu0 %v6646
    %6904 = vmatprep.subr.mxu0 %v6649
    %6905 = vmatpush1.msra.mxu0 %v6648
    %6906 = vmatprep.subr.mxu0 %v6651
    %6907 = vmatpush1.msra.mxu0 %v6650
    %6908 = vmatprep.subr.mxu0 %v6653
    %6909 = vmatpush1.msra.mxu0 %v6652
    %6910 = vmatprep.subr.mxu0 %v6655
    %6911 = vmatpush1.msra.mxu0 %v6654
    %6912 = vmatprep.subr.mxu0 %v6657
    %6913 = vmatpush1.msra.mxu0 %v6656
    %6914 = vmatprep.subr.mxu0 %v6659
    %6915 = vmatpush1.msra.mxu0 %v6658
    %6916 = vmatprep.subr.mxu0 %v6661
    %6917 = vmatpush1.msra.mxu0 %v6660
    %6918 = vmatprep.subr.mxu0 %v6663
    %6919 = vmatpush1.msra.mxu0 %v6662
    %6920 = vmatprep.subr.mxu0 %v6665
    %6921 = vmatpush1.msra.mxu0 %v6664
    %6922 = vmatprep.subr.mxu0 %v6667
    %6923 = vmatpush1.msra.mxu0 %v6666
    %6924 = vmatprep.subr.mxu0 %v6669
    %6925 = vmatpush1.msra.mxu0 %v6668
    %6926 = vmatprep.subr.mxu0 %v6671
    %6927 = vmatpush1.msra.mxu0 %v6670
    %6928 = vmatprep.subr.mxu0 %v6673
    %6929 = vmatpush1.msra.mxu0 %v6672
    %6930 = vmatprep.subr.mxu0 %v6675
    %6931 = vmatpush1.msra.mxu0 %v6674
    %6932 = vmatprep.subr.mxu0 %v6677
    %6933 = vmatpush1.msra.mxu0 %v6676
    %6934 = vmatprep.subr.mxu0 %v6679
    %6935 = vmatpush1.msra.mxu0 %v6678
    %6936 = vmatprep.subr.mxu0 %v6681
    %6937 = vmatpush1.msra.mxu0 %v6680
    %6938 = vmatprep.subr.mxu0 %v6683
    %6939 = vmatpush1.msra.mxu0 %v6682
    %6940 = vmatprep.subr.mxu0 %v6685
    %6941 = vmatpush1.msra.mxu0 %v6684
    %6942 = vmatprep.subr.mxu0 %v6687
    %6943 = vmatpush1.msra.mxu0 %v6686
    %6944 = vmatprep.subr.mxu0 %v6689
    %6945 = vmatpush1.msra.mxu0 %v6688
    %6946 = vmatprep.mubr.f32.mxu0 %v6618
    %6947 = vmatmul.mubr.f32.gmra.mrb[0].mxu0 %v6617
    %v6948 = vpop.f32.mrb[0].mxu0
    %v6949 = vadd.f32 0.0, %v6948
    %v6950 = vpop.f32.mrb[0].mxu0
    %v6951 = vadd.f32 0.0, %v6950
    %6952 = vdwg.mxu0
    %6953 = vmatprep.subr.mxu0 %v6691
    %6954 = vmatpush1.msra.mxu0 %v6690
    %6955 = vmatprep.subr.mxu0 %v6693
    %6956 = vmatpush1.msra.mxu0 %v6692
    %6957 = vmatprep.subr.mxu0 %v6695
    %6958 = vmatpush1.msra.mxu0 %v6694
    %6959 = vmatprep.subr.mxu0 %v6697
    %6960 = vmatpush1.msra.mxu0 %v6696
    %6961 = vmatprep.subr.mxu0 %v6699
    %6962 = vmatpush1.msra.mxu0 %v6698
    %6963 = vmatprep.subr.mxu0 %v6701
    %6964 = vmatpush1.msra.mxu0 %v6700
    %6965 = vmatprep.subr.mxu0 %v6703
    %6966 = vmatpush1.msra.mxu0 %v6702
    %6967 = vmatprep.subr.mxu0 %v6705
    %6968 = vmatpush1.msra.mxu0 %v6704
    %6969 = vmatprep.subr.mxu0 %v6707
    %6970 = vmatpush1.msra.mxu0 %v6706
    %6971 = vmatprep.subr.mxu0 %v6709
    %6972 = vmatpush1.msra.mxu0 %v6708
    %6973 = vmatprep.subr.mxu0 %v6711
    %6974 = vmatpush1.msra.mxu0 %v6710
    %6975 = vmatprep.subr.mxu0 %v6713
    %6976 = vmatpush1.msra.mxu0 %v6712
    %6977 = vmatprep.subr.mxu0 %v6715
    %6978 = vmatpush1.msra.mxu0 %v6714
    %6979 = vmatprep.subr.mxu0 %v6717
    %6980 = vmatpush1.msra.mxu0 %v6716
    %6981 = vmatprep.subr.mxu0 %v6719
    %6982 = vmatpush1.msra.mxu0 %v6718
    %6983 = vmatprep.subr.mxu0 %v6721
    %6984 = vmatpush1.msra.mxu0 %v6720
    %6985 = vmatprep.subr.mxu0 %v6723
    %6986 = vmatpush1.msra.mxu0 %v6722
    %6987 = vmatprep.subr.mxu0 %v6725
    %6988 = vmatpush1.msra.mxu0 %v6724
    %6989 = vmatprep.subr.mxu0 %v6727
    %6990 = vmatpush1.msra.mxu0 %v6726
    %6991 = vmatprep.subr.mxu0 %v6729
    %6992 = vmatpush1.msra.mxu0 %v6728
    %6993 = vmatprep.subr.mxu0 %v6731
    %6994 = vmatpush1.msra.mxu0 %v6730
    %6995 = vmatprep.subr.mxu0 %v6733
    %6996 = vmatpush1.msra.mxu0 %v6732
    %6997 = vmatprep.subr.mxu0 %v6735
    %6998 = vmatpush1.msra.mxu0 %v6734
    %6999 = vmatprep.subr.mxu0 %v6737
    %7000 = vmatpush1.msra.mxu0 %v6736
    %7001 = vmatprep.subr.mxu0 %v6739
    %7002 = vmatpush1.msra.mxu0 %v6738
    %7003 = vmatprep.subr.mxu0 %v6741
    %7004 = vmatpush1.msra.mxu0 %v6740
    %7005 = vmatprep.subr.mxu0 %v6743
    %7006 = vmatpush1.msra.mxu0 %v6742
    %7007 = vmatprep.subr.mxu0 %v6745
    %7008 = vmatpush1.msra.mxu0 %v6744
    %7009 = vmatprep.subr.mxu0 %v6747
    %7010 = vmatpush1.msra.mxu0 %v6746
    %7011 = vmatprep.subr.mxu0 %v6749
    %7012 = vmatpush1.msra.mxu0 %v6748
    %7013 = vmatprep.subr.mxu0 %v6751
    %7014 = vmatpush1.msra.mxu0 %v6750
    %7015 = vmatprep.subr.mxu0 %v6753
    %7016 = vmatpush1.msra.mxu0 %v6752
    %7017 = vmatprep.mubr.f32.mxu0 %v6620
    %7018 = vmatmul.mubr.f32.gmra.mrb[0].mxu0 %v6619
    %v7019 = vpop.f32.mrb[0].mxu0
    %v7020 = vadd.f32 %v6949, %v7019
    %v7021 = vpop.f32.mrb[0].mxu0
    %v7022 = vadd.f32 %v6951, %v7021
    %7023 = vdwg.mxu0
    %7024 = vmatprep.subr.mxu0 %v6755
    %7025 = vmatpush1.msra.mxu0 %v6754
    %7026 = vmatprep.subr.mxu0 %v6757
    %7027 = vmatpush1.msra.mxu0 %v6756
    %7028 = vmatprep.subr.mxu0 %v6759
    %7029 = vmatpush1.msra.mxu0 %v6758
    %7030 = vmatprep.subr.mxu0 %v6761
    %7031 = vmatpush1.msra.mxu0 %v6760
    %7032 = vmatprep.subr.mxu0 %v6763
    %7033 = vmatpush1.msra.mxu0 %v6762
    %7034 = vmatprep.subr.mxu0 %v6765
    %7035 = vmatpush1.msra.mxu0 %v6764
    %7036 = vmatprep.subr.mxu0 %v6767
    %7037 = vmatpush1.msra.mxu0 %v6766
    %7038 = vmatprep.subr.mxu0 %v6769
    %7039 = vmatpush1.msra.mxu0 %v6768
    %7040 = vmatprep.subr.mxu0 %v6771
    %7041 = vmatpush1.msra.mxu0 %v6770
    %7042 = vmatprep.subr.mxu0 %v6773
    %7043 = vmatpush1.msra.mxu0 %v6772
    %7044 = vmatprep.subr.mxu0 %v6775
    %7045 = vmatpush1.msra.mxu0 %v6774
    %7046 = vmatprep.subr.mxu0 %v6777
    %7047 = vmatpush1.msra.mxu0 %v6776
    %7048 = vmatprep.subr.mxu0 %v6779
    %7049 = vmatpush1.msra.mxu0 %v6778
    %7050 = vmatprep.subr.mxu0 %v6781
    %7051 = vmatpush1.msra.mxu0 %v6780
    %7052 = vmatprep.subr.mxu0 %v6783
    %7053 = vmatpush1.msra.mxu0 %v6782
    %7054 = vmatprep.subr.mxu0 %v6785
    %7055 = vmatpush1.msra.mxu0 %v6784
    %7056 = vmatprep.subr.mxu0 %v6787
    %7057 = vmatpush1.msra.mxu0 %v6786
    %7058 = vmatprep.subr.mxu0 %v6789
    %7059 = vmatpush1.msra.mxu0 %v6788
    %7060 = vmatprep.subr.mxu0 %v6791
    %7061 = vmatpush1.msra.mxu0 %v6790
    %7062 = vmatprep.subr.mxu0 %v6793
    %7063 = vmatpush1.msra.mxu0 %v6792
    %7064 = vmatprep.subr.mxu0 %v6795
    %7065 = vmatpush1.msra.mxu0 %v6794
    %7066 = vmatprep.subr.mxu0 %v6797
    %7067 = vmatpush1.msra.mxu0 %v6796
    %7068 = vmatprep.subr.mxu0 %v6799
    %7069 = vmatpush1.msra.mxu0 %v6798
    %7070 = vmatprep.subr.mxu0 %v6801
    %7071 = vmatpush1.msra.mxu0 %v6800
    %7072 = vmatprep.subr.mxu0 %v6803
    %7073 = vmatpush1.msra.mxu0 %v6802
    %7074 = vmatprep.subr.mxu0 %v6805
    %7075 = vmatpush1.msra.mxu0 %v6804
    %7076 = vmatprep.subr.mxu0 %v6807
    %7077 = vmatpush1.msra.mxu0 %v6806
    %7078 = vmatprep.subr.mxu0 %v6809
    %7079 = vmatpush1.msra.mxu0 %v6808
    %7080 = vmatprep.subr.mxu0 %v6811
    %7081 = vmatpush1.msra.mxu0 %v6810
    %7082 = vmatprep.subr.mxu0 %v6813
    %7083 = vmatpush1.msra.mxu0 %v6812
    %7084 = vmatprep.subr.mxu0 %v6815
    %7085 = vmatpush1.msra.mxu0 %v6814
    %7086 = vmatprep.subr.mxu0 %v6817
    %7087 = vmatpush1.msra.mxu0 %v6816
    %7088 = vmatprep.mubr.f32.mxu0 %v6622
    %7089 = vmatmul.mubr.f32.gmra.mrb[0].mxu0 %v6621
    %v7090 = vpop.f32.mrb[0].mxu0
    %v7091 = vadd.f32 %v7020, %v7090
    %v7092 = vpop.f32.mrb[0].mxu0
    %v7093 = vadd.f32 %v7022, %v7092
    %7094 = vdwg.mxu0
    %7095 = vmatprep.subr.mxu0 %v6819
    %7096 = vmatpush1.msra.mxu0 %v6818
    %7097 = vmatprep.subr.mxu0 %v6821
    %7098 = vmatpush1.msra.mxu0 %v6820
    %7099 = vmatprep.subr.mxu0 %v6823
    %7100 = vmatpush1.msra.mxu0 %v6822
    %7101 = vmatprep.subr.mxu0 %v6825
    %7102 = vmatpush1.msra.mxu0 %v6824
    %7103 = vmatprep.subr.mxu0 %v6827
    %7104 = vmatpush1.msra.mxu0 %v6826
    %7105 = vmatprep.subr.mxu0 %v6829
    %7106 = vmatpush1.msra.mxu0 %v6828
    %7107 = vmatprep.subr.mxu0 %v6831
    %7108 = vmatpush1.msra.mxu0 %v6830
    %7109 = vmatprep.subr.mxu0 %v6833
    %7110 = vmatpush1.msra.mxu0 %v6832
    %7111 = vmatprep.subr.mxu0 %v6835
    %7112 = vmatpush1.msra.mxu0 %v6834
    %7113 = vmatprep.subr.mxu0 %v6837
    %7114 = vmatpush1.msra.mxu0 %v6836
    %7115 = vmatprep.subr.mxu0 %v6839
    %7116 = vmatpush1.msra.mxu0 %v6838
    %7117 = vmatprep.subr.mxu0 %v6841
    %7118 = vmatpush1.msra.mxu0 %v6840
    %7119 = vmatprep.subr.mxu0 %v6843
    %7120 = vmatpush1.msra.mxu0 %v6842
    %7121 = vmatprep.subr.mxu0 %v6845
    %7122 = vmatpush1.msra.mxu0 %v6844
    %7123 = vmatprep.subr.mxu0 %v6847
    %7124 = vmatpush1.msra.mxu0 %v6846
    %7125 = vmatprep.subr.mxu0 %v6849
    %7126 = vmatpush1.msra.mxu0 %v6848
    %7127 = vmatprep.subr.mxu0 %v6851
    %7128 = vmatpush1.msra.mxu0 %v6850
    %7129 = vmatprep.subr.mxu0 %v6853
    %7130 = vmatpush1.msra.mxu0 %v6852
    %7131 = vmatprep.subr.mxu0 %v6855
    %7132 = vmatpush1.msra.mxu0 %v6854
    %7133 = vmatprep.subr.mxu0 %v6857
    %7134 = vmatpush1.msra.mxu0 %v6856
    %7135 = vmatprep.subr.mxu0 %v6859
    %7136 = vmatpush1.msra.mxu0 %v6858
    %7137 = vmatprep.subr.mxu0 %v6861
    %7138 = vmatpush1.msra.mxu0 %v6860
    %7139 = vmatprep.subr.mxu0 %v6863
    %7140 = vmatpush1.msra.mxu0 %v6862
    %7141 = vmatprep.subr.mxu0 %v6865
    %7142 = vmatpush1.msra.mxu0 %v6864
    %7143 = vmatprep.subr.mxu0 %v6867
    %7144 = vmatpush1.msra.mxu0 %v6866
    %7145 = vmatprep.subr.mxu0 %v6869
    %7146 = vmatpush1.msra.mxu0 %v6868
    %7147 = vmatprep.subr.mxu0 %v6871
    %7148 = vmatpush1.msra.mxu0 %v6870
    %7149 = vmatprep.subr.mxu0 %v6873
    %7150 = vmatpush1.msra.mxu0 %v6872
    %7151 = vmatprep.subr.mxu0 %v6875
    %7152 = vmatpush1.msra.mxu0 %v6874
    %7153 = vmatprep.subr.mxu0 %v6877
    %7154 = vmatpush1.msra.mxu0 %v6876
    %7155 = vmatprep.subr.mxu0 %v6879
    %7156 = vmatpush1.msra.mxu0 %v6878
    %7157 = vmatprep.subr.mxu0 %v6881
    %7158 = vmatpush1.msra.mxu0 %v6880
    %7159 = vmatprep.mubr.f32.mxu0 %v6624
    %7160 = vmatmul.mubr.f32.gmra.mrb[0].mxu0 %v6623
    %v7161 = vpop.f32.mrb[0].mxu0
    %v7162 = vadd.f32 %v7091, %v7161
    %v7163 = vpop.f32.mrb[0].mxu0
    %v7164 = vadd.f32 %v7093, %v7163
    %7165 = vdwg.mxu0
    %v7166 = vadd.f32 %v6614, %v7162
    %v7167 = vadd.f32 %v6615, %v7164
    %7168 = vst [vmem:[#allocation3] sm:$0xff] %v7166
    %7169 = vst [vmem:[#allocation3 + $0x8] sm:$0xff] %v7167
    %v7170 = vld [vmem:[#allocation3] sm:$0xff]
    %v7171 = vld [vmem:[#allocation3 + $0x8] sm:$0xff]
    %s7172 = scalar_lea.vmem [#allocation2], 384
    %v7173 = vld [vmem:[%s7172] sm:$0xff]
    %v7174 = vld [vmem:[%s7172 + $0x8] sm:$0xff]
    %v7175 = vld [vmem:[%s7172 + $0x10] sm:$0xff]
    %v7176 = vld [vmem:[%s7172 + $0x18] sm:$0xff]
    %v7177 = vld [vmem:[%s7172 + $0x20] sm:$0xff]
    %v7178 = vld [vmem:[%s7172 + $0x28] sm:$0xff]
    %v7179 = vld [vmem:[%s7172 + $0x30] sm:$0xff]
    %v7180 = vld [vmem:[%s7172 + $0x38] sm:$0xff]
    %s7181 = scalar_lea.vmem [#allocation14], 12288
    %v7182 = vld [vmem:[%s7181] sm:$0xff]
    %v7183 = vld [vmem:[%s7181 + $0x8] sm:$0xff]
    %v7184 = vld [vmem:[%s7181 + $0x10] sm:$0xff]
    %v7185 = vld [vmem:[%s7181 + $0x18] sm:$0xff]
    %v7186 = vld [vmem:[%s7181 + $0x20] sm:$0xff]
    %v7187 = vld [vmem:[%s7181 + $0x28] sm:$0xff]
    %v7188 = vld [vmem:[%s7181 + $0x30] sm:$0xff]
    %v7189 = vld [vmem:[%s7181 + $0x38] sm:$0xff]
    %v7190 = vld [vmem:[%s7181 + $0x40] sm:$0xff]
    %v7191 = vld [vmem:[%s7181 + $0x48] sm:$0xff]
    %v7192 = vld [vmem:[%s7181 + $0x50] sm:$0xff]
    %v7193 = vld [vmem:[%s7181 + $0x58] sm:$0xff]
    %v7194 = vld [vmem:[%s7181 + $0x60] sm:$0xff]
    %v7195 = vld [vmem:[%s7181 + $0x68] sm:$0xff]
    %v7196 = vld [vmem:[%s7181 + $0x70] sm:$0xff]
    %v7197 = vld [vmem:[%s7181 + $0x78] sm:$0xff]
    %v7198 = vld [vmem:[%s7181 + $0x80] sm:$0xff]
    %v7199 = vld [vmem:[%s7181 + $0x88] sm:$0xff]
    %v7200 = vld [vmem:[%s7181 + $0x90] sm:$0xff]
    %v7201 = vld [vmem:[%s7181 + $0x98] sm:$0xff]
    %v7202 = vld [vmem:[%s7181 + $0xa0] sm:$0xff]
    %v7203 = vld [vmem:[%s7181 + $0xa8] sm:$0xff]
    %v7204 = vld [vmem:[%s7181 + $0xb0] sm:$0xff]
    %v7205 = vld [vmem:[%s7181 + $0xb8] sm:$0xff]
    %v7206 = vld [vmem:[%s7181 + $0xc0] sm:$0xff]
    %v7207 = vld [vmem:[%s7181 + $0xc8] sm:$0xff]
    %v7208 = vld [vmem:[%s7181 + $0xd0] sm:$0xff]
    %v7209 = vld [vmem:[%s7181 + $0xd8] sm:$0xff]
    %v7210 = vld [vmem:[%s7181 + $0xe0] sm:$0xff]
    %v7211 = vld [vmem:[%s7181 + $0xe8] sm:$0xff]
    %v7212 = vld [vmem:[%s7181 + $0xf0] sm:$0xff]
    %v7213 = vld [vmem:[%s7181 + $0xf8] sm:$0xff]
    %v7214 = vld [vmem:[%s7181 + $0x100] sm:$0xff]
    %v7215 = vld [vmem:[%s7181 + $0x108] sm:$0xff]
    %v7216 = vld [vmem:[%s7181 + $0x110] sm:$0xff]
    %v7217 = vld [vmem:[%s7181 + $0x118] sm:$0xff]
    %v7218 = vld [vmem:[%s7181 + $0x120] sm:$0xff]
    %v7219 = vld [vmem:[%s7181 + $0x128] sm:$0xff]
    %v7220 = vld [vmem:[%s7181 + $0x130] sm:$0xff]
    %v7221 = vld [vmem:[%s7181 + $0x138] sm:$0xff]
    %v7222 = vld [vmem:[%s7181 + $0x140] sm:$0xff]
    %v7223 = vld [vmem:[%s7181 + $0x148] sm:$0xff]
    %v7224 = vld [vmem:[%s7181 + $0x150] sm:$0xff]
    %v7225 = vld [vmem:[%s7181 + $0x158] sm:$0xff]
    %v7226 = vld [vmem:[%s7181 + $0x160] sm:$0xff]
    %v7227 = vld [vmem:[%s7181 + $0x168] sm:$0xff]
    %v7228 = vld [vmem:[%s7181 + $0x170] sm:$0xff]
    %v7229 = vld [vmem:[%s7181 + $0x178] sm:$0xff]
    %v7230 = vld [vmem:[%s7181 + $0x180] sm:$0xff]
    %v7231 = vld [vmem:[%s7181 + $0x188] sm:$0xff]
    %v7232 = vld [vmem:[%s7181 + $0x190] sm:$0xff]
    %v7233 = vld [vmem:[%s7181 + $0x198] sm:$0xff]
    %v7234 = vld [vmem:[%s7181 + $0x1a0] sm:$0xff]
    %v7235 = vld [vmem:[%s7181 + $0x1a8] sm:$0xff]
    %v7236 = vld [vmem:[%s7181 + $0x1b0] sm:$0xff]
    %v7237 = vld [vmem:[%s7181 + $0x1b8] sm:$0xff]
    %v7238 = vld [vmem:[%s7181 + $0x1c0] sm:$0xff]
    %v7239 = vld [vmem:[%s7181 + $0x1c8] sm:$0xff]
    %v7240 = vld [vmem:[%s7181 + $0x1d0] sm:$0xff]
    %v7241 = vld [vmem:[%s7181 + $0x1d8] sm:$0xff]
    %v7242 = vld [vmem:[%s7181 + $0x1e0] sm:$0xff]
    %v7243 = vld [vmem:[%s7181 + $0x1e8] sm:$0xff]
    %v7244 = vld [vmem:[%s7181 + $0x1f0] sm:$0xff]
    %v7245 = vld [vmem:[%s7181 + $0x1f8] sm:$0xff]
    %v7246 = vld [vmem:[%s7181 + $0x200] sm:$0xff]
    %v7247 = vld [vmem:[%s7181 + $0x208] sm:$0xff]
    %v7248 = vld [vmem:[%s7181 + $0x210] sm:$0xff]
    %v7249 = vld [vmem:[%s7181 + $0x218] sm:$0xff]
    %v7250 = vld [vmem:[%s7181 + $0x220] sm:$0xff]
    %v7251 = vld [vmem:[%s7181 + $0x228] sm:$0xff]
    %v7252 = vld [vmem:[%s7181 + $0x230] sm:$0xff]
    %v7253 = vld [vmem:[%s7181 + $0x238] sm:$0xff]
    %v7254 = vld [vmem:[%s7181 + $0x240] sm:$0xff]
    %v7255 = vld [vmem:[%s7181 + $0x248] sm:$0xff]
    %v7256 = vld [vmem:[%s7181 + $0x250] sm:$0xff]
    %v7257 = vld [vmem:[%s7181 + $0x258] sm:$0xff]
    %v7258 = vld [vmem:[%s7181 + $0x260] sm:$0xff]
    %v7259 = vld [vmem:[%s7181 + $0x268] sm:$0xff]
    %v7260 = vld [vmem:[%s7181 + $0x270] sm:$0xff]
    %v7261 = vld [vmem:[%s7181 + $0x278] sm:$0xff]
    %v7262 = vld [vmem:[%s7181 + $0x280] sm:$0xff]
    %v7263 = vld [vmem:[%s7181 + $0x288] sm:$0xff]
    %v7264 = vld [vmem:[%s7181 + $0x290] sm:$0xff]
    %v7265 = vld [vmem:[%s7181 + $0x298] sm:$0xff]
    %v7266 = vld [vmem:[%s7181 + $0x2a0] sm:$0xff]
    %v7267 = vld [vmem:[%s7181 + $0x2a8] sm:$0xff]
    %v7268 = vld [vmem:[%s7181 + $0x2b0] sm:$0xff]
    %v7269 = vld [vmem:[%s7181 + $0x2b8] sm:$0xff]
    %v7270 = vld [vmem:[%s7181 + $0x2c0] sm:$0xff]
    %v7271 = vld [vmem:[%s7181 + $0x2c8] sm:$0xff]
    %v7272 = vld [vmem:[%s7181 + $0x2d0] sm:$0xff]
    %v7273 = vld [vmem:[%s7181 + $0x2d8] sm:$0xff]
    %v7274 = vld [vmem:[%s7181 + $0x2e0] sm:$0xff]
    %v7275 = vld [vmem:[%s7181 + $0x2e8] sm:$0xff]
    %v7276 = vld [vmem:[%s7181 + $0x2f0] sm:$0xff]
    %v7277 = vld [vmem:[%s7181 + $0x2f8] sm:$0xff]
    %v7278 = vld [vmem:[%s7181 + $0x300] sm:$0xff]
    %v7279 = vld [vmem:[%s7181 + $0x308] sm:$0xff]
    %v7280 = vld [vmem:[%s7181 + $0x310] sm:$0xff]
    %v7281 = vld [vmem:[%s7181 + $0x318] sm:$0xff]
    %v7282 = vld [vmem:[%s7181 + $0x320] sm:$0xff]
    %v7283 = vld [vmem:[%s7181 + $0x328] sm:$0xff]
    %v7284 = vld [vmem:[%s7181 + $0x330] sm:$0xff]
    %v7285 = vld [vmem:[%s7181 + $0x338] sm:$0xff]
    %v7286 = vld [vmem:[%s7181 + $0x340] sm:$0xff]
    %v7287 = vld [vmem:[%s7181 + $0x348] sm:$0xff]
    %v7288 = vld [vmem:[%s7181 + $0x350] sm:$0xff]
    %v7289 = vld [vmem:[%s7181 + $0x358] sm:$0xff]
    %v7290 = vld [vmem:[%s7181 + $0x360] sm:$0xff]
    %v7291 = vld [vmem:[%s7181 + $0x368] sm:$0xff]
    %v7292 = vld [vmem:[%s7181 + $0x370] sm:$0xff]
    %v7293 = vld [vmem:[%s7181 + $0x378] sm:$0xff]
    %v7294 = vld [vmem:[%s7181 + $0x380] sm:$0xff]
    %v7295 = vld [vmem:[%s7181 + $0x388] sm:$0xff]
    %v7296 = vld [vmem:[%s7181 + $0x390] sm:$0xff]
    %v7297 = vld [vmem:[%s7181 + $0x398] sm:$0xff]
    %v7298 = vld [vmem:[%s7181 + $0x3a0] sm:$0xff]
    %v7299 = vld [vmem:[%s7181 + $0x3a8] sm:$0xff]
    %v7300 = vld [vmem:[%s7181 + $0x3b0] sm:$0xff]
    %v7301 = vld [vmem:[%s7181 + $0x3b8] sm:$0xff]
    %v7302 = vld [vmem:[%s7181 + $0x3c0] sm:$0xff]
    %v7303 = vld [vmem:[%s7181 + $0x3c8] sm:$0xff]
    %v7304 = vld [vmem:[%s7181 + $0x3d0] sm:$0xff]
    %v7305 = vld [vmem:[%s7181 + $0x3d8] sm:$0xff]
    %v7306 = vld [vmem:[%s7181 + $0x3e0] sm:$0xff]
    %v7307 = vld [vmem:[%s7181 + $0x3e8] sm:$0xff]
    %v7308 = vld [vmem:[%s7181 + $0x3f0] sm:$0xff]
    %v7309 = vld [vmem:[%s7181 + $0x3f8] sm:$0xff]
    %v7310 = vld [vmem:[%s7181 + $0x400] sm:$0xff]
    %v7311 = vld [vmem:[%s7181 + $0x408] sm:$0xff]
    %v7312 = vld [vmem:[%s7181 + $0x410] sm:$0xff]
    %v7313 = vld [vmem:[%s7181 + $0x418] sm:$0xff]
    %v7314 = vld [vmem:[%s7181 + $0x420] sm:$0xff]
    %v7315 = vld [vmem:[%s7181 + $0x428] sm:$0xff]
    %v7316 = vld [vmem:[%s7181 + $0x430] sm:$0xff]
    %v7317 = vld [vmem:[%s7181 + $0x438] sm:$0xff]
    %v7318 = vld [vmem:[%s7181 + $0x440] sm:$0xff]
    %v7319 = vld [vmem:[%s7181 + $0x448] sm:$0xff]
    %v7320 = vld [vmem:[%s7181 + $0x450] sm:$0xff]
    %v7321 = vld [vmem:[%s7181 + $0x458] sm:$0xff]
    %v7322 = vld [vmem:[%s7181 + $0x460] sm:$0xff]
    %v7323 = vld [vmem:[%s7181 + $0x468] sm:$0xff]
    %v7324 = vld [vmem:[%s7181 + $0x470] sm:$0xff]
    %v7325 = vld [vmem:[%s7181 + $0x478] sm:$0xff]
    %v7326 = vld [vmem:[%s7181 + $0x480] sm:$0xff]
    %v7327 = vld [vmem:[%s7181 + $0x488] sm:$0xff]
    %v7328 = vld [vmem:[%s7181 + $0x490] sm:$0xff]
    %v7329 = vld [vmem:[%s7181 + $0x498] sm:$0xff]
    %v7330 = vld [vmem:[%s7181 + $0x4a0] sm:$0xff]
    %v7331 = vld [vmem:[%s7181 + $0x4a8] sm:$0xff]
    %v7332 = vld [vmem:[%s7181 + $0x4b0] sm:$0xff]
    %v7333 = vld [vmem:[%s7181 + $0x4b8] sm:$0xff]
    %v7334 = vld [vmem:[%s7181 + $0x4c0] sm:$0xff]
    %v7335 = vld [vmem:[%s7181 + $0x4c8] sm:$0xff]
    %v7336 = vld [vmem:[%s7181 + $0x4d0] sm:$0xff]
    %v7337 = vld [vmem:[%s7181 + $0x4d8] sm:$0xff]
    %v7338 = vld [vmem:[%s7181 + $0x4e0] sm:$0xff]
    %v7339 = vld [vmem:[%s7181 + $0x4e8] sm:$0xff]
    %v7340 = vld [vmem:[%s7181 + $0x4f0] sm:$0xff]
    %v7341 = vld [vmem:[%s7181 + $0x4f8] sm:$0xff]
    %v7342 = vld [vmem:[%s7181 + $0x500] sm:$0xff]
    %v7343 = vld [vmem:[%s7181 + $0x508] sm:$0xff]
    %v7344 = vld [vmem:[%s7181 + $0x510] sm:$0xff]
    %v7345 = vld [vmem:[%s7181 + $0x518] sm:$0xff]
    %v7346 = vld [vmem:[%s7181 + $0x520] sm:$0xff]
    %v7347 = vld [vmem:[%s7181 + $0x528] sm:$0xff]
    %v7348 = vld [vmem:[%s7181 + $0x530] sm:$0xff]
    %v7349 = vld [vmem:[%s7181 + $0x538] sm:$0xff]
    %v7350 = vld [vmem:[%s7181 + $0x540] sm:$0xff]
    %v7351 = vld [vmem:[%s7181 + $0x548] sm:$0xff]
    %v7352 = vld [vmem:[%s7181 + $0x550] sm:$0xff]
    %v7353 = vld [vmem:[%s7181 + $0x558] sm:$0xff]
    %v7354 = vld [vmem:[%s7181 + $0x560] sm:$0xff]
    %v7355 = vld [vmem:[%s7181 + $0x568] sm:$0xff]
    %v7356 = vld [vmem:[%s7181 + $0x570] sm:$0xff]
    %v7357 = vld [vmem:[%s7181 + $0x578] sm:$0xff]
    %v7358 = vld [vmem:[%s7181 + $0x580] sm:$0xff]
    %v7359 = vld [vmem:[%s7181 + $0x588] sm:$0xff]
    %v7360 = vld [vmem:[%s7181 + $0x590] sm:$0xff]
    %v7361 = vld [vmem:[%s7181 + $0x598] sm:$0xff]
    %v7362 = vld [vmem:[%s7181 + $0x5a0] sm:$0xff]
    %v7363 = vld [vmem:[%s7181 + $0x5a8] sm:$0xff]
    %v7364 = vld [vmem:[%s7181 + $0x5b0] sm:$0xff]
    %v7365 = vld [vmem:[%s7181 + $0x5b8] sm:$0xff]
    %v7366 = vld [vmem:[%s7181 + $0x5c0] sm:$0xff]
    %v7367 = vld [vmem:[%s7181 + $0x5c8] sm:$0xff]
    %v7368 = vld [vmem:[%s7181 + $0x5d0] sm:$0xff]
    %v7369 = vld [vmem:[%s7181 + $0x5d8] sm:$0xff]
    %v7370 = vld [vmem:[%s7181 + $0x5e0] sm:$0xff]
    %v7371 = vld [vmem:[%s7181 + $0x5e8] sm:$0xff]
    %v7372 = vld [vmem:[%s7181 + $0x5f0] sm:$0xff]
    %v7373 = vld [vmem:[%s7181 + $0x5f8] sm:$0xff]
    %v7374 = vld [vmem:[%s7181 + $0x600] sm:$0xff]
    %v7375 = vld [vmem:[%s7181 + $0x608] sm:$0xff]
    %v7376 = vld [vmem:[%s7181 + $0x610] sm:$0xff]
    %v7377 = vld [vmem:[%s7181 + $0x618] sm:$0xff]
    %v7378 = vld [vmem:[%s7181 + $0x620] sm:$0xff]
    %v7379 = vld [vmem:[%s7181 + $0x628] sm:$0xff]
    %v7380 = vld [vmem:[%s7181 + $0x630] sm:$0xff]
    %v7381 = vld [vmem:[%s7181 + $0x638] sm:$0xff]
    %v7382 = vld [vmem:[%s7181 + $0x640] sm:$0xff]
    %v7383 = vld [vmem:[%s7181 + $0x648] sm:$0xff]
    %v7384 = vld [vmem:[%s7181 + $0x650] sm:$0xff]
    %v7385 = vld [vmem:[%s7181 + $0x658] sm:$0xff]
    %v7386 = vld [vmem:[%s7181 + $0x660] sm:$0xff]
    %v7387 = vld [vmem:[%s7181 + $0x668] sm:$0xff]
    %v7388 = vld [vmem:[%s7181 + $0x670] sm:$0xff]
    %v7389 = vld [vmem:[%s7181 + $0x678] sm:$0xff]
    %v7390 = vld [vmem:[%s7181 + $0x680] sm:$0xff]
    %v7391 = vld [vmem:[%s7181 + $0x688] sm:$0xff]
    %v7392 = vld [vmem:[%s7181 + $0x690] sm:$0xff]
    %v7393 = vld [vmem:[%s7181 + $0x698] sm:$0xff]
    %v7394 = vld [vmem:[%s7181 + $0x6a0] sm:$0xff]
    %v7395 = vld [vmem:[%s7181 + $0x6a8] sm:$0xff]
    %v7396 = vld [vmem:[%s7181 + $0x6b0] sm:$0xff]
    %v7397 = vld [vmem:[%s7181 + $0x6b8] sm:$0xff]
    %v7398 = vld [vmem:[%s7181 + $0x6c0] sm:$0xff]
    %v7399 = vld [vmem:[%s7181 + $0x6c8] sm:$0xff]
    %v7400 = vld [vmem:[%s7181 + $0x6d0] sm:$0xff]
    %v7401 = vld [vmem:[%s7181 + $0x6d8] sm:$0xff]
    %v7402 = vld [vmem:[%s7181 + $0x6e0] sm:$0xff]
    %v7403 = vld [vmem:[%s7181 + $0x6e8] sm:$0xff]
    %v7404 = vld [vmem:[%s7181 + $0x6f0] sm:$0xff]
    %v7405 = vld [vmem:[%s7181 + $0x6f8] sm:$0xff]
    %v7406 = vld [vmem:[%s7181 + $0x700] sm:$0xff]
    %v7407 = vld [vmem:[%s7181 + $0x708] sm:$0xff]
    %v7408 = vld [vmem:[%s7181 + $0x710] sm:$0xff]
    %v7409 = vld [vmem:[%s7181 + $0x718] sm:$0xff]
    %v7410 = vld [vmem:[%s7181 + $0x720] sm:$0xff]
    %v7411 = vld [vmem:[%s7181 + $0x728] sm:$0xff]
    %v7412 = vld [vmem:[%s7181 + $0x730] sm:$0xff]
    %v7413 = vld [vmem:[%s7181 + $0x738] sm:$0xff]
    %v7414 = vld [vmem:[%s7181 + $0x740] sm:$0xff]
    %v7415 = vld [vmem:[%s7181 + $0x748] sm:$0xff]
    %v7416 = vld [vmem:[%s7181 + $0x750] sm:$0xff]
    %v7417 = vld [vmem:[%s7181 + $0x758] sm:$0xff]
    %v7418 = vld [vmem:[%s7181 + $0x760] sm:$0xff]
    %v7419 = vld [vmem:[%s7181 + $0x768] sm:$0xff]
    %v7420 = vld [vmem:[%s7181 + $0x770] sm:$0xff]
    %v7421 = vld [vmem:[%s7181 + $0x778] sm:$0xff]
    %v7422 = vld [vmem:[%s7181 + $0x780] sm:$0xff]
    %v7423 = vld [vmem:[%s7181 + $0x788] sm:$0xff]
    %v7424 = vld [vmem:[%s7181 + $0x790] sm:$0xff]
    %v7425 = vld [vmem:[%s7181 + $0x798] sm:$0xff]
    %v7426 = vld [vmem:[%s7181 + $0x7a0] sm:$0xff]
    %v7427 = vld [vmem:[%s7181 + $0x7a8] sm:$0xff]
    %v7428 = vld [vmem:[%s7181 + $0x7b0] sm:$0xff]
    %v7429 = vld [vmem:[%s7181 + $0x7b8] sm:$0xff]
    %v7430 = vld [vmem:[%s7181 + $0x7c0] sm:$0xff]
    %v7431 = vld [vmem:[%s7181 + $0x7c8] sm:$0xff]
    %v7432 = vld [vmem:[%s7181 + $0x7d0] sm:$0xff]
    %v7433 = vld [vmem:[%s7181 + $0x7d8] sm:$0xff]
    %v7434 = vld [vmem:[%s7181 + $0x7e0] sm:$0xff]
    %v7435 = vld [vmem:[%s7181 + $0x7e8] sm:$0xff]
    %v7436 = vld [vmem:[%s7181 + $0x7f0] sm:$0xff]
    %v7437 = vld [vmem:[%s7181 + $0x7f8] sm:$0xff]
    %7438 = vmatprep.subr.mxu0 %v7183
    %7439 = vmatpush1.msra.mxu0 %v7182
    %7440 = vmatprep.subr.mxu0 %v7185
    %7441 = vmatpush1.msra.mxu0 %v7184
    %7442 = vmatprep.subr.mxu0 %v7187
    %7443 = vmatpush1.msra.mxu0 %v7186
    %7444 = vmatprep.subr.mxu0 %v7189
    %7445 = vmatpush1.msra.mxu0 %v7188
    %7446 = vmatprep.subr.mxu0 %v7191
    %7447 = vmatpush1.msra.mxu0 %v7190
    %7448 = vmatprep.subr.mxu0 %v7193
    %7449 = vmatpush1.msra.mxu0 %v7192
    %7450 = vmatprep.subr.mxu0 %v7195
    %7451 = vmatpush1.msra.mxu0 %v7194
    %7452 = vmatprep.subr.mxu0 %v7197
    %7453 = vmatpush1.msra.mxu0 %v7196
    %7454 = vmatprep.subr.mxu0 %v7199
    %7455 = vmatpush1.msra.mxu0 %v7198
    %7456 = vmatprep.subr.mxu0 %v7201
    %7457 = vmatpush1.msra.mxu0 %v7200
    %7458 = vmatprep.subr.mxu0 %v7203
    %7459 = vmatpush1.msra.mxu0 %v7202
    %7460 = vmatprep.subr.mxu0 %v7205
    %7461 = vmatpush1.msra.mxu0 %v7204
    %7462 = vmatprep.subr.mxu0 %v7207
    %7463 = vmatpush1.msra.mxu0 %v7206
    %7464 = vmatprep.subr.mxu0 %v7209
    %7465 = vmatpush1.msra.mxu0 %v7208
    %7466 = vmatprep.subr.mxu0 %v7211
    %7467 = vmatpush1.msra.mxu0 %v7210
    %7468 = vmatprep.subr.mxu0 %v7213
    %7469 = vmatpush1.msra.mxu0 %v7212
    %7470 = vmatprep.subr.mxu0 %v7215
    %7471 = vmatpush1.msra.mxu0 %v7214
    %7472 = vmatprep.subr.mxu0 %v7217
    %7473 = vmatpush1.msra.mxu0 %v7216
    %7474 = vmatprep.subr.mxu0 %v7219
    %7475 = vmatpush1.msra.mxu0 %v7218
    %7476 = vmatprep.subr.mxu0 %v7221
    %7477 = vmatpush1.msra.mxu0 %v7220
    %7478 = vmatprep.subr.mxu0 %v7223
    %7479 = vmatpush1.msra.mxu0 %v7222
    %7480 = vmatprep.subr.mxu0 %v7225
    %7481 = vmatpush1.msra.mxu0 %v7224
    %7482 = vmatprep.subr.mxu0 %v7227
    %7483 = vmatpush1.msra.mxu0 %v7226
    %7484 = vmatprep.subr.mxu0 %v7229
    %7485 = vmatpush1.msra.mxu0 %v7228
    %7486 = vmatprep.subr.mxu0 %v7231
    %7487 = vmatpush1.msra.mxu0 %v7230
    %7488 = vmatprep.subr.mxu0 %v7233
    %7489 = vmatpush1.msra.mxu0 %v7232
    %7490 = vmatprep.subr.mxu0 %v7235
    %7491 = vmatpush1.msra.mxu0 %v7234
    %7492 = vmatprep.subr.mxu0 %v7237
    %7493 = vmatpush1.msra.mxu0 %v7236
    %7494 = vmatprep.subr.mxu0 %v7239
    %7495 = vmatpush1.msra.mxu0 %v7238
    %7496 = vmatprep.subr.mxu0 %v7241
    %7497 = vmatpush1.msra.mxu0 %v7240
    %7498 = vmatprep.subr.mxu0 %v7243
    %7499 = vmatpush1.msra.mxu0 %v7242
    %7500 = vmatprep.subr.mxu0 %v7245
    %7501 = vmatpush1.msra.mxu0 %v7244
    %7502 = vmatprep.mubr.f32.mxu0 %v7174
    %7503 = vmatmul.mubr.f32.gmra.mrb[0].mxu0 %v7173
    %v7504 = vpop.f32.mrb[0].mxu0
    %v7505 = vadd.f32 0.0, %v7504
    %v7506 = vpop.f32.mrb[0].mxu0
    %v7507 = vadd.f32 0.0, %v7506
    %7508 = vdwg.mxu0
    %7509 = vmatprep.subr.mxu0 %v7247
    %7510 = vmatpush1.msra.mxu0 %v7246
    %7511 = vmatprep.subr.mxu0 %v7249
    %7512 = vmatpush1.msra.mxu0 %v7248
    %7513 = vmatprep.subr.mxu0 %v7251
    %7514 = vmatpush1.msra.mxu0 %v7250
    %7515 = vmatprep.subr.mxu0 %v7253
    %7516 = vmatpush1.msra.mxu0 %v7252
    %7517 = vmatprep.subr.mxu0 %v7255
    %7518 = vmatpush1.msra.mxu0 %v7254
    %7519 = vmatprep.subr.mxu0 %v7257
    %7520 = vmatpush1.msra.mxu0 %v7256
    %7521 = vmatprep.subr.mxu0 %v7259
    %7522 = vmatpush1.msra.mxu0 %v7258
    %7523 = vmatprep.subr.mxu0 %v7261
    %7524 = vmatpush1.msra.mxu0 %v7260
    %7525 = vmatprep.subr.mxu0 %v7263
    %7526 = vmatpush1.msra.mxu0 %v7262
    %7527 = vmatprep.subr.mxu0 %v7265
    %7528 = vmatpush1.msra.mxu0 %v7264
    %7529 = vmatprep.subr.mxu0 %v7267
    %7530 = vmatpush1.msra.mxu0 %v7266
    %7531 = vmatprep.subr.mxu0 %v7269
    %7532 = vmatpush1.msra.mxu0 %v7268
    %7533 = vmatprep.subr.mxu0 %v7271
    %7534 = vmatpush1.msra.mxu0 %v7270
    %7535 = vmatprep.subr.mxu0 %v7273
    %7536 = vmatpush1.msra.mxu0 %v7272
    %7537 = vmatprep.subr.mxu0 %v7275
    %7538 = vmatpush1.msra.mxu0 %v7274
    %7539 = vmatprep.subr.mxu0 %v7277
    %7540 = vmatpush1.msra.mxu0 %v7276
    %7541 = vmatprep.subr.mxu0 %v7279
    %7542 = vmatpush1.msra.mxu0 %v7278
    %7543 = vmatprep.subr.mxu0 %v7281
    %7544 = vmatpush1.msra.mxu0 %v7280
    %7545 = vmatprep.subr.mxu0 %v7283
    %7546 = vmatpush1.msra.mxu0 %v7282
    %7547 = vmatprep.subr.mxu0 %v7285
    %7548 = vmatpush1.msra.mxu0 %v7284
    %7549 = vmatprep.subr.mxu0 %v7287
    %7550 = vmatpush1.msra.mxu0 %v7286
    %7551 = vmatprep.subr.mxu0 %v7289
    %7552 = vmatpush1.msra.mxu0 %v7288
    %7553 = vmatprep.subr.mxu0 %v7291
    %7554 = vmatpush1.msra.mxu0 %v7290
    %7555 = vmatprep.subr.mxu0 %v7293
    %7556 = vmatpush1.msra.mxu0 %v7292
    %7557 = vmatprep.subr.mxu0 %v7295
    %7558 = vmatpush1.msra.mxu0 %v7294
    %7559 = vmatprep.subr.mxu0 %v7297
    %7560 = vmatpush1.msra.mxu0 %v7296
    %7561 = vmatprep.subr.mxu0 %v7299
    %7562 = vmatpush1.msra.mxu0 %v7298
    %7563 = vmatprep.subr.mxu0 %v7301
    %7564 = vmatpush1.msra.mxu0 %v7300
    %7565 = vmatprep.subr.mxu0 %v7303
    %7566 = vmatpush1.msra.mxu0 %v7302
    %7567 = vmatprep.subr.mxu0 %v7305
    %7568 = vmatpush1.msra.mxu0 %v7304
    %7569 = vmatprep.subr.mxu0 %v7307
    %7570 = vmatpush1.msra.mxu0 %v7306
    %7571 = vmatprep.subr.mxu0 %v7309
    %7572 = vmatpush1.msra.mxu0 %v7308
    %7573 = vmatprep.mubr.f32.mxu0 %v7176
    %7574 = vmatmul.mubr.f32.gmra.mrb[0].mxu0 %v7175
    %v7575 = vpop.f32.mrb[0].mxu0
    %v7576 = vadd.f32 %v7505, %v7575
    %v7577 = vpop.f32.mrb[0].mxu0
    %v7578 = vadd.f32 %v7507, %v7577
    %7579 = vdwg.mxu0
    %7580 = vmatprep.subr.mxu0 %v7311
    %7581 = vmatpush1.msra.mxu0 %v7310
    %7582 = vmatprep.subr.mxu0 %v7313
    %7583 = vmatpush1.msra.mxu0 %v7312
    %7584 = vmatprep.subr.mxu0 %v7315
    %7585 = vmatpush1.msra.mxu0 %v7314
    %7586 = vmatprep.subr.mxu0 %v7317
    %7587 = vmatpush1.msra.mxu0 %v7316
    %7588 = vmatprep.subr.mxu0 %v7319
    %7589 = vmatpush1.msra.mxu0 %v7318
    %7590 = vmatprep.subr.mxu0 %v7321
    %7591 = vmatpush1.msra.mxu0 %v7320
    %7592 = vmatprep.subr.mxu0 %v7323
    %7593 = vmatpush1.msra.mxu0 %v7322
    %7594 = vmatprep.subr.mxu0 %v7325
    %7595 = vmatpush1.msra.mxu0 %v7324
    %7596 = vmatprep.subr.mxu0 %v7327
    %7597 = vmatpush1.msra.mxu0 %v7326
    %7598 = vmatprep.subr.mxu0 %v7329
    %7599 = vmatpush1.msra.mxu0 %v7328
    %7600 = vmatprep.subr.mxu0 %v7331
    %7601 = vmatpush1.msra.mxu0 %v7330
    %7602 = vmatprep.subr.mxu0 %v7333
    %7603 = vmatpush1.msra.mxu0 %v7332
    %7604 = vmatprep.subr.mxu0 %v7335
    %7605 = vmatpush1.msra.mxu0 %v7334
    %7606 = vmatprep.subr.mxu0 %v7337
    %7607 = vmatpush1.msra.mxu0 %v7336
    %7608 = vmatprep.subr.mxu0 %v7339
    %7609 = vmatpush1.msra.mxu0 %v7338
    %7610 = vmatprep.subr.mxu0 %v7341
    %7611 = vmatpush1.msra.mxu0 %v7340
    %7612 = vmatprep.subr.mxu0 %v7343
    %7613 = vmatpush1.msra.mxu0 %v7342
    %7614 = vmatprep.subr.mxu0 %v7345
    %7615 = vmatpush1.msra.mxu0 %v7344
    %7616 = vmatprep.subr.mxu0 %v7347
    %7617 = vmatpush1.msra.mxu0 %v7346
    %7618 = vmatprep.subr.mxu0 %v7349
    %7619 = vmatpush1.msra.mxu0 %v7348
    %7620 = vmatprep.subr.mxu0 %v7351
    %7621 = vmatpush1.msra.mxu0 %v7350
    %7622 = vmatprep.subr.mxu0 %v7353
    %7623 = vmatpush1.msra.mxu0 %v7352
    %7624 = vmatprep.subr.mxu0 %v7355
    %7625 = vmatpush1.msra.mxu0 %v7354
    %7626 = vmatprep.subr.mxu0 %v7357
    %7627 = vmatpush1.msra.mxu0 %v7356
    %7628 = vmatprep.subr.mxu0 %v7359
    %7629 = vmatpush1.msra.mxu0 %v7358
    %7630 = vmatprep.subr.mxu0 %v7361
    %7631 = vmatpush1.msra.mxu0 %v7360
    %7632 = vmatprep.subr.mxu0 %v7363
    %7633 = vmatpush1.msra.mxu0 %v7362
    %7634 = vmatprep.subr.mxu0 %v7365
    %7635 = vmatpush1.msra.mxu0 %v7364
    %7636 = vmatprep.subr.mxu0 %v7367
    %7637 = vmatpush1.msra.mxu0 %v7366
    %7638 = vmatprep.subr.mxu0 %v7369
    %7639 = vmatpush1.msra.mxu0 %v7368
    %7640 = vmatprep.subr.mxu0 %v7371
    %7641 = vmatpush1.msra.mxu0 %v7370
    %7642 = vmatprep.subr.mxu0 %v7373
    %7643 = vmatpush1.msra.mxu0 %v7372
    %7644 = vmatprep.mubr.f32.mxu0 %v7178
    %7645 = vmatmul.mubr.f32.gmra.mrb[0].mxu0 %v7177
    %v7646 = vpop.f32.mrb[0].mxu0
    %v7647 = vadd.f32 %v7576, %v7646
    %v7648 = vpop.f32.mrb[0].mxu0
    %v7649 = vadd.f32 %v7578, %v7648
    %7650 = vdwg.mxu0
    %7651 = vmatprep.subr.mxu0 %v7375
    %7652 = vmatpush1.msra.mxu0 %v7374
    %7653 = vmatprep.subr.mxu0 %v7377
    %7654 = vmatpush1.msra.mxu0 %v7376
    %7655 = vmatprep.subr.mxu0 %v7379
    %7656 = vmatpush1.msra.mxu0 %v7378
    %7657 = vmatprep.subr.mxu0 %v7381
    %7658 = vmatpush1.msra.mxu0 %v7380
    %7659 = vmatprep.subr.mxu0 %v7383
    %7660 = vmatpush1.msra.mxu0 %v7382
    %7661 = vmatprep.subr.mxu0 %v7385
    %7662 = vmatpush1.msra.mxu0 %v7384
    %7663 = vmatprep.subr.mxu0 %v7387
    %7664 = vmatpush1.msra.mxu0 %v7386
    %7665 = vmatprep.subr.mxu0 %v7389
    %7666 = vmatpush1.msra.mxu0 %v7388
    %7667 = vmatprep.subr.mxu0 %v7391
    %7668 = vmatpush1.msra.mxu0 %v7390
    %7669 = vmatprep.subr.mxu0 %v7393
    %7670 = vmatpush1.msra.mxu0 %v7392
    %7671 = vmatprep.subr.mxu0 %v7395
    %7672 = vmatpush1.msra.mxu0 %v7394
    %7673 = vmatprep.subr.mxu0 %v7397
    %7674 = vmatpush1.msra.mxu0 %v7396
    %7675 = vmatprep.subr.mxu0 %v7399
    %7676 = vmatpush1.msra.mxu0 %v7398
    %7677 = vmatprep.subr.mxu0 %v7401
    %7678 = vmatpush1.msra.mxu0 %v7400
    %7679 = vmatprep.subr.mxu0 %v7403
    %7680 = vmatpush1.msra.mxu0 %v7402
    %7681 = vmatprep.subr.mxu0 %v7405
    %7682 = vmatpush1.msra.mxu0 %v7404
    %7683 = vmatprep.subr.mxu0 %v7407
    %7684 = vmatpush1.msra.mxu0 %v7406
    %7685 = vmatprep.subr.mxu0 %v7409
    %7686 = vmatpush1.msra.mxu0 %v7408
    %7687 = vmatprep.subr.mxu0 %v7411
    %7688 = vmatpush1.msra.mxu0 %v7410
    %7689 = vmatprep.subr.mxu0 %v7413
    %7690 = vmatpush1.msra.mxu0 %v7412
    %7691 = vmatprep.subr.mxu0 %v7415
    %7692 = vmatpush1.msra.mxu0 %v7414
    %7693 = vmatprep.subr.mxu0 %v7417
    %7694 = vmatpush1.msra.mxu0 %v7416
    %7695 = vmatprep.subr.mxu0 %v7419
    %7696 = vmatpush1.msra.mxu0 %v7418
    %7697 = vmatprep.subr.mxu0 %v7421
    %7698 = vmatpush1.msra.mxu0 %v7420
    %7699 = vmatprep.subr.mxu0 %v7423
    %7700 = vmatpush1.msra.mxu0 %v7422
    %7701 = vmatprep.subr.mxu0 %v7425
    %7702 = vmatpush1.msra.mxu0 %v7424
    %7703 = vmatprep.subr.mxu0 %v7427
    %7704 = vmatpush1.msra.mxu0 %v7426
    %7705 = vmatprep.subr.mxu0 %v7429
    %7706 = vmatpush1.msra.mxu0 %v7428
    %7707 = vmatprep.subr.mxu0 %v7431
    %7708 = vmatpush1.msra.mxu0 %v7430
    %7709 = vmatprep.subr.mxu0 %v7433
    %7710 = vmatpush1.msra.mxu0 %v7432
    %7711 = vmatprep.subr.mxu0 %v7435
    %7712 = vmatpush1.msra.mxu0 %v7434
    %7713 = vmatprep.subr.mxu0 %v7437
    %7714 = vmatpush1.msra.mxu0 %v7436
    %7715 = vmatprep.mubr.f32.mxu0 %v7180
    %7716 = vmatmul.mubr.f32.gmra.mrb[0].mxu0 %v7179
    %v7717 = vpop.f32.mrb[0].mxu0
    %v7718 = vadd.f32 %v7647, %v7717
    %v7719 = vpop.f32.mrb[0].mxu0
    %v7720 = vadd.f32 %v7649, %v7719
    %7721 = vdwg.mxu0
    %v7722 = vadd.f32 %v7170, %v7718
    %v7723 = vadd.f32 %v7171, %v7720
    %7724 = vst [vmem:[#allocation3] sm:$0xff] %v7722
    %7725 = vst [vmem:[#allocation3 + $0x8] sm:$0xff] %v7723
    %v7726 = vld [vmem:[#allocation3] sm:$0xff]
    %v7727 = vld [vmem:[#allocation3 + $0x8] sm:$0xff]
    %s7728 = scalar_lea.vmem [#allocation2], 448
    %v7729 = vld [vmem:[%s7728] sm:$0xff]
    %v7730 = vld [vmem:[%s7728 + $0x8] sm:$0xff]
    %v7731 = vld [vmem:[%s7728 + $0x10] sm:$0xff]
    %v7732 = vld [vmem:[%s7728 + $0x18] sm:$0xff]
    %v7733 = vld [vmem:[%s7728 + $0x20] sm:$0xff]
    %v7734 = vld [vmem:[%s7728 + $0x28] sm:$0xff]
    %v7735 = vld [vmem:[%s7728 + $0x30] sm:$0xff]
    %v7736 = vld [vmem:[%s7728 + $0x38] sm:$0xff]
    %s7737 = scalar_lea.vmem [#allocation14], 14336
    %v7738 = vld [vmem:[%s7737] sm:$0xff]
    %v7739 = vld [vmem:[%s7737 + $0x8] sm:$0xff]
    %v7740 = vld [vmem:[%s7737 + $0x10] sm:$0xff]
    %v7741 = vld [vmem:[%s7737 + $0x18] sm:$0xff]
    %v7742 = vld [vmem:[%s7737 + $0x20] sm:$0xff]
    %v7743 = vld [vmem:[%s7737 + $0x28] sm:$0xff]
    %v7744 = vld [vmem:[%s7737 + $0x30] sm:$0xff]
    %v7745 = vld [vmem:[%s7737 + $0x38] sm:$0xff]
    %v7746 = vld [vmem:[%s7737 + $0x40] sm:$0xff]
    %v7747 = vld [vmem:[%s7737 + $0x48] sm:$0xff]
    %v7748 = vld [vmem:[%s7737 + $0x50] sm:$0xff]
    %v7749 = vld [vmem:[%s7737 + $0x58] sm:$0xff]
    %v7750 = vld [vmem:[%s7737 + $0x60] sm:$0xff]
    %v7751 = vld [vmem:[%s7737 + $0x68] sm:$0xff]
    %v7752 = vld [vmem:[%s7737 + $0x70] sm:$0xff]
    %v7753 = vld [vmem:[%s7737 + $0x78] sm:$0xff]
    %v7754 = vld [vmem:[%s7737 + $0x80] sm:$0xff]
    %v7755 = vld [vmem:[%s7737 + $0x88] sm:$0xff]
    %v7756 = vld [vmem:[%s7737 + $0x90] sm:$0xff]
    %v7757 = vld [vmem:[%s7737 + $0x98] sm:$0xff]
    %v7758 = vld [vmem:[%s7737 + $0xa0] sm:$0xff]
    %v7759 = vld [vmem:[%s7737 + $0xa8] sm:$0xff]
    %v7760 = vld [vmem:[%s7737 + $0xb0] sm:$0xff]
    %v7761 = vld [vmem:[%s7737 + $0xb8] sm:$0xff]
    %v7762 = vld [vmem:[%s7737 + $0xc0] sm:$0xff]
    %v7763 = vld [vmem:[%s7737 + $0xc8] sm:$0xff]
    %v7764 = vld [vmem:[%s7737 + $0xd0] sm:$0xff]
    %v7765 = vld [vmem:[%s7737 + $0xd8] sm:$0xff]
    %v7766 = vld [vmem:[%s7737 + $0xe0] sm:$0xff]
    %v7767 = vld [vmem:[%s7737 + $0xe8] sm:$0xff]
    %v7768 = vld [vmem:[%s7737 + $0xf0] sm:$0xff]
    %v7769 = vld [vmem:[%s7737 + $0xf8] sm:$0xff]
    %v7770 = vld [vmem:[%s7737 + $0x100] sm:$0xff]
    %v7771 = vld [vmem:[%s7737 + $0x108] sm:$0xff]
    %v7772 = vld [vmem:[%s7737 + $0x110] sm:$0xff]
    %v7773 = vld [vmem:[%s7737 + $0x118] sm:$0xff]
    %v7774 = vld [vmem:[%s7737 + $0x120] sm:$0xff]
    %v7775 = vld [vmem:[%s7737 + $0x128] sm:$0xff]
    %v7776 = vld [vmem:[%s7737 + $0x130] sm:$0xff]
    %v7777 = vld [vmem:[%s7737 + $0x138] sm:$0xff]
    %v7778 = vld [vmem:[%s7737 + $0x140] sm:$0xff]
    %v7779 = vld [vmem:[%s7737 + $0x148] sm:$0xff]
    %v7780 = vld [vmem:[%s7737 + $0x150] sm:$0xff]
    %v7781 = vld [vmem:[%s7737 + $0x158] sm:$0xff]
    %v7782 = vld [vmem:[%s7737 + $0x160] sm:$0xff]
    %v7783 = vld [vmem:[%s7737 + $0x168] sm:$0xff]
    %v7784 = vld [vmem:[%s7737 + $0x170] sm:$0xff]
    %v7785 = vld [vmem:[%s7737 + $0x178] sm:$0xff]
    %v7786 = vld [vmem:[%s7737 + $0x180] sm:$0xff]
    %v7787 = vld [vmem:[%s7737 + $0x188] sm:$0xff]
    %v7788 = vld [vmem:[%s7737 + $0x190] sm:$0xff]
    %v7789 = vld [vmem:[%s7737 + $0x198] sm:$0xff]
    %v7790 = vld [vmem:[%s7737 + $0x1a0] sm:$0xff]
    %v7791 = vld [vmem:[%s7737 + $0x1a8] sm:$0xff]
    %v7792 = vld [vmem:[%s7737 + $0x1b0] sm:$0xff]
    %v7793 = vld [vmem:[%s7737 + $0x1b8] sm:$0xff]
    %v7794 = vld [vmem:[%s7737 + $0x1c0] sm:$0xff]
    %v7795 = vld [vmem:[%s7737 + $0x1c8] sm:$0xff]
    %v7796 = vld [vmem:[%s7737 + $0x1d0] sm:$0xff]
    %v7797 = vld [vmem:[%s7737 + $0x1d8] sm:$0xff]
    %v7798 = vld [vmem:[%s7737 + $0x1e0] sm:$0xff]
    %v7799 = vld [vmem:[%s7737 + $0x1e8] sm:$0xff]
    %v7800 = vld [vmem:[%s7737 + $0x1f0] sm:$0xff]
    %v7801 = vld [vmem:[%s7737 + $0x1f8] sm:$0xff]
    %v7802 = vld [vmem:[%s7737 + $0x200] sm:$0xff]
    %v7803 = vld [vmem:[%s7737 + $0x208] sm:$0xff]
    %v7804 = vld [vmem:[%s7737 + $0x210] sm:$0xff]
    %v7805 = vld [vmem:[%s7737 + $0x218] sm:$0xff]
    %v7806 = vld [vmem:[%s7737 + $0x220] sm:$0xff]
    %v7807 = vld [vmem:[%s7737 + $0x228] sm:$0xff]
    %v7808 = vld [vmem:[%s7737 + $0x230] sm:$0xff]
    %v7809 = vld [vmem:[%s7737 + $0x238] sm:$0xff]
    %v7810 = vld [vmem:[%s7737 + $0x240] sm:$0xff]
    %v7811 = vld [vmem:[%s7737 + $0x248] sm:$0xff]
    %v7812 = vld [vmem:[%s7737 + $0x250] sm:$0xff]
    %v7813 = vld [vmem:[%s7737 + $0x258] sm:$0xff]
    %v7814 = vld [vmem:[%s7737 + $0x260] sm:$0xff]
    %v7815 = vld [vmem:[%s7737 + $0x268] sm:$0xff]
    %v7816 = vld [vmem:[%s7737 + $0x270] sm:$0xff]
    %v7817 = vld [vmem:[%s7737 + $0x278] sm:$0xff]
    %v7818 = vld [vmem:[%s7737 + $0x280] sm:$0xff]
    %v7819 = vld [vmem:[%s7737 + $0x288] sm:$0xff]
    %v7820 = vld [vmem:[%s7737 + $0x290] sm:$0xff]
    %v7821 = vld [vmem:[%s7737 + $0x298] sm:$0xff]
    %v7822 = vld [vmem:[%s7737 + $0x2a0] sm:$0xff]
    %v7823 = vld [vmem:[%s7737 + $0x2a8] sm:$0xff]
    %v7824 = vld [vmem:[%s7737 + $0x2b0] sm:$0xff]
    %v7825 = vld [vmem:[%s7737 + $0x2b8] sm:$0xff]
    %v7826 = vld [vmem:[%s7737 + $0x2c0] sm:$0xff]
    %v7827 = vld [vmem:[%s7737 + $0x2c8] sm:$0xff]
    %v7828 = vld [vmem:[%s7737 + $0x2d0] sm:$0xff]
    %v7829 = vld [vmem:[%s7737 + $0x2d8] sm:$0xff]
    %v7830 = vld [vmem:[%s7737 + $0x2e0] sm:$0xff]
    %v7831 = vld [vmem:[%s7737 + $0x2e8] sm:$0xff]
    %v7832 = vld [vmem:[%s7737 + $0x2f0] sm:$0xff]
    %v7833 = vld [vmem:[%s7737 + $0x2f8] sm:$0xff]
    %v7834 = vld [vmem:[%s7737 + $0x300] sm:$0xff]
    %v7835 = vld [vmem:[%s7737 + $0x308] sm:$0xff]
    %v7836 = vld [vmem:[%s7737 + $0x310] sm:$0xff]
    %v7837 = vld [vmem:[%s7737 + $0x318] sm:$0xff]
    %v7838 = vld [vmem:[%s7737 + $0x320] sm:$0xff]
    %v7839 = vld [vmem:[%s7737 + $0x328] sm:$0xff]
    %v7840 = vld [vmem:[%s7737 + $0x330] sm:$0xff]
    %v7841 = vld [vmem:[%s7737 + $0x338] sm:$0xff]
    %v7842 = vld [vmem:[%s7737 + $0x340] sm:$0xff]
    %v7843 = vld [vmem:[%s7737 + $0x348] sm:$0xff]
    %v7844 = vld [vmem:[%s7737 + $0x350] sm:$0xff]
    %v7845 = vld [vmem:[%s7737 + $0x358] sm:$0xff]
    %v7846 = vld [vmem:[%s7737 + $0x360] sm:$0xff]
    %v7847 = vld [vmem:[%s7737 + $0x368] sm:$0xff]
    %v7848 = vld [vmem:[%s7737 + $0x370] sm:$0xff]
    %v7849 = vld [vmem:[%s7737 + $0x378] sm:$0xff]
    %v7850 = vld [vmem:[%s7737 + $0x380] sm:$0xff]
    %v7851 = vld [vmem:[%s7737 + $0x388] sm:$0xff]
    %v7852 = vld [vmem:[%s7737 + $0x390] sm:$0xff]
    %v7853 = vld [vmem:[%s7737 + $0x398] sm:$0xff]
    %v7854 = vld [vmem:[%s7737 + $0x3a0] sm:$0xff]
    %v7855 = vld [vmem:[%s7737 + $0x3a8] sm:$0xff]
    %v7856 = vld [vmem:[%s7737 + $0x3b0] sm:$0xff]
    %v7857 = vld [vmem:[%s7737 + $0x3b8] sm:$0xff]
    %v7858 = vld [vmem:[%s7737 + $0x3c0] sm:$0xff]
    %v7859 = vld [vmem:[%s7737 + $0x3c8] sm:$0xff]
    %v7860 = vld [vmem:[%s7737 + $0x3d0] sm:$0xff]
    %v7861 = vld [vmem:[%s7737 + $0x3d8] sm:$0xff]
    %v7862 = vld [vmem:[%s7737 + $0x3e0] sm:$0xff]
    %v7863 = vld [vmem:[%s7737 + $0x3e8] sm:$0xff]
    %v7864 = vld [vmem:[%s7737 + $0x3f0] sm:$0xff]
    %v7865 = vld [vmem:[%s7737 + $0x3f8] sm:$0xff]
    %v7866 = vld [vmem:[%s7737 + $0x400] sm:$0xff]
    %v7867 = vld [vmem:[%s7737 + $0x408] sm:$0xff]
    %v7868 = vld [vmem:[%s7737 + $0x410] sm:$0xff]
    %v7869 = vld [vmem:[%s7737 + $0x418] sm:$0xff]
    %v7870 = vld [vmem:[%s7737 + $0x420] sm:$0xff]
    %v7871 = vld [vmem:[%s7737 + $0x428] sm:$0xff]
    %v7872 = vld [vmem:[%s7737 + $0x430] sm:$0xff]
    %v7873 = vld [vmem:[%s7737 + $0x438] sm:$0xff]
    %v7874 = vld [vmem:[%s7737 + $0x440] sm:$0xff]
    %v7875 = vld [vmem:[%s7737 + $0x448] sm:$0xff]
    %v7876 = vld [vmem:[%s7737 + $0x450] sm:$0xff]
    %v7877 = vld [vmem:[%s7737 + $0x458] sm:$0xff]
    %v7878 = vld [vmem:[%s7737 + $0x460] sm:$0xff]
    %v7879 = vld [vmem:[%s7737 + $0x468] sm:$0xff]
    %v7880 = vld [vmem:[%s7737 + $0x470] sm:$0xff]
    %v7881 = vld [vmem:[%s7737 + $0x478] sm:$0xff]
    %v7882 = vld [vmem:[%s7737 + $0x480] sm:$0xff]
    %v7883 = vld [vmem:[%s7737 + $0x488] sm:$0xff]
    %v7884 = vld [vmem:[%s7737 + $0x490] sm:$0xff]
    %v7885 = vld [vmem:[%s7737 + $0x498] sm:$0xff]
    %v7886 = vld [vmem:[%s7737 + $0x4a0] sm:$0xff]
    %v7887 = vld [vmem:[%s7737 + $0x4a8] sm:$0xff]
    %v7888 = vld [vmem:[%s7737 + $0x4b0] sm:$0xff]
    %v7889 = vld [vmem:[%s7737 + $0x4b8] sm:$0xff]
    %v7890 = vld [vmem:[%s7737 + $0x4c0] sm:$0xff]
    %v7891 = vld [vmem:[%s7737 + $0x4c8] sm:$0xff]
    %v7892 = vld [vmem:[%s7737 + $0x4d0] sm:$0xff]
    %v7893 = vld [vmem:[%s7737 + $0x4d8] sm:$0xff]
    %v7894 = vld [vmem:[%s7737 + $0x4e0] sm:$0xff]
    %v7895 = vld [vmem:[%s7737 + $0x4e8] sm:$0xff]
    %v7896 = vld [vmem:[%s7737 + $0x4f0] sm:$0xff]
    %v7897 = vld [vmem:[%s7737 + $0x4f8] sm:$0xff]
    %v7898 = vld [vmem:[%s7737 + $0x500] sm:$0xff]
    %v7899 = vld [vmem:[%s7737 + $0x508] sm:$0xff]
    %v7900 = vld [vmem:[%s7737 + $0x510] sm:$0xff]
    %v7901 = vld [vmem:[%s7737 + $0x518] sm:$0xff]
    %v7902 = vld [vmem:[%s7737 + $0x520] sm:$0xff]
    %v7903 = vld [vmem:[%s7737 + $0x528] sm:$0xff]
    %v7904 = vld [vmem:[%s7737 + $0x530] sm:$0xff]
    %v7905 = vld [vmem:[%s7737 + $0x538] sm:$0xff]
    %v7906 = vld [vmem:[%s7737 + $0x540] sm:$0xff]
    %v7907 = vld [vmem:[%s7737 + $0x548] sm:$0xff]
    %v7908 = vld [vmem:[%s7737 + $0x550] sm:$0xff]
    %v7909 = vld [vmem:[%s7737 + $0x558] sm:$0xff]
    %v7910 = vld [vmem:[%s7737 + $0x560] sm:$0xff]
    %v7911 = vld [vmem:[%s7737 + $0x568] sm:$0xff]
    %v7912 = vld [vmem:[%s7737 + $0x570] sm:$0xff]
    %v7913 = vld [vmem:[%s7737 + $0x578] sm:$0xff]
    %v7914 = vld [vmem:[%s7737 + $0x580] sm:$0xff]
    %v7915 = vld [vmem:[%s7737 + $0x588] sm:$0xff]
    %v7916 = vld [vmem:[%s7737 + $0x590] sm:$0xff]
    %v7917 = vld [vmem:[%s7737 + $0x598] sm:$0xff]
    %v7918 = vld [vmem:[%s7737 + $0x5a0] sm:$0xff]
    %v7919 = vld [vmem:[%s7737 + $0x5a8] sm:$0xff]
    %v7920 = vld [vmem:[%s7737 + $0x5b0] sm:$0xff]
    %v7921 = vld [vmem:[%s7737 + $0x5b8] sm:$0xff]
    %v7922 = vld [vmem:[%s7737 + $0x5c0] sm:$0xff]
    %v7923 = vld [vmem:[%s7737 + $0x5c8] sm:$0xff]
    %v7924 = vld [vmem:[%s7737 + $0x5d0] sm:$0xff]
    %v7925 = vld [vmem:[%s7737 + $0x5d8] sm:$0xff]
    %v7926 = vld [vmem:[%s7737 + $0x5e0] sm:$0xff]
    %v7927 = vld [vmem:[%s7737 + $0x5e8] sm:$0xff]
    %v7928 = vld [vmem:[%s7737 + $0x5f0] sm:$0xff]
    %v7929 = vld [vmem:[%s7737 + $0x5f8] sm:$0xff]
    %v7930 = vld [vmem:[%s7737 + $0x600] sm:$0xff]
    %v7931 = vld [vmem:[%s7737 + $0x608] sm:$0xff]
    %v7932 = vld [vmem:[%s7737 + $0x610] sm:$0xff]
    %v7933 = vld [vmem:[%s7737 + $0x618] sm:$0xff]
    %v7934 = vld [vmem:[%s7737 + $0x620] sm:$0xff]
    %v7935 = vld [vmem:[%s7737 + $0x628] sm:$0xff]
    %v7936 = vld [vmem:[%s7737 + $0x630] sm:$0xff]
    %v7937 = vld [vmem:[%s7737 + $0x638] sm:$0xff]
    %v7938 = vld [vmem:[%s7737 + $0x640] sm:$0xff]
    %v7939 = vld [vmem:[%s7737 + $0x648] sm:$0xff]
    %v7940 = vld [vmem:[%s7737 + $0x650] sm:$0xff]
    %v7941 = vld [vmem:[%s7737 + $0x658] sm:$0xff]
    %v7942 = vld [vmem:[%s7737 + $0x660] sm:$0xff]
    %v7943 = vld [vmem:[%s7737 + $0x668] sm:$0xff]
    %v7944 = vld [vmem:[%s7737 + $0x670] sm:$0xff]
    %v7945 = vld [vmem:[%s7737 + $0x678] sm:$0xff]
    %v7946 = vld [vmem:[%s7737 + $0x680] sm:$0xff]
    %v7947 = vld [vmem:[%s7737 + $0x688] sm:$0xff]
    %v7948 = vld [vmem:[%s7737 + $0x690] sm:$0xff]
    %v7949 = vld [vmem:[%s7737 + $0x698] sm:$0xff]
    %v7950 = vld [vmem:[%s7737 + $0x6a0] sm:$0xff]
    %v7951 = vld [vmem:[%s7737 + $0x6a8] sm:$0xff]
    %v7952 = vld [vmem:[%s7737 + $0x6b0] sm:$0xff]
    %v7953 = vld [vmem:[%s7737 + $0x6b8] sm:$0xff]
    %v7954 = vld [vmem:[%s7737 + $0x6c0] sm:$0xff]
    %v7955 = vld [vmem:[%s7737 + $0x6c8] sm:$0xff]
    %v7956 = vld [vmem:[%s7737 + $0x6d0] sm:$0xff]
    %v7957 = vld [vmem:[%s7737 + $0x6d8] sm:$0xff]
    %v7958 = vld [vmem:[%s7737 + $0x6e0] sm:$0xff]
    %v7959 = vld [vmem:[%s7737 + $0x6e8] sm:$0xff]
    %v7960 = vld [vmem:[%s7737 + $0x6f0] sm:$0xff]
    %v7961 = vld [vmem:[%s7737 + $0x6f8] sm:$0xff]
    %v7962 = vld [vmem:[%s7737 + $0x700] sm:$0xff]
    %v7963 = vld [vmem:[%s7737 + $0x708] sm:$0xff]
    %v7964 = vld [vmem:[%s7737 + $0x710] sm:$0xff]
    %v7965 = vld [vmem:[%s7737 + $0x718] sm:$0xff]
    %v7966 = vld [vmem:[%s7737 + $0x720] sm:$0xff]
    %v7967 = vld [vmem:[%s7737 + $0x728] sm:$0xff]
    %v7968 = vld [vmem:[%s7737 + $0x730] sm:$0xff]
    %v7969 = vld [vmem:[%s7737 + $0x738] sm:$0xff]
    %v7970 = vld [vmem:[%s7737 + $0x740] sm:$0xff]
    %v7971 = vld [vmem:[%s7737 + $0x748] sm:$0xff]
    %v7972 = vld [vmem:[%s7737 + $0x750] sm:$0xff]
    %v7973 = vld [vmem:[%s7737 + $0x758] sm:$0xff]
    %v7974 = vld [vmem:[%s7737 + $0x760] sm:$0xff]
    %v7975 = vld [vmem:[%s7737 + $0x768] sm:$0xff]
    %v7976 = vld [vmem:[%s7737 + $0x770] sm:$0xff]
    %v7977 = vld [vmem:[%s7737 + $0x778] sm:$0xff]
    %v7978 = vld [vmem:[%s7737 + $0x780] sm:$0xff]
    %v7979 = vld [vmem:[%s7737 + $0x788] sm:$0xff]
    %v7980 = vld [vmem:[%s7737 + $0x790] sm:$0xff]
    %v7981 = vld [vmem:[%s7737 + $0x798] sm:$0xff]
    %v7982 = vld [vmem:[%s7737 + $0x7a0] sm:$0xff]
    %v7983 = vld [vmem:[%s7737 + $0x7a8] sm:$0xff]
    %v7984 = vld [vmem:[%s7737 + $0x7b0] sm:$0xff]
    %v7985 = vld [vmem:[%s7737 + $0x7b8] sm:$0xff]
    %v7986 = vld [vmem:[%s7737 + $0x7c0] sm:$0xff]
    %v7987 = vld [vmem:[%s7737 + $0x7c8] sm:$0xff]
    %v7988 = vld [vmem:[%s7737 + $0x7d0] sm:$0xff]
    %v7989 = vld [vmem:[%s7737 + $0x7d8] sm:$0xff]
    %v7990 = vld [vmem:[%s7737 + $0x7e0] sm:$0xff]
    %v7991 = vld [vmem:[%s7737 + $0x7e8] sm:$0xff]
    %v7992 = vld [vmem:[%s7737 + $0x7f0] sm:$0xff]
    %v7993 = vld [vmem:[%s7737 + $0x7f8] sm:$0xff]
    %7994 = vmatprep.subr.mxu0 %v7739
    %7995 = vmatpush1.msra.mxu0 %v7738
    %7996 = vmatprep.subr.mxu0 %v7741
    %7997 = vmatpush1.msra.mxu0 %v7740
    %7998 = vmatprep.subr.mxu0 %v7743
    %7999 = vmatpush1.msra.mxu0 %v7742
    %8000 = vmatprep.subr.mxu0 %v7745
    %8001 = vmatpush1.msra.mxu0 %v7744
    %8002 = vmatprep.subr.mxu0 %v7747
    %8003 = vmatpush1.msra.mxu0 %v7746
    %8004 = vmatprep.subr.mxu0 %v7749
    %8005 = vmatpush1.msra.mxu0 %v7748
    %8006 = vmatprep.subr.mxu0 %v7751
    %8007 = vmatpush1.msra.mxu0 %v7750
    %8008 = vmatprep.subr.mxu0 %v7753
    %8009 = vmatpush1.msra.mxu0 %v7752
    %8010 = vmatprep.subr.mxu0 %v7755
    %8011 = vmatpush1.msra.mxu0 %v7754
    %8012 = vmatprep.subr.mxu0 %v7757
    %8013 = vmatpush1.msra.mxu0 %v7756
    %8014 = vmatprep.subr.mxu0 %v7759
    %8015 = vmatpush1.msra.mxu0 %v7758
    %8016 = vmatprep.subr.mxu0 %v7761
    %8017 = vmatpush1.msra.mxu0 %v7760
    %8018 = vmatprep.subr.mxu0 %v7763
    %8019 = vmatpush1.msra.mxu0 %v7762
    %8020 = vmatprep.subr.mxu0 %v7765
    %8021 = vmatpush1.msra.mxu0 %v7764
    %8022 = vmatprep.subr.mxu0 %v7767
    %8023 = vmatpush1.msra.mxu0 %v7766
    %8024 = vmatprep.subr.mxu0 %v7769
    %8025 = vmatpush1.msra.mxu0 %v7768
    %8026 = vmatprep.subr.mxu0 %v7771
    %8027 = vmatpush1.msra.mxu0 %v7770
    %8028 = vmatprep.subr.mxu0 %v7773
    %8029 = vmatpush1.msra.mxu0 %v7772
    %8030 = vmatprep.subr.mxu0 %v7775
    %8031 = vmatpush1.msra.mxu0 %v7774
    %8032 = vmatprep.subr.mxu0 %v7777
    %8033 = vmatpush1.msra.mxu0 %v7776
    %8034 = vmatprep.subr.mxu0 %v7779
    %8035 = vmatpush1.msra.mxu0 %v7778
    %8036 = vmatprep.subr.mxu0 %v7781
    %8037 = vmatpush1.msra.mxu0 %v7780
    %8038 = vmatprep.subr.mxu0 %v7783
    %8039 = vmatpush1.msra.mxu0 %v7782
    %8040 = vmatprep.subr.mxu0 %v7785
    %8041 = vmatpush1.msra.mxu0 %v7784
    %8042 = vmatprep.subr.mxu0 %v7787
    %8043 = vmatpush1.msra.mxu0 %v7786
    %8044 = vmatprep.subr.mxu0 %v7789
    %8045 = vmatpush1.msra.mxu0 %v7788
    %8046 = vmatprep.subr.mxu0 %v7791
    %8047 = vmatpush1.msra.mxu0 %v7790
    %8048 = vmatprep.subr.mxu0 %v7793
    %8049 = vmatpush1.msra.mxu0 %v7792
    %8050 = vmatprep.subr.mxu0 %v7795
    %8051 = vmatpush1.msra.mxu0 %v7794
    %8052 = vmatprep.subr.mxu0 %v7797
    %8053 = vmatpush1.msra.mxu0 %v7796
    %8054 = vmatprep.subr.mxu0 %v7799
    %8055 = vmatpush1.msra.mxu0 %v7798
    %8056 = vmatprep.subr.mxu0 %v7801
    %8057 = vmatpush1.msra.mxu0 %v7800
    %8058 = vmatprep.mubr.f32.mxu0 %v7730
    %8059 = vmatmul.mubr.f32.gmra.mrb[0].mxu0 %v7729
    %v8060 = vpop.f32.mrb[0].mxu0
    %v8061 = vadd.f32 0.0, %v8060
    %v8062 = vpop.f32.mrb[0].mxu0
    %v8063 = vadd.f32 0.0, %v8062
    %8064 = vdwg.mxu0
    %8065 = vmatprep.subr.mxu0 %v7803
    %8066 = vmatpush1.msra.mxu0 %v7802
    %8067 = vmatprep.subr.mxu0 %v7805
    %8068 = vmatpush1.msra.mxu0 %v7804
    %8069 = vmatprep.subr.mxu0 %v7807
    %8070 = vmatpush1.msra.mxu0 %v7806
    %8071 = vmatprep.subr.mxu0 %v7809
    %8072 = vmatpush1.msra.mxu0 %v7808
    %8073 = vmatprep.subr.mxu0 %v7811
    %8074 = vmatpush1.msra.mxu0 %v7810
    %8075 = vmatprep.subr.mxu0 %v7813
    %8076 = vmatpush1.msra.mxu0 %v7812
    %8077 = vmatprep.subr.mxu0 %v7815
    %8078 = vmatpush1.msra.mxu0 %v7814
    %8079 = vmatprep.subr.mxu0 %v7817
    %8080 = vmatpush1.msra.mxu0 %v7816
    %8081 = vmatprep.subr.mxu0 %v7819
    %8082 = vmatpush1.msra.mxu0 %v7818
    %8083 = vmatprep.subr.mxu0 %v7821
    %8084 = vmatpush1.msra.mxu0 %v7820
    %8085 = vmatprep.subr.mxu0 %v7823
    %8086 = vmatpush1.msra.mxu0 %v7822
    %8087 = vmatprep.subr.mxu0 %v7825
    %8088 = vmatpush1.msra.mxu0 %v7824
    %8089 = vmatprep.subr.mxu0 %v7827
    %8090 = vmatpush1.msra.mxu0 %v7826
    %8091 = vmatprep.subr.mxu0 %v7829
    %8092 = vmatpush1.msra.mxu0 %v7828
    %8093 = vmatprep.subr.mxu0 %v7831
    %8094 = vmatpush1.msra.mxu0 %v7830
    %8095 = vmatprep.subr.mxu0 %v7833
    %8096 = vmatpush1.msra.mxu0 %v7832
    %8097 = vmatprep.subr.mxu0 %v7835
    %8098 = vmatpush1.msra.mxu0 %v7834
    %8099 = vmatprep.subr.mxu0 %v7837
    %8100 = vmatpush1.msra.mxu0 %v7836
    %8101 = vmatprep.subr.mxu0 %v7839
    %8102 = vmatpush1.msra.mxu0 %v7838
    %8103 = vmatprep.subr.mxu0 %v7841
    %8104 = vmatpush1.msra.mxu0 %v7840
    %8105 = vmatprep.subr.mxu0 %v7843
    %8106 = vmatpush1.msra.mxu0 %v7842
    %8107 = vmatprep.subr.mxu0 %v7845
    %8108 = vmatpush1.msra.mxu0 %v7844
    %8109 = vmatprep.subr.mxu0 %v7847
    %8110 = vmatpush1.msra.mxu0 %v7846
    %8111 = vmatprep.subr.mxu0 %v7849
    %8112 = vmatpush1.msra.mxu0 %v7848
    %8113 = vmatprep.subr.mxu0 %v7851
    %8114 = vmatpush1.msra.mxu0 %v7850
    %8115 = vmatprep.subr.mxu0 %v7853
    %8116 = vmatpush1.msra.mxu0 %v7852
    %8117 = vmatprep.subr.mxu0 %v7855
    %8118 = vmatpush1.msra.mxu0 %v7854
    %8119 = vmatprep.subr.mxu0 %v7857
    %8120 = vmatpush1.msra.mxu0 %v7856
    %8121 = vmatprep.subr.mxu0 %v7859
    %8122 = vmatpush1.msra.mxu0 %v7858
    %8123 = vmatprep.subr.mxu0 %v7861
    %8124 = vmatpush1.msra.mxu0 %v7860
    %8125 = vmatprep.subr.mxu0 %v7863
    %8126 = vmatpush1.msra.mxu0 %v7862
    %8127 = vmatprep.subr.mxu0 %v7865
    %8128 = vmatpush1.msra.mxu0 %v7864
    %8129 = vmatprep.mubr.f32.mxu0 %v7732
    %8130 = vmatmul.mubr.f32.gmra.mrb[0].mxu0 %v7731
    %v8131 = vpop.f32.mrb[0].mxu0
    %v8132 = vadd.f32 %v8061, %v8131
    %v8133 = vpop.f32.mrb[0].mxu0
    %v8134 = vadd.f32 %v8063, %v8133
    %8135 = vdwg.mxu0
    %8136 = vmatprep.subr.mxu0 %v7867
    %8137 = vmatpush1.msra.mxu0 %v7866
    %8138 = vmatprep.subr.mxu0 %v7869
    %8139 = vmatpush1.msra.mxu0 %v7868
    %8140 = vmatprep.subr.mxu0 %v7871
    %8141 = vmatpush1.msra.mxu0 %v7870
    %8142 = vmatprep.subr.mxu0 %v7873
    %8143 = vmatpush1.msra.mxu0 %v7872
    %8144 = vmatprep.subr.mxu0 %v7875
    %8145 = vmatpush1.msra.mxu0 %v7874
    %8146 = vmatprep.subr.mxu0 %v7877
    %8147 = vmatpush1.msra.mxu0 %v7876
    %8148 = vmatprep.subr.mxu0 %v7879
    %8149 = vmatpush1.msra.mxu0 %v7878
    %8150 = vmatprep.subr.mxu0 %v7881
    %8151 = vmatpush1.msra.mxu0 %v7880
    %8152 = vmatprep.subr.mxu0 %v7883
    %8153 = vmatpush1.msra.mxu0 %v7882
    %8154 = vmatprep.subr.mxu0 %v7885
    %8155 = vmatpush1.msra.mxu0 %v7884
    %8156 = vmatprep.subr.mxu0 %v7887
    %8157 = vmatpush1.msra.mxu0 %v7886
    %8158 = vmatprep.subr.mxu0 %v7889
    %8159 = vmatpush1.msra.mxu0 %v7888
    %8160 = vmatprep.subr.mxu0 %v7891
    %8161 = vmatpush1.msra.mxu0 %v7890
    %8162 = vmatprep.subr.mxu0 %v7893
    %8163 = vmatpush1.msra.mxu0 %v7892
    %8164 = vmatprep.subr.mxu0 %v7895
    %8165 = vmatpush1.msra.mxu0 %v7894
    %8166 = vmatprep.subr.mxu0 %v7897
    %8167 = vmatpush1.msra.mxu0 %v7896
    %8168 = vmatprep.subr.mxu0 %v7899
    %8169 = vmatpush1.msra.mxu0 %v7898
    %8170 = vmatprep.subr.mxu0 %v7901
    %8171 = vmatpush1.msra.mxu0 %v7900
    %8172 = vmatprep.subr.mxu0 %v7903
    %8173 = vmatpush1.msra.mxu0 %v7902
    %8174 = vmatprep.subr.mxu0 %v7905
    %8175 = vmatpush1.msra.mxu0 %v7904
    %8176 = vmatprep.subr.mxu0 %v7907
    %8177 = vmatpush1.msra.mxu0 %v7906
    %8178 = vmatprep.subr.mxu0 %v7909
    %8179 = vmatpush1.msra.mxu0 %v7908
    %8180 = vmatprep.subr.mxu0 %v7911
    %8181 = vmatpush1.msra.mxu0 %v7910
    %8182 = vmatprep.subr.mxu0 %v7913
    %8183 = vmatpush1.msra.mxu0 %v7912
    %8184 = vmatprep.subr.mxu0 %v7915
    %8185 = vmatpush1.msra.mxu0 %v7914
    %8186 = vmatprep.subr.mxu0 %v7917
    %8187 = vmatpush1.msra.mxu0 %v7916
    %8188 = vmatprep.subr.mxu0 %v7919
    %8189 = vmatpush1.msra.mxu0 %v7918
    %8190 = vmatprep.subr.mxu0 %v7921
    %8191 = vmatpush1.msra.mxu0 %v7920
    %8192 = vmatprep.subr.mxu0 %v7923
    %8193 = vmatpush1.msra.mxu0 %v7922
    %8194 = vmatprep.subr.mxu0 %v7925
    %8195 = vmatpush1.msra.mxu0 %v7924
    %8196 = vmatprep.subr.mxu0 %v7927
    %8197 = vmatpush1.msra.mxu0 %v7926
    %8198 = vmatprep.subr.mxu0 %v7929
    %8199 = vmatpush1.msra.mxu0 %v7928
    %8200 = vmatprep.mubr.f32.mxu0 %v7734
    %8201 = vmatmul.mubr.f32.gmra.mrb[0].mxu0 %v7733
    %v8202 = vpop.f32.mrb[0].mxu0
    %v8203 = vadd.f32 %v8132, %v8202
    %v8204 = vpop.f32.mrb[0].mxu0
    %v8205 = vadd.f32 %v8134, %v8204
    %8206 = vdwg.mxu0
    %8207 = vmatprep.subr.mxu0 %v7931
    %8208 = vmatpush1.msra.mxu0 %v7930
    %8209 = vmatprep.subr.mxu0 %v7933
    %8210 = vmatpush1.msra.mxu0 %v7932
    %8211 = vmatprep.subr.mxu0 %v7935
    %8212 = vmatpush1.msra.mxu0 %v7934
    %8213 = vmatprep.subr.mxu0 %v7937
    %8214 = vmatpush1.msra.mxu0 %v7936
    %8215 = vmatprep.subr.mxu0 %v7939
    %8216 = vmatpush1.msra.mxu0 %v7938
    %8217 = vmatprep.subr.mxu0 %v7941
    %8218 = vmatpush1.msra.mxu0 %v7940
    %8219 = vmatprep.subr.mxu0 %v7943
    %8220 = vmatpush1.msra.mxu0 %v7942
    %8221 = vmatprep.subr.mxu0 %v7945
    %8222 = vmatpush1.msra.mxu0 %v7944
    %8223 = vmatprep.subr.mxu0 %v7947
    %8224 = vmatpush1.msra.mxu0 %v7946
    %8225 = vmatprep.subr.mxu0 %v7949
    %8226 = vmatpush1.msra.mxu0 %v7948
    %8227 = vmatprep.subr.mxu0 %v7951
    %8228 = vmatpush1.msra.mxu0 %v7950
    %8229 = vmatprep.subr.mxu0 %v7953
    %8230 = vmatpush1.msra.mxu0 %v7952
    %8231 = vmatprep.subr.mxu0 %v7955
    %8232 = vmatpush1.msra.mxu0 %v7954
    %8233 = vmatprep.subr.mxu0 %v7957
    %8234 = vmatpush1.msra.mxu0 %v7956
    %8235 = vmatprep.subr.mxu0 %v7959
    %8236 = vmatpush1.msra.mxu0 %v7958
    %8237 = vmatprep.subr.mxu0 %v7961
    %8238 = vmatpush1.msra.mxu0 %v7960
    %8239 = vmatprep.subr.mxu0 %v7963
    %8240 = vmatpush1.msra.mxu0 %v7962
    %8241 = vmatprep.subr.mxu0 %v7965
    %8242 = vmatpush1.msra.mxu0 %v7964
    %8243 = vmatprep.subr.mxu0 %v7967
    %8244 = vmatpush1.msra.mxu0 %v7966
    %8245 = vmatprep.subr.mxu0 %v7969
    %8246 = vmatpush1.msra.mxu0 %v7968
    %8247 = vmatprep.subr.mxu0 %v7971
    %8248 = vmatpush1.msra.mxu0 %v7970
    %8249 = vmatprep.subr.mxu0 %v7973
    %8250 = vmatpush1.msra.mxu0 %v7972
    %8251 = vmatprep.subr.mxu0 %v7975
    %8252 = vmatpush1.msra.mxu0 %v7974
    %8253 = vmatprep.subr.mxu0 %v7977
    %8254 = vmatpush1.msra.mxu0 %v7976
    %8255 = vmatprep.subr.mxu0 %v7979
    %8256 = vmatpush1.msra.mxu0 %v7978
    %8257 = vmatprep.subr.mxu0 %v7981
    %8258 = vmatpush1.msra.mxu0 %v7980
    %8259 = vmatprep.subr.mxu0 %v7983
    %8260 = vmatpush1.msra.mxu0 %v7982
    %8261 = vmatprep.subr.mxu0 %v7985
    %8262 = vmatpush1.msra.mxu0 %v7984
    %8263 = vmatprep.subr.mxu0 %v7987
    %8264 = vmatpush1.msra.mxu0 %v7986
    %8265 = vmatprep.subr.mxu0 %v7989
    %8266 = vmatpush1.msra.mxu0 %v7988
    %8267 = vmatprep.subr.mxu0 %v7991
    %8268 = vmatpush1.msra.mxu0 %v7990
    %8269 = vmatprep.subr.mxu0 %v7993
    %8270 = vmatpush1.msra.mxu0 %v7992
    %8271 = vmatprep.mubr.f32.mxu0 %v7736
    %8272 = vmatmul.mubr.f32.gmra.mrb[0].mxu0 %v7735
    %v8273 = vpop.f32.mrb[0].mxu0
    %v8274 = vadd.f32 %v8203, %v8273
    %v8275 = vpop.f32.mrb[0].mxu0
    %v8276 = vadd.f32 %v8205, %v8275
    %8277 = vdwg.mxu0
    %v8278 = vadd.f32 %v7726, %v8274
    %v8279 = vadd.f32 %v7727, %v8276
    %8280 = vst [vmem:[#allocation3] sm:$0xff] %v8278
    %8281 = vst [vmem:[#allocation3 + $0x8] sm:$0xff] %v8279
    %v8282 = vld [vmem:[#allocation3] sm:$0xff]
    %v8283 = vld [vmem:[#allocation3 + $0x8] sm:$0xff]
    %s8284 = scalar_lea.vmem [#allocation2], 512
    %v8285 = vld [vmem:[%s8284] sm:$0xff]
    %v8286 = vld [vmem:[%s8284 + $0x8] sm:$0xff]
    %v8287 = vld [vmem:[%s8284 + $0x10] sm:$0xff]
    %v8288 = vld [vmem:[%s8284 + $0x18] sm:$0xff]
    %v8289 = vld [vmem:[%s8284 + $0x20] sm:$0xff]
    %v8290 = vld [vmem:[%s8284 + $0x28] sm:$0xff]
    %v8291 = vld [vmem:[%s8284 + $0x30] sm:$0xff]
    %v8292 = vld [vmem:[%s8284 + $0x38] sm:$0xff]
    %s8293 = scalar_lea.vmem [#allocation14], 16384
    %v8294 = vld [vmem:[%s8293] sm:$0xff]
    %v8295 = vld [vmem:[%s8293 + $0x8] sm:$0xff]
    %v8296 = vld [vmem:[%s8293 + $0x10] sm:$0xff]
    %v8297 = vld [vmem:[%s8293 + $0x18] sm:$0xff]
    %v8298 = vld [vmem:[%s8293 + $0x20] sm:$0xff]
    %v8299 = vld [vmem:[%s8293 + $0x28] sm:$0xff]
    %v8300 = vld [vmem:[%s8293 + $0x30] sm:$0xff]
    %v8301 = vld [vmem:[%s8293 + $0x38] sm:$0xff]
    %v8302 = vld [vmem:[%s8293 + $0x40] sm:$0xff]
    %v8303 = vld [vmem:[%s8293 + $0x48] sm:$0xff]
    %v8304 = vld [vmem:[%s8293 + $0x50] sm:$0xff]
    %v8305 = vld [vmem:[%s8293 + $0x58] sm:$0xff]
    %v8306 = vld [vmem:[%s8293 + $0x60] sm:$0xff]
    %v8307 = vld [vmem:[%s8293 + $0x68] sm:$0xff]
    %v8308 = vld [vmem:[%s8293 + $0x70] sm:$0xff]
    %v8309 = vld [vmem:[%s8293 + $0x78] sm:$0xff]
    %v8310 = vld [vmem:[%s8293 + $0x80] sm:$0xff]
    %v8311 = vld [vmem:[%s8293 + $0x88] sm:$0xff]
    %v8312 = vld [vmem:[%s8293 + $0x90] sm:$0xff]
    %v8313 = vld [vmem:[%s8293 + $0x98] sm:$0xff]
    %v8314 = vld [vmem:[%s8293 + $0xa0] sm:$0xff]
    %v8315 = vld [vmem:[%s8293 + $0xa8] sm:$0xff]
    %v8316 = vld [vmem:[%s8293 + $0xb0] sm:$0xff]
    %v8317 = vld [vmem:[%s8293 + $0xb8] sm:$0xff]
    %v8318 = vld [vmem:[%s8293 + $0xc0] sm:$0xff]
    %v8319 = vld [vmem:[%s8293 + $0xc8] sm:$0xff]
    %v8320 = vld [vmem:[%s8293 + $0xd0] sm:$0xff]
    %v8321 = vld [vmem:[%s8293 + $0xd8] sm:$0xff]
    %v8322 = vld [vmem:[%s8293 + $0xe0] sm:$0xff]
    %v8323 = vld [vmem:[%s8293 + $0xe8] sm:$0xff]
    %v8324 = vld [vmem:[%s8293 + $0xf0] sm:$0xff]
    %v8325 = vld [vmem:[%s8293 + $0xf8] sm:$0xff]
    %v8326 = vld [vmem:[%s8293 + $0x100] sm:$0xff]
    %v8327 = vld [vmem:[%s8293 + $0x108] sm:$0xff]
    %v8328 = vld [vmem:[%s8293 + $0x110] sm:$0xff]
    %v8329 = vld [vmem:[%s8293 + $0x118] sm:$0xff]
    %v8330 = vld [vmem:[%s8293 + $0x120] sm:$0xff]
    %v8331 = vld [vmem:[%s8293 + $0x128] sm:$0xff]
    %v8332 = vld [vmem:[%s8293 + $0x130] sm:$0xff]
    %v8333 = vld [vmem:[%s8293 + $0x138] sm:$0xff]
    %v8334 = vld [vmem:[%s8293 + $0x140] sm:$0xff]
    %v8335 = vld [vmem:[%s8293 + $0x148] sm:$0xff]
    %v8336 = vld [vmem:[%s8293 + $0x150] sm:$0xff]
    %v8337 = vld [vmem:[%s8293 + $0x158] sm:$0xff]
    %v8338 = vld [vmem:[%s8293 + $0x160] sm:$0xff]
    %v8339 = vld [vmem:[%s8293 + $0x168] sm:$0xff]
    %v8340 = vld [vmem:[%s8293 + $0x170] sm:$0xff]
    %v8341 = vld [vmem:[%s8293 + $0x178] sm:$0xff]
    %v8342 = vld [vmem:[%s8293 + $0x180] sm:$0xff]
    %v8343 = vld [vmem:[%s8293 + $0x188] sm:$0xff]
    %v8344 = vld [vmem:[%s8293 + $0x190] sm:$0xff]
    %v8345 = vld [vmem:[%s8293 + $0x198] sm:$0xff]
    %v8346 = vld [vmem:[%s8293 + $0x1a0] sm:$0xff]
    %v8347 = vld [vmem:[%s8293 + $0x1a8] sm:$0xff]
    %v8348 = vld [vmem:[%s8293 + $0x1b0] sm:$0xff]
    %v8349 = vld [vmem:[%s8293 + $0x1b8] sm:$0xff]
    %v8350 = vld [vmem:[%s8293 + $0x1c0] sm:$0xff]
    %v8351 = vld [vmem:[%s8293 + $0x1c8] sm:$0xff]
    %v8352 = vld [vmem:[%s8293 + $0x1d0] sm:$0xff]
    %v8353 = vld [vmem:[%s8293 + $0x1d8] sm:$0xff]
    %v8354 = vld [vmem:[%s8293 + $0x1e0] sm:$0xff]
    %v8355 = vld [vmem:[%s8293 + $0x1e8] sm:$0xff]
    %v8356 = vld [vmem:[%s8293 + $0x1f0] sm:$0xff]
    %v8357 = vld [vmem:[%s8293 + $0x1f8] sm:$0xff]
    %v8358 = vld [vmem:[%s8293 + $0x200] sm:$0xff]
    %v8359 = vld [vmem:[%s8293 + $0x208] sm:$0xff]
    %v8360 = vld [vmem:[%s8293 + $0x210] sm:$0xff]
    %v8361 = vld [vmem:[%s8293 + $0x218] sm:$0xff]
    %v8362 = vld [vmem:[%s8293 + $0x220] sm:$0xff]
    %v8363 = vld [vmem:[%s8293 + $0x228] sm:$0xff]
    %v8364 = vld [vmem:[%s8293 + $0x230] sm:$0xff]
    %v8365 = vld [vmem:[%s8293 + $0x238] sm:$0xff]
    %v8366 = vld [vmem:[%s8293 + $0x240] sm:$0xff]
    %v8367 = vld [vmem:[%s8293 + $0x248] sm:$0xff]
    %v8368 = vld [vmem:[%s8293 + $0x250] sm:$0xff]
    %v8369 = vld [vmem:[%s8293 + $0x258] sm:$0xff]
    %v8370 = vld [vmem:[%s8293 + $0x260] sm:$0xff]
    %v8371 = vld [vmem:[%s8293 + $0x268] sm:$0xff]
    %v8372 = vld [vmem:[%s8293 + $0x270] sm:$0xff]
    %v8373 = vld [vmem:[%s8293 + $0x278] sm:$0xff]
    %v8374 = vld [vmem:[%s8293 + $0x280] sm:$0xff]
    %v8375 = vld [vmem:[%s8293 + $0x288] sm:$0xff]
    %v8376 = vld [vmem:[%s8293 + $0x290] sm:$0xff]
    %v8377 = vld [vmem:[%s8293 + $0x298] sm:$0xff]
    %v8378 = vld [vmem:[%s8293 + $0x2a0] sm:$0xff]
    %v8379 = vld [vmem:[%s8293 + $0x2a8] sm:$0xff]
    %v8380 = vld [vmem:[%s8293 + $0x2b0] sm:$0xff]
    %v8381 = vld [vmem:[%s8293 + $0x2b8] sm:$0xff]
    %v8382 = vld [vmem:[%s8293 + $0x2c0] sm:$0xff]
    %v8383 = vld [vmem:[%s8293 + $0x2c8] sm:$0xff]
    %v8384 = vld [vmem:[%s8293 + $0x2d0] sm:$0xff]
    %v8385 = vld [vmem:[%s8293 + $0x2d8] sm:$0xff]
    %v8386 = vld [vmem:[%s8293 + $0x2e0] sm:$0xff]
    %v8387 = vld [vmem:[%s8293 + $0x2e8] sm:$0xff]
    %v8388 = vld [vmem:[%s8293 + $0x2f0] sm:$0xff]
    %v8389 = vld [vmem:[%s8293 + $0x2f8] sm:$0xff]
    %v8390 = vld [vmem:[%s8293 + $0x300] sm:$0xff]
    %v8391 = vld [vmem:[%s8293 + $0x308] sm:$0xff]
    %v8392 = vld [vmem:[%s8293 + $0x310] sm:$0xff]
    %v8393 = vld [vmem:[%s8293 + $0x318] sm:$0xff]
    %v8394 = vld [vmem:[%s8293 + $0x320] sm:$0xff]
    %v8395 = vld [vmem:[%s8293 + $0x328] sm:$0xff]
    %v8396 = vld [vmem:[%s8293 + $0x330] sm:$0xff]
    %v8397 = vld [vmem:[%s8293 + $0x338] sm:$0xff]
    %v8398 = vld [vmem:[%s8293 + $0x340] sm:$0xff]
    %v8399 = vld [vmem:[%s8293 + $0x348] sm:$0xff]
    %v8400 = vld [vmem:[%s8293 + $0x350] sm:$0xff]
    %v8401 = vld [vmem:[%s8293 + $0x358] sm:$0xff]
    %v8402 = vld [vmem:[%s8293 + $0x360] sm:$0xff]
    %v8403 = vld [vmem:[%s8293 + $0x368] sm:$0xff]
    %v8404 = vld [vmem:[%s8293 + $0x370] sm:$0xff]
    %v8405 = vld [vmem:[%s8293 + $0x378] sm:$0xff]
    %v8406 = vld [vmem:[%s8293 + $0x380] sm:$0xff]
    %v8407 = vld [vmem:[%s8293 + $0x388] sm:$0xff]
    %v8408 = vld [vmem:[%s8293 + $0x390] sm:$0xff]
    %v8409 = vld [vmem:[%s8293 + $0x398] sm:$0xff]
    %v8410 = vld [vmem:[%s8293 + $0x3a0] sm:$0xff]
    %v8411 = vld [vmem:[%s8293 + $0x3a8] sm:$0xff]
    %v8412 = vld [vmem:[%s8293 + $0x3b0] sm:$0xff]
    %v8413 = vld [vmem:[%s8293 + $0x3b8] sm:$0xff]
    %v8414 = vld [vmem:[%s8293 + $0x3c0] sm:$0xff]
    %v8415 = vld [vmem:[%s8293 + $0x3c8] sm:$0xff]
    %v8416 = vld [vmem:[%s8293 + $0x3d0] sm:$0xff]
    %v8417 = vld [vmem:[%s8293 + $0x3d8] sm:$0xff]
    %v8418 = vld [vmem:[%s8293 + $0x3e0] sm:$0xff]
    %v8419 = vld [vmem:[%s8293 + $0x3e8] sm:$0xff]
    %v8420 = vld [vmem:[%s8293 + $0x3f0] sm:$0xff]
    %v8421 = vld [vmem:[%s8293 + $0x3f8] sm:$0xff]
    %v8422 = vld [vmem:[%s8293 + $0x400] sm:$0xff]
    %v8423 = vld [vmem:[%s8293 + $0x408] sm:$0xff]
    %v8424 = vld [vmem:[%s8293 + $0x410] sm:$0xff]
    %v8425 = vld [vmem:[%s8293 + $0x418] sm:$0xff]
    %v8426 = vld [vmem:[%s8293 + $0x420] sm:$0xff]
    %v8427 = vld [vmem:[%s8293 + $0x428] sm:$0xff]
    %v8428 = vld [vmem:[%s8293 + $0x430] sm:$0xff]
    %v8429 = vld [vmem:[%s8293 + $0x438] sm:$0xff]
    %v8430 = vld [vmem:[%s8293 + $0x440] sm:$0xff]
    %v8431 = vld [vmem:[%s8293 + $0x448] sm:$0xff]
    %v8432 = vld [vmem:[%s8293 + $0x450] sm:$0xff]
    %v8433 = vld [vmem:[%s8293 + $0x458] sm:$0xff]
    %v8434 = vld [vmem:[%s8293 + $0x460] sm:$0xff]
    %v8435 = vld [vmem:[%s8293 + $0x468] sm:$0xff]
    %v8436 = vld [vmem:[%s8293 + $0x470] sm:$0xff]
    %v8437 = vld [vmem:[%s8293 + $0x478] sm:$0xff]
    %v8438 = vld [vmem:[%s8293 + $0x480] sm:$0xff]
    %v8439 = vld [vmem:[%s8293 + $0x488] sm:$0xff]
    %v8440 = vld [vmem:[%s8293 + $0x490] sm:$0xff]
    %v8441 = vld [vmem:[%s8293 + $0x498] sm:$0xff]
    %v8442 = vld [vmem:[%s8293 + $0x4a0] sm:$0xff]
    %v8443 = vld [vmem:[%s8293 + $0x4a8] sm:$0xff]
    %v8444 = vld [vmem:[%s8293 + $0x4b0] sm:$0xff]
    %v8445 = vld [vmem:[%s8293 + $0x4b8] sm:$0xff]
    %v8446 = vld [vmem:[%s8293 + $0x4c0] sm:$0xff]
    %v8447 = vld [vmem:[%s8293 + $0x4c8] sm:$0xff]
    %v8448 = vld [vmem:[%s8293 + $0x4d0] sm:$0xff]
    %v8449 = vld [vmem:[%s8293 + $0x4d8] sm:$0xff]
    %v8450 = vld [vmem:[%s8293 + $0x4e0] sm:$0xff]
    %v8451 = vld [vmem:[%s8293 + $0x4e8] sm:$0xff]
    %v8452 = vld [vmem:[%s8293 + $0x4f0] sm:$0xff]
    %v8453 = vld [vmem:[%s8293 + $0x4f8] sm:$0xff]
    %v8454 = vld [vmem:[%s8293 + $0x500] sm:$0xff]
    %v8455 = vld [vmem:[%s8293 + $0x508] sm:$0xff]
    %v8456 = vld [vmem:[%s8293 + $0x510] sm:$0xff]
    %v8457 = vld [vmem:[%s8293 + $0x518] sm:$0xff]
    %v8458 = vld [vmem:[%s8293 + $0x520] sm:$0xff]
    %v8459 = vld [vmem:[%s8293 + $0x528] sm:$0xff]
    %v8460 = vld [vmem:[%s8293 + $0x530] sm:$0xff]
    %v8461 = vld [vmem:[%s8293 + $0x538] sm:$0xff]
    %v8462 = vld [vmem:[%s8293 + $0x540] sm:$0xff]
    %v8463 = vld [vmem:[%s8293 + $0x548] sm:$0xff]
    %v8464 = vld [vmem:[%s8293 + $0x550] sm:$0xff]
    %v8465 = vld [vmem:[%s8293 + $0x558] sm:$0xff]
    %v8466 = vld [vmem:[%s8293 + $0x560] sm:$0xff]
    %v8467 = vld [vmem:[%s8293 + $0x568] sm:$0xff]
    %v8468 = vld [vmem:[%s8293 + $0x570] sm:$0xff]
    %v8469 = vld [vmem:[%s8293 + $0x578] sm:$0xff]
    %v8470 = vld [vmem:[%s8293 + $0x580] sm:$0xff]
    %v8471 = vld [vmem:[%s8293 + $0x588] sm:$0xff]
    %v8472 = vld [vmem:[%s8293 + $0x590] sm:$0xff]
    %v8473 = vld [vmem:[%s8293 + $0x598] sm:$0xff]
    %v8474 = vld [vmem:[%s8293 + $0x5a0] sm:$0xff]
    %v8475 = vld [vmem:[%s8293 + $0x5a8] sm:$0xff]
    %v8476 = vld [vmem:[%s8293 + $0x5b0] sm:$0xff]
    %v8477 = vld [vmem:[%s8293 + $0x5b8] sm:$0xff]
    %v8478 = vld [vmem:[%s8293 + $0x5c0] sm:$0xff]
    %v8479 = vld [vmem:[%s8293 + $0x5c8] sm:$0xff]
    %v8480 = vld [vmem:[%s8293 + $0x5d0] sm:$0xff]
    %v8481 = vld [vmem:[%s8293 + $0x5d8] sm:$0xff]
    %v8482 = vld [vmem:[%s8293 + $0x5e0] sm:$0xff]
    %v8483 = vld [vmem:[%s8293 + $0x5e8] sm:$0xff]
    %v8484 = vld [vmem:[%s8293 + $0x5f0] sm:$0xff]
    %v8485 = vld [vmem:[%s8293 + $0x5f8] sm:$0xff]
    %v8486 = vld [vmem:[%s8293 + $0x600] sm:$0xff]
    %v8487 = vld [vmem:[%s8293 + $0x608] sm:$0xff]
    %v8488 = vld [vmem:[%s8293 + $0x610] sm:$0xff]
    %v8489 = vld [vmem:[%s8293 + $0x618] sm:$0xff]
    %v8490 = vld [vmem:[%s8293 + $0x620] sm:$0xff]
    %v8491 = vld [vmem:[%s8293 + $0x628] sm:$0xff]
    %v8492 = vld [vmem:[%s8293 + $0x630] sm:$0xff]
    %v8493 = vld [vmem:[%s8293 + $0x638] sm:$0xff]
    %v8494 = vld [vmem:[%s8293 + $0x640] sm:$0xff]
    %v8495 = vld [vmem:[%s8293 + $0x648] sm:$0xff]
    %v8496 = vld [vmem:[%s8293 + $0x650] sm:$0xff]
    %v8497 = vld [vmem:[%s8293 + $0x658] sm:$0xff]
    %v8498 = vld [vmem:[%s8293 + $0x660] sm:$0xff]
    %v8499 = vld [vmem:[%s8293 + $0x668] sm:$0xff]
    %v8500 = vld [vmem:[%s8293 + $0x670] sm:$0xff]
    %v8501 = vld [vmem:[%s8293 + $0x678] sm:$0xff]
    %v8502 = vld [vmem:[%s8293 + $0x680] sm:$0xff]
    %v8503 = vld [vmem:[%s8293 + $0x688] sm:$0xff]
    %v8504 = vld [vmem:[%s8293 + $0x690] sm:$0xff]
    %v8505 = vld [vmem:[%s8293 + $0x698] sm:$0xff]
    %v8506 = vld [vmem:[%s8293 + $0x6a0] sm:$0xff]
    %v8507 = vld [vmem:[%s8293 + $0x6a8] sm:$0xff]
    %v8508 = vld [vmem:[%s8293 + $0x6b0] sm:$0xff]
    %v8509 = vld [vmem:[%s8293 + $0x6b8] sm:$0xff]
    %v8510 = vld [vmem:[%s8293 + $0x6c0] sm:$0xff]
    %v8511 = vld [vmem:[%s8293 + $0x6c8] sm:$0xff]
    %v8512 = vld [vmem:[%s8293 + $0x6d0] sm:$0xff]
    %v8513 = vld [vmem:[%s8293 + $0x6d8] sm:$0xff]
    %v8514 = vld [vmem:[%s8293 + $0x6e0] sm:$0xff]
    %v8515 = vld [vmem:[%s8293 + $0x6e8] sm:$0xff]
    %v8516 = vld [vmem:[%s8293 + $0x6f0] sm:$0xff]
    %v8517 = vld [vmem:[%s8293 + $0x6f8] sm:$0xff]
    %v8518 = vld [vmem:[%s8293 + $0x700] sm:$0xff]
    %v8519 = vld [vmem:[%s8293 + $0x708] sm:$0xff]
    %v8520 = vld [vmem:[%s8293 + $0x710] sm:$0xff]
    %v8521 = vld [vmem:[%s8293 + $0x718] sm:$0xff]
    %v8522 = vld [vmem:[%s8293 + $0x720] sm:$0xff]
    %v8523 = vld [vmem:[%s8293 + $0x728] sm:$0xff]
    %v8524 = vld [vmem:[%s8293 + $0x730] sm:$0xff]
    %v8525 = vld [vmem:[%s8293 + $0x738] sm:$0xff]
    %v8526 = vld [vmem:[%s8293 + $0x740] sm:$0xff]
    %v8527 = vld [vmem:[%s8293 + $0x748] sm:$0xff]
    %v8528 = vld [vmem:[%s8293 + $0x750] sm:$0xff]
    %v8529 = vld [vmem:[%s8293 + $0x758] sm:$0xff]
    %v8530 = vld [vmem:[%s8293 + $0x760] sm:$0xff]
    %v8531 = vld [vmem:[%s8293 + $0x768] sm:$0xff]
    %v8532 = vld [vmem:[%s8293 + $0x770] sm:$0xff]
    %v8533 = vld [vmem:[%s8293 + $0x778] sm:$0xff]
    %v8534 = vld [vmem:[%s8293 + $0x780] sm:$0xff]
    %v8535 = vld [vmem:[%s8293 + $0x788] sm:$0xff]
    %v8536 = vld [vmem:[%s8293 + $0x790] sm:$0xff]
    %v8537 = vld [vmem:[%s8293 + $0x798] sm:$0xff]
    %v8538 = vld [vmem:[%s8293 + $0x7a0] sm:$0xff]
    %v8539 = vld [vmem:[%s8293 + $0x7a8] sm:$0xff]
    %v8540 = vld [vmem:[%s8293 + $0x7b0] sm:$0xff]
    %v8541 = vld [vmem:[%s8293 + $0x7b8] sm:$0xff]
    %v8542 = vld [vmem:[%s8293 + $0x7c0] sm:$0xff]
    %v8543 = vld [vmem:[%s8293 + $0x7c8] sm:$0xff]
    %v8544 = vld [vmem:[%s8293 + $0x7d0] sm:$0xff]
    %v8545 = vld [vmem:[%s8293 + $0x7d8] sm:$0xff]
    %v8546 = vld [vmem:[%s8293 + $0x7e0] sm:$0xff]
    %v8547 = vld [vmem:[%s8293 + $0x7e8] sm:$0xff]
    %v8548 = vld [vmem:[%s8293 + $0x7f0] sm:$0xff]
    %v8549 = vld [vmem:[%s8293 + $0x7f8] sm:$0xff]
    %8550 = vmatprep.subr.mxu0 %v8295
    %8551 = vmatpush1.msra.mxu0 %v8294
    %8552 = vmatprep.subr.mxu0 %v8297
    %8553 = vmatpush1.msra.mxu0 %v8296
    %8554 = vmatprep.subr.mxu0 %v8299
    %8555 = vmatpush1.msra.mxu0 %v8298
    %8556 = vmatprep.subr.mxu0 %v8301
    %8557 = vmatpush1.msra.mxu0 %v8300
    %8558 = vmatprep.subr.mxu0 %v8303
    %8559 = vmatpush1.msra.mxu0 %v8302
    %8560 = vmatprep.subr.mxu0 %v8305
    %8561 = vmatpush1.msra.mxu0 %v8304
    %8562 = vmatprep.subr.mxu0 %v8307
    %8563 = vmatpush1.msra.mxu0 %v8306
    %8564 = vmatprep.subr.mxu0 %v8309
    %8565 = vmatpush1.msra.mxu0 %v8308
    %8566 = vmatprep.subr.mxu0 %v8311
    %8567 = vmatpush1.msra.mxu0 %v8310
    %8568 = vmatprep.subr.mxu0 %v8313
    %8569 = vmatpush1.msra.mxu0 %v8312
    %8570 = vmatprep.subr.mxu0 %v8315
    %8571 = vmatpush1.msra.mxu0 %v8314
    %8572 = vmatprep.subr.mxu0 %v8317
    %8573 = vmatpush1.msra.mxu0 %v8316
    %8574 = vmatprep.subr.mxu0 %v8319
    %8575 = vmatpush1.msra.mxu0 %v8318
    %8576 = vmatprep.subr.mxu0 %v8321
    %8577 = vmatpush1.msra.mxu0 %v8320
    %8578 = vmatprep.subr.mxu0 %v8323
    %8579 = vmatpush1.msra.mxu0 %v8322
    %8580 = vmatprep.subr.mxu0 %v8325
    %8581 = vmatpush1.msra.mxu0 %v8324
    %8582 = vmatprep.subr.mxu0 %v8327
    %8583 = vmatpush1.msra.mxu0 %v8326
    %8584 = vmatprep.subr.mxu0 %v8329
    %8585 = vmatpush1.msra.mxu0 %v8328
    %8586 = vmatprep.subr.mxu0 %v8331
    %8587 = vmatpush1.msra.mxu0 %v8330
    %8588 = vmatprep.subr.mxu0 %v8333
    %8589 = vmatpush1.msra.mxu0 %v8332
    %8590 = vmatprep.subr.mxu0 %v8335
    %8591 = vmatpush1.msra.mxu0 %v8334
    %8592 = vmatprep.subr.mxu0 %v8337
    %8593 = vmatpush1.msra.mxu0 %v8336
    %8594 = vmatprep.subr.mxu0 %v8339
    %8595 = vmatpush1.msra.mxu0 %v8338
    %8596 = vmatprep.subr.mxu0 %v8341
    %8597 = vmatpush1.msra.mxu0 %v8340
    %8598 = vmatprep.subr.mxu0 %v8343
    %8599 = vmatpush1.msra.mxu0 %v8342
    %8600 = vmatprep.subr.mxu0 %v8345
    %8601 = vmatpush1.msra.mxu0 %v8344
    %8602 = vmatprep.subr.mxu0 %v8347
    %8603 = vmatpush1.msra.mxu0 %v8346
    %8604 = vmatprep.subr.mxu0 %v8349
    %8605 = vmatpush1.msra.mxu0 %v8348
    %8606 = vmatprep.subr.mxu0 %v8351
    %8607 = vmatpush1.msra.mxu0 %v8350
    %8608 = vmatprep.subr.mxu0 %v8353
    %8609 = vmatpush1.msra.mxu0 %v8352
    %8610 = vmatprep.subr.mxu0 %v8355
    %8611 = vmatpush1.msra.mxu0 %v8354
    %8612 = vmatprep.subr.mxu0 %v8357
    %8613 = vmatpush1.msra.mxu0 %v8356
    %8614 = vmatprep.mubr.f32.mxu0 %v8286
    %8615 = vmatmul.mubr.f32.gmra.mrb[0].mxu0 %v8285
    %v8616 = vpop.f32.mrb[0].mxu0
    %v8617 = vadd.f32 0.0, %v8616
    %v8618 = vpop.f32.mrb[0].mxu0
    %v8619 = vadd.f32 0.0, %v8618
    %8620 = vdwg.mxu0
    %8621 = vmatprep.subr.mxu0 %v8359
    %8622 = vmatpush1.msra.mxu0 %v8358
    %8623 = vmatprep.subr.mxu0 %v8361
    %8624 = vmatpush1.msra.mxu0 %v8360
    %8625 = vmatprep.subr.mxu0 %v8363
    %8626 = vmatpush1.msra.mxu0 %v8362
    %8627 = vmatprep.subr.mxu0 %v8365
    %8628 = vmatpush1.msra.mxu0 %v8364
    %8629 = vmatprep.subr.mxu0 %v8367
    %8630 = vmatpush1.msra.mxu0 %v8366
    %8631 = vmatprep.subr.mxu0 %v8369
    %8632 = vmatpush1.msra.mxu0 %v8368
    %8633 = vmatprep.subr.mxu0 %v8371
    %8634 = vmatpush1.msra.mxu0 %v8370
    %8635 = vmatprep.subr.mxu0 %v8373
    %8636 = vmatpush1.msra.mxu0 %v8372
    %8637 = vmatprep.subr.mxu0 %v8375
    %8638 = vmatpush1.msra.mxu0 %v8374
    %8639 = vmatprep.subr.mxu0 %v8377
    %8640 = vmatpush1.msra.mxu0 %v8376
    %8641 = vmatprep.subr.mxu0 %v8379
    %8642 = vmatpush1.msra.mxu0 %v8378
    %8643 = vmatprep.subr.mxu0 %v8381
    %8644 = vmatpush1.msra.mxu0 %v8380
    %8645 = vmatprep.subr.mxu0 %v8383
    %8646 = vmatpush1.msra.mxu0 %v8382
    %8647 = vmatprep.subr.mxu0 %v8385
    %8648 = vmatpush1.msra.mxu0 %v8384
    %8649 = vmatprep.subr.mxu0 %v8387
    %8650 = vmatpush1.msra.mxu0 %v8386
    %8651 = vmatprep.subr.mxu0 %v8389
    %8652 = vmatpush1.msra.mxu0 %v8388
    %8653 = vmatprep.subr.mxu0 %v8391
    %8654 = vmatpush1.msra.mxu0 %v8390
    %8655 = vmatprep.subr.mxu0 %v8393
    %8656 = vmatpush1.msra.mxu0 %v8392
    %8657 = vmatprep.subr.mxu0 %v8395
    %8658 = vmatpush1.msra.mxu0 %v8394
    %8659 = vmatprep.subr.mxu0 %v8397
    %8660 = vmatpush1.msra.mxu0 %v8396
    %8661 = vmatprep.subr.mxu0 %v8399
    %8662 = vmatpush1.msra.mxu0 %v8398
    %8663 = vmatprep.subr.mxu0 %v8401
    %8664 = vmatpush1.msra.mxu0 %v8400
    %8665 = vmatprep.subr.mxu0 %v8403
    %8666 = vmatpush1.msra.mxu0 %v8402
    %8667 = vmatprep.subr.mxu0 %v8405
    %8668 = vmatpush1.msra.mxu0 %v8404
    %8669 = vmatprep.subr.mxu0 %v8407
    %8670 = vmatpush1.msra.mxu0 %v8406
    %8671 = vmatprep.subr.mxu0 %v8409
    %8672 = vmatpush1.msra.mxu0 %v8408
    %8673 = vmatprep.subr.mxu0 %v8411
    %8674 = vmatpush1.msra.mxu0 %v8410
    %8675 = vmatprep.subr.mxu0 %v8413
    %8676 = vmatpush1.msra.mxu0 %v8412
    %8677 = vmatprep.subr.mxu0 %v8415
    %8678 = vmatpush1.msra.mxu0 %v8414
    %8679 = vmatprep.subr.mxu0 %v8417
    %8680 = vmatpush1.msra.mxu0 %v8416
    %8681 = vmatprep.subr.mxu0 %v8419
    %8682 = vmatpush1.msra.mxu0 %v8418
    %8683 = vmatprep.subr.mxu0 %v8421
    %8684 = vmatpush1.msra.mxu0 %v8420
    %8685 = vmatprep.mubr.f32.mxu0 %v8288
    %8686 = vmatmul.mubr.f32.gmra.mrb[0].mxu0 %v8287
    %v8687 = vpop.f32.mrb[0].mxu0
    %v8688 = vadd.f32 %v8617, %v8687
    %v8689 = vpop.f32.mrb[0].mxu0
    %v8690 = vadd.f32 %v8619, %v8689
    %8691 = vdwg.mxu0
    %8692 = vmatprep.subr.mxu0 %v8423
    %8693 = vmatpush1.msra.mxu0 %v8422
    %8694 = vmatprep.subr.mxu0 %v8425
    %8695 = vmatpush1.msra.mxu0 %v8424
    %8696 = vmatprep.subr.mxu0 %v8427
    %8697 = vmatpush1.msra.mxu0 %v8426
    %8698 = vmatprep.subr.mxu0 %v8429
    %8699 = vmatpush1.msra.mxu0 %v8428
    %8700 = vmatprep.subr.mxu0 %v8431
    %8701 = vmatpush1.msra.mxu0 %v8430
    %8702 = vmatprep.subr.mxu0 %v8433
    %8703 = vmatpush1.msra.mxu0 %v8432
    %8704 = vmatprep.subr.mxu0 %v8435
    %8705 = vmatpush1.msra.mxu0 %v8434
    %8706 = vmatprep.subr.mxu0 %v8437
    %8707 = vmatpush1.msra.mxu0 %v8436
    %8708 = vmatprep.subr.mxu0 %v8439
    %8709 = vmatpush1.msra.mxu0 %v8438
    %8710 = vmatprep.subr.mxu0 %v8441
    %8711 = vmatpush1.msra.mxu0 %v8440
    %8712 = vmatprep.subr.mxu0 %v8443
    %8713 = vmatpush1.msra.mxu0 %v8442
    %8714 = vmatprep.subr.mxu0 %v8445
    %8715 = vmatpush1.msra.mxu0 %v8444
    %8716 = vmatprep.subr.mxu0 %v8447
    %8717 = vmatpush1.msra.mxu0 %v8446
    %8718 = vmatprep.subr.mxu0 %v8449
    %8719 = vmatpush1.msra.mxu0 %v8448
    %8720 = vmatprep.subr.mxu0 %v8451
    %8721 = vmatpush1.msra.mxu0 %v8450
    %8722 = vmatprep.subr.mxu0 %v8453
    %8723 = vmatpush1.msra.mxu0 %v8452
    %8724 = vmatprep.subr.mxu0 %v8455
    %8725 = vmatpush1.msra.mxu0 %v8454
    %8726 = vmatprep.subr.mxu0 %v8457
    %8727 = vmatpush1.msra.mxu0 %v8456
    %8728 = vmatprep.subr.mxu0 %v8459
    %8729 = vmatpush1.msra.mxu0 %v8458
    %8730 = vmatprep.subr.mxu0 %v8461
    %8731 = vmatpush1.msra.mxu0 %v8460
    %8732 = vmatprep.subr.mxu0 %v8463
    %8733 = vmatpush1.msra.mxu0 %v8462
    %8734 = vmatprep.subr.mxu0 %v8465
    %8735 = vmatpush1.msra.mxu0 %v8464
    %8736 = vmatprep.subr.mxu0 %v8467
    %8737 = vmatpush1.msra.mxu0 %v8466
    %8738 = vmatprep.subr.mxu0 %v8469
    %8739 = vmatpush1.msra.mxu0 %v8468
    %8740 = vmatprep.subr.mxu0 %v8471
    %8741 = vmatpush1.msra.mxu0 %v8470
    %8742 = vmatprep.subr.mxu0 %v8473
    %8743 = vmatpush1.msra.mxu0 %v8472
    %8744 = vmatprep.subr.mxu0 %v8475
    %8745 = vmatpush1.msra.mxu0 %v8474
    %8746 = vmatprep.subr.mxu0 %v8477
    %8747 = vmatpush1.msra.mxu0 %v8476
    %8748 = vmatprep.subr.mxu0 %v8479
    %8749 = vmatpush1.msra.mxu0 %v8478
    %8750 = vmatprep.subr.mxu0 %v8481
    %8751 = vmatpush1.msra.mxu0 %v8480
    %8752 = vmatprep.subr.mxu0 %v8483
    %8753 = vmatpush1.msra.mxu0 %v8482
    %8754 = vmatprep.subr.mxu0 %v8485
    %8755 = vmatpush1.msra.mxu0 %v8484
    %8756 = vmatprep.mubr.f32.mxu0 %v8290
    %8757 = vmatmul.mubr.f32.gmra.mrb[0].mxu0 %v8289
    %v8758 = vpop.f32.mrb[0].mxu0
    %v8759 = vadd.f32 %v8688, %v8758
    %v8760 = vpop.f32.mrb[0].mxu0
    %v8761 = vadd.f32 %v8690, %v8760
    %8762 = vdwg.mxu0
    %8763 = vmatprep.subr.mxu0 %v8487
    %8764 = vmatpush1.msra.mxu0 %v8486
    %8765 = vmatprep.subr.mxu0 %v8489
    %8766 = vmatpush1.msra.mxu0 %v8488
    %8767 = vmatprep.subr.mxu0 %v8491
    %8768 = vmatpush1.msra.mxu0 %v8490
    %8769 = vmatprep.subr.mxu0 %v8493
    %8770 = vmatpush1.msra.mxu0 %v8492
    %8771 = vmatprep.subr.mxu0 %v8495
    %8772 = vmatpush1.msra.mxu0 %v8494
    %8773 = vmatprep.subr.mxu0 %v8497
    %8774 = vmatpush1.msra.mxu0 %v8496
    %8775 = vmatprep.subr.mxu0 %v8499
    %8776 = vmatpush1.msra.mxu0 %v8498
    %8777 = vmatprep.subr.mxu0 %v8501
    %8778 = vmatpush1.msra.mxu0 %v8500
    %8779 = vmatprep.subr.mxu0 %v8503
    %8780 = vmatpush1.msra.mxu0 %v8502
    %8781 = vmatprep.subr.mxu0 %v8505
    %8782 = vmatpush1.msra.mxu0 %v8504
    %8783 = vmatprep.subr.mxu0 %v8507
    %8784 = vmatpush1.msra.mxu0 %v8506
    %8785 = vmatprep.subr.mxu0 %v8509
    %8786 = vmatpush1.msra.mxu0 %v8508
    %8787 = vmatprep.subr.mxu0 %v8511
    %8788 = vmatpush1.msra.mxu0 %v8510
    %8789 = vmatprep.subr.mxu0 %v8513
    %8790 = vmatpush1.msra.mxu0 %v8512
    %8791 = vmatprep.subr.mxu0 %v8515
    %8792 = vmatpush1.msra.mxu0 %v8514
    %8793 = vmatprep.subr.mxu0 %v8517
    %8794 = vmatpush1.msra.mxu0 %v8516
    %8795 = vmatprep.subr.mxu0 %v8519
    %8796 = vmatpush1.msra.mxu0 %v8518
    %8797 = vmatprep.subr.mxu0 %v8521
    %8798 = vmatpush1.msra.mxu0 %v8520
    %8799 = vmatprep.subr.mxu0 %v8523
    %8800 = vmatpush1.msra.mxu0 %v8522
    %8801 = vmatprep.subr.mxu0 %v8525
    %8802 = vmatpush1.msra.mxu0 %v8524
    %8803 = vmatprep.subr.mxu0 %v8527
    %8804 = vmatpush1.msra.mxu0 %v8526
    %8805 = vmatprep.subr.mxu0 %v8529
    %8806 = vmatpush1.msra.mxu0 %v8528
    %8807 = vmatprep.subr.mxu0 %v8531
    %8808 = vmatpush1.msra.mxu0 %v8530
    %8809 = vmatprep.subr.mxu0 %v8533
    %8810 = vmatpush1.msra.mxu0 %v8532
    %8811 = vmatprep.subr.mxu0 %v8535
    %8812 = vmatpush1.msra.mxu0 %v8534
    %8813 = vmatprep.subr.mxu0 %v8537
    %8814 = vmatpush1.msra.mxu0 %v8536
    %8815 = vmatprep.subr.mxu0 %v8539
    %8816 = vmatpush1.msra.mxu0 %v8538
    %8817 = vmatprep.subr.mxu0 %v8541
    %8818 = vmatpush1.msra.mxu0 %v8540
    %8819 = vmatprep.subr.mxu0 %v8543
    %8820 = vmatpush1.msra.mxu0 %v8542
    %8821 = vmatprep.subr.mxu0 %v8545
    %8822 = vmatpush1.msra.mxu0 %v8544
    %8823 = vmatprep.subr.mxu0 %v8547
    %8824 = vmatpush1.msra.mxu0 %v8546
    %8825 = vmatprep.subr.mxu0 %v8549
    %8826 = vmatpush1.msra.mxu0 %v8548
    %8827 = vmatprep.mubr.f32.mxu0 %v8292
    %8828 = vmatmul.mubr.f32.gmra.mrb[0].mxu0 %v8291
    %v8829 = vpop.f32.mrb[0].mxu0
    %v8830 = vadd.f32 %v8759, %v8829
    %v8831 = vpop.f32.mrb[0].mxu0
    %v8832 = vadd.f32 %v8761, %v8831
    %8833 = vdwg.mxu0
    %v8834 = vadd.f32 %v8282, %v8830
    %v8835 = vadd.f32 %v8283, %v8832
    %8836 = vst [vmem:[#allocation3] sm:$0xff] %v8834
    %8837 = vst [vmem:[#allocation3 + $0x8] sm:$0xff] %v8835
    %v8838 = vld [vmem:[#allocation3] sm:$0xff]
    %v8839 = vld [vmem:[#allocation3 + $0x8] sm:$0xff]
    %s8840 = scalar_lea.vmem [#allocation2], 576
    %v8841 = vld [vmem:[%s8840] sm:$0xff]
    %v8842 = vld [vmem:[%s8840 + $0x8] sm:$0xff]
    %v8843 = vld [vmem:[%s8840 + $0x10] sm:$0xff]
    %v8844 = vld [vmem:[%s8840 + $0x18] sm:$0xff]
    %v8845 = vld [vmem:[%s8840 + $0x20] sm:$0xff]
    %v8846 = vld [vmem:[%s8840 + $0x28] sm:$0xff]
    %v8847 = vld [vmem:[%s8840 + $0x30] sm:$0xff]
    %v8848 = vld [vmem:[%s8840 + $0x38] sm:$0xff]
    %s8849 = scalar_lea.vmem [#allocation14], 18432
    %v8850 = vld [vmem:[%s8849] sm:$0xff]
    %v8851 = vld [vmem:[%s8849 + $0x8] sm:$0xff]
    %v8852 = vld [vmem:[%s8849 + $0x10] sm:$0xff]
    %v8853 = vld [vmem:[%s8849 + $0x18] sm:$0xff]
    %v8854 = vld [vmem:[%s8849 + $0x20] sm:$0xff]
    %v8855 = vld [vmem:[%s8849 + $0x28] sm:$0xff]
    %v8856 = vld [vmem:[%s8849 + $0x30] sm:$0xff]
    %v8857 = vld [vmem:[%s8849 + $0x38] sm:$0xff]
    %v8858 = vld [vmem:[%s8849 + $0x40] sm:$0xff]
    %v8859 = vld [vmem:[%s8849 + $0x48] sm:$0xff]
    %v8860 = vld [vmem:[%s8849 + $0x50] sm:$0xff]
    %v8861 = vld [vmem:[%s8849 + $0x58] sm:$0xff]
    %v8862 = vld [vmem:[%s8849 + $0x60] sm:$0xff]
    %v8863 = vld [vmem:[%s8849 + $0x68] sm:$0xff]
    %v8864 = vld [vmem:[%s8849 + $0x70] sm:$0xff]
    %v8865 = vld [vmem:[%s8849 + $0x78] sm:$0xff]
    %v8866 = vld [vmem:[%s8849 + $0x80] sm:$0xff]
    %v8867 = vld [vmem:[%s8849 + $0x88] sm:$0xff]
    %v8868 = vld [vmem:[%s8849 + $0x90] sm:$0xff]
    %v8869 = vld [vmem:[%s8849 + $0x98] sm:$0xff]
    %v8870 = vld [vmem:[%s8849 + $0xa0] sm:$0xff]
    %v8871 = vld [vmem:[%s8849 + $0xa8] sm:$0xff]
    %v8872 = vld [vmem:[%s8849 + $0xb0] sm:$0xff]
    %v8873 = vld [vmem:[%s8849 + $0xb8] sm:$0xff]
    %v8874 = vld [vmem:[%s8849 + $0xc0] sm:$0xff]
    %v8875 = vld [vmem:[%s8849 + $0xc8] sm:$0xff]
    %v8876 = vld [vmem:[%s8849 + $0xd0] sm:$0xff]
    %v8877 = vld [vmem:[%s8849 + $0xd8] sm:$0xff]
    %v8878 = vld [vmem:[%s8849 + $0xe0] sm:$0xff]
    %v8879 = vld [vmem:[%s8849 + $0xe8] sm:$0xff]
    %v8880 = vld [vmem:[%s8849 + $0xf0] sm:$0xff]
    %v8881 = vld [vmem:[%s8849 + $0xf8] sm:$0xff]
    %v8882 = vld [vmem:[%s8849 + $0x100] sm:$0xff]
    %v8883 = vld [vmem:[%s8849 + $0x108] sm:$0xff]
    %v8884 = vld [vmem:[%s8849 + $0x110] sm:$0xff]
    %v8885 = vld [vmem:[%s8849 + $0x118] sm:$0xff]
    %v8886 = vld [vmem:[%s8849 + $0x120] sm:$0xff]
    %v8887 = vld [vmem:[%s8849 + $0x128] sm:$0xff]
    %v8888 = vld [vmem:[%s8849 + $0x130] sm:$0xff]
    %v8889 = vld [vmem:[%s8849 + $0x138] sm:$0xff]
    %v8890 = vld [vmem:[%s8849 + $0x140] sm:$0xff]
    %v8891 = vld [vmem:[%s8849 + $0x148] sm:$0xff]
    %v8892 = vld [vmem:[%s8849 + $0x150] sm:$0xff]
    %v8893 = vld [vmem:[%s8849 + $0x158] sm:$0xff]
    %v8894 = vld [vmem:[%s8849 + $0x160] sm:$0xff]
    %v8895 = vld [vmem:[%s8849 + $0x168] sm:$0xff]
    %v8896 = vld [vmem:[%s8849 + $0x170] sm:$0xff]
    %v8897 = vld [vmem:[%s8849 + $0x178] sm:$0xff]
    %v8898 = vld [vmem:[%s8849 + $0x180] sm:$0xff]
    %v8899 = vld [vmem:[%s8849 + $0x188] sm:$0xff]
    %v8900 = vld [vmem:[%s8849 + $0x190] sm:$0xff]
    %v8901 = vld [vmem:[%s8849 + $0x198] sm:$0xff]
    %v8902 = vld [vmem:[%s8849 + $0x1a0] sm:$0xff]
    %v8903 = vld [vmem:[%s8849 + $0x1a8] sm:$0xff]
    %v8904 = vld [vmem:[%s8849 + $0x1b0] sm:$0xff]
    %v8905 = vld [vmem:[%s8849 + $0x1b8] sm:$0xff]
    %v8906 = vld [vmem:[%s8849 + $0x1c0] sm:$0xff]
    %v8907 = vld [vmem:[%s8849 + $0x1c8] sm:$0xff]
    %v8908 = vld [vmem:[%s8849 + $0x1d0] sm:$0xff]
    %v8909 = vld [vmem:[%s8849 + $0x1d8] sm:$0xff]
    %v8910 = vld [vmem:[%s8849 + $0x1e0] sm:$0xff]
    %v8911 = vld [vmem:[%s8849 + $0x1e8] sm:$0xff]
    %v8912 = vld [vmem:[%s8849 + $0x1f0] sm:$0xff]
    %v8913 = vld [vmem:[%s8849 + $0x1f8] sm:$0xff]
    %v8914 = vld [vmem:[%s8849 + $0x200] sm:$0xff]
    %v8915 = vld [vmem:[%s8849 + $0x208] sm:$0xff]
    %v8916 = vld [vmem:[%s8849 + $0x210] sm:$0xff]
    %v8917 = vld [vmem:[%s8849 + $0x218] sm:$0xff]
    %v8918 = vld [vmem:[%s8849 + $0x220] sm:$0xff]
    %v8919 = vld [vmem:[%s8849 + $0x228] sm:$0xff]
    %v8920 = vld [vmem:[%s8849 + $0x230] sm:$0xff]
    %v8921 = vld [vmem:[%s8849 + $0x238] sm:$0xff]
    %v8922 = vld [vmem:[%s8849 + $0x240] sm:$0xff]
    %v8923 = vld [vmem:[%s8849 + $0x248] sm:$0xff]
    %v8924 = vld [vmem:[%s8849 + $0x250] sm:$0xff]
    %v8925 = vld [vmem:[%s8849 + $0x258] sm:$0xff]
    %v8926 = vld [vmem:[%s8849 + $0x260] sm:$0xff]
    %v8927 = vld [vmem:[%s8849 + $0x268] sm:$0xff]
    %v8928 = vld [vmem:[%s8849 + $0x270] sm:$0xff]
    %v8929 = vld [vmem:[%s8849 + $0x278] sm:$0xff]
    %v8930 = vld [vmem:[%s8849 + $0x280] sm:$0xff]
    %v8931 = vld [vmem:[%s8849 + $0x288] sm:$0xff]
    %v8932 = vld [vmem:[%s8849 + $0x290] sm:$0xff]
    %v8933 = vld [vmem:[%s8849 + $0x298] sm:$0xff]
    %v8934 = vld [vmem:[%s8849 + $0x2a0] sm:$0xff]
    %v8935 = vld [vmem:[%s8849 + $0x2a8] sm:$0xff]
    %v8936 = vld [vmem:[%s8849 + $0x2b0] sm:$0xff]
    %v8937 = vld [vmem:[%s8849 + $0x2b8] sm:$0xff]
    %v8938 = vld [vmem:[%s8849 + $0x2c0] sm:$0xff]
    %v8939 = vld [vmem:[%s8849 + $0x2c8] sm:$0xff]
    %v8940 = vld [vmem:[%s8849 + $0x2d0] sm:$0xff]
    %v8941 = vld [vmem:[%s8849 + $0x2d8] sm:$0xff]
    %v8942 = vld [vmem:[%s8849 + $0x2e0] sm:$0xff]
    %v8943 = vld [vmem:[%s8849 + $0x2e8] sm:$0xff]
    %v8944 = vld [vmem:[%s8849 + $0x2f0] sm:$0xff]
    %v8945 = vld [vmem:[%s8849 + $0x2f8] sm:$0xff]
    %v8946 = vld [vmem:[%s8849 + $0x300] sm:$0xff]
    %v8947 = vld [vmem:[%s8849 + $0x308] sm:$0xff]
    %v8948 = vld [vmem:[%s8849 + $0x310] sm:$0xff]
    %v8949 = vld [vmem:[%s8849 + $0x318] sm:$0xff]
    %v8950 = vld [vmem:[%s8849 + $0x320] sm:$0xff]
    %v8951 = vld [vmem:[%s8849 + $0x328] sm:$0xff]
    %v8952 = vld [vmem:[%s8849 + $0x330] sm:$0xff]
    %v8953 = vld [vmem:[%s8849 + $0x338] sm:$0xff]
    %v8954 = vld [vmem:[%s8849 + $0x340] sm:$0xff]
    %v8955 = vld [vmem:[%s8849 + $0x348] sm:$0xff]
    %v8956 = vld [vmem:[%s8849 + $0x350] sm:$0xff]
    %v8957 = vld [vmem:[%s8849 + $0x358] sm:$0xff]
    %v8958 = vld [vmem:[%s8849 + $0x360] sm:$0xff]
    %v8959 = vld [vmem:[%s8849 + $0x368] sm:$0xff]
    %v8960 = vld [vmem:[%s8849 + $0x370] sm:$0xff]
    %v8961 = vld [vmem:[%s8849 + $0x378] sm:$0xff]
    %v8962 = vld [vmem:[%s8849 + $0x380] sm:$0xff]
    %v8963 = vld [vmem:[%s8849 + $0x388] sm:$0xff]
    %v8964 = vld [vmem:[%s8849 + $0x390] sm:$0xff]
    %v8965 = vld [vmem:[%s8849 + $0x398] sm:$0xff]
    %v8966 = vld [vmem:[%s8849 + $0x3a0] sm:$0xff]
    %v8967 = vld [vmem:[%s8849 + $0x3a8] sm:$0xff]
    %v8968 = vld [vmem:[%s8849 + $0x3b0] sm:$0xff]
    %v8969 = vld [vmem:[%s8849 + $0x3b8] sm:$0xff]
    %v8970 = vld [vmem:[%s8849 + $0x3c0] sm:$0xff]
    %v8971 = vld [vmem:[%s8849 + $0x3c8] sm:$0xff]
    %v8972 = vld [vmem:[%s8849 + $0x3d0] sm:$0xff]
    %v8973 = vld [vmem:[%s8849 + $0x3d8] sm:$0xff]
    %v8974 = vld [vmem:[%s8849 + $0x3e0] sm:$0xff]
    %v8975 = vld [vmem:[%s8849 + $0x3e8] sm:$0xff]
    %v8976 = vld [vmem:[%s8849 + $0x3f0] sm:$0xff]
    %v8977 = vld [vmem:[%s8849 + $0x3f8] sm:$0xff]
    %v8978 = vld [vmem:[%s8849 + $0x400] sm:$0xff]
    %v8979 = vld [vmem:[%s8849 + $0x408] sm:$0xff]
    %v8980 = vld [vmem:[%s8849 + $0x410] sm:$0xff]
    %v8981 = vld [vmem:[%s8849 + $0x418] sm:$0xff]
    %v8982 = vld [vmem:[%s8849 + $0x420] sm:$0xff]
    %v8983 = vld [vmem:[%s8849 + $0x428] sm:$0xff]
    %v8984 = vld [vmem:[%s8849 + $0x430] sm:$0xff]
    %v8985 = vld [vmem:[%s8849 + $0x438] sm:$0xff]
    %v8986 = vld [vmem:[%s8849 + $0x440] sm:$0xff]
    %v8987 = vld [vmem:[%s8849 + $0x448] sm:$0xff]
    %v8988 = vld [vmem:[%s8849 + $0x450] sm:$0xff]
    %v8989 = vld [vmem:[%s8849 + $0x458] sm:$0xff]
    %v8990 = vld [vmem:[%s8849 + $0x460] sm:$0xff]
    %v8991 = vld [vmem:[%s8849 + $0x468] sm:$0xff]
    %v8992 = vld [vmem:[%s8849 + $0x470] sm:$0xff]
    %v8993 = vld [vmem:[%s8849 + $0x478] sm:$0xff]
    %v8994 = vld [vmem:[%s8849 + $0x480] sm:$0xff]
    %v8995 = vld [vmem:[%s8849 + $0x488] sm:$0xff]
    %v8996 = vld [vmem:[%s8849 + $0x490] sm:$0xff]
    %v8997 = vld [vmem:[%s8849 + $0x498] sm:$0xff]
    %v8998 = vld [vmem:[%s8849 + $0x4a0] sm:$0xff]
    %v8999 = vld [vmem:[%s8849 + $0x4a8] sm:$0xff]
    %v9000 = vld [vmem:[%s8849 + $0x4b0] sm:$0xff]
    %v9001 = vld [vmem:[%s8849 + $0x4b8] sm:$0xff]
    %v9002 = vld [vmem:[%s8849 + $0x4c0] sm:$0xff]
    %v9003 = vld [vmem:[%s8849 + $0x4c8] sm:$0xff]
    %v9004 = vld [vmem:[%s8849 + $0x4d0] sm:$0xff]
    %v9005 = vld [vmem:[%s8849 + $0x4d8] sm:$0xff]
    %v9006 = vld [vmem:[%s8849 + $0x4e0] sm:$0xff]
    %v9007 = vld [vmem:[%s8849 + $0x4e8] sm:$0xff]
    %v9008 = vld [vmem:[%s8849 + $0x4f0] sm:$0xff]
    %v9009 = vld [vmem:[%s8849 + $0x4f8] sm:$0xff]
    %v9010 = vld [vmem:[%s8849 + $0x500] sm:$0xff]
    %v9011 = vld [vmem:[%s8849 + $0x508] sm:$0xff]
    %v9012 = vld [vmem:[%s8849 + $0x510] sm:$0xff]
    %v9013 = vld [vmem:[%s8849 + $0x518] sm:$0xff]
    %v9014 = vld [vmem:[%s8849 + $0x520] sm:$0xff]
    %v9015 = vld [vmem:[%s8849 + $0x528] sm:$0xff]
    %v9016 = vld [vmem:[%s8849 + $0x530] sm:$0xff]
    %v9017 = vld [vmem:[%s8849 + $0x538] sm:$0xff]
    %v9018 = vld [vmem:[%s8849 + $0x540] sm:$0xff]
    %v9019 = vld [vmem:[%s8849 + $0x548] sm:$0xff]
    %v9020 = vld [vmem:[%s8849 + $0x550] sm:$0xff]
    %v9021 = vld [vmem:[%s8849 + $0x558] sm:$0xff]
    %v9022 = vld [vmem:[%s8849 + $0x560] sm:$0xff]
    %v9023 = vld [vmem:[%s8849 + $0x568] sm:$0xff]
    %v9024 = vld [vmem:[%s8849 + $0x570] sm:$0xff]
    %v9025 = vld [vmem:[%s8849 + $0x578] sm:$0xff]
    %v9026 = vld [vmem:[%s8849 + $0x580] sm:$0xff]
    %v9027 = vld [vmem:[%s8849 + $0x588] sm:$0xff]
    %v9028 = vld [vmem:[%s8849 + $0x590] sm:$0xff]
    %v9029 = vld [vmem:[%s8849 + $0x598] sm:$0xff]
    %v9030 = vld [vmem:[%s8849 + $0x5a0] sm:$0xff]
    %v9031 = vld [vmem:[%s8849 + $0x5a8] sm:$0xff]
    %v9032 = vld [vmem:[%s8849 + $0x5b0] sm:$0xff]
    %v9033 = vld [vmem:[%s8849 + $0x5b8] sm:$0xff]
    %v9034 = vld [vmem:[%s8849 + $0x5c0] sm:$0xff]
    %v9035 = vld [vmem:[%s8849 + $0x5c8] sm:$0xff]
    %v9036 = vld [vmem:[%s8849 + $0x5d0] sm:$0xff]
    %v9037 = vld [vmem:[%s8849 + $0x5d8] sm:$0xff]
    %v9038 = vld [vmem:[%s8849 + $0x5e0] sm:$0xff]
    %v9039 = vld [vmem:[%s8849 + $0x5e8] sm:$0xff]
    %v9040 = vld [vmem:[%s8849 + $0x5f0] sm:$0xff]
    %v9041 = vld [vmem:[%s8849 + $0x5f8] sm:$0xff]
    %v9042 = vld [vmem:[%s8849 + $0x600] sm:$0xff]
    %v9043 = vld [vmem:[%s8849 + $0x608] sm:$0xff]
    %v9044 = vld [vmem:[%s8849 + $0x610] sm:$0xff]
    %v9045 = vld [vmem:[%s8849 + $0x618] sm:$0xff]
    %v9046 = vld [vmem:[%s8849 + $0x620] sm:$0xff]
    %v9047 = vld [vmem:[%s8849 + $0x628] sm:$0xff]
    %v9048 = vld [vmem:[%s8849 + $0x630] sm:$0xff]
    %v9049 = vld [vmem:[%s8849 + $0x638] sm:$0xff]
    %v9050 = vld [vmem:[%s8849 + $0x640] sm:$0xff]
    %v9051 = vld [vmem:[%s8849 + $0x648] sm:$0xff]
    %v9052 = vld [vmem:[%s8849 + $0x650] sm:$0xff]
    %v9053 = vld [vmem:[%s8849 + $0x658] sm:$0xff]
    %v9054 = vld [vmem:[%s8849 + $0x660] sm:$0xff]
    %v9055 = vld [vmem:[%s8849 + $0x668] sm:$0xff]
    %v9056 = vld [vmem:[%s8849 + $0x670] sm:$0xff]
    %v9057 = vld [vmem:[%s8849 + $0x678] sm:$0xff]
    %v9058 = vld [vmem:[%s8849 + $0x680] sm:$0xff]
    %v9059 = vld [vmem:[%s8849 + $0x688] sm:$0xff]
    %v9060 = vld [vmem:[%s8849 + $0x690] sm:$0xff]
    %v9061 = vld [vmem:[%s8849 + $0x698] sm:$0xff]
    %v9062 = vld [vmem:[%s8849 + $0x6a0] sm:$0xff]
    %v9063 = vld [vmem:[%s8849 + $0x6a8] sm:$0xff]
    %v9064 = vld [vmem:[%s8849 + $0x6b0] sm:$0xff]
    %v9065 = vld [vmem:[%s8849 + $0x6b8] sm:$0xff]
    %v9066 = vld [vmem:[%s8849 + $0x6c0] sm:$0xff]
    %v9067 = vld [vmem:[%s8849 + $0x6c8] sm:$0xff]
    %v9068 = vld [vmem:[%s8849 + $0x6d0] sm:$0xff]
    %v9069 = vld [vmem:[%s8849 + $0x6d8] sm:$0xff]
    %v9070 = vld [vmem:[%s8849 + $0x6e0] sm:$0xff]
    %v9071 = vld [vmem:[%s8849 + $0x6e8] sm:$0xff]
    %v9072 = vld [vmem:[%s8849 + $0x6f0] sm:$0xff]
    %v9073 = vld [vmem:[%s8849 + $0x6f8] sm:$0xff]
    %v9074 = vld [vmem:[%s8849 + $0x700] sm:$0xff]
    %v9075 = vld [vmem:[%s8849 + $0x708] sm:$0xff]
    %v9076 = vld [vmem:[%s8849 + $0x710] sm:$0xff]
    %v9077 = vld [vmem:[%s8849 + $0x718] sm:$0xff]
    %v9078 = vld [vmem:[%s8849 + $0x720] sm:$0xff]
    %v9079 = vld [vmem:[%s8849 + $0x728] sm:$0xff]
    %v9080 = vld [vmem:[%s8849 + $0x730] sm:$0xff]
    %v9081 = vld [vmem:[%s8849 + $0x738] sm:$0xff]
    %v9082 = vld [vmem:[%s8849 + $0x740] sm:$0xff]
    %v9083 = vld [vmem:[%s8849 + $0x748] sm:$0xff]
    %v9084 = vld [vmem:[%s8849 + $0x750] sm:$0xff]
    %v9085 = vld [vmem:[%s8849 + $0x758] sm:$0xff]
    %v9086 = vld [vmem:[%s8849 + $0x760] sm:$0xff]
    %v9087 = vld [vmem:[%s8849 + $0x768] sm:$0xff]
    %v9088 = vld [vmem:[%s8849 + $0x770] sm:$0xff]
    %v9089 = vld [vmem:[%s8849 + $0x778] sm:$0xff]
    %v9090 = vld [vmem:[%s8849 + $0x780] sm:$0xff]
    %v9091 = vld [vmem:[%s8849 + $0x788] sm:$0xff]
    %v9092 = vld [vmem:[%s8849 + $0x790] sm:$0xff]
    %v9093 = vld [vmem:[%s8849 + $0x798] sm:$0xff]
    %v9094 = vld [vmem:[%s8849 + $0x7a0] sm:$0xff]
    %v9095 = vld [vmem:[%s8849 + $0x7a8] sm:$0xff]
    %v9096 = vld [vmem:[%s8849 + $0x7b0] sm:$0xff]
    %v9097 = vld [vmem:[%s8849 + $0x7b8] sm:$0xff]
    %v9098 = vld [vmem:[%s8849 + $0x7c0] sm:$0xff]
    %v9099 = vld [vmem:[%s8849 + $0x7c8] sm:$0xff]
    %v9100 = vld [vmem:[%s8849 + $0x7d0] sm:$0xff]
    %v9101 = vld [vmem:[%s8849 + $0x7d8] sm:$0xff]
    %v9102 = vld [vmem:[%s8849 + $0x7e0] sm:$0xff]
    %v9103 = vld [vmem:[%s8849 + $0x7e8] sm:$0xff]
    %v9104 = vld [vmem:[%s8849 + $0x7f0] sm:$0xff]
    %v9105 = vld [vmem:[%s8849 + $0x7f8] sm:$0xff]
    %9106 = vmatprep.subr.mxu0 %v8851
    %9107 = vmatpush1.msra.mxu0 %v8850
    %9108 = vmatprep.subr.mxu0 %v8853
    %9109 = vmatpush1.msra.mxu0 %v8852
    %9110 = vmatprep.subr.mxu0 %v8855
    %9111 = vmatpush1.msra.mxu0 %v8854
    %9112 = vmatprep.subr.mxu0 %v8857
    %9113 = vmatpush1.msra.mxu0 %v8856
    %9114 = vmatprep.subr.mxu0 %v8859
    %9115 = vmatpush1.msra.mxu0 %v8858
    %9116 = vmatprep.subr.mxu0 %v8861
    %9117 = vmatpush1.msra.mxu0 %v8860
    %9118 = vmatprep.subr.mxu0 %v8863
    %9119 = vmatpush1.msra.mxu0 %v8862
    %9120 = vmatprep.subr.mxu0 %v8865
    %9121 = vmatpush1.msra.mxu0 %v8864
    %9122 = vmatprep.subr.mxu0 %v8867
    %9123 = vmatpush1.msra.mxu0 %v8866
    %9124 = vmatprep.subr.mxu0 %v8869
    %9125 = vmatpush1.msra.mxu0 %v8868
    %9126 = vmatprep.subr.mxu0 %v8871
    %9127 = vmatpush1.msra.mxu0 %v8870
    %9128 = vmatprep.subr.mxu0 %v8873
    %9129 = vmatpush1.msra.mxu0 %v8872
    %9130 = vmatprep.subr.mxu0 %v8875
    %9131 = vmatpush1.msra.mxu0 %v8874
    %9132 = vmatprep.subr.mxu0 %v8877
    %9133 = vmatpush1.msra.mxu0 %v8876
    %9134 = vmatprep.subr.mxu0 %v8879
    %9135 = vmatpush1.msra.mxu0 %v8878
    %9136 = vmatprep.subr.mxu0 %v8881
    %9137 = vmatpush1.msra.mxu0 %v8880
    %9138 = vmatprep.subr.mxu0 %v8883
    %9139 = vmatpush1.msra.mxu0 %v8882
    %9140 = vmatprep.subr.mxu0 %v8885
    %9141 = vmatpush1.msra.mxu0 %v8884
    %9142 = vmatprep.subr.mxu0 %v8887
    %9143 = vmatpush1.msra.mxu0 %v8886
    %9144 = vmatprep.subr.mxu0 %v8889
    %9145 = vmatpush1.msra.mxu0 %v8888
    %9146 = vmatprep.subr.mxu0 %v8891
    %9147 = vmatpush1.msra.mxu0 %v8890
    %9148 = vmatprep.subr.mxu0 %v8893
    %9149 = vmatpush1.msra.mxu0 %v8892
    %9150 = vmatprep.subr.mxu0 %v8895
    %9151 = vmatpush1.msra.mxu0 %v8894
    %9152 = vmatprep.subr.mxu0 %v8897
    %9153 = vmatpush1.msra.mxu0 %v8896
    %9154 = vmatprep.subr.mxu0 %v8899
    %9155 = vmatpush1.msra.mxu0 %v8898
    %9156 = vmatprep.subr.mxu0 %v8901
    %9157 = vmatpush1.msra.mxu0 %v8900
    %9158 = vmatprep.subr.mxu0 %v8903
    %9159 = vmatpush1.msra.mxu0 %v8902
    %9160 = vmatprep.subr.mxu0 %v8905
    %9161 = vmatpush1.msra.mxu0 %v8904
    %9162 = vmatprep.subr.mxu0 %v8907
    %9163 = vmatpush1.msra.mxu0 %v8906
    %9164 = vmatprep.subr.mxu0 %v8909
    %9165 = vmatpush1.msra.mxu0 %v8908
    %9166 = vmatprep.subr.mxu0 %v8911
    %9167 = vmatpush1.msra.mxu0 %v8910
    %9168 = vmatprep.subr.mxu0 %v8913
    %9169 = vmatpush1.msra.mxu0 %v8912
    %9170 = vmatprep.mubr.f32.mxu0 %v8842
    %9171 = vmatmul.mubr.f32.gmra.mrb[0].mxu0 %v8841
    %v9172 = vpop.f32.mrb[0].mxu0
    %v9173 = vadd.f32 0.0, %v9172
    %v9174 = vpop.f32.mrb[0].mxu0
    %v9175 = vadd.f32 0.0, %v9174
    %9176 = vdwg.mxu0
    %9177 = vmatprep.subr.mxu0 %v8915
    %9178 = vmatpush1.msra.mxu0 %v8914
    %9179 = vmatprep.subr.mxu0 %v8917
    %9180 = vmatpush1.msra.mxu0 %v8916
    %9181 = vmatprep.subr.mxu0 %v8919
    %9182 = vmatpush1.msra.mxu0 %v8918
    %9183 = vmatprep.subr.mxu0 %v8921
    %9184 = vmatpush1.msra.mxu0 %v8920
    %9185 = vmatprep.subr.mxu0 %v8923
    %9186 = vmatpush1.msra.mxu0 %v8922
    %9187 = vmatprep.subr.mxu0 %v8925
    %9188 = vmatpush1.msra.mxu0 %v8924
    %9189 = vmatprep.subr.mxu0 %v8927
    %9190 = vmatpush1.msra.mxu0 %v8926
    %9191 = vmatprep.subr.mxu0 %v8929
    %9192 = vmatpush1.msra.mxu0 %v8928
    %9193 = vmatprep.subr.mxu0 %v8931
    %9194 = vmatpush1.msra.mxu0 %v8930
    %9195 = vmatprep.subr.mxu0 %v8933
    %9196 = vmatpush1.msra.mxu0 %v8932
    %9197 = vmatprep.subr.mxu0 %v8935
    %9198 = vmatpush1.msra.mxu0 %v8934
    %9199 = vmatprep.subr.mxu0 %v8937
    %9200 = vmatpush1.msra.mxu0 %v8936
    %9201 = vmatprep.subr.mxu0 %v8939
    %9202 = vmatpush1.msra.mxu0 %v8938
    %9203 = vmatprep.subr.mxu0 %v8941
    %9204 = vmatpush1.msra.mxu0 %v8940
    %9205 = vmatprep.subr.mxu0 %v8943
    %9206 = vmatpush1.msra.mxu0 %v8942
    %9207 = vmatprep.subr.mxu0 %v8945
    %9208 = vmatpush1.msra.mxu0 %v8944
    %9209 = vmatprep.subr.mxu0 %v8947
    %9210 = vmatpush1.msra.mxu0 %v8946
    %9211 = vmatprep.subr.mxu0 %v8949
    %9212 = vmatpush1.msra.mxu0 %v8948
    %9213 = vmatprep.subr.mxu0 %v8951
    %9214 = vmatpush1.msra.mxu0 %v8950
    %9215 = vmatprep.subr.mxu0 %v8953
    %9216 = vmatpush1.msra.mxu0 %v8952
    %9217 = vmatprep.subr.mxu0 %v8955
    %9218 = vmatpush1.msra.mxu0 %v8954
    %9219 = vmatprep.subr.mxu0 %v8957
    %9220 = vmatpush1.msra.mxu0 %v8956
    %9221 = vmatprep.subr.mxu0 %v8959
    %9222 = vmatpush1.msra.mxu0 %v8958
    %9223 = vmatprep.subr.mxu0 %v8961
    %9224 = vmatpush1.msra.mxu0 %v8960
    %9225 = vmatprep.subr.mxu0 %v8963
    %9226 = vmatpush1.msra.mxu0 %v8962
    %9227 = vmatprep.subr.mxu0 %v8965
    %9228 = vmatpush1.msra.mxu0 %v8964
    %9229 = vmatprep.subr.mxu0 %v8967
    %9230 = vmatpush1.msra.mxu0 %v8966
    %9231 = vmatprep.subr.mxu0 %v8969
    %9232 = vmatpush1.msra.mxu0 %v8968
    %9233 = vmatprep.subr.mxu0 %v8971
    %9234 = vmatpush1.msra.mxu0 %v8970
    %9235 = vmatprep.subr.mxu0 %v8973
    %9236 = vmatpush1.msra.mxu0 %v8972
    %9237 = vmatprep.subr.mxu0 %v8975
    %9238 = vmatpush1.msra.mxu0 %v8974
    %9239 = vmatprep.subr.mxu0 %v8977
    %9240 = vmatpush1.msra.mxu0 %v8976
    %9241 = vmatprep.mubr.f32.mxu0 %v8844
    %9242 = vmatmul.mubr.f32.gmra.mrb[0].mxu0 %v8843
    %v9243 = vpop.f32.mrb[0].mxu0
    %v9244 = vadd.f32 %v9173, %v9243
    %v9245 = vpop.f32.mrb[0].mxu0
    %v9246 = vadd.f32 %v9175, %v9245
    %9247 = vdwg.mxu0
    %9248 = vmatprep.subr.mxu0 %v8979
    %9249 = vmatpush1.msra.mxu0 %v8978
    %9250 = vmatprep.subr.mxu0 %v8981
    %9251 = vmatpush1.msra.mxu0 %v8980
    %9252 = vmatprep.subr.mxu0 %v8983
    %9253 = vmatpush1.msra.mxu0 %v8982
    %9254 = vmatprep.subr.mxu0 %v8985
    %9255 = vmatpush1.msra.mxu0 %v8984
    %9256 = vmatprep.subr.mxu0 %v8987
    %9257 = vmatpush1.msra.mxu0 %v8986
    %9258 = vmatprep.subr.mxu0 %v8989
    %9259 = vmatpush1.msra.mxu0 %v8988
    %9260 = vmatprep.subr.mxu0 %v8991
    %9261 = vmatpush1.msra.mxu0 %v8990
    %9262 = vmatprep.subr.mxu0 %v8993
    %9263 = vmatpush1.msra.mxu0 %v8992
    %9264 = vmatprep.subr.mxu0 %v8995
    %9265 = vmatpush1.msra.mxu0 %v8994
    %9266 = vmatprep.subr.mxu0 %v8997
    %9267 = vmatpush1.msra.mxu0 %v8996
    %9268 = vmatprep.subr.mxu0 %v8999
    %9269 = vmatpush1.msra.mxu0 %v8998
    %9270 = vmatprep.subr.mxu0 %v9001
    %9271 = vmatpush1.msra.mxu0 %v9000
    %9272 = vmatprep.subr.mxu0 %v9003
    %9273 = vmatpush1.msra.mxu0 %v9002
    %9274 = vmatprep.subr.mxu0 %v9005
    %9275 = vmatpush1.msra.mxu0 %v9004
    %9276 = vmatprep.subr.mxu0 %v9007
    %9277 = vmatpush1.msra.mxu0 %v9006
    %9278 = vmatprep.subr.mxu0 %v9009
    %9279 = vmatpush1.msra.mxu0 %v9008
    %9280 = vmatprep.subr.mxu0 %v9011
    %9281 = vmatpush1.msra.mxu0 %v9010
    %9282 = vmatprep.subr.mxu0 %v9013
    %9283 = vmatpush1.msra.mxu0 %v9012
    %9284 = vmatprep.subr.mxu0 %v9015
    %9285 = vmatpush1.msra.mxu0 %v9014
    %9286 = vmatprep.subr.mxu0 %v9017
    %9287 = vmatpush1.msra.mxu0 %v9016
    %9288 = vmatprep.subr.mxu0 %v9019
    %9289 = vmatpush1.msra.mxu0 %v9018
    %9290 = vmatprep.subr.mxu0 %v9021
    %9291 = vmatpush1.msra.mxu0 %v9020
    %9292 = vmatprep.subr.mxu0 %v9023
    %9293 = vmatpush1.msra.mxu0 %v9022
    %9294 = vmatprep.subr.mxu0 %v9025
    %9295 = vmatpush1.msra.mxu0 %v9024
    %9296 = vmatprep.subr.mxu0 %v9027
    %9297 = vmatpush1.msra.mxu0 %v9026
    %9298 = vmatprep.subr.mxu0 %v9029
    %9299 = vmatpush1.msra.mxu0 %v9028
    %9300 = vmatprep.subr.mxu0 %v9031
    %9301 = vmatpush1.msra.mxu0 %v9030
    %9302 = vmatprep.subr.mxu0 %v9033
    %9303 = vmatpush1.msra.mxu0 %v9032
    %9304 = vmatprep.subr.mxu0 %v9035
    %9305 = vmatpush1.msra.mxu0 %v9034
    %9306 = vmatprep.subr.mxu0 %v9037
    %9307 = vmatpush1.msra.mxu0 %v9036
    %9308 = vmatprep.subr.mxu0 %v9039
    %9309 = vmatpush1.msra.mxu0 %v9038
    %9310 = vmatprep.subr.mxu0 %v9041
    %9311 = vmatpush1.msra.mxu0 %v9040
    %9312 = vmatprep.mubr.f32.mxu0 %v8846
    %9313 = vmatmul.mubr.f32.gmra.mrb[0].mxu0 %v8845
    %v9314 = vpop.f32.mrb[0].mxu0
    %v9315 = vadd.f32 %v9244, %v9314
    %v9316 = vpop.f32.mrb[0].mxu0
    %v9317 = vadd.f32 %v9246, %v9316
    %9318 = vdwg.mxu0
    %9319 = vmatprep.subr.mxu0 %v9043
    %9320 = vmatpush1.msra.mxu0 %v9042
    %9321 = vmatprep.subr.mxu0 %v9045
    %9322 = vmatpush1.msra.mxu0 %v9044
    %9323 = vmatprep.subr.mxu0 %v9047
    %9324 = vmatpush1.msra.mxu0 %v9046
    %9325 = vmatprep.subr.mxu0 %v9049
    %9326 = vmatpush1.msra.mxu0 %v9048
    %9327 = vmatprep.subr.mxu0 %v9051
    %9328 = vmatpush1.msra.mxu0 %v9050
    %9329 = vmatprep.subr.mxu0 %v9053
    %9330 = vmatpush1.msra.mxu0 %v9052
    %9331 = vmatprep.subr.mxu0 %v9055
    %9332 = vmatpush1.msra.mxu0 %v9054
    %9333 = vmatprep.subr.mxu0 %v9057
    %9334 = vmatpush1.msra.mxu0 %v9056
    %9335 = vmatprep.subr.mxu0 %v9059
    %9336 = vmatpush1.msra.mxu0 %v9058
    %9337 = vmatprep.subr.mxu0 %v9061
    %9338 = vmatpush1.msra.mxu0 %v9060
    %9339 = vmatprep.subr.mxu0 %v9063
    %9340 = vmatpush1.msra.mxu0 %v9062
    %9341 = vmatprep.subr.mxu0 %v9065
    %9342 = vmatpush1.msra.mxu0 %v9064
    %9343 = vmatprep.subr.mxu0 %v9067
    %9344 = vmatpush1.msra.mxu0 %v9066
    %9345 = vmatprep.subr.mxu0 %v9069
    %9346 = vmatpush1.msra.mxu0 %v9068
    %9347 = vmatprep.subr.mxu0 %v9071
    %9348 = vmatpush1.msra.mxu0 %v9070
    %9349 = vmatprep.subr.mxu0 %v9073
    %9350 = vmatpush1.msra.mxu0 %v9072
    %9351 = vmatprep.subr.mxu0 %v9075
    %9352 = vmatpush1.msra.mxu0 %v9074
    %9353 = vmatprep.subr.mxu0 %v9077
    %9354 = vmatpush1.msra.mxu0 %v9076
    %9355 = vmatprep.subr.mxu0 %v9079
    %9356 = vmatpush1.msra.mxu0 %v9078
    %9357 = vmatprep.subr.mxu0 %v9081
    %9358 = vmatpush1.msra.mxu0 %v9080
    %9359 = vmatprep.subr.mxu0 %v9083
    %9360 = vmatpush1.msra.mxu0 %v9082
    %9361 = vmatprep.subr.mxu0 %v9085
    %9362 = vmatpush1.msra.mxu0 %v9084
    %9363 = vmatprep.subr.mxu0 %v9087
    %9364 = vmatpush1.msra.mxu0 %v9086
    %9365 = vmatprep.subr.mxu0 %v9089
    %9366 = vmatpush1.msra.mxu0 %v9088
    %9367 = vmatprep.subr.mxu0 %v9091
    %9368 = vmatpush1.msra.mxu0 %v9090
    %9369 = vmatprep.subr.mxu0 %v9093
    %9370 = vmatpush1.msra.mxu0 %v9092
    %9371 = vmatprep.subr.mxu0 %v9095
    %9372 = vmatpush1.msra.mxu0 %v9094
    %9373 = vmatprep.subr.mxu0 %v9097
    %9374 = vmatpush1.msra.mxu0 %v9096
    %9375 = vmatprep.subr.mxu0 %v9099
    %9376 = vmatpush1.msra.mxu0 %v9098
    %9377 = vmatprep.subr.mxu0 %v9101
    %9378 = vmatpush1.msra.mxu0 %v9100
    %9379 = vmatprep.subr.mxu0 %v9103
    %9380 = vmatpush1.msra.mxu0 %v9102
    %9381 = vmatprep.subr.mxu0 %v9105
    %9382 = vmatpush1.msra.mxu0 %v9104
    %9383 = vmatprep.mubr.f32.mxu0 %v8848
    %9384 = vmatmul.mubr.f32.gmra.mrb[0].mxu0 %v8847
    %v9385 = vpop.f32.mrb[0].mxu0
    %v9386 = vadd.f32 %v9315, %v9385
    %v9387 = vpop.f32.mrb[0].mxu0
    %v9388 = vadd.f32 %v9317, %v9387
    %9389 = vdwg.mxu0
    %v9390 = vadd.f32 %v8838, %v9386
    %v9391 = vadd.f32 %v8839, %v9388
    %9392 = vst [vmem:[#allocation3] sm:$0xff] %v9390
    %9393 = vst [vmem:[#allocation3 + $0x8] sm:$0xff] %v9391
    %v9394 = vld [vmem:[#allocation3] sm:$0xff]
    %v9395 = vld [vmem:[#allocation3 + $0x8] sm:$0xff]
    %v9396 = vld [vmem:[#allocation15] sm:$0x3]
    %v9398 = vlaneseq
    %v9399 = vshrl.u32 %v9398, 7
    %v9400 = vsub.s32 0, %v9399
    %v9401 = vrot.slane %v9396, %v9400
    %v9402 = vlaneseq
    %v9403 = vshrl.u32 %v9402, 7
    %v9404 = vsub.s32 1, %v9403
    %v9405 = vrot.slane %v9396, %v9404
    %v9408 = vadd.f32 %v9394, %v9401
    %v9409 = vadd.f32 %v9395, %v9405
    %v9410 = vmax.f32 %v9408, 0.0
    %v9411 = vmax.f32 %v9409, 0.0
    %v9412 = vld [vmem:[#allocation17] sm:$0xff]
    %v9413 = vld [vmem:[#allocation17 + $0x8] sm:$0xff]
    %v9414 = vld [vmem:[#allocation17 + $0x10] sm:$0xff]
    %v9415 = vld [vmem:[#allocation17 + $0x18] sm:$0xff]
    %v9416 = vld [vmem:[#allocation17 + $0x20] sm:$0xff]
    %v9417 = vld [vmem:[#allocation17 + $0x28] sm:$0xff]
    %v9418 = vld [vmem:[#allocation17 + $0x30] sm:$0xff]
    %v9419 = vld [vmem:[#allocation17 + $0x38] sm:$0xff]
    %v9420 = vld [vmem:[#allocation17 + $0x40] sm:$0xff]
    %v9421 = vld [vmem:[#allocation17 + $0x48] sm:$0xff]
    %v9422 = vld [vmem:[#allocation17 + $0x50] sm:$0xff]
    %v9423 = vld [vmem:[#allocation17 + $0x58] sm:$0xff]
    %v9424 = vld [vmem:[#allocation17 + $0x60] sm:$0xff]
    %v9425 = vld [vmem:[#allocation17 + $0x68] sm:$0xff]
    %v9426 = vld [vmem:[#allocation17 + $0x70] sm:$0xff]
    %v9427 = vld [vmem:[#allocation17 + $0x78] sm:$0xff]
    %v9428 = vld [vmem:[#allocation17 + $0x80] sm:$0xff]
    %v9429 = vld [vmem:[#allocation17 + $0x88] sm:$0xff]
    %v9430 = vld [vmem:[#allocation17 + $0x90] sm:$0xff]
    %v9431 = vld [vmem:[#allocation17 + $0x98] sm:$0xff]
    %v9432 = vld [vmem:[#allocation17 + $0xa0] sm:$0xff]
    %v9433 = vld [vmem:[#allocation17 + $0xa8] sm:$0xff]
    %v9434 = vld [vmem:[#allocation17 + $0xb0] sm:$0xff]
    %v9435 = vld [vmem:[#allocation17 + $0xb8] sm:$0xff]
    %v9436 = vld [vmem:[#allocation17 + $0xc0] sm:$0xff]
    %v9437 = vld [vmem:[#allocation17 + $0xc8] sm:$0xff]
    %v9438 = vld [vmem:[#allocation17 + $0xd0] sm:$0xff]
    %v9439 = vld [vmem:[#allocation17 + $0xd8] sm:$0xff]
    %v9440 = vld [vmem:[#allocation17 + $0xe0] sm:$0xff]
    %v9441 = vld [vmem:[#allocation17 + $0xe8] sm:$0xff]
    %v9442 = vld [vmem:[#allocation17 + $0xf0] sm:$0xff]
    %v9443 = vld [vmem:[#allocation17 + $0xf8] sm:$0xff]
    %v9444 = vld [vmem:[#allocation18] sm:$0x1]
    %v9446 = vlaneseq
    %v9447 = vshrl.u32 %v9446, 7
    %v9448 = vsub.s32 0, %v9447
    %v9449 = vrot.slane %v9444, %v9448
    %9451 = vmatprep.subr.mxu0 0.0
    %9452 = vmatpush1.msra.mxu0 %v9412
    %9453 = vmatprep.subr.mxu0 0.0
    %9454 = vmatpush1.msra.mxu0 %v9413
    %9455 = vmatprep.subr.mxu0 0.0
    %9456 = vmatpush1.msra.mxu0 %v9414
    %9457 = vmatprep.subr.mxu0 0.0
    %9458 = vmatpush1.msra.mxu0 %v9415
    %9459 = vmatprep.subr.mxu0 0.0
    %9460 = vmatpush1.msra.mxu0 %v9416
    %9461 = vmatprep.subr.mxu0 0.0
    %9462 = vmatpush1.msra.mxu0 %v9417
    %9463 = vmatprep.subr.mxu0 0.0
    %9464 = vmatpush1.msra.mxu0 %v9418
    %9465 = vmatprep.subr.mxu0 0.0
    %9466 = vmatpush1.msra.mxu0 %v9419
    %9467 = vmatprep.subr.mxu0 0.0
    %9468 = vmatpush1.msra.mxu0 %v9420
    %9469 = vmatprep.subr.mxu0 0.0
    %9470 = vmatpush1.msra.mxu0 %v9421
    %9471 = vmatprep.subr.mxu0 0.0
    %9472 = vmatpush1.msra.mxu0 %v9422
    %9473 = vmatprep.subr.mxu0 0.0
    %9474 = vmatpush1.msra.mxu0 %v9423
    %9475 = vmatprep.subr.mxu0 0.0
    %9476 = vmatpush1.msra.mxu0 %v9424
    %9477 = vmatprep.subr.mxu0 0.0
    %9478 = vmatpush1.msra.mxu0 %v9425
    %9479 = vmatprep.subr.mxu0 0.0
    %9480 = vmatpush1.msra.mxu0 %v9426
    %9481 = vmatprep.subr.mxu0 0.0
    %9482 = vmatpush1.msra.mxu0 %v9427
    %9483 = vmatprep.subr.mxu0 0.0
    %9484 = vmatpush1.msra.mxu0 %v9428
    %9485 = vmatprep.subr.mxu0 0.0
    %9486 = vmatpush1.msra.mxu0 %v9429
    %9487 = vmatprep.subr.mxu0 0.0
    %9488 = vmatpush1.msra.mxu0 %v9430
    %9489 = vmatprep.subr.mxu0 0.0
    %9490 = vmatpush1.msra.mxu0 %v9431
    %9491 = vmatprep.subr.mxu0 0.0
    %9492 = vmatpush1.msra.mxu0 %v9432
    %9493 = vmatprep.subr.mxu0 0.0
    %9494 = vmatpush1.msra.mxu0 %v9433
    %9495 = vmatprep.subr.mxu0 0.0
    %9496 = vmatpush1.msra.mxu0 %v9434
    %9497 = vmatprep.subr.mxu0 0.0
    %9498 = vmatpush1.msra.mxu0 %v9435
    %9499 = vmatprep.subr.mxu0 0.0
    %9500 = vmatpush1.msra.mxu0 %v9436
    %9501 = vmatprep.subr.mxu0 0.0
    %9502 = vmatpush1.msra.mxu0 %v9437
    %9503 = vmatprep.subr.mxu0 0.0
    %9504 = vmatpush1.msra.mxu0 %v9438
    %9505 = vmatprep.subr.mxu0 0.0
    %9506 = vmatpush1.msra.mxu0 %v9439
    %9507 = vmatprep.subr.mxu0 0.0
    %9508 = vmatpush1.msra.mxu0 %v9440
    %9509 = vmatprep.subr.mxu0 0.0
    %9510 = vmatpush1.msra.mxu0 %v9441
    %9511 = vmatprep.subr.mxu0 0.0
    %9512 = vmatpush1.msra.mxu0 %v9442
    %9513 = vmatprep.subr.mxu0 0.0
    %9514 = vmatpush1.msra.mxu0 %v9443
    %9515 = vmatprep.mubr.f32.mxu0 %v9411
    %9516 = vmatmul.mubr.f32.gmra.mrb[0].mxu0 %v9410
    %v9517 = vpop.f32.mrb[0].mxu0
    %v9518 = vadd.f32 %v9449, %v9517
    %v9519 = vpop.f32.mrb[0].mxu0
    %9520 = vdwg.mxu0
    %v9521 = vmax.f32 %v9518, 0.0
    %v9522 = vld [vmem:[%s11] sm:$0xff]
    %v9523 = vld [vmem:[%s11 + $0x8] sm:$0xff]
    %v9524 = vld [vmem:[%s11 + $0x10] sm:$0xff]
    %v9525 = vld [vmem:[%s11 + $0x18] sm:$0xff]
    %v9526 = vld [vmem:[%s11 + $0x20] sm:$0xff]
    %v9527 = vld [vmem:[%s11 + $0x28] sm:$0xff]
    %v9528 = vld [vmem:[%s11 + $0x30] sm:$0xff]
    %v9529 = vld [vmem:[%s11 + $0x38] sm:$0xff]
    %v9530 = vld [vmem:[%s11 + $0x40] sm:$0xff]
    %v9531 = vld [vmem:[%s11 + $0x48] sm:$0xff]
    %v9532 = vld [vmem:[%s11 + $0x50] sm:$0xff]
    %v9533 = vld [vmem:[%s11 + $0x58] sm:$0xff]
    %v9534 = vld [vmem:[%s11 + $0x60] sm:$0xff]
    %v9535 = vld [vmem:[%s11 + $0x68] sm:$0xff]
    %v9536 = vld [vmem:[%s11 + $0x70] sm:$0xff]
    %v9537 = vld [vmem:[%s11 + $0x78] sm:$0xff]
    %v9538 = vld [vmem:[#allocation20] sm:$0x1]
    %v9540 = vlaneseq
    %v9541 = vshrl.u32 %v9540, 7
    %v9542 = vsub.s32 0, %v9541
    %v9543 = vrot.slane %v9538, %v9542
    %9545 = vmatprep.subr.mxu0 0.0
    %9546 = vmatpush1.msra.mxu0 %v9522
    %9547 = vmatprep.subr.mxu0 0.0
    %9548 = vmatpush1.msra.mxu0 %v9523
    %9549 = vmatprep.subr.mxu0 0.0
    %9550 = vmatpush1.msra.mxu0 %v9524
    %9551 = vmatprep.subr.mxu0 0.0
    %9552 = vmatpush1.msra.mxu0 %v9525
    %9553 = vmatprep.subr.mxu0 0.0
    %9554 = vmatpush1.msra.mxu0 %v9526
    %9555 = vmatprep.subr.mxu0 0.0
    %9556 = vmatpush1.msra.mxu0 %v9527
    %9557 = vmatprep.subr.mxu0 0.0
    %9558 = vmatpush1.msra.mxu0 %v9528
    %9559 = vmatprep.subr.mxu0 0.0
    %9560 = vmatpush1.msra.mxu0 %v9529
    %9561 = vmatprep.subr.mxu0 0.0
    %9562 = vmatpush1.msra.mxu0 %v9530
    %9563 = vmatprep.subr.mxu0 0.0
    %9564 = vmatpush1.msra.mxu0 %v9531
    %9565 = vmatprep.subr.mxu0 0.0
    %9566 = vmatpush1.msra.mxu0 %v9532
    %9567 = vmatprep.subr.mxu0 0.0
    %9568 = vmatpush1.msra.mxu0 %v9533
    %9569 = vmatprep.subr.mxu0 0.0
    %9570 = vmatpush1.msra.mxu0 %v9534
    %9571 = vmatprep.subr.mxu0 0.0
    %9572 = vmatpush1.msra.mxu0 %v9535
    %9573 = vmatprep.subr.mxu0 0.0
    %9574 = vmatpush1.msra.mxu0 %v9536
    %9575 = vmatprep.subr.mxu0 0.0
    %9576 = vmatpush1.msra.mxu0 %v9537
    %9577 = vmatprep.subr.mxu0 0.0
    %9578 = vmatpush1.msra.mxu0 0.0
    %9579 = vmatprep.subr.mxu0 0.0
    %9580 = vmatpush1.msra.mxu0 0.0
    %9581 = vmatprep.subr.mxu0 0.0
    %9582 = vmatpush1.msra.mxu0 0.0
    %9583 = vmatprep.subr.mxu0 0.0
    %9584 = vmatpush1.msra.mxu0 0.0
    %9585 = vmatprep.subr.mxu0 0.0
    %9586 = vmatpush1.msra.mxu0 0.0
    %9587 = vmatprep.subr.mxu0 0.0
    %9588 = vmatpush1.msra.mxu0 0.0
    %9589 = vmatprep.subr.mxu0 0.0
    %9590 = vmatpush1.msra.mxu0 0.0
    %9591 = vmatprep.subr.mxu0 0.0
    %9592 = vmatpush1.msra.mxu0 0.0
    %9593 = vmatprep.subr.mxu0 0.0
    %9594 = vmatpush1.msra.mxu0 0.0
    %9595 = vmatprep.subr.mxu0 0.0
    %9596 = vmatpush1.msra.mxu0 0.0
    %9597 = vmatprep.subr.mxu0 0.0
    %9598 = vmatpush1.msra.mxu0 0.0
    %9599 = vmatprep.subr.mxu0 0.0
    %9600 = vmatpush1.msra.mxu0 0.0
    %9601 = vmatprep.subr.mxu0 0.0
    %9602 = vmatpush1.msra.mxu0 0.0
    %9603 = vmatprep.subr.mxu0 0.0
    %9604 = vmatpush1.msra.mxu0 0.0
    %9605 = vmatprep.subr.mxu0 0.0
    %9606 = vmatpush1.msra.mxu0 0.0
    %9607 = vmatprep.subr.mxu0 0.0
    %9608 = vmatpush1.msra.mxu0 0.0
    %9609 = vmatprep.mubr.f32.mxu0 0.0
    %9610 = vmatmul.mubr.f32.gmra.mrb[0].mxu0 %v9521
    %v9611 = vpop.f32.mrb[0].mxu0
    %v9612 = vadd.f32 %v9543, %v9611
    %v9613 = vpop.f32.mrb[0].mxu0
    %9614 = vdwg.mxu0
    %v9615 = vmax.f32 %v9612, 0.0
    %v9616 = vld [vmem:[%s13] sm:$0xff]
    %v9617 = vld [vmem:[%s13 + $0x8] sm:$0xff]
    %v9618 = vld [vmem:[%s13 + $0x10] sm:$0xff]
    %v9619 = vld [vmem:[%s13 + $0x18] sm:$0xff]
    %v9620 = vld [vmem:[%s13 + $0x20] sm:$0xff]
    %v9621 = vld [vmem:[%s13 + $0x28] sm:$0xff]
    %v9622 = vld [vmem:[%s13 + $0x30] sm:$0xff]
    %v9623 = vld [vmem:[%s13 + $0x38] sm:$0xff]
    %v9624 = vld [vmem:[#allocation21] sm:$0x1]
    %v9626 = vlaneseq
    %v9627 = vshrl.u32 %v9626, 7
    %v9628 = vsub.s32 0, %v9627
    %v9629 = vrot.slane %v9624, %v9628
    %vm9631 = vcmask 523264
    %v9633 = vsel %vm9631, %v9615, 0
    %9635 = vmatprep.subr.mxu0 0.0
    %9636 = vmatpush1.msra.mxu0 %v9616
    %9637 = vmatprep.subr.mxu0 0.0
    %9638 = vmatpush1.msra.mxu0 %v9617
    %9639 = vmatprep.subr.mxu0 0.0
    %9640 = vmatpush1.msra.mxu0 %v9618
    %9641 = vmatprep.subr.mxu0 0.0
    %9642 = vmatpush1.msra.mxu0 %v9619
    %9643 = vmatprep.subr.mxu0 0.0
    %9644 = vmatpush1.msra.mxu0 %v9620
    %9645 = vmatprep.subr.mxu0 0.0
    %9646 = vmatpush1.msra.mxu0 %v9621
    %9647 = vmatprep.subr.mxu0 0.0
    %9648 = vmatpush1.msra.mxu0 %v9622
    %9649 = vmatprep.subr.mxu0 0.0
    %9650 = vmatpush1.msra.mxu0 %v9623
    %9651 = vmatprep.subr.mxu0 0.0
    %9652 = vmatpush1.msra.mxu0 0.0
    %9653 = vmatprep.subr.mxu0 0.0
    %9654 = vmatpush1.msra.mxu0 0.0
    %9655 = vmatprep.subr.mxu0 0.0
    %9656 = vmatpush1.msra.mxu0 0.0
    %9657 = vmatprep.subr.mxu0 0.0
    %9658 = vmatpush1.msra.mxu0 0.0
    %9659 = vmatprep.subr.mxu0 0.0
    %9660 = vmatpush1.msra.mxu0 0.0
    %9661 = vmatprep.subr.mxu0 0.0
    %9662 = vmatpush1.msra.mxu0 0.0
    %9663 = vmatprep.subr.mxu0 0.0
    %9664 = vmatpush1.msra.mxu0 0.0
    %9665 = vmatprep.subr.mxu0 0.0
    %9666 = vmatpush1.msra.mxu0 0.0
    %9667 = vmatprep.subr.mxu0 0.0
    %9668 = vmatpush1.msra.mxu0 0.0
    %9669 = vmatprep.subr.mxu0 0.0
    %9670 = vmatpush1.msra.mxu0 0.0
    %9671 = vmatprep.subr.mxu0 0.0
    %9672 = vmatpush1.msra.mxu0 0.0
    %9673 = vmatprep.subr.mxu0 0.0
    %9674 = vmatpush1.msra.mxu0 0.0
    %9675 = vmatprep.subr.mxu0 0.0
    %9676 = vmatpush1.msra.mxu0 0.0
    %9677 = vmatprep.subr.mxu0 0.0
    %9678 = vmatpush1.msra.mxu0 0.0
    %9679 = vmatprep.subr.mxu0 0.0
    %9680 = vmatpush1.msra.mxu0 0.0
    %9681 = vmatprep.subr.mxu0 0.0
    %9682 = vmatpush1.msra.mxu0 0.0
    %9683 = vmatprep.subr.mxu0 0.0
    %9684 = vmatpush1.msra.mxu0 0.0
    %9685 = vmatprep.subr.mxu0 0.0
    %9686 = vmatpush1.msra.mxu0 0.0
    %9687 = vmatprep.subr.mxu0 0.0
    %9688 = vmatpush1.msra.mxu0 0.0
    %9689 = vmatprep.subr.mxu0 0.0
    %9690 = vmatpush1.msra.mxu0 0.0
    %9691 = vmatprep.subr.mxu0 0.0
    %9692 = vmatpush1.msra.mxu0 0.0
    %9693 = vmatprep.subr.mxu0 0.0
    %9694 = vmatpush1.msra.mxu0 0.0
    %9695 = vmatprep.subr.mxu0 0.0
    %9696 = vmatpush1.msra.mxu0 0.0
    %9697 = vmatprep.subr.mxu0 0.0
    %9698 = vmatpush1.msra.mxu0 0.0
    %9699 = vmatprep.mubr.f32.mxu0 0.0
    %9700 = vmatmul.mubr.f32.gmra.mrb[0].mxu0 %v9633
    %v9701 = vpop.f32.mrb[0].mxu0
    %v9702 = vadd.f32 %v9629, %v9701
    %v9703 = vpop.f32.mrb[0].mxu0
    %9704 = vdwg.mxu0
    %vm9705 = vcmask 31744
    %9706 = vst.msk [vmem:[%s15] sm:$0xff] %vm9705, %v9702
    // Predicated region
    $region110: #{net_forward.1} parent=1 // pred_check
      _
    $region111: #{net_forward.1} parent=1 // pred_check_branch
      %9708 = sbr.rel (0) target = $region113
    $region112: #{net_forward.1} parent=1 // pred_region
      _
    $region113: #{net_forward.1} parent=1 // pred_fallthru
      _
    // Predicated region
    $region114: #{net_forward.1} parent=1 // pred_check
      _
    $region115: #{net_forward.1} parent=1 // pred_check_branch
      %9710 = sbr.rel (0) target = $region117
    $region116: #{net_forward.1} parent=1 // pred_region
      _
    $region117: #{net_forward.1} parent=1 // pred_fallthru
      _
    %9711 = vsyncpa [#allocation5], 1
    %9712 = vsyncpa [#allocation7], 1
    %9713 = vsyncpa [#allocation10], 1
    %9714 = vsyncpa [#allocation13], 1
    %9715 = vsyncpa [#allocation16], 1
    %9716 = vsyncpa [#allocation19], 1
    %9717 = vsyncpa [#allocation22], 1

</llo_original>
